<compile_context>
chip_gen: v7x
topology: tpu7x:2x2x1
jax: 0.10.0
libtpu: 0.0.40
codegen_flags: <defaults>
</compile_context>

<pallas_src>
import functools

import jax
import jax.numpy as jnp
import numpy as np
from jax.experimental import pallas as pl
from jax.experimental.pallas import tpu as pltpu


# ---------------------------------------------------------------------------
# Host-side packing (runs ONCE at init, outside the jitted forward).
# ---------------------------------------------------------------------------
def _conv_border_masks(h, w):
    """[9, h*w] f32 masks: tap (kh, kw) valid where (h+kh-1, w+kw-1) in-bounds.

    Only the kw != 1 rows are read in the kernel (the zero-filled lane shift
    already zeroes vertically out-of-range rows); kept 9-wide for simplicity.
    """
    hh, ww = np.meshgrid(np.arange(h), np.arange(w), indexing="ij")
    masks = []
    for kh in range(3):
        for kw in range(3):
            dh, dw = kh - 1, kw - 1
            valid = ((hh + dh >= 0) & (hh + dh < h) &
                     (ww + dw >= 0) & (ww + dw < w))
            masks.append(valid.reshape(-1))
    return np.stack(masks).astype(np.float32)


def _pack_conv(w, b, batch, fused):
    """kron(W_tap, I_B) weights for channel-major / batch-minor activation rows.

    fused=True  -> [OC*B, 9*IC*B]  (taps on the contraction axis; one matmul)
    fused=False -> [9*OC*B, IC*B]  (per-tap sublane blocks; 9 accumulated
                                    matmuls -- used when IC*B % 8 != 0 so the
                                    tap stack can't use aligned sublane stores)
    """
    oc, ic, kh, kw = w.shape
    eye = jnp.eye(batch, dtype=w.dtype)
    taps = [jnp.kron(w[:, :, i, j], eye) for i in range(kh) for j in range(kw)]
    wk = jnp.concatenate(taps, axis=1 if fused else 0)
    return wk, jnp.repeat(b, batch).reshape(oc * batch, 1)


def pack_params(params, batch, img_h, img_w):
    """Pack torch-layout params once; the jitted forward only consumes these."""
    w1, b1, w2, b2, wf, bf = params
    c_in, oc1, oc2 = w1.shape[1], w1.shape[0], w2.shape[0]
    ncls = wf.shape[0]
    hw3 = wf.shape[1] // oc2
    w1k, b1c = _pack_conv(w1, b1, batch, fused=(c_in * batch) % 8 == 0)
    w2k, b2c = _pack_conv(w2, b2, batch, fused=(oc1 * batch) % 8 == 0)
    # FC weight restacked so column c*ncls + n holds wf[n, c*hw3 + p] at row p.
    wfs = wf.reshape(ncls, oc2, hw3).transpose(2, 1, 0).reshape(hw3, oc2 * ncls)
    bfp = bf.reshape(1, ncls)
    m1 = jnp.asarray(_conv_border_masks(img_h, img_w))
    m2 = jnp.asarray(_conv_border_masks(img_h // 2, img_w // 2))
    return (w1k, b1c, m1, w2k, b2c, m2, wfs, bfp)


# ---------------------------------------------------------------------------
# Fused Pallas kernel: conv1+relu -> pool1 -> conv2+relu -> pool2 -> fc1
# ---------------------------------------------------------------------------
def _cnn_fused_kernel(x0_ref, w1_ref, b1_ref, m1_ref, w2_ref, b2_ref, m2_ref,
                      wf_ref, bf_ref, out_ref, sel1_ref, sel2_ref,
                      taps1_ref, taps2_ref, *, batch, oc2, img_h, img_w, ncls):
    f32 = jnp.float32

    def iota_f32(shape, dim):
        return jax.lax.broadcasted_iota(jnp.int32, shape, dim).astype(f32)

    def fdiv(x, d):
        # Exact floor(x / d) for small non-negative integer-valued floats.
        return jnp.floor((x + 0.5) * (1.0 / d))

    def shift_lanes(x, off):
        # out[:, p] = x[:, p + off] when 0 <= p + off < HW, else 0 (static off).
        rows, hw = x.shape
        if off == 0:
            return x
        pad = jnp.zeros((rows, abs(off)), x.dtype)
        if off > 0:
            return jnp.concatenate([x[:, off:], pad], axis=1)
        return jnp.concatenate([pad, x[:, :hw + off]], axis=1)

    def conv3x3_relu(act, wk_ref, b_ref, m_ref, w, taps_ref):
        rows_in, _ = act.shape
        rows_out = b_ref.shape[0]
        fused = (rows_in % 8) == 0          # aligned sublane stores into taps_ref
        acc = None
        for kh in range(3):
            for kw in range(3):
                tap = kh * 3 + kw
                off = (kh - 1) * w + (kw - 1)
                src = shift_lanes(act, off)
                if kw != 1:                 # horizontal border; vertical border
                    src = src * m_ref[pl.ds(tap, 1), :]   # handled by the shift
                if fused:
                    taps_ref[pl.ds(tap * rows_in, rows_in), :] = src
                else:
                    wt = wk_ref[pl.ds(tap * rows_out, rows_out), :]
                    part = jnp.dot(wt, src, preferred_element_type=f32)
                    acc = part if acc is None else acc + part
        if fused:
            acc = jnp.dot(wk_ref[...], taps_ref[...], preferred_element_type=f32)
        return jnp.maximum(acc + b_ref[...], 0.0)

    def pool_select(h, w):
        # sel[p, q] = 1 iff p == 2*(q // (w/2))*w + 2*(q % (w/2)); exact in f32.
        h2, w2 = h // 2, w // 2
        shape = (h * w, h2 * w2)
        p = iota_f32(shape, 0)
        q = iota_f32(shape, 1)
        qh = fdiv(q, w2)
        qw = q - qh * w2
        return (p == 2.0 * w * qh + 2.0 * qw).astype(f32)

    def maxpool2x2(act, w, sel_ref):
        # Max over the 4 window offsets FIRST, then ONE selection matmul.
        # NOTE: the shifted taps are unmasked; this is only correct because the
        # selection matrix picks even (h, w) positions, whose (h+dh, w+dw)
        # neighbours (dh, dw in {0, 1}) are always in-bounds for even H, W.
        h = act.shape[1] // w
        sel_ref[...] = pool_select(h, w)
        m = act
        for off in (1, w, w + 1):
            m = jnp.maximum(m, shift_lanes(act, off))
        return jnp.dot(m, sel_ref[...], preferred_element_type=f32)

    h1, w1 = img_h, img_w
    h2, w2 = h1 // 2, w1 // 2

    act = x0_ref[...]                                         # [Cin*B, h1*w1]
    act = conv3x3_relu(act, w1_ref, b1_ref, m1_ref, w1, taps1_ref)
    act = maxpool2x2(act, w1, sel1_ref)                       # [OC1*B, h2*w2]
    act = conv3x3_relu(act, w2_ref, b2_ref, m2_ref, w2, taps2_ref)
    act = maxpool2x2(act, w2, sel2_ref)                       # [OC2*B, hw3]

    # ---- fc1: one matmul chain instead of a per-channel loop ---------------
    # rows of `act` are c*B + b;  z[c*B+b, c'*ncls+n] = act[c*B+b, :] . wf_c'[n]
    rows, cols = oc2 * batch, oc2 * ncls
    z = jnp.dot(act, wf_ref[...], preferred_element_type=f32)    # [rows, cols]
    r_i = iota_f32((rows, cols), 0)
    q_i = iota_f32((rows, cols), 1)
    z = z * (fdiv(r_i, batch) == fdiv(q_i, ncls)).astype(f32)    # keep c == c'
    # E[b, r] = 1 iff r % B == b  (folds the channel rows of each batch elem)
    rb = iota_f32((batch, rows), 0)
    rr = iota_f32((batch, rows), 1)
    e_mat = ((rr - batch * fdiv(rr, batch)) == rb).astype(f32)
    # F[q, n] = 1 iff q % ncls == n  (folds the per-channel class columns)
    qq = iota_f32((cols, ncls), 0)
    nn = iota_f32((cols, ncls), 1)
    f_mat = ((qq - ncls * fdiv(qq, ncls)) == nn).astype(f32)
    logits = jnp.dot(jnp.dot(e_mat, z, preferred_element_type=f32), f_mat,
                     preferred_element_type=f32)
    out_ref[...] = logits + bf_ref[...]


# ---------------------------------------------------------------------------
# Wrapper
# ---------------------------------------------------------------------------
def cnn_forward(x, packed):
    """x: [B, Cin, H, W] float32; packed = pack_params(params, B, H, W)."""
    w1k, b1c, m1, w2k, b2c, m2, wfs, bfp = packed
    batch, c_in, h, w = x.shape
    assert h % 4 == 0 and w % 4 == 0, "two 2x2 maxpools require H, W % 4 == 0"
    oc1 = b1c.shape[0] // batch
    oc2 = b2c.shape[0] // batch
    ncls = bfp.shape[1]
    h2, w2 = h // 2, w // 2

    # Channel-major, batch-minor rows; flattened (h, w) on the lane axis.
    x0 = jnp.transpose(x, (1, 0, 2, 3)).reshape(c_in * batch, h * w)

    kernel = functools.partial(_cnn_fused_kernel, batch=batch, oc2=oc2,
                               img_h=h, img_w=w, ncls=ncls)
    args = (x0, w1k, b1c, m1, w2k, b2c, m2, wfs, bfp)
    return pl.pallas_call(
        kernel,
        out_shape=jax.ShapeDtypeStruct((batch, ncls), jnp.float32),
        grid=(1,),
        in_specs=[pl.BlockSpec(a.shape, lambda i: (0, 0)) for a in args],
        out_specs=pl.BlockSpec((batch, ncls), lambda i: (0, 0)),
        scratch_shapes=[
            pltpu.VMEM((h * w, h2 * w2), jnp.float32),                 # sel1
            pltpu.VMEM((h2 * w2, (h2 // 2) * (w2 // 2)), jnp.float32),  # sel2
            pltpu.VMEM((9 * c_in * batch, h * w), jnp.float32),        # conv1 taps
            pltpu.VMEM((9 * oc1 * batch, h2 * w2), jnp.float32),       # conv2 taps
        ],
        compiler_params=pltpu.CompilerParams(
            dimension_semantics=("arbitrary",)),
    )(*args)


def _reference_forward(x, params):
    """Pure-JAX reference for a sanity check."""
    w1, b1, w2, b2, wf, bf = params

    def conv(x, w, b):
        y = jax.lax.conv_general_dilated(
            x, w, window_strides=(1, 1), padding=((1, 1), (1, 1)),
            dimension_numbers=("NCHW", "OIHW", "NCHW"))
        return jax.nn.relu(y + b[None, :, None, None])

    def pool(x):
        return jax.lax.reduce_window(
            x, -jnp.inf, jax.lax.max, (1, 1, 2, 2), (1, 1, 2, 2), "VALID")

    x = pool(conv(x, w1, b1))
    x = pool(conv(x, w2, b2))
    x = x.reshape(x.shape[0], -1)
    return x @ wf.T + bf


if __name__ == "__main__":
    num_classes = 10
    B = 2
    key = jax.random.PRNGKey(0)
    kx, k1, k2, k3, k4, k5, k6 = jax.random.split(key, 7)

    # Input: MNIST-like [B, 1, 28, 28] (required for fc1's 16*7*7 input dim).
    x = jax.random.normal(kx, (B, 1, 28, 28), dtype=jnp.float32)

    # Deterministic parameter init (conv: OIHW, fc: [out, in] like torch).
    w1 = jax.random.normal(k1, (8, 1, 3, 3), dtype=jnp.float32) * 0.1
    b1 = jax.random.normal(k2, (8,), dtype=jnp.float32) * 0.1
    w2 = jax.random.normal(k3, (16, 8, 3, 3), dtype=jnp.float32) * 0.1
    b2 = jax.random.normal(k4, (16,), dtype=jnp.float32) * 0.1
    wf = jax.random.normal(k5, (num_classes, 16 * 7 * 7), dtype=jnp.float32) * 0.05
    bf = jax.random.normal(k6, (num_classes,), dtype=jnp.float32) * 0.05
    params = (w1, b1, w2, b2, wf, bf)

    # Pack once at init (outside the jitted forward).
    packed = jax.block_until_ready(pack_params(params, B, 28, 28))

    fwd = jax.jit(cnn_forward)
    out = jax.block_until_ready(fwd(x, packed))
    assert out.shape == (B, num_classes), out.shape

    ref = jax.block_until_ready(_reference_forward(x, params))
    max_err = float(jnp.max(jnp.abs(out - ref)))
    assert jnp.allclose(out, ref, rtol=2e-3, atol=2e-3), (
        "mismatch vs reference: max abs diff = %s" % max_err)

    print("KERNEL_OK")
</pallas_src>

<mosaic_0001>
module attributes {stable_mosaic.version = 11 : i64} {
  func.func @_cnn_fused_kernel(%arg0: i32, %arg1: memref<2x784xf32, #tpu.memory_space<vmem>>, %arg2: memref<144x2xf32, #tpu.memory_space<vmem>>, %arg3: memref<16x1xf32, #tpu.memory_space<vmem>>, %arg4: memref<9x784xf32, #tpu.memory_space<vmem>>, %arg5: memref<32x144xf32, #tpu.memory_space<vmem>>, %arg6: memref<32x1xf32, #tpu.memory_space<vmem>>, %arg7: memref<9x196xf32, #tpu.memory_space<vmem>>, %arg8: memref<49x160xf32, #tpu.memory_space<vmem>>, %arg9: memref<1x10xf32, #tpu.memory_space<vmem>>, %arg10: memref<2x10xf32, #tpu.memory_space<vmem>>, %arg11: memref<784x196xf32, #tpu.memory_space<vmem>>, %arg12: memref<196x49xf32, #tpu.memory_space<vmem>>, %arg13: memref<18x784xf32, #tpu.memory_space<vmem>>, %arg14: memref<144x196xf32, #tpu.memory_space<vmem>>) attributes {dimension_semantics = [#tpu.dimension_semantics<arbitrary>], iteration_bounds = array<i64: 1>, scalar_prefetch = 0 : i64, scratch_operands = 4 : i64, tpu.core_type = #tpu.core_type<tc>, window_params = [{pipeline_mode = #tpu.pipeline_mode<synchronous>, transform_indices = @transform_0, window_bounds = array<i64: 2, 784>}, {pipeline_mode = #tpu.pipeline_mode<synchronous>, transform_indices = @transform_1, window_bounds = array<i64: 144, 2>}, {pipeline_mode = #tpu.pipeline_mode<synchronous>, transform_indices = @transform_2, window_bounds = array<i64: 16, 1>}, {pipeline_mode = #tpu.pipeline_mode<synchronous>, transform_indices = @transform_3, window_bounds = array<i64: 9, 784>}, {pipeline_mode = #tpu.pipeline_mode<synchronous>, transform_indices = @transform_4, window_bounds = array<i64: 32, 144>}, {pipeline_mode = #tpu.pipeline_mode<synchronous>, transform_indices = @transform_5, window_bounds = array<i64: 32, 1>}, {pipeline_mode = #tpu.pipeline_mode<synchronous>, transform_indices = @transform_6, window_bounds = array<i64: 9, 196>}, {pipeline_mode = #tpu.pipeline_mode<synchronous>, transform_indices = @transform_7, window_bounds = array<i64: 49, 160>}, {pipeline_mode = #tpu.pipeline_mode<synchronous>, transform_indices = @transform_8, window_bounds = array<i64: 1, 10>}, {pipeline_mode = #tpu.pipeline_mode<synchronous>, transform_indices = @transform_9, window_bounds = array<i64: 2, 10>}]} {
    %c0 = arith.constant 0 : index
    %c0_0 = arith.constant 0 : index
    %0 = vector.load %arg1[%c0, %c0_0] : memref<2x784xf32, #tpu.memory_space<vmem>>, vector<2x784xf32>
    %cst = arith.constant 0.000000e+00 : f32
    %1 = vector.broadcast %cst : f32 to vector<2x29xf32>
    %2 = vector.extract_strided_slice %0 {offsets = [0, 0], sizes = [2, 755], strides = [1, 1]} : vector<2x784xf32> to vector<2x755xf32>
    %3 = tpu.concatenate %1, %2 in 1 : vector<2x29xf32>, vector<2x755xf32> -> vector<2x784xf32>
    %c0_1 = arith.constant 0 : index
    %c0_2 = arith.constant 0 : index
    %4 = vector.load %arg4[%c0_1, %c0_2] : memref<9x784xf32, #tpu.memory_space<vmem>>, vector<1x784xf32>
    %5 = vector.broadcast %4 : vector<1x784xf32> to vector<2x784xf32>
    %6 = arith.mulf %3, %5 : vector<2x784xf32>
    %c0_3 = arith.constant 0 : index
    %c0_4 = arith.constant 0 : index
    %7 = vector.load %arg2[%c0_3, %c0_4] : memref<144x2xf32, #tpu.memory_space<vmem>>, vector<16x2xf32>
    %cst_5 = arith.constant dense<0.000000e+00> : vector<16x784xf32>
    %8 = tpu.matmul %7, %6, %cst_5 {dimension_numbers = #tpu.dot_dimension_numbers<[1], [0], [0], [1], [0, 0, 1, 1], [], []>} : vector<16x2xf32>, vector<2x784xf32>, vector<16x784xf32> -> vector<16x784xf32>
    %cst_6 = arith.constant 0.000000e+00 : f32
    %9 = vector.broadcast %cst_6 : f32 to vector<2x28xf32>
    %10 = vector.extract_strided_slice %0 {offsets = [0, 0], sizes = [2, 756], strides = [1, 1]} : vector<2x784xf32> to vector<2x756xf32>
    %11 = tpu.concatenate %9, %10 in 1 : vector<2x28xf32>, vector<2x756xf32> -> vector<2x784xf32>
    %c16 = arith.constant 16 : index
    %c0_7 = arith.constant 0 : index
    %12 = vector.load %arg2[%c16, %c0_7] : memref<144x2xf32, #tpu.memory_space<vmem>>, vector<16x2xf32>
    %cst_8 = arith.constant dense<0.000000e+00> : vector<16x784xf32>
    %13 = tpu.matmul %12, %11, %cst_8 {dimension_numbers = #tpu.dot_dimension_numbers<[1], [0], [0], [1], [0, 0, 1, 1], [], []>} : vector<16x2xf32>, vector<2x784xf32>, vector<16x784xf32> -> vector<16x784xf32>
    %14 = arith.addf %8, %13 : vector<16x784xf32>
    %cst_9 = arith.constant 0.000000e+00 : f32
    %15 = vector.broadcast %cst_9 : f32 to vector<2x27xf32>
    %16 = vector.extract_strided_slice %0 {offsets = [0, 0], sizes = [2, 757], strides = [1, 1]} : vector<2x784xf32> to vector<2x757xf32>
    %17 = tpu.concatenate %15, %16 in 1 : vector<2x27xf32>, vector<2x757xf32> -> vector<2x784xf32>
    %c2 = arith.constant 2 : index
    %c0_10 = arith.constant 0 : index
    %18 = vector.load %arg4[%c2, %c0_10] : memref<9x784xf32, #tpu.memory_space<vmem>>, vector<1x784xf32>
    %19 = vector.broadcast %18 : vector<1x784xf32> to vector<2x784xf32>
    %20 = arith.mulf %17, %19 : vector<2x784xf32>
    %c32 = arith.constant 32 : index
    %c0_11 = arith.constant 0 : index
    %21 = vector.load %arg2[%c32, %c0_11] : memref<144x2xf32, #tpu.memory_space<vmem>>, vector<16x2xf32>
    %cst_12 = arith.constant dense<0.000000e+00> : vector<16x784xf32>
    %22 = tpu.matmul %21, %20, %cst_12 {dimension_numbers = #tpu.dot_dimension_numbers<[1], [0], [0], [1], [0, 0, 1, 1], [], []>} : vector<16x2xf32>, vector<2x784xf32>, vector<16x784xf32> -> vector<16x784xf32>
    %23 = arith.addf %14, %22 : vector<16x784xf32>
    %cst_13 = arith.constant 0.000000e+00 : f32
    %24 = vector.broadcast %cst_13 : f32 to vector<2x1xf32>
    %25 = vector.extract_strided_slice %0 {offsets = [0, 0], sizes = [2, 783], strides = [1, 1]} : vector<2x784xf32> to vector<2x783xf32>
    %26 = tpu.concatenate %24, %25 in 1 : vector<2x1xf32>, vector<2x783xf32> -> vector<2x784xf32>
    %c3 = arith.constant 3 : index
    %c0_14 = arith.constant 0 : index
    %27 = vector.load %arg4[%c3, %c0_14] : memref<9x784xf32, #tpu.memory_space<vmem>>, vector<1x784xf32>
    %28 = vector.broadcast %27 : vector<1x784xf32> to vector<2x784xf32>
    %29 = arith.mulf %26, %28 : vector<2x784xf32>
    %c48 = arith.constant 48 : index
    %c0_15 = arith.constant 0 : index
    %30 = vector.load %arg2[%c48, %c0_15] : memref<144x2xf32, #tpu.memory_space<vmem>>, vector<16x2xf32>
    %cst_16 = arith.constant dense<0.000000e+00> : vector<16x784xf32>
    %31 = tpu.matmul %30, %29, %cst_16 {dimension_numbers = #tpu.dot_dimension_numbers<[1], [0], [0], [1], [0, 0, 1, 1], [], []>} : vector<16x2xf32>, vector<2x784xf32>, vector<16x784xf32> -> vector<16x784xf32>
    %32 = arith.addf %23, %31 : vector<16x784xf32>
    %c64 = arith.constant 64 : index
    %c0_17 = arith.constant 0 : index
    %33 = vector.load %arg2[%c64, %c0_17] : memref<144x2xf32, #tpu.memory_space<vmem>>, vector<16x2xf32>
    %cst_18 = arith.constant dense<0.000000e+00> : vector<16x784xf32>
    %34 = tpu.matmul %33, %0, %cst_18 {dimension_numbers = #tpu.dot_dimension_numbers<[1], [0], [0], [1], [0, 0, 1, 1], [], []>} : vector<16x2xf32>, vector<2x784xf32>, vector<16x784xf32> -> vector<16x784xf32>
    %35 = arith.addf %32, %34 : vector<16x784xf32>
    %cst_19 = arith.constant 0.000000e+00 : f32
    %36 = vector.broadcast %cst_19 : f32 to vector<2x1xf32>
    %37 = vector.extract_strided_slice %0 {offsets = [0, 1], sizes = [2, 783], strides = [1, 1]} : vector<2x784xf32> to vector<2x783xf32>
    %38 = tpu.concatenate %37, %36 in 1 : vector<2x783xf32>, vector<2x1xf32> -> vector<2x784xf32>
    %c5 = arith.constant 5 : index
    %c0_20 = arith.constant 0 : index
    %39 = vector.load %arg4[%c5, %c0_20] : memref<9x784xf32, #tpu.memory_space<vmem>>, vector<1x784xf32>
    %40 = vector.broadcast %39 : vector<1x784xf32> to vector<2x784xf32>
    %41 = arith.mulf %38, %40 : vector<2x784xf32>
    %c80 = arith.constant 80 : index
    %c0_21 = arith.constant 0 : index
    %42 = vector.load %arg2[%c80, %c0_21] : memref<144x2xf32, #tpu.memory_space<vmem>>, vector<16x2xf32>
    %cst_22 = arith.constant dense<0.000000e+00> : vector<16x784xf32>
    %43 = tpu.matmul %42, %41, %cst_22 {dimension_numbers = #tpu.dot_dimension_numbers<[1], [0], [0], [1], [0, 0, 1, 1], [], []>} : vector<16x2xf32>, vector<2x784xf32>, vector<16x784xf32> -> vector<16x784xf32>
    %44 = arith.addf %35, %43 : vector<16x784xf32>
    %cst_23 = arith.constant 0.000000e+00 : f32
    %45 = vector.broadcast %cst_23 : f32 to vector<2x27xf32>
    %46 = vector.extract_strided_slice %0 {offsets = [0, 27], sizes = [2, 757], strides = [1, 1]} : vector<2x784xf32> to vector<2x757xf32>
    %47 = tpu.concatenate %46, %45 in 1 : vector<2x757xf32>, vector<2x27xf32> -> vector<2x784xf32>
    %c6 = arith.constant 6 : index
    %c0_24 = arith.constant 0 : index
    %48 = vector.load %arg4[%c6, %c0_24] : memref<9x784xf32, #tpu.memory_space<vmem>>, vector<1x784xf32>
    %49 = vector.broadcast %48 : vector<1x784xf32> to vector<2x784xf32>
    %50 = arith.mulf %47, %49 : vector<2x784xf32>
    %c96 = arith.constant 96 : index
    %c0_25 = arith.constant 0 : index
    %51 = vector.load %arg2[%c96, %c0_25] : memref<144x2xf32, #tpu.memory_space<vmem>>, vector<16x2xf32>
    %cst_26 = arith.constant dense<0.000000e+00> : vector<16x784xf32>
    %52 = tpu.matmul %51, %50, %cst_26 {dimension_numbers = #tpu.dot_dimension_numbers<[1], [0], [0], [1], [0, 0, 1, 1], [], []>} : vector<16x2xf32>, vector<2x784xf32>, vector<16x784xf32> -> vector<16x784xf32>
    %53 = arith.addf %44, %52 : vector<16x784xf32>
    %cst_27 = arith.constant 0.000000e+00 : f32
    %54 = vector.broadcast %cst_27 : f32 to vector<2x28xf32>
    %55 = vector.extract_strided_slice %0 {offsets = [0, 28], sizes = [2, 756], strides = [1, 1]} : vector<2x784xf32> to vector<2x756xf32>
    %56 = tpu.concatenate %55, %54 in 1 : vector<2x756xf32>, vector<2x28xf32> -> vector<2x784xf32>
    %c112 = arith.constant 112 : index
    %c0_28 = arith.constant 0 : index
    %57 = vector.load %arg2[%c112, %c0_28] : memref<144x2xf32, #tpu.memory_space<vmem>>, vector<16x2xf32>
    %cst_29 = arith.constant dense<0.000000e+00> : vector<16x784xf32>
    %58 = tpu.matmul %57, %56, %cst_29 {dimension_numbers = #tpu.dot_dimension_numbers<[1], [0], [0], [1], [0, 0, 1, 1], [], []>} : vector<16x2xf32>, vector<2x784xf32>, vector<16x784xf32> -> vector<16x784xf32>
    %59 = arith.addf %53, %58 : vector<16x784xf32>
    %cst_30 = arith.constant 0.000000e+00 : f32
    %60 = vector.broadcast %cst_30 : f32 to vector<2x29xf32>
    %61 = vector.extract_strided_slice %0 {offsets = [0, 29], sizes = [2, 755], strides = [1, 1]} : vector<2x784xf32> to vector<2x755xf32>
    %62 = tpu.concatenate %61, %60 in 1 : vector<2x755xf32>, vector<2x29xf32> -> vector<2x784xf32>
    %c8 = arith.constant 8 : index
    %c0_31 = arith.constant 0 : index
    %63 = vector.load %arg4[%c8, %c0_31] : memref<9x784xf32, #tpu.memory_space<vmem>>, vector<1x784xf32>
    %64 = vector.broadcast %63 : vector<1x784xf32> to vector<2x784xf32>
    %65 = arith.mulf %62, %64 : vector<2x784xf32>
    %c128 = arith.constant 128 : index
    %c0_32 = arith.constant 0 : index
    %66 = vector.load %arg2[%c128, %c0_32] : memref<144x2xf32, #tpu.memory_space<vmem>>, vector<16x2xf32>
    %cst_33 = arith.constant dense<0.000000e+00> : vector<16x784xf32>
    %67 = tpu.matmul %66, %65, %cst_33 {dimension_numbers = #tpu.dot_dimension_numbers<[1], [0], [0], [1], [0, 0, 1, 1], [], []>} : vector<16x2xf32>, vector<2x784xf32>, vector<16x784xf32> -> vector<16x784xf32>
    %68 = arith.addf %59, %67 : vector<16x784xf32>
    %c0_34 = arith.constant 0 : index
    %c0_35 = arith.constant 0 : index
    %69 = vector.load %arg3[%c0_34, %c0_35] : memref<16x1xf32, #tpu.memory_space<vmem>>, vector<16x1xf32>
    %70 = vector.broadcast %69 : vector<16x1xf32> to vector<16x784xf32>
    %71 = arith.addf %68, %70 : vector<16x784xf32>
    %cst_36 = arith.constant 0.000000e+00 : f32
    %72 = vector.broadcast %cst_36 : f32 to vector<16x784xf32>
    %73 = arith.maximumf %71, %72 : vector<16x784xf32>
    %74 = tpu.iota {dimensions = array<i32: 0>} : vector<784x196xi32>
    %75 = arith.sitofp %74 : vector<784x196xi32> to vector<784x196xf32>
    %76 = tpu.iota {dimensions = array<i32: 1>} : vector<784x196xi32>
    %77 = arith.sitofp %76 : vector<784x196xi32> to vector<784x196xf32>
    %cst_37 = arith.constant 5.000000e-01 : f32
    %78 = vector.broadcast %cst_37 : f32 to vector<784x196xf32>
    %79 = arith.addf %77, %78 : vector<784x196xf32>
    %cst_38 = arith.constant 0.0714285746 : f32
    %80 = vector.broadcast %cst_38 : f32 to vector<784x196xf32>
    %81 = arith.mulf %79, %80 : vector<784x196xf32>
    %82 = math.floor %81 : vector<784x196xf32>
    %cst_39 = arith.constant 1.400000e+01 : f32
    %83 = vector.broadcast %cst_39 : f32 to vector<784x196xf32>
    %84 = arith.mulf %82, %83 : vector<784x196xf32>
    %85 = arith.subf %77, %84 : vector<784x196xf32>
    %cst_40 = arith.constant 5.600000e+01 : f32
    %86 = vector.broadcast %cst_40 : f32 to vector<784x196xf32>
    %87 = arith.mulf %86, %82 : vector<784x196xf32>
    %cst_41 = arith.constant 2.000000e+00 : f32
    %88 = vector.broadcast %cst_41 : f32 to vector<784x196xf32>
    %89 = arith.mulf %88, %85 : vector<784x196xf32>
    %90 = arith.addf %87, %89 : vector<784x196xf32>
    %91 = arith.cmpf oeq, %75, %90 : vector<784x196xf32>
    %92 = arith.extui %91 : vector<784x196xi1> to vector<784x196xi32>
    %93 = arith.sitofp %92 : vector<784x196xi32> to vector<784x196xf32>
    %c0_42 = arith.constant 0 : index
    %c0_43 = arith.constant 0 : index
    %94 = vector.load %arg11[%c0_42, %c0_43] : memref<784x196xf32, #tpu.memory_space<vmem>>, vector<784x196xf32>
    tpu.vector_store %arg11[%c0_42, %c0_43], %93 {strides = array<i32>} : memref<784x196xf32, #tpu.memory_space<vmem>>, vector<784x196xf32>,
    %cst_44 = arith.constant 0.000000e+00 : f32
    %95 = vector.broadcast %cst_44 : f32 to vector<16x1xf32>
    %96 = vector.extract_strided_slice %73 {offsets = [0, 1], sizes = [16, 783], strides = [1, 1]} : vector<16x784xf32> to vector<16x783xf32>
    %97 = tpu.concatenate %96, %95 in 1 : vector<16x783xf32>, vector<16x1xf32> -> vector<16x784xf32>
    %98 = arith.maximumf %73, %97 : vector<16x784xf32>
    %cst_45 = arith.constant 0.000000e+00 : f32
    %99 = vector.broadcast %cst_45 : f32 to vector<16x28xf32>
    %100 = vector.extract_strided_slice %73 {offsets = [0, 28], sizes = [16, 756], strides = [1, 1]} : vector<16x784xf32> to vector<16x756xf32>
    %101 = tpu.concatenate %100, %99 in 1 : vector<16x756xf32>, vector<16x28xf32> -> vector<16x784xf32>
    %102 = arith.maximumf %98, %101 : vector<16x784xf32>
    %cst_46 = arith.constant 0.000000e+00 : f32
    %103 = vector.broadcast %cst_46 : f32 to vector<16x29xf32>
    %104 = vector.extract_strided_slice %73 {offsets = [0, 29], sizes = [16, 755], strides = [1, 1]} : vector<16x784xf32> to vector<16x755xf32>
    %105 = tpu.concatenate %104, %103 in 1 : vector<16x755xf32>, vector<16x29xf32> -> vector<16x784xf32>
    %106 = arith.maximumf %102, %105 : vector<16x784xf32>
    %c0_47 = arith.constant 0 : index
    %c0_48 = arith.constant 0 : index
    %107 = vector.load %arg11[%c0_47, %c0_48] : memref<784x196xf32, #tpu.memory_space<vmem>>, vector<784x196xf32>
    %cst_49 = arith.constant dense<0.000000e+00> : vector<16x196xf32>
    %108 = tpu.matmul %106, %107, %cst_49 {dimension_numbers = #tpu.dot_dimension_numbers<[1], [0], [0], [1], [0, 0, 1, 1], [], []>} : vector<16x784xf32>, vector<784x196xf32>, vector<16x196xf32> -> vector<16x196xf32>
    %cst_50 = arith.constant 0.000000e+00 : f32
    %109 = vector.broadcast %cst_50 : f32 to vector<16x15xf32>
    %110 = vector.extract_strided_slice %108 {offsets = [0, 0], sizes = [16, 181], strides = [1, 1]} : vector<16x196xf32> to vector<16x181xf32>
    %111 = tpu.concatenate %109, %110 in 1 : vector<16x15xf32>, vector<16x181xf32> -> vector<16x196xf32>
    %c0_51 = arith.constant 0 : index
    %c0_52 = arith.constant 0 : index
    %112 = vector.load %arg7[%c0_51, %c0_52] : memref<9x196xf32, #tpu.memory_space<vmem>>, vector<1x196xf32>
    %113 = vector.broadcast %112 : vector<1x196xf32> to vector<16x196xf32>
    %114 = arith.mulf %111, %113 : vector<16x196xf32>
    %c0_53 = arith.constant 0 : index
    %c0_54 = arith.constant 0 : index
    %115 = vector.load %arg14[%c0_53, %c0_54] : memref<144x196xf32, #tpu.memory_space<vmem>>, vector<16x196xf32>
    tpu.vector_store %arg14[%c0_53, %c0_54], %114 {strides = array<i32>} : memref<144x196xf32, #tpu.memory_space<vmem>>, vector<16x196xf32>,
    %cst_55 = arith.constant 0.000000e+00 : f32
    %116 = vector.broadcast %cst_55 : f32 to vector<16x14xf32>
    %117 = vector.extract_strided_slice %108 {offsets = [0, 0], sizes = [16, 182], strides = [1, 1]} : vector<16x196xf32> to vector<16x182xf32>
    %118 = tpu.concatenate %116, %117 in 1 : vector<16x14xf32>, vector<16x182xf32> -> vector<16x196xf32>
    %c16_56 = arith.constant 16 : index
    %c0_57 = arith.constant 0 : index
    %119 = vector.load %arg14[%c16_56, %c0_57] : memref<144x196xf32, #tpu.memory_space<vmem>>, vector<16x196xf32>
    tpu.vector_store %arg14[%c16_56, %c0_57], %118 {strides = array<i32>} : memref<144x196xf32, #tpu.memory_space<vmem>>, vector<16x196xf32>,
    %cst_58 = arith.constant 0.000000e+00 : f32
    %120 = vector.broadcast %cst_58 : f32 to vector<16x13xf32>
    %121 = vector.extract_strided_slice %108 {offsets = [0, 0], sizes = [16, 183], strides = [1, 1]} : vector<16x196xf32> to vector<16x183xf32>
    %122 = tpu.concatenate %120, %121 in 1 : vector<16x13xf32>, vector<16x183xf32> -> vector<16x196xf32>
    %c2_59 = arith.constant 2 : index
    %c0_60 = arith.constant 0 : index
    %123 = vector.load %arg7[%c2_59, %c0_60] : memref<9x196xf32, #tpu.memory_space<vmem>>, vector<1x196xf32>
    %124 = vector.broadcast %123 : vector<1x196xf32> to vector<16x196xf32>
    %125 = arith.mulf %122, %124 : vector<16x196xf32>
    %c32_61 = arith.constant 32 : index
    %c0_62 = arith.constant 0 : index
    %126 = vector.load %arg14[%c32_61, %c0_62] : memref<144x196xf32, #tpu.memory_space<vmem>>, vector<16x196xf32>
    tpu.vector_store %arg14[%c32_61, %c0_62], %125 {strides = array<i32>} : memref<144x196xf32, #tpu.memory_space<vmem>>, vector<16x196xf32>,
    %cst_63 = arith.constant 0.000000e+00 : f32
    %127 = vector.broadcast %cst_63 : f32 to vector<16x1xf32>
    %128 = vector.extract_strided_slice %108 {offsets = [0, 0], sizes = [16, 195], strides = [1, 1]} : vector<16x196xf32> to vector<16x195xf32>
    %129 = tpu.concatenate %127, %128 in 1 : vector<16x1xf32>, vector<16x195xf32> -> vector<16x196xf32>
    %c3_64 = arith.constant 3 : index
    %c0_65 = arith.constant 0 : index
    %130 = vector.load %arg7[%c3_64, %c0_65] : memref<9x196xf32, #tpu.memory_space<vmem>>, vector<1x196xf32>
    %131 = vector.broadcast %130 : vector<1x196xf32> to vector<16x196xf32>
    %132 = arith.mulf %129, %131 : vector<16x196xf32>
    %c48_66 = arith.constant 48 : index
    %c0_67 = arith.constant 0 : index
    %133 = vector.load %arg14[%c48_66, %c0_67] : memref<144x196xf32, #tpu.memory_space<vmem>>, vector<16x196xf32>
    tpu.vector_store %arg14[%c48_66, %c0_67], %132 {strides = array<i32>} : memref<144x196xf32, #tpu.memory_space<vmem>>, vector<16x196xf32>,
    %c64_68 = arith.constant 64 : index
    %c0_69 = arith.constant 0 : index
    %134 = vector.load %arg14[%c64_68, %c0_69] : memref<144x196xf32, #tpu.memory_space<vmem>>, vector<16x196xf32>
    tpu.vector_store %arg14[%c64_68, %c0_69], %108 {strides = array<i32>} : memref<144x196xf32, #tpu.memory_space<vmem>>, vector<16x196xf32>,
    %cst_70 = arith.constant 0.000000e+00 : f32
    %135 = vector.broadcast %cst_70 : f32 to vector<16x1xf32>
    %136 = vector.extract_strided_slice %108 {offsets = [0, 1], sizes = [16, 195], strides = [1, 1]} : vector<16x196xf32> to vector<16x195xf32>
    %137 = tpu.concatenate %136, %135 in 1 : vector<16x195xf32>, vector<16x1xf32> -> vector<16x196xf32>
    %c5_71 = arith.constant 5 : index
    %c0_72 = arith.constant 0 : index
    %138 = vector.load %arg7[%c5_71, %c0_72] : memref<9x196xf32, #tpu.memory_space<vmem>>, vector<1x196xf32>
    %139 = vector.broadcast %138 : vector<1x196xf32> to vector<16x196xf32>
    %140 = arith.mulf %137, %139 : vector<16x196xf32>
    %c80_73 = arith.constant 80 : index
    %c0_74 = arith.constant 0 : index
    %141 = vector.load %arg14[%c80_73, %c0_74] : memref<144x196xf32, #tpu.memory_space<vmem>>, vector<16x196xf32>
    tpu.vector_store %arg14[%c80_73, %c0_74], %140 {strides = array<i32>} : memref<144x196xf32, #tpu.memory_space<vmem>>, vector<16x196xf32>,
    %cst_75 = arith.constant 0.000000e+00 : f32
    %142 = vector.broadcast %cst_75 : f32 to vector<16x13xf32>
    %143 = vector.extract_strided_slice %108 {offsets = [0, 13], sizes = [16, 183], strides = [1, 1]} : vector<16x196xf32> to vector<16x183xf32>
    %144 = tpu.concatenate %143, %142 in 1 : vector<16x183xf32>, vector<16x13xf32> -> vector<16x196xf32>
    %c6_76 = arith.constant 6 : index
    %c0_77 = arith.constant 0 : index
    %145 = vector.load %arg7[%c6_76, %c0_77] : memref<9x196xf32, #tpu.memory_space<vmem>>, vector<1x196xf32>
    %146 = vector.broadcast %145 : vector<1x196xf32> to vector<16x196xf32>
    %147 = arith.mulf %144, %146 : vector<16x196xf32>
    %c96_78 = arith.constant 96 : index
    %c0_79 = arith.constant 0 : index
    %148 = vector.load %arg14[%c96_78, %c0_79] : memref<144x196xf32, #tpu.memory_space<vmem>>, vector<16x196xf32>
    tpu.vector_store %arg14[%c96_78, %c0_79], %147 {strides = array<i32>} : memref<144x196xf32, #tpu.memory_space<vmem>>, vector<16x196xf32>,
    %cst_80 = arith.constant 0.000000e+00 : f32
    %149 = vector.broadcast %cst_80 : f32 to vector<16x14xf32>
    %150 = vector.extract_strided_slice %108 {offsets = [0, 14], sizes = [16, 182], strides = [1, 1]} : vector<16x196xf32> to vector<16x182xf32>
    %151 = tpu.concatenate %150, %149 in 1 : vector<16x182xf32>, vector<16x14xf32> -> vector<16x196xf32>
    %c112_81 = arith.constant 112 : index
    %c0_82 = arith.constant 0 : index
    %152 = vector.load %arg14[%c112_81, %c0_82] : memref<144x196xf32, #tpu.memory_space<vmem>>, vector<16x196xf32>
    tpu.vector_store %arg14[%c112_81, %c0_82], %151 {strides = array<i32>} : memref<144x196xf32, #tpu.memory_space<vmem>>, vector<16x196xf32>,
    %cst_83 = arith.constant 0.000000e+00 : f32
    %153 = vector.broadcast %cst_83 : f32 to vector<16x15xf32>
    %154 = vector.extract_strided_slice %108 {offsets = [0, 15], sizes = [16, 181], strides = [1, 1]} : vector<16x196xf32> to vector<16x181xf32>
    %155 = tpu.concatenate %154, %153 in 1 : vector<16x181xf32>, vector<16x15xf32> -> vector<16x196xf32>
    %c8_84 = arith.constant 8 : index
    %c0_85 = arith.constant 0 : index
    %156 = vector.load %arg7[%c8_84, %c0_85] : memref<9x196xf32, #tpu.memory_space<vmem>>, vector<1x196xf32>
    %157 = vector.broadcast %156 : vector<1x196xf32> to vector<16x196xf32>
    %158 = arith.mulf %155, %157 : vector<16x196xf32>
    %c128_86 = arith.constant 128 : index
    %c0_87 = arith.constant 0 : index
    %159 = vector.load %arg14[%c128_86, %c0_87] : memref<144x196xf32, #tpu.memory_space<vmem>>, vector<16x196xf32>
    tpu.vector_store %arg14[%c128_86, %c0_87], %158 {strides = array<i32>} : memref<144x196xf32, #tpu.memory_space<vmem>>, vector<16x196xf32>,
    %c0_88 = arith.constant 0 : index
    %c0_89 = arith.constant 0 : index
    %160 = vector.load %arg5[%c0_88, %c0_89] : memref<32x144xf32, #tpu.memory_space<vmem>>, vector<32x144xf32>
    %c0_90 = arith.constant 0 : index
    %c0_91 = arith.constant 0 : index
    %161 = vector.load %arg14[%c0_90, %c0_91] : memref<144x196xf32, #tpu.memory_space<vmem>>, vector<144x196xf32>
    %cst_92 = arith.constant dense<0.000000e+00> : vector<32x196xf32>
    %162 = tpu.matmul %160, %161, %cst_92 {dimension_numbers = #tpu.dot_dimension_numbers<[1], [0], [0], [1], [0, 0, 1, 1], [], []>} : vector<32x144xf32>, vector<144x196xf32>, vector<32x196xf32> -> vector<32x196xf32>
    %c0_93 = arith.constant 0 : index
    %c0_94 = arith.constant 0 : index
    %163 = vector.load %arg6[%c0_93, %c0_94] : memref<32x1xf32, #tpu.memory_space<vmem>>, vector<32x1xf32>
    %164 = vector.broadcast %163 : vector<32x1xf32> to vector<32x196xf32>
    %165 = arith.addf %162, %164 : vector<32x196xf32>
    %cst_95 = arith.constant 0.000000e+00 : f32
    %166 = vector.broadcast %cst_95 : f32 to vector<32x196xf32>
    %167 = arith.maximumf %165, %166 : vector<32x196xf32>
    %168 = tpu.iota {dimensions = array<i32: 0>} : vector<196x49xi32>
    %169 = arith.sitofp %168 : vector<196x49xi32> to vector<196x49xf32>
    %170 = tpu.iota {dimensions = array<i32: 1>} : vector<196x49xi32>
    %171 = arith.sitofp %170 : vector<196x49xi32> to vector<196x49xf32>
    %cst_96 = arith.constant 5.000000e-01 : f32
    %172 = vector.broadcast %cst_96 : f32 to vector<196x49xf32>
    %173 = arith.addf %171, %172 : vector<196x49xf32>
    %cst_97 = arith.constant 0.142857149 : f32
    %174 = vector.broadcast %cst_97 : f32 to vector<196x49xf32>
    %175 = arith.mulf %173, %174 : vector<196x49xf32>
    %176 = math.floor %175 : vector<196x49xf32>
    %cst_98 = arith.constant 7.000000e+00 : f32
    %177 = vector.broadcast %cst_98 : f32 to vector<196x49xf32>
    %178 = arith.mulf %176, %177 : vector<196x49xf32>
    %179 = arith.subf %171, %178 : vector<196x49xf32>
    %cst_99 = arith.constant 2.800000e+01 : f32
    %180 = vector.broadcast %cst_99 : f32 to vector<196x49xf32>
    %181 = arith.mulf %180, %176 : vector<196x49xf32>
    %cst_100 = arith.constant 2.000000e+00 : f32
    %182 = vector.broadcast %cst_100 : f32 to vector<196x49xf32>
    %183 = arith.mulf %182, %179 : vector<196x49xf32>
    %184 = arith.addf %181, %183 : vector<196x49xf32>
    %185 = arith.cmpf oeq, %169, %184 : vector<196x49xf32>
    %186 = arith.extui %185 : vector<196x49xi1> to vector<196x49xi32>
    %187 = arith.sitofp %186 : vector<196x49xi32> to vector<196x49xf32>
    %c0_101 = arith.constant 0 : index
    %c0_102 = arith.constant 0 : index
    %188 = vector.load %arg12[%c0_101, %c0_102] : memref<196x49xf32, #tpu.memory_space<vmem>>, vector<196x49xf32>
    tpu.vector_store %arg12[%c0_101, %c0_102], %187 {strides = array<i32>} : memref<196x49xf32, #tpu.memory_space<vmem>>, vector<196x49xf32>,
    %cst_103 = arith.constant 0.000000e+00 : f32
    %189 = vector.broadcast %cst_103 : f32 to vector<32x1xf32>
    %190 = vector.extract_strided_slice %167 {offsets = [0, 1], sizes = [32, 195], strides = [1, 1]} : vector<32x196xf32> to vector<32x195xf32>
    %191 = tpu.concatenate %190, %189 in 1 : vector<32x195xf32>, vector<32x1xf32> -> vector<32x196xf32>
    %192 = arith.maximumf %167, %191 : vector<32x196xf32>
    %cst_104 = arith.constant 0.000000e+00 : f32
    %193 = vector.broadcast %cst_104 : f32 to vector<32x14xf32>
    %194 = vector.extract_strided_slice %167 {offsets = [0, 14], sizes = [32, 182], strides = [1, 1]} : vector<32x196xf32> to vector<32x182xf32>
    %195 = tpu.concatenate %194, %193 in 1 : vector<32x182xf32>, vector<32x14xf32> -> vector<32x196xf32>
    %196 = arith.maximumf %192, %195 : vector<32x196xf32>
    %cst_105 = arith.constant 0.000000e+00 : f32
    %197 = vector.broadcast %cst_105 : f32 to vector<32x15xf32>
    %198 = vector.extract_strided_slice %167 {offsets = [0, 15], sizes = [32, 181], strides = [1, 1]} : vector<32x196xf32> to vector<32x181xf32>
    %199 = tpu.concatenate %198, %197 in 1 : vector<32x181xf32>, vector<32x15xf32> -> vector<32x196xf32>
    %200 = arith.maximumf %196, %199 : vector<32x196xf32>
    %c0_106 = arith.constant 0 : index
    %c0_107 = arith.constant 0 : index
    %201 = vector.load %arg12[%c0_106, %c0_107] : memref<196x49xf32, #tpu.memory_space<vmem>>, vector<196x49xf32>
    %cst_108 = arith.constant dense<0.000000e+00> : vector<32x49xf32>
    %202 = tpu.matmul %200, %201, %cst_108 {dimension_numbers = #tpu.dot_dimension_numbers<[1], [0], [0], [1], [0, 0, 1, 1], [], []>} : vector<32x196xf32>, vector<196x49xf32>, vector<32x49xf32> -> vector<32x49xf32>
    %c0_109 = arith.constant 0 : index
    %c0_110 = arith.constant 0 : index
    %203 = vector.load %arg8[%c0_109, %c0_110] : memref<49x160xf32, #tpu.memory_space<vmem>>, vector<49x160xf32>
    %cst_111 = arith.constant dense<0.000000e+00> : vector<32x160xf32>
    %204 = tpu.matmul %202, %203, %cst_111 {dimension_numbers = #tpu.dot_dimension_numbers<[1], [0], [0], [1], [0, 0, 1, 1], [], []>} : vector<32x49xf32>, vector<49x160xf32>, vector<32x160xf32> -> vector<32x160xf32>
    %205 = tpu.iota {dimensions = array<i32: 0>} : vector<32x160xi32>
    %206 = arith.sitofp %205 : vector<32x160xi32> to vector<32x160xf32>
    %207 = tpu.iota {dimensions = array<i32: 1>} : vector<32x160xi32>
    %208 = arith.sitofp %207 : vector<32x160xi32> to vector<32x160xf32>
    %cst_112 = arith.constant 5.000000e-01 : f32
    %209 = vector.broadcast %cst_112 : f32 to vector<32x160xf32>
    %210 = arith.addf %206, %209 : vector<32x160xf32>
    %cst_113 = arith.constant 5.000000e-01 : f32
    %211 = vector.broadcast %cst_113 : f32 to vector<32x160xf32>
    %212 = arith.mulf %210, %211 : vector<32x160xf32>
    %213 = math.floor %212 : vector<32x160xf32>
    %cst_114 = arith.constant 5.000000e-01 : f32
    %214 = vector.broadcast %cst_114 : f32 to vector<32x160xf32>
    %215 = arith.addf %208, %214 : vector<32x160xf32>
    %cst_115 = arith.constant 1.000000e-01 : f32
    %216 = vector.broadcast %cst_115 : f32 to vector<32x160xf32>
    %217 = arith.mulf %215, %216 : vector<32x160xf32>
    %218 = math.floor %217 : vector<32x160xf32>
    %219 = arith.cmpf oeq, %213, %218 : vector<32x160xf32>
    %220 = arith.extui %219 : vector<32x160xi1> to vector<32x160xi32>
    %221 = arith.sitofp %220 : vector<32x160xi32> to vector<32x160xf32>
    %222 = arith.mulf %204, %221 : vector<32x160xf32>
    %223 = tpu.iota {dimensions = array<i32: 0>} : vector<2x32xi32>
    %224 = arith.sitofp %223 : vector<2x32xi32> to vector<2x32xf32>
    %225 = tpu.iota {dimensions = array<i32: 1>} : vector<2x32xi32>
    %226 = arith.sitofp %225 : vector<2x32xi32> to vector<2x32xf32>
    %cst_116 = arith.constant 5.000000e-01 : f32
    %227 = vector.broadcast %cst_116 : f32 to vector<2x32xf32>
    %228 = arith.addf %226, %227 : vector<2x32xf32>
    %cst_117 = arith.constant 5.000000e-01 : f32
    %229 = vector.broadcast %cst_117 : f32 to vector<2x32xf32>
    %230 = arith.mulf %228, %229 : vector<2x32xf32>
    %231 = math.floor %230 : vector<2x32xf32>
    %cst_118 = arith.constant 2.000000e+00 : f32
    %232 = vector.broadcast %cst_118 : f32 to vector<2x32xf32>
    %233 = arith.mulf %232, %231 : vector<2x32xf32>
    %234 = arith.subf %226, %233 : vector<2x32xf32>
    %235 = arith.cmpf oeq, %234, %224 : vector<2x32xf32>
    %236 = arith.extui %235 : vector<2x32xi1> to vector<2x32xi32>
    %237 = arith.sitofp %236 : vector<2x32xi32> to vector<2x32xf32>
    %238 = tpu.iota {dimensions = array<i32: 0>} : vector<160x10xi32>
    %239 = arith.sitofp %238 : vector<160x10xi32> to vector<160x10xf32>
    %240 = tpu.iota {dimensions = array<i32: 1>} : vector<160x10xi32>
    %241 = arith.sitofp %240 : vector<160x10xi32> to vector<160x10xf32>
    %cst_119 = arith.constant 5.000000e-01 : f32
    %242 = vector.broadcast %cst_119 : f32 to vector<160x10xf32>
    %243 = arith.addf %239, %242 : vector<160x10xf32>
    %cst_120 = arith.constant 1.000000e-01 : f32
    %244 = vector.broadcast %cst_120 : f32 to vector<160x10xf32>
    %245 = arith.mulf %243, %244 : vector<160x10xf32>
    %246 = math.floor %245 : vector<160x10xf32>
    %cst_121 = arith.constant 1.000000e+01 : f32
    %247 = vector.broadcast %cst_121 : f32 to vector<160x10xf32>
    %248 = arith.mulf %247, %246 : vector<160x10xf32>
    %249 = arith.subf %239, %248 : vector<160x10xf32>
    %250 = arith.cmpf oeq, %249, %241 : vector<160x10xf32>
    %251 = arith.extui %250 : vector<160x10xi1> to vector<160x10xi32>
    %252 = arith.sitofp %251 : vector<160x10xi32> to vector<160x10xf32>
    %cst_122 = arith.constant dense<0.000000e+00> : vector<2x160xf32>
    %253 = tpu.matmul %237, %222, %cst_122 {dimension_numbers = #tpu.dot_dimension_numbers<[1], [0], [0], [1], [0, 0, 1, 1], [], []>} : vector<2x32xf32>, vector<32x160xf32>, vector<2x160xf32> -> vector<2x160xf32>
    %cst_123 = arith.constant dense<0.000000e+00> : vector<2x10xf32>
    %254 = tpu.matmul %253, %252, %cst_123 {dimension_numbers = #tpu.dot_dimension_numbers<[1], [0], [0], [1], [0, 0, 1, 1], [], []>} : vector<2x160xf32>, vector<160x10xf32>, vector<2x10xf32> -> vector<2x10xf32>
    %c0_124 = arith.constant 0 : index
    %c0_125 = arith.constant 0 : index
    %255 = vector.load %arg9[%c0_124, %c0_125] : memref<1x10xf32, #tpu.memory_space<vmem>>, vector<1x10xf32>
    %256 = vector.broadcast %255 : vector<1x10xf32> to vector<2x10xf32>
    %257 = arith.addf %254, %256 : vector<2x10xf32>
    %c0_126 = arith.constant 0 : index
    %c0_127 = arith.constant 0 : index
    %258 = vector.load %arg10[%c0_126, %c0_127] : memref<2x10xf32, #tpu.memory_space<vmem>>, vector<2x10xf32>
    tpu.vector_store %arg10[%c0_126, %c0_127], %257 {strides = array<i32>} : memref<2x10xf32, #tpu.memory_space<vmem>>, vector<2x10xf32>,
    return
  }
  func.func @transform_0(%arg0: i32) -> (i32, i32) {
    %c0_i32 = arith.constant 0 : i32
    %c0_i32_0 = arith.constant 0 : i32
    %c0_i32_1 = arith.constant 0 : i32
    return %c0_i32, %c0_i32_0 : i32, i32
  }
  func.func @transform_1(%arg0: i32) -> (i32, i32) {
    %c0_i32 = arith.constant 0 : i32
    %c0_i32_0 = arith.constant 0 : i32
    %c0_i32_1 = arith.constant 0 : i32
    return %c0_i32, %c0_i32_0 : i32, i32
  }
  func.func @transform_2(%arg0: i32) -> (i32, i32) {
    %c0_i32 = arith.constant 0 : i32
    %c0_i32_0 = arith.constant 0 : i32
    %c0_i32_1 = arith.constant 0 : i32
    return %c0_i32, %c0_i32_0 : i32, i32
  }
  func.func @transform_3(%arg0: i32) -> (i32, i32) {
    %c0_i32 = arith.constant 0 : i32
    %c0_i32_0 = arith.constant 0 : i32
    %c0_i32_1 = arith.constant 0 : i32
    return %c0_i32, %c0_i32_0 : i32, i32
  }
  func.func @transform_4(%arg0: i32) -> (i32, i32) {
    %c0_i32 = arith.constant 0 : i32
    %c0_i32_0 = arith.constant 0 : i32
    %c0_i32_1 = arith.constant 0 : i32
    return %c0_i32, %c0_i32_0 : i32, i32
  }
  func.func @transform_5(%arg0: i32) -> (i32, i32) {
    %c0_i32 = arith.constant 0 : i32
    %c0_i32_0 = arith.constant 0 : i32
    %c0_i32_1 = arith.constant 0 : i32
    return %c0_i32, %c0_i32_0 : i32, i32
  }
  func.func @transform_6(%arg0: i32) -> (i32, i32) {
    %c0_i32 = arith.constant 0 : i32
    %c0_i32_0 = arith.constant 0 : i32
    %c0_i32_1 = arith.constant 0 : i32
    return %c0_i32, %c0_i32_0 : i32, i32
  }
  func.func @transform_7(%arg0: i32) -> (i32, i32) {
    %c0_i32 = arith.constant 0 : i32
    %c0_i32_0 = arith.constant 0 : i32
    %c0_i32_1 = arith.constant 0 : i32
    return %c0_i32, %c0_i32_0 : i32, i32
  }
  func.func @transform_8(%arg0: i32) -> (i32, i32) {
    %c0_i32 = arith.constant 0 : i32
    %c0_i32_0 = arith.constant 0 : i32
    %c0_i32_1 = arith.constant 0 : i32
    return %c0_i32, %c0_i32_0 : i32, i32
  }
  func.func @transform_9(%arg0: i32) -> (i32, i32) {
    %c0_i32 = arith.constant 0 : i32
    %c0_i32_0 = arith.constant 0 : i32
    %c0_i32_1 = arith.constant 0 : i32
    return %c0_i32, %c0_i32_0 : i32, i32
  }
}

</mosaic_0001>

<llo_original>
// kernel: cnn_forward.1
$region0: #{cnn_forward.1}
  #allocation0 [shape = 'u32[]', space=smem, size = 0x4, offset = 0x4, fixed_abs, tag = 'smem constant byte address 0x4 - core index']
  #allocation1 [shape = 'u32[144,128]{1,0:T(1,128)}', space=vmem, size = 0x12000, scoped, tag = 'internal scratch']
  #allocation2 [shape = 'f32[784,196]{1,0:T(8,128)}', space=vmem, size = 0xc4000, scoped, tag = 'scratch operand']
  #allocation3 [shape = 'f32[196,49]{1,0:T(8,128)}', space=vmem, size = 0x19000, scoped, tag = 'scratch operand']
  #allocation4 [shape = 'f32[18,784]{1,0:T(8,128)}', space=vmem, size = 0x15000, scoped, tag = 'scratch operand']
  #allocation5 [shape = 'f32[144,196]{1,0:T(8,128)}', space=vmem, size = 0x24000, scoped, tag = 'scratch operand']
  %s0 = inlined_call_operand.vmem [shape: f32[2,784], index: 0, kind: input, shape index: {}]
  %s1 = inlined_call_operand.vmem [shape: f32[144,2], index: 1, kind: input, shape index: {}]
  %s2 = inlined_call_operand.vmem [shape: f32[16,1], index: 2, kind: input, shape index: {}]
  %s3 = inlined_call_operand.vmem [shape: f32[9,784], index: 3, kind: input, shape index: {}]
  %s4 = inlined_call_operand.vmem [shape: f32[32,144], index: 4, kind: input, shape index: {}]
  %s5 = inlined_call_operand.vmem [shape: f32[32,1], index: 5, kind: input, shape index: {}]
  %s6 = inlined_call_operand.vmem [shape: f32[9,196], index: 6, kind: input, shape index: {}]
  %s7 = inlined_call_operand.vmem [shape: f32[49,160], index: 7, kind: input, shape index: {}]
  %s8 = inlined_call_operand.vmem [shape: f32[1,10], index: 8, kind: input, shape index: {}]
  %s9 = inlined_call_operand.hbm [shape: f32[2,10], index: 9, kind: output, shape index: {}]
  %s10 = sld [smem:[#allocation0]]
  $region46: #{cnn_forward.1} parent=0
    _
  %s12 = ssub.s32 1, %s10
  %s13 = scalar_select 0, %s12, %s10
  $region1: #{cnn_forward.1} parent=0
    #allocation6 [shape = 'u8[1024]{0}', space=vmem, size = 0x400, scoped, tag = 'output window, operand 0, single buffered']
    #allocation7 [shape = 's32[1]{0}', space=sflag, size = 0x4, scoped, tag = 'scoped memory for cnn_forward.1']
    %14 = vsyncpa [#allocation7], 0
    // Predicated region
    $region2: #{cnn_forward.1} parent=1 // pred_check
      _
    $region3: #{cnn_forward.1} parent=1 // pred_check_branch
      %16 = sbr.rel (0) target = $region5
    $region4: #{cnn_forward.1} parent=1 // pred_region
      _
    $region5: #{cnn_forward.1} parent=1 // pred_fallthru
      _
    // Predicated region
    $region6: #{cnn_forward.1} parent=1 // pred_check
      _
    $region7: #{cnn_forward.1} parent=1 // pred_check_branch
      %18 = sbr.rel (0) target = $region9
    $region8: #{cnn_forward.1} parent=1 // pred_region
      _
    $region9: #{cnn_forward.1} parent=1 // pred_fallthru
      _
    // Predicated region
    $region10: #{cnn_forward.1} parent=1 // pred_check
      _
    $region11: #{cnn_forward.1} parent=1 // pred_check_branch
      %20 = sbr.rel (0) target = $region13
    $region12: #{cnn_forward.1} parent=1 // pred_region
      _
    $region13: #{cnn_forward.1} parent=1 // pred_fallthru
      _
    // Predicated region
    $region14: #{cnn_forward.1} parent=1 // pred_check
      _
    $region15: #{cnn_forward.1} parent=1 // pred_check_branch
      %22 = sbr.rel (0) target = $region17
    $region16: #{cnn_forward.1} parent=1 // pred_region
      _
    $region17: #{cnn_forward.1} parent=1 // pred_fallthru
      _
    // Predicated region
    $region18: #{cnn_forward.1} parent=1 // pred_check
      _
    $region19: #{cnn_forward.1} parent=1 // pred_check_branch
      %24 = sbr.rel (0) target = $region21
    $region20: #{cnn_forward.1} parent=1 // pred_region
      _
    $region21: #{cnn_forward.1} parent=1 // pred_fallthru
      _
    // Predicated region
    $region22: #{cnn_forward.1} parent=1 // pred_check
      _
    $region23: #{cnn_forward.1} parent=1 // pred_check_branch
      %26 = sbr.rel (0) target = $region25
    $region24: #{cnn_forward.1} parent=1 // pred_region
      _
    $region25: #{cnn_forward.1} parent=1 // pred_fallthru
      _
    // Predicated region
    $region26: #{cnn_forward.1} parent=1 // pred_check
      _
    $region27: #{cnn_forward.1} parent=1 // pred_check_branch
      %28 = sbr.rel (0) target = $region29
    $region28: #{cnn_forward.1} parent=1 // pred_region
      _
    $region29: #{cnn_forward.1} parent=1 // pred_fallthru
      _
    // Predicated region
    $region30: #{cnn_forward.1} parent=1 // pred_check
      _
    $region31: #{cnn_forward.1} parent=1 // pred_check_branch
      %30 = sbr.rel (0) target = $region33
    $region32: #{cnn_forward.1} parent=1 // pred_region
      _
    $region33: #{cnn_forward.1} parent=1 // pred_fallthru
      _
    // Predicated region
    $region34: #{cnn_forward.1} parent=1 // pred_check
      _
    $region35: #{cnn_forward.1} parent=1 // pred_check_branch
      %32 = sbr.rel (0) target = $region37
    $region36: #{cnn_forward.1} parent=1 // pred_region
      _
    $region37: #{cnn_forward.1} parent=1 // pred_fallthru
      _
    %v33 = vld [vmem:[%s0] sm:$0xff]
    %v34 = vld [vmem:[%s0 + $0x8] sm:$0x3f]
    %v37 = vcombine.high %v33, %v33
    %v39 = vunpack.c.l.s4 1983009808
    %v40 = vunpack.c.0.s8 %v39
    %v41 = vlaneseq
    %v42 = vshrl.u32 %v41, 7
    %v43 = vsub.s32 %v40, %v42
    %v44 = vrot.slane %v33, %v43
    %v46 = vunpack.c.l.s4 1983009808
    %v47 = vunpack.c.0.s8 %v46
    %v48 = vlaneseq
    %v49 = vshrl.u32 %v48, 7
    %v50 = vsub.s32 %v47, %v49
    %v51 = vrot.slane %v37, %v50
    %v52 = vcombine.high %v44, %v44
    %v53 = vcombine.high %v51, %v51
    %v55 = vunpack.c.l.s4 1983009808
    %v56 = vunpack.c.0.s8 %v55
    %v57 = vlaneseq
    %v58 = vshrl.u32 %v57, 7
    %v59 = vsub.s32 %v56, %v58
    %v60 = vrot.slane %v34, %v59
    %v61 = vcombine.high %v60, %v60
    %62 = vrot.lane.b32.xlu0 %v44, 29
    %v63 = vpop.permute.xlu0 %62
    %64 = vrot.lane.b32.xlu0 %v52, 29
    %v65 = vpop.permute.xlu0 %64
    %66 = vrot.lane.b32.xlu0 %v51, 29
    %v67 = vpop.permute.xlu0 %66
    %68 = vrot.lane.b32.xlu0 %v53, 29
    %v69 = vpop.permute.xlu0 %68
    %70 = vrot.lane.b32.xlu0 %v60, 29
    %v71 = vpop.permute.xlu0 %70
    %72 = vrot.lane.b32.xlu0 %v61, 29
    %v73 = vpop.permute.xlu0 %72
    %vm74 = vcmask 236544
    %v75 = vsel %vm74, %v63, %v65
    %v76 = vsel %vm74, %v65, %v67
    %v77 = vsel %vm74, %v67, %v69
    %v78 = vsel %vm74, %v69, %v71
    %v79 = vsel %vm74, %v71, %v73
    %v87 = vsel %vm74, 0.0, %v63
    %v88 = vld [vmem:[%s3] ss:$8 sm:$0xf]
    %v89 = vld [vmem:[%s3] ss:$8 sm:$0x70]
    %v90 = vor.u32 %v88, %v89
    %v92 = vlaneseq
    %v93 = vshrl.u32 %v92, 7
    %v94 = vsub.s32 0, %v93
    %v95 = vrot.slane %v90, %v94
    %v96 = vlaneseq
    %v97 = vshrl.u32 %v96, 7
    %v98 = vsub.s32 1, %v97
    %v99 = vrot.slane %v90, %v98
    %v100 = vlaneseq
    %v101 = vshrl.u32 %v100, 7
    %v102 = vsub.s32 2, %v101
    %v103 = vrot.slane %v90, %v102
    %v104 = vlaneseq
    %v105 = vshrl.u32 %v104, 7
    %v106 = vsub.s32 3, %v105
    %v107 = vrot.slane %v90, %v106
    %v108 = vlaneseq
    %v109 = vshrl.u32 %v108, 7
    %v110 = vsub.s32 4, %v109
    %v111 = vrot.slane %v90, %v110
    %v112 = vlaneseq
    %v113 = vshrl.u32 %v112, 7
    %v114 = vsub.s32 5, %v113
    %v115 = vrot.slane %v90, %v114
    %v116 = vlaneseq
    %v117 = vshrl.u32 %v116, 7
    %v118 = vsub.s32 6, %v117
    %v119 = vrot.slane %v90, %v118
    %v127 = vmul.f32 %v87, %v95
    %v128 = vmul.f32 %v75, %v99
    %v129 = vmul.f32 %v76, %v103
    %v130 = vmul.f32 %v77, %v107
    %v131 = vmul.f32 %v78, %v111
    %v132 = vmul.f32 %v79, %v115
    %v133 = vmul.f32 %v73, %v119
    %v134 = vld [vmem:[%s1] sm:$0xff]
    %v135 = vld [vmem:[%s1 + $0x8] sm:$0xff]
    %136 = vrot.lane.b32.xlu0 %v44, 28
    %v137 = vpop.permute.xlu0 %136
    %138 = vrot.lane.b32.xlu0 %v52, 28
    %v139 = vpop.permute.xlu0 %138
    %140 = vrot.lane.b32.xlu0 %v51, 28
    %v141 = vpop.permute.xlu0 %140
    %142 = vrot.lane.b32.xlu0 %v53, 28
    %v143 = vpop.permute.xlu0 %142
    %144 = vrot.lane.b32.xlu0 %v60, 28
    %v145 = vpop.permute.xlu0 %144
    %146 = vrot.lane.b32.xlu0 %v61, 28
    %v147 = vpop.permute.xlu0 %146
    %vm148 = vcmask 228352
    %v149 = vsel %vm148, %v137, %v139
    %v150 = vsel %vm148, %v139, %v141
    %v151 = vsel %vm148, %v141, %v143
    %v152 = vsel %vm148, %v143, %v145
    %v153 = vsel %vm148, %v145, %v147
    %v155 = vsel %vm148, 0.0, %v137
    %v156 = vld [vmem:[%s1 + $0x10] sm:$0xff]
    %v157 = vld [vmem:[%s1 + $0x18] sm:$0xff]
    %vm158 = vcmask 15360
    %v160 = vsel %vm158, %v156, 0
    %v163 = vsel %vm158, %v157, 0
    %vm165 = vcmask 1041408
    %v167 = vsel %vm165, %v155, 0
    %v169 = vsel %vm165, %v149, 0
    %v171 = vsel %vm165, %v150, 0
    %v173 = vsel %vm165, %v151, 0
    %v175 = vsel %vm165, %v152, 0
    %v177 = vsel %vm165, %v153, 0
    %v179 = vsel %vm165, %v147, 0
    %181 = vmatprep.subr.mxu0 %v169
    %182 = vmatpush1.msra.mxu0 %v167
    %183 = vmatprep.subr.mxu0 0.0
    %184 = vmatpush1.msra.mxu0 0.0
    %185 = vmatprep.subr.mxu0 0.0
    %186 = vmatpush1.msra.mxu0 0.0
    %187 = vmatprep.subr.mxu0 0.0
    %188 = vmatpush1.msra.mxu0 0.0
    %189 = vmatprep.subr.mxu0 0.0
    %190 = vmatpush1.msra.mxu0 0.0
    %191 = vmatprep.subr.mxu0 0.0
    %192 = vmatpush1.msra.mxu0 0.0
    %193 = vmatprep.subr.mxu0 0.0
    %194 = vmatpush1.msra.mxu0 0.0
    %195 = vmatprep.subr.mxu0 0.0
    %196 = vmatpush1.msra.mxu0 0.0
    %197 = vmatprep.subr.mxu0 0.0
    %198 = vmatpush1.msra.mxu0 0.0
    %199 = vmatprep.subr.mxu0 0.0
    %200 = vmatpush1.msra.mxu0 0.0
    %201 = vmatprep.subr.mxu0 0.0
    %202 = vmatpush1.msra.mxu0 0.0
    %203 = vmatprep.subr.mxu0 0.0
    %204 = vmatpush1.msra.mxu0 0.0
    %205 = vmatprep.subr.mxu0 0.0
    %206 = vmatpush1.msra.mxu0 0.0
    %207 = vmatprep.subr.mxu0 0.0
    %208 = vmatpush1.msra.mxu0 0.0
    %209 = vmatprep.subr.mxu0 0.0
    %210 = vmatpush1.msra.mxu0 0.0
    %211 = vmatprep.subr.mxu0 0.0
    %212 = vmatpush1.msra.mxu0 0.0
    %213 = vmatprep.subr.mxu0 0.0
    %214 = vmatpush1.msra.mxu0 0.0
    %215 = vmatprep.subr.mxu0 0.0
    %216 = vmatpush1.msra.mxu0 0.0
    %217 = vmatprep.subr.mxu0 0.0
    %218 = vmatpush1.msra.mxu0 0.0
    %219 = vmatprep.subr.mxu0 0.0
    %220 = vmatpush1.msra.mxu0 0.0
    %221 = vmatprep.subr.mxu0 0.0
    %222 = vmatpush1.msra.mxu0 0.0
    %223 = vmatprep.subr.mxu0 0.0
    %224 = vmatpush1.msra.mxu0 0.0
    %225 = vmatprep.subr.mxu0 0.0
    %226 = vmatpush1.msra.mxu0 0.0
    %227 = vmatprep.subr.mxu0 0.0
    %228 = vmatpush1.msra.mxu0 0.0
    %229 = vmatprep.subr.mxu0 0.0
    %230 = vmatpush1.msra.mxu0 0.0
    %231 = vmatprep.subr.mxu0 0.0
    %232 = vmatpush1.msra.mxu0 0.0
    %233 = vmatprep.subr.mxu0 0.0
    %234 = vmatpush1.msra.mxu0 0.0
    %235 = vmatprep.subr.mxu0 0.0
    %236 = vmatpush1.msra.mxu0 0.0
    %237 = vmatprep.subr.mxu0 0.0
    %238 = vmatpush1.msra.mxu0 0.0
    %239 = vmatprep.subr.mxu0 0.0
    %240 = vmatpush1.msra.mxu0 0.0
    %241 = vmatprep.subr.mxu0 0.0
    %242 = vmatpush1.msra.mxu0 0.0
    %243 = vmatprep.subr.mxu0 0.0
    %244 = vmatpush1.msra.mxu0 0.0
    %245 = vmatprep.mubr.f32.mxu0 0.0
    %246 = vmatmul.mubr.f32.gmra.mrb[0].mxu0 %v160
    %v247 = vpop.f32.mrb[0].mxu0
    %v248 = vadd.f32 0.0, %v247
    %v249 = vpop.f32.mrb[0].mxu0
    %v250 = vadd.f32 0.0, %v249
    %251 = vmatprep.mubr.f32.mxu0 0.0
    %252 = vmatmul.mubr.f32.gmra.mrb[0].mxu0 %v163
    %v253 = vpop.f32.mrb[0].mxu0
    %v254 = vadd.f32 0.0, %v253
    %v255 = vpop.f32.mrb[0].mxu0
    %v256 = vadd.f32 0.0, %v255
    %257 = vdwg.mxu0
    %258 = vmatprep.subr.mxu0 %v173
    %259 = vmatpush1.msra.mxu0 %v171
    %260 = vmatprep.subr.mxu0 0.0
    %261 = vmatpush1.msra.mxu0 0.0
    %262 = vmatprep.subr.mxu0 0.0
    %263 = vmatpush1.msra.mxu0 0.0
    %264 = vmatprep.subr.mxu0 0.0
    %265 = vmatpush1.msra.mxu0 0.0
    %266 = vmatprep.subr.mxu0 0.0
    %267 = vmatpush1.msra.mxu0 0.0
    %268 = vmatprep.subr.mxu0 0.0
    %269 = vmatpush1.msra.mxu0 0.0
    %270 = vmatprep.subr.mxu0 0.0
    %271 = vmatpush1.msra.mxu0 0.0
    %272 = vmatprep.subr.mxu0 0.0
    %273 = vmatpush1.msra.mxu0 0.0
    %274 = vmatprep.subr.mxu0 0.0
    %275 = vmatpush1.msra.mxu0 0.0
    %276 = vmatprep.subr.mxu0 0.0
    %277 = vmatpush1.msra.mxu0 0.0
    %278 = vmatprep.subr.mxu0 0.0
    %279 = vmatpush1.msra.mxu0 0.0
    %280 = vmatprep.subr.mxu0 0.0
    %281 = vmatpush1.msra.mxu0 0.0
    %282 = vmatprep.subr.mxu0 0.0
    %283 = vmatpush1.msra.mxu0 0.0
    %284 = vmatprep.subr.mxu0 0.0
    %285 = vmatpush1.msra.mxu0 0.0
    %286 = vmatprep.subr.mxu0 0.0
    %287 = vmatpush1.msra.mxu0 0.0
    %288 = vmatprep.subr.mxu0 0.0
    %289 = vmatpush1.msra.mxu0 0.0
    %290 = vmatprep.subr.mxu0 0.0
    %291 = vmatpush1.msra.mxu0 0.0
    %292 = vmatprep.subr.mxu0 0.0
    %293 = vmatpush1.msra.mxu0 0.0
    %294 = vmatprep.subr.mxu0 0.0
    %295 = vmatpush1.msra.mxu0 0.0
    %296 = vmatprep.subr.mxu0 0.0
    %297 = vmatpush1.msra.mxu0 0.0
    %298 = vmatprep.subr.mxu0 0.0
    %299 = vmatpush1.msra.mxu0 0.0
    %300 = vmatprep.subr.mxu0 0.0
    %301 = vmatpush1.msra.mxu0 0.0
    %302 = vmatprep.subr.mxu0 0.0
    %303 = vmatpush1.msra.mxu0 0.0
    %304 = vmatprep.subr.mxu0 0.0
    %305 = vmatpush1.msra.mxu0 0.0
    %306 = vmatprep.subr.mxu0 0.0
    %307 = vmatpush1.msra.mxu0 0.0
    %308 = vmatprep.subr.mxu0 0.0
    %309 = vmatpush1.msra.mxu0 0.0
    %310 = vmatprep.subr.mxu0 0.0
    %311 = vmatpush1.msra.mxu0 0.0
    %312 = vmatprep.subr.mxu0 0.0
    %313 = vmatpush1.msra.mxu0 0.0
    %314 = vmatprep.subr.mxu0 0.0
    %315 = vmatpush1.msra.mxu0 0.0
    %316 = vmatprep.subr.mxu0 0.0
    %317 = vmatpush1.msra.mxu0 0.0
    %318 = vmatprep.subr.mxu0 0.0
    %319 = vmatpush1.msra.mxu0 0.0
    %320 = vmatprep.subr.mxu0 0.0
    %321 = vmatpush1.msra.mxu0 0.0
    %322 = vmatprep.mubr.f32.mxu0 0.0
    %323 = vmatmul.mubr.f32.gmra.mrb[0].mxu0 %v160
    %v324 = vpop.f32.mrb[0].mxu0
    %v325 = vadd.f32 0.0, %v324
    %v326 = vpop.f32.mrb[0].mxu0
    %v327 = vadd.f32 0.0, %v326
    %328 = vmatprep.mubr.f32.mxu0 0.0
    %329 = vmatmul.mubr.f32.gmra.mrb[0].mxu0 %v163
    %v330 = vpop.f32.mrb[0].mxu0
    %v331 = vadd.f32 0.0, %v330
    %v332 = vpop.f32.mrb[0].mxu0
    %v333 = vadd.f32 0.0, %v332
    %334 = vdwg.mxu0
    %335 = vmatprep.subr.mxu0 %v177
    %336 = vmatpush1.msra.mxu0 %v175
    %337 = vmatprep.subr.mxu0 0.0
    %338 = vmatpush1.msra.mxu0 0.0
    %339 = vmatprep.subr.mxu0 0.0
    %340 = vmatpush1.msra.mxu0 0.0
    %341 = vmatprep.subr.mxu0 0.0
    %342 = vmatpush1.msra.mxu0 0.0
    %343 = vmatprep.subr.mxu0 0.0
    %344 = vmatpush1.msra.mxu0 0.0
    %345 = vmatprep.subr.mxu0 0.0
    %346 = vmatpush1.msra.mxu0 0.0
    %347 = vmatprep.subr.mxu0 0.0
    %348 = vmatpush1.msra.mxu0 0.0
    %349 = vmatprep.subr.mxu0 0.0
    %350 = vmatpush1.msra.mxu0 0.0
    %351 = vmatprep.subr.mxu0 0.0
    %352 = vmatpush1.msra.mxu0 0.0
    %353 = vmatprep.subr.mxu0 0.0
    %354 = vmatpush1.msra.mxu0 0.0
    %355 = vmatprep.subr.mxu0 0.0
    %356 = vmatpush1.msra.mxu0 0.0
    %357 = vmatprep.subr.mxu0 0.0
    %358 = vmatpush1.msra.mxu0 0.0
    %359 = vmatprep.subr.mxu0 0.0
    %360 = vmatpush1.msra.mxu0 0.0
    %361 = vmatprep.subr.mxu0 0.0
    %362 = vmatpush1.msra.mxu0 0.0
    %363 = vmatprep.subr.mxu0 0.0
    %364 = vmatpush1.msra.mxu0 0.0
    %365 = vmatprep.subr.mxu0 0.0
    %366 = vmatpush1.msra.mxu0 0.0
    %367 = vmatprep.subr.mxu0 0.0
    %368 = vmatpush1.msra.mxu0 0.0
    %369 = vmatprep.subr.mxu0 0.0
    %370 = vmatpush1.msra.mxu0 0.0
    %371 = vmatprep.subr.mxu0 0.0
    %372 = vmatpush1.msra.mxu0 0.0
    %373 = vmatprep.subr.mxu0 0.0
    %374 = vmatpush1.msra.mxu0 0.0
    %375 = vmatprep.subr.mxu0 0.0
    %376 = vmatpush1.msra.mxu0 0.0
    %377 = vmatprep.subr.mxu0 0.0
    %378 = vmatpush1.msra.mxu0 0.0
    %379 = vmatprep.subr.mxu0 0.0
    %380 = vmatpush1.msra.mxu0 0.0
    %381 = vmatprep.subr.mxu0 0.0
    %382 = vmatpush1.msra.mxu0 0.0
    %383 = vmatprep.subr.mxu0 0.0
    %384 = vmatpush1.msra.mxu0 0.0
    %385 = vmatprep.subr.mxu0 0.0
    %386 = vmatpush1.msra.mxu0 0.0
    %387 = vmatprep.subr.mxu0 0.0
    %388 = vmatpush1.msra.mxu0 0.0
    %389 = vmatprep.subr.mxu0 0.0
    %390 = vmatpush1.msra.mxu0 0.0
    %391 = vmatprep.subr.mxu0 0.0
    %392 = vmatpush1.msra.mxu0 0.0
    %393 = vmatprep.subr.mxu0 0.0
    %394 = vmatpush1.msra.mxu0 0.0
    %395 = vmatprep.subr.mxu0 0.0
    %396 = vmatpush1.msra.mxu0 0.0
    %397 = vmatprep.subr.mxu0 0.0
    %398 = vmatpush1.msra.mxu0 0.0
    %399 = vmatprep.mubr.f32.mxu0 0.0
    %400 = vmatmul.mubr.f32.gmra.mrb[0].mxu0 %v160
    %v401 = vpop.f32.mrb[0].mxu0
    %v402 = vadd.f32 0.0, %v401
    %v403 = vpop.f32.mrb[0].mxu0
    %v404 = vadd.f32 0.0, %v403
    %405 = vmatprep.mubr.f32.mxu0 0.0
    %406 = vmatmul.mubr.f32.gmra.mrb[0].mxu0 %v163
    %v407 = vpop.f32.mrb[0].mxu0
    %v408 = vadd.f32 0.0, %v407
    %v409 = vpop.f32.mrb[0].mxu0
    %v410 = vadd.f32 0.0, %v409
    %411 = vdwg.mxu0
    %412 = vmatprep.subr.mxu0 0.0
    %413 = vmatpush1.msra.mxu0 %v179
    %414 = vmatprep.subr.mxu0 0.0
    %415 = vmatpush1.msra.mxu0 0.0
    %416 = vmatprep.subr.mxu0 0.0
    %417 = vmatpush1.msra.mxu0 0.0
    %418 = vmatprep.subr.mxu0 0.0
    %419 = vmatpush1.msra.mxu0 0.0
    %420 = vmatprep.subr.mxu0 0.0
    %421 = vmatpush1.msra.mxu0 0.0
    %422 = vmatprep.subr.mxu0 0.0
    %423 = vmatpush1.msra.mxu0 0.0
    %424 = vmatprep.subr.mxu0 0.0
    %425 = vmatpush1.msra.mxu0 0.0
    %426 = vmatprep.subr.mxu0 0.0
    %427 = vmatpush1.msra.mxu0 0.0
    %428 = vmatprep.subr.mxu0 0.0
    %429 = vmatpush1.msra.mxu0 0.0
    %430 = vmatprep.subr.mxu0 0.0
    %431 = vmatpush1.msra.mxu0 0.0
    %432 = vmatprep.subr.mxu0 0.0
    %433 = vmatpush1.msra.mxu0 0.0
    %434 = vmatprep.subr.mxu0 0.0
    %435 = vmatpush1.msra.mxu0 0.0
    %436 = vmatprep.subr.mxu0 0.0
    %437 = vmatpush1.msra.mxu0 0.0
    %438 = vmatprep.subr.mxu0 0.0
    %439 = vmatpush1.msra.mxu0 0.0
    %440 = vmatprep.subr.mxu0 0.0
    %441 = vmatpush1.msra.mxu0 0.0
    %442 = vmatprep.subr.mxu0 0.0
    %443 = vmatpush1.msra.mxu0 0.0
    %444 = vmatprep.subr.mxu0 0.0
    %445 = vmatpush1.msra.mxu0 0.0
    %446 = vmatprep.subr.mxu0 0.0
    %447 = vmatpush1.msra.mxu0 0.0
    %448 = vmatprep.subr.mxu0 0.0
    %449 = vmatpush1.msra.mxu0 0.0
    %450 = vmatprep.subr.mxu0 0.0
    %451 = vmatpush1.msra.mxu0 0.0
    %452 = vmatprep.subr.mxu0 0.0
    %453 = vmatpush1.msra.mxu0 0.0
    %454 = vmatprep.subr.mxu0 0.0
    %455 = vmatpush1.msra.mxu0 0.0
    %456 = vmatprep.subr.mxu0 0.0
    %457 = vmatpush1.msra.mxu0 0.0
    %458 = vmatprep.subr.mxu0 0.0
    %459 = vmatpush1.msra.mxu0 0.0
    %460 = vmatprep.subr.mxu0 0.0
    %461 = vmatpush1.msra.mxu0 0.0
    %462 = vmatprep.subr.mxu0 0.0
    %463 = vmatpush1.msra.mxu0 0.0
    %464 = vmatprep.subr.mxu0 0.0
    %465 = vmatpush1.msra.mxu0 0.0
    %466 = vmatprep.subr.mxu0 0.0
    %467 = vmatpush1.msra.mxu0 0.0
    %468 = vmatprep.subr.mxu0 0.0
    %469 = vmatpush1.msra.mxu0 0.0
    %470 = vmatprep.subr.mxu0 0.0
    %471 = vmatpush1.msra.mxu0 0.0
    %472 = vmatprep.subr.mxu0 0.0
    %473 = vmatpush1.msra.mxu0 0.0
    %474 = vmatprep.subr.mxu0 0.0
    %475 = vmatpush1.msra.mxu0 0.0
    %476 = vmatprep.mubr.f32.mxu0 0.0
    %477 = vmatmul.mubr.f32.gmra.mrb[0].mxu0 %v160
    %v478 = vpop.f32.mrb[0].mxu0
    %v479 = vadd.f32 0.0, %v478
    %v480 = vpop.f32.mrb[0].mxu0
    %481 = vmatprep.mubr.f32.mxu0 0.0
    %482 = vmatmul.mubr.f32.gmra.mrb[0].mxu0 %v163
    %v483 = vpop.f32.mrb[0].mxu0
    %v484 = vadd.f32 0.0, %v483
    %v485 = vpop.f32.mrb[0].mxu0
    %486 = vdwg.mxu0
    %v488 = vsel %vm158, %v134, 0
    %v491 = vsel %vm158, %v135, 0
    %v494 = vsel %vm165, %v127, 0
    %v497 = vsel %vm165, %v128, 0
    %v500 = vsel %vm165, %v129, 0
    %v503 = vsel %vm165, %v130, 0
    %v506 = vsel %vm165, %v131, 0
    %v509 = vsel %vm165, %v132, 0
    %v512 = vsel %vm165, %v133, 0
    %514 = vmatprep.subr.mxu0 %v497
    %515 = vmatpush1.msra.mxu0 %v494
    %516 = vmatprep.subr.mxu0 0.0
    %517 = vmatpush1.msra.mxu0 0.0
    %518 = vmatprep.subr.mxu0 0.0
    %519 = vmatpush1.msra.mxu0 0.0
    %520 = vmatprep.subr.mxu0 0.0
    %521 = vmatpush1.msra.mxu0 0.0
    %522 = vmatprep.subr.mxu0 0.0
    %523 = vmatpush1.msra.mxu0 0.0
    %524 = vmatprep.subr.mxu0 0.0
    %525 = vmatpush1.msra.mxu0 0.0
    %526 = vmatprep.subr.mxu0 0.0
    %527 = vmatpush1.msra.mxu0 0.0
    %528 = vmatprep.subr.mxu0 0.0
    %529 = vmatpush1.msra.mxu0 0.0
    %530 = vmatprep.subr.mxu0 0.0
    %531 = vmatpush1.msra.mxu0 0.0
    %532 = vmatprep.subr.mxu0 0.0
    %533 = vmatpush1.msra.mxu0 0.0
    %534 = vmatprep.subr.mxu0 0.0
    %535 = vmatpush1.msra.mxu0 0.0
    %536 = vmatprep.subr.mxu0 0.0
    %537 = vmatpush1.msra.mxu0 0.0
    %538 = vmatprep.subr.mxu0 0.0
    %539 = vmatpush1.msra.mxu0 0.0
    %540 = vmatprep.subr.mxu0 0.0
    %541 = vmatpush1.msra.mxu0 0.0
    %542 = vmatprep.subr.mxu0 0.0
    %543 = vmatpush1.msra.mxu0 0.0
    %544 = vmatprep.subr.mxu0 0.0
    %545 = vmatpush1.msra.mxu0 0.0
    %546 = vmatprep.subr.mxu0 0.0
    %547 = vmatpush1.msra.mxu0 0.0
    %548 = vmatprep.subr.mxu0 0.0
    %549 = vmatpush1.msra.mxu0 0.0
    %550 = vmatprep.subr.mxu0 0.0
    %551 = vmatpush1.msra.mxu0 0.0
    %552 = vmatprep.subr.mxu0 0.0
    %553 = vmatpush1.msra.mxu0 0.0
    %554 = vmatprep.subr.mxu0 0.0
    %555 = vmatpush1.msra.mxu0 0.0
    %556 = vmatprep.subr.mxu0 0.0
    %557 = vmatpush1.msra.mxu0 0.0
    %558 = vmatprep.subr.mxu0 0.0
    %559 = vmatpush1.msra.mxu0 0.0
    %560 = vmatprep.subr.mxu0 0.0
    %561 = vmatpush1.msra.mxu0 0.0
    %562 = vmatprep.subr.mxu0 0.0
    %563 = vmatpush1.msra.mxu0 0.0
    %564 = vmatprep.subr.mxu0 0.0
    %565 = vmatpush1.msra.mxu0 0.0
    %566 = vmatprep.subr.mxu0 0.0
    %567 = vmatpush1.msra.mxu0 0.0
    %568 = vmatprep.subr.mxu0 0.0
    %569 = vmatpush1.msra.mxu0 0.0
    %570 = vmatprep.subr.mxu0 0.0
    %571 = vmatpush1.msra.mxu0 0.0
    %572 = vmatprep.subr.mxu0 0.0
    %573 = vmatpush1.msra.mxu0 0.0
    %574 = vmatprep.subr.mxu0 0.0
    %575 = vmatpush1.msra.mxu0 0.0
    %576 = vmatprep.subr.mxu0 0.0
    %577 = vmatpush1.msra.mxu0 0.0
    %578 = vmatprep.mubr.f32.mxu0 0.0
    %579 = vmatmul.mubr.f32.gmra.mrb[0].mxu0 %v488
    %v580 = vpop.f32.mrb[0].mxu0
    %v581 = vadd.f32 %v248, %v580
    %v582 = vpop.f32.mrb[0].mxu0
    %v583 = vadd.f32 %v250, %v582
    %584 = vmatprep.mubr.f32.mxu0 0.0
    %585 = vmatmul.mubr.f32.gmra.mrb[0].mxu0 %v491
    %v586 = vpop.f32.mrb[0].mxu0
    %v587 = vadd.f32 %v254, %v586
    %v588 = vpop.f32.mrb[0].mxu0
    %v589 = vadd.f32 %v256, %v588
    %590 = vdwg.mxu0
    %591 = vmatprep.subr.mxu0 %v503
    %592 = vmatpush1.msra.mxu0 %v500
    %593 = vmatprep.subr.mxu0 0.0
    %594 = vmatpush1.msra.mxu0 0.0
    %595 = vmatprep.subr.mxu0 0.0
    %596 = vmatpush1.msra.mxu0 0.0
    %597 = vmatprep.subr.mxu0 0.0
    %598 = vmatpush1.msra.mxu0 0.0
    %599 = vmatprep.subr.mxu0 0.0
    %600 = vmatpush1.msra.mxu0 0.0
    %601 = vmatprep.subr.mxu0 0.0
    %602 = vmatpush1.msra.mxu0 0.0
    %603 = vmatprep.subr.mxu0 0.0
    %604 = vmatpush1.msra.mxu0 0.0
    %605 = vmatprep.subr.mxu0 0.0
    %606 = vmatpush1.msra.mxu0 0.0
    %607 = vmatprep.subr.mxu0 0.0
    %608 = vmatpush1.msra.mxu0 0.0
    %609 = vmatprep.subr.mxu0 0.0
    %610 = vmatpush1.msra.mxu0 0.0
    %611 = vmatprep.subr.mxu0 0.0
    %612 = vmatpush1.msra.mxu0 0.0
    %613 = vmatprep.subr.mxu0 0.0
    %614 = vmatpush1.msra.mxu0 0.0
    %615 = vmatprep.subr.mxu0 0.0
    %616 = vmatpush1.msra.mxu0 0.0
    %617 = vmatprep.subr.mxu0 0.0
    %618 = vmatpush1.msra.mxu0 0.0
    %619 = vmatprep.subr.mxu0 0.0
    %620 = vmatpush1.msra.mxu0 0.0
    %621 = vmatprep.subr.mxu0 0.0
    %622 = vmatpush1.msra.mxu0 0.0
    %623 = vmatprep.subr.mxu0 0.0
    %624 = vmatpush1.msra.mxu0 0.0
    %625 = vmatprep.subr.mxu0 0.0
    %626 = vmatpush1.msra.mxu0 0.0
    %627 = vmatprep.subr.mxu0 0.0
    %628 = vmatpush1.msra.mxu0 0.0
    %629 = vmatprep.subr.mxu0 0.0
    %630 = vmatpush1.msra.mxu0 0.0
    %631 = vmatprep.subr.mxu0 0.0
    %632 = vmatpush1.msra.mxu0 0.0
    %633 = vmatprep.subr.mxu0 0.0
    %634 = vmatpush1.msra.mxu0 0.0
    %635 = vmatprep.subr.mxu0 0.0
    %636 = vmatpush1.msra.mxu0 0.0
    %637 = vmatprep.subr.mxu0 0.0
    %638 = vmatpush1.msra.mxu0 0.0
    %639 = vmatprep.subr.mxu0 0.0
    %640 = vmatpush1.msra.mxu0 0.0
    %641 = vmatprep.subr.mxu0 0.0
    %642 = vmatpush1.msra.mxu0 0.0
    %643 = vmatprep.subr.mxu0 0.0
    %644 = vmatpush1.msra.mxu0 0.0
    %645 = vmatprep.subr.mxu0 0.0
    %646 = vmatpush1.msra.mxu0 0.0
    %647 = vmatprep.subr.mxu0 0.0
    %648 = vmatpush1.msra.mxu0 0.0
    %649 = vmatprep.subr.mxu0 0.0
    %650 = vmatpush1.msra.mxu0 0.0
    %651 = vmatprep.subr.mxu0 0.0
    %652 = vmatpush1.msra.mxu0 0.0
    %653 = vmatprep.subr.mxu0 0.0
    %654 = vmatpush1.msra.mxu0 0.0
    %655 = vmatprep.mubr.f32.mxu0 0.0
    %656 = vmatmul.mubr.f32.gmra.mrb[0].mxu0 %v488
    %v657 = vpop.f32.mrb[0].mxu0
    %v658 = vadd.f32 %v325, %v657
    %v659 = vpop.f32.mrb[0].mxu0
    %v660 = vadd.f32 %v327, %v659
    %661 = vmatprep.mubr.f32.mxu0 0.0
    %662 = vmatmul.mubr.f32.gmra.mrb[0].mxu0 %v491
    %v663 = vpop.f32.mrb[0].mxu0
    %v664 = vadd.f32 %v331, %v663
    %v665 = vpop.f32.mrb[0].mxu0
    %v666 = vadd.f32 %v333, %v665
    %667 = vdwg.mxu0
    %668 = vmatprep.subr.mxu0 %v509
    %669 = vmatpush1.msra.mxu0 %v506
    %670 = vmatprep.subr.mxu0 0.0
    %671 = vmatpush1.msra.mxu0 0.0
    %672 = vmatprep.subr.mxu0 0.0
    %673 = vmatpush1.msra.mxu0 0.0
    %674 = vmatprep.subr.mxu0 0.0
    %675 = vmatpush1.msra.mxu0 0.0
    %676 = vmatprep.subr.mxu0 0.0
    %677 = vmatpush1.msra.mxu0 0.0
    %678 = vmatprep.subr.mxu0 0.0
    %679 = vmatpush1.msra.mxu0 0.0
    %680 = vmatprep.subr.mxu0 0.0
    %681 = vmatpush1.msra.mxu0 0.0
    %682 = vmatprep.subr.mxu0 0.0
    %683 = vmatpush1.msra.mxu0 0.0
    %684 = vmatprep.subr.mxu0 0.0
    %685 = vmatpush1.msra.mxu0 0.0
    %686 = vmatprep.subr.mxu0 0.0
    %687 = vmatpush1.msra.mxu0 0.0
    %688 = vmatprep.subr.mxu0 0.0
    %689 = vmatpush1.msra.mxu0 0.0
    %690 = vmatprep.subr.mxu0 0.0
    %691 = vmatpush1.msra.mxu0 0.0
    %692 = vmatprep.subr.mxu0 0.0
    %693 = vmatpush1.msra.mxu0 0.0
    %694 = vmatprep.subr.mxu0 0.0
    %695 = vmatpush1.msra.mxu0 0.0
    %696 = vmatprep.subr.mxu0 0.0
    %697 = vmatpush1.msra.mxu0 0.0
    %698 = vmatprep.subr.mxu0 0.0
    %699 = vmatpush1.msra.mxu0 0.0
    %700 = vmatprep.subr.mxu0 0.0
    %701 = vmatpush1.msra.mxu0 0.0
    %702 = vmatprep.subr.mxu0 0.0
    %703 = vmatpush1.msra.mxu0 0.0
    %704 = vmatprep.subr.mxu0 0.0
    %705 = vmatpush1.msra.mxu0 0.0
    %706 = vmatprep.subr.mxu0 0.0
    %707 = vmatpush1.msra.mxu0 0.0
    %708 = vmatprep.subr.mxu0 0.0
    %709 = vmatpush1.msra.mxu0 0.0
    %710 = vmatprep.subr.mxu0 0.0
    %711 = vmatpush1.msra.mxu0 0.0
    %712 = vmatprep.subr.mxu0 0.0
    %713 = vmatpush1.msra.mxu0 0.0
    %714 = vmatprep.subr.mxu0 0.0
    %715 = vmatpush1.msra.mxu0 0.0
    %716 = vmatprep.subr.mxu0 0.0
    %717 = vmatpush1.msra.mxu0 0.0
    %718 = vmatprep.subr.mxu0 0.0
    %719 = vmatpush1.msra.mxu0 0.0
    %720 = vmatprep.subr.mxu0 0.0
    %721 = vmatpush1.msra.mxu0 0.0
    %722 = vmatprep.subr.mxu0 0.0
    %723 = vmatpush1.msra.mxu0 0.0
    %724 = vmatprep.subr.mxu0 0.0
    %725 = vmatpush1.msra.mxu0 0.0
    %726 = vmatprep.subr.mxu0 0.0
    %727 = vmatpush1.msra.mxu0 0.0
    %728 = vmatprep.subr.mxu0 0.0
    %729 = vmatpush1.msra.mxu0 0.0
    %730 = vmatprep.subr.mxu0 0.0
    %731 = vmatpush1.msra.mxu0 0.0
    %732 = vmatprep.mubr.f32.mxu0 0.0
    %733 = vmatmul.mubr.f32.gmra.mrb[0].mxu0 %v488
    %v734 = vpop.f32.mrb[0].mxu0
    %v735 = vadd.f32 %v402, %v734
    %v736 = vpop.f32.mrb[0].mxu0
    %v737 = vadd.f32 %v404, %v736
    %738 = vmatprep.mubr.f32.mxu0 0.0
    %739 = vmatmul.mubr.f32.gmra.mrb[0].mxu0 %v491
    %v740 = vpop.f32.mrb[0].mxu0
    %v741 = vadd.f32 %v408, %v740
    %v742 = vpop.f32.mrb[0].mxu0
    %v743 = vadd.f32 %v410, %v742
    %744 = vdwg.mxu0
    %745 = vmatprep.subr.mxu0 0.0
    %746 = vmatpush1.msra.mxu0 %v512
    %747 = vmatprep.subr.mxu0 0.0
    %748 = vmatpush1.msra.mxu0 0.0
    %749 = vmatprep.subr.mxu0 0.0
    %750 = vmatpush1.msra.mxu0 0.0
    %751 = vmatprep.subr.mxu0 0.0
    %752 = vmatpush1.msra.mxu0 0.0
    %753 = vmatprep.subr.mxu0 0.0
    %754 = vmatpush1.msra.mxu0 0.0
    %755 = vmatprep.subr.mxu0 0.0
    %756 = vmatpush1.msra.mxu0 0.0
    %757 = vmatprep.subr.mxu0 0.0
    %758 = vmatpush1.msra.mxu0 0.0
    %759 = vmatprep.subr.mxu0 0.0
    %760 = vmatpush1.msra.mxu0 0.0
    %761 = vmatprep.subr.mxu0 0.0
    %762 = vmatpush1.msra.mxu0 0.0
    %763 = vmatprep.subr.mxu0 0.0
    %764 = vmatpush1.msra.mxu0 0.0
    %765 = vmatprep.subr.mxu0 0.0
    %766 = vmatpush1.msra.mxu0 0.0
    %767 = vmatprep.subr.mxu0 0.0
    %768 = vmatpush1.msra.mxu0 0.0
    %769 = vmatprep.subr.mxu0 0.0
    %770 = vmatpush1.msra.mxu0 0.0
    %771 = vmatprep.subr.mxu0 0.0
    %772 = vmatpush1.msra.mxu0 0.0
    %773 = vmatprep.subr.mxu0 0.0
    %774 = vmatpush1.msra.mxu0 0.0
    %775 = vmatprep.subr.mxu0 0.0
    %776 = vmatpush1.msra.mxu0 0.0
    %777 = vmatprep.subr.mxu0 0.0
    %778 = vmatpush1.msra.mxu0 0.0
    %779 = vmatprep.subr.mxu0 0.0
    %780 = vmatpush1.msra.mxu0 0.0
    %781 = vmatprep.subr.mxu0 0.0
    %782 = vmatpush1.msra.mxu0 0.0
    %783 = vmatprep.subr.mxu0 0.0
    %784 = vmatpush1.msra.mxu0 0.0
    %785 = vmatprep.subr.mxu0 0.0
    %786 = vmatpush1.msra.mxu0 0.0
    %787 = vmatprep.subr.mxu0 0.0
    %788 = vmatpush1.msra.mxu0 0.0
    %789 = vmatprep.subr.mxu0 0.0
    %790 = vmatpush1.msra.mxu0 0.0
    %791 = vmatprep.subr.mxu0 0.0
    %792 = vmatpush1.msra.mxu0 0.0
    %793 = vmatprep.subr.mxu0 0.0
    %794 = vmatpush1.msra.mxu0 0.0
    %795 = vmatprep.subr.mxu0 0.0
    %796 = vmatpush1.msra.mxu0 0.0
    %797 = vmatprep.subr.mxu0 0.0
    %798 = vmatpush1.msra.mxu0 0.0
    %799 = vmatprep.subr.mxu0 0.0
    %800 = vmatpush1.msra.mxu0 0.0
    %801 = vmatprep.subr.mxu0 0.0
    %802 = vmatpush1.msra.mxu0 0.0
    %803 = vmatprep.subr.mxu0 0.0
    %804 = vmatpush1.msra.mxu0 0.0
    %805 = vmatprep.subr.mxu0 0.0
    %806 = vmatpush1.msra.mxu0 0.0
    %807 = vmatprep.subr.mxu0 0.0
    %808 = vmatpush1.msra.mxu0 0.0
    %809 = vmatprep.mubr.f32.mxu0 0.0
    %810 = vmatmul.mubr.f32.gmra.mrb[0].mxu0 %v488
    %v811 = vpop.f32.mrb[0].mxu0
    %v812 = vadd.f32 %v479, %v811
    %v813 = vpop.f32.mrb[0].mxu0
    %814 = vmatprep.mubr.f32.mxu0 0.0
    %815 = vmatmul.mubr.f32.gmra.mrb[0].mxu0 %v491
    %v816 = vpop.f32.mrb[0].mxu0
    %v817 = vadd.f32 %v484, %v816
    %v818 = vpop.f32.mrb[0].mxu0
    %819 = vdwg.mxu0
    %820 = vrot.lane.b32.xlu0 %v44, 27
    %v821 = vpop.permute.xlu0 %820
    %822 = vrot.lane.b32.xlu0 %v52, 27
    %v823 = vpop.permute.xlu0 %822
    %824 = vrot.lane.b32.xlu0 %v51, 27
    %v825 = vpop.permute.xlu0 %824
    %826 = vrot.lane.b32.xlu0 %v53, 27
    %v827 = vpop.permute.xlu0 %826
    %828 = vrot.lane.b32.xlu0 %v60, 27
    %v829 = vpop.permute.xlu0 %828
    %830 = vrot.lane.b32.xlu0 %v61, 27
    %v831 = vpop.permute.xlu0 %830
    %vm832 = vcmask 220160
    %v833 = vsel %vm832, %v821, %v823
    %v834 = vsel %vm832, %v823, %v825
    %v835 = vsel %vm832, %v825, %v827
    %v836 = vsel %vm832, %v827, %v829
    %v837 = vsel %vm832, %v829, %v831
    %v845 = vsel %vm832, 0.0, %v821
    %s846 = scalar_lea.vmem %s3, 2
    %v847 = vld [vmem:[%s846] ss:$8 sm:$0xf]
    %v848 = vld [vmem:[%s846] ss:$8 sm:$0x70]
    %v849 = vor.u32 %v847, %v848
    %v851 = vlaneseq
    %v852 = vshrl.u32 %v851, 7
    %v853 = vsub.s32 0, %v852
    %v854 = vrot.slane %v849, %v853
    %v855 = vlaneseq
    %v856 = vshrl.u32 %v855, 7
    %v857 = vsub.s32 1, %v856
    %v858 = vrot.slane %v849, %v857
    %v859 = vlaneseq
    %v860 = vshrl.u32 %v859, 7
    %v861 = vsub.s32 2, %v860
    %v862 = vrot.slane %v849, %v861
    %v863 = vlaneseq
    %v864 = vshrl.u32 %v863, 7
    %v865 = vsub.s32 3, %v864
    %v866 = vrot.slane %v849, %v865
    %v867 = vlaneseq
    %v868 = vshrl.u32 %v867, 7
    %v869 = vsub.s32 4, %v868
    %v870 = vrot.slane %v849, %v869
    %v871 = vlaneseq
    %v872 = vshrl.u32 %v871, 7
    %v873 = vsub.s32 5, %v872
    %v874 = vrot.slane %v849, %v873
    %v875 = vlaneseq
    %v876 = vshrl.u32 %v875, 7
    %v877 = vsub.s32 6, %v876
    %v878 = vrot.slane %v849, %v877
    %v886 = vmul.f32 %v845, %v854
    %v887 = vmul.f32 %v833, %v858
    %v888 = vmul.f32 %v834, %v862
    %v889 = vmul.f32 %v835, %v866
    %v890 = vmul.f32 %v836, %v870
    %v891 = vmul.f32 %v837, %v874
    %v892 = vmul.f32 %v831, %v878
    %v893 = vld [vmem:[%s1 + $0x20] sm:$0xff]
    %v894 = vld [vmem:[%s1 + $0x28] sm:$0xff]
    %v896 = vsel %vm158, %v893, 0
    %v899 = vsel %vm158, %v894, 0
    %v902 = vsel %vm165, %v886, 0
    %v905 = vsel %vm165, %v887, 0
    %v908 = vsel %vm165, %v888, 0
    %v911 = vsel %vm165, %v889, 0
    %v914 = vsel %vm165, %v890, 0
    %v917 = vsel %vm165, %v891, 0
    %v920 = vsel %vm165, %v892, 0
    %922 = vmatprep.subr.mxu0 %v905
    %923 = vmatpush1.msra.mxu0 %v902
    %924 = vmatprep.subr.mxu0 0.0
    %925 = vmatpush1.msra.mxu0 0.0
    %926 = vmatprep.subr.mxu0 0.0
    %927 = vmatpush1.msra.mxu0 0.0
    %928 = vmatprep.subr.mxu0 0.0
    %929 = vmatpush1.msra.mxu0 0.0
    %930 = vmatprep.subr.mxu0 0.0
    %931 = vmatpush1.msra.mxu0 0.0
    %932 = vmatprep.subr.mxu0 0.0
    %933 = vmatpush1.msra.mxu0 0.0
    %934 = vmatprep.subr.mxu0 0.0
    %935 = vmatpush1.msra.mxu0 0.0
    %936 = vmatprep.subr.mxu0 0.0
    %937 = vmatpush1.msra.mxu0 0.0
    %938 = vmatprep.subr.mxu0 0.0
    %939 = vmatpush1.msra.mxu0 0.0
    %940 = vmatprep.subr.mxu0 0.0
    %941 = vmatpush1.msra.mxu0 0.0
    %942 = vmatprep.subr.mxu0 0.0
    %943 = vmatpush1.msra.mxu0 0.0
    %944 = vmatprep.subr.mxu0 0.0
    %945 = vmatpush1.msra.mxu0 0.0
    %946 = vmatprep.subr.mxu0 0.0
    %947 = vmatpush1.msra.mxu0 0.0
    %948 = vmatprep.subr.mxu0 0.0
    %949 = vmatpush1.msra.mxu0 0.0
    %950 = vmatprep.subr.mxu0 0.0
    %951 = vmatpush1.msra.mxu0 0.0
    %952 = vmatprep.subr.mxu0 0.0
    %953 = vmatpush1.msra.mxu0 0.0
    %954 = vmatprep.subr.mxu0 0.0
    %955 = vmatpush1.msra.mxu0 0.0
    %956 = vmatprep.subr.mxu0 0.0
    %957 = vmatpush1.msra.mxu0 0.0
    %958 = vmatprep.subr.mxu0 0.0
    %959 = vmatpush1.msra.mxu0 0.0
    %960 = vmatprep.subr.mxu0 0.0
    %961 = vmatpush1.msra.mxu0 0.0
    %962 = vmatprep.subr.mxu0 0.0
    %963 = vmatpush1.msra.mxu0 0.0
    %964 = vmatprep.subr.mxu0 0.0
    %965 = vmatpush1.msra.mxu0 0.0
    %966 = vmatprep.subr.mxu0 0.0
    %967 = vmatpush1.msra.mxu0 0.0
    %968 = vmatprep.subr.mxu0 0.0
    %969 = vmatpush1.msra.mxu0 0.0
    %970 = vmatprep.subr.mxu0 0.0
    %971 = vmatpush1.msra.mxu0 0.0
    %972 = vmatprep.subr.mxu0 0.0
    %973 = vmatpush1.msra.mxu0 0.0
    %974 = vmatprep.subr.mxu0 0.0
    %975 = vmatpush1.msra.mxu0 0.0
    %976 = vmatprep.subr.mxu0 0.0
    %977 = vmatpush1.msra.mxu0 0.0
    %978 = vmatprep.subr.mxu0 0.0
    %979 = vmatpush1.msra.mxu0 0.0
    %980 = vmatprep.subr.mxu0 0.0
    %981 = vmatpush1.msra.mxu0 0.0
    %982 = vmatprep.subr.mxu0 0.0
    %983 = vmatpush1.msra.mxu0 0.0
    %984 = vmatprep.subr.mxu0 0.0
    %985 = vmatpush1.msra.mxu0 0.0
    %986 = vmatprep.mubr.f32.mxu0 0.0
    %987 = vmatmul.mubr.f32.gmra.mrb[0].mxu0 %v896
    %v988 = vpop.f32.mrb[0].mxu0
    %v989 = vadd.f32 0.0, %v988
    %v990 = vpop.f32.mrb[0].mxu0
    %v991 = vadd.f32 0.0, %v990
    %992 = vmatprep.mubr.f32.mxu0 0.0
    %993 = vmatmul.mubr.f32.gmra.mrb[0].mxu0 %v899
    %v994 = vpop.f32.mrb[0].mxu0
    %v995 = vadd.f32 0.0, %v994
    %v996 = vpop.f32.mrb[0].mxu0
    %v997 = vadd.f32 0.0, %v996
    %998 = vdwg.mxu0
    %999 = vmatprep.subr.mxu0 %v911
    %1000 = vmatpush1.msra.mxu0 %v908
    %1001 = vmatprep.subr.mxu0 0.0
    %1002 = vmatpush1.msra.mxu0 0.0
    %1003 = vmatprep.subr.mxu0 0.0
    %1004 = vmatpush1.msra.mxu0 0.0
    %1005 = vmatprep.subr.mxu0 0.0
    %1006 = vmatpush1.msra.mxu0 0.0
    %1007 = vmatprep.subr.mxu0 0.0
    %1008 = vmatpush1.msra.mxu0 0.0
    %1009 = vmatprep.subr.mxu0 0.0
    %1010 = vmatpush1.msra.mxu0 0.0
    %1011 = vmatprep.subr.mxu0 0.0
    %1012 = vmatpush1.msra.mxu0 0.0
    %1013 = vmatprep.subr.mxu0 0.0
    %1014 = vmatpush1.msra.mxu0 0.0
    %1015 = vmatprep.subr.mxu0 0.0
    %1016 = vmatpush1.msra.mxu0 0.0
    %1017 = vmatprep.subr.mxu0 0.0
    %1018 = vmatpush1.msra.mxu0 0.0
    %1019 = vmatprep.subr.mxu0 0.0
    %1020 = vmatpush1.msra.mxu0 0.0
    %1021 = vmatprep.subr.mxu0 0.0
    %1022 = vmatpush1.msra.mxu0 0.0
    %1023 = vmatprep.subr.mxu0 0.0
    %1024 = vmatpush1.msra.mxu0 0.0
    %1025 = vmatprep.subr.mxu0 0.0
    %1026 = vmatpush1.msra.mxu0 0.0
    %1027 = vmatprep.subr.mxu0 0.0
    %1028 = vmatpush1.msra.mxu0 0.0
    %1029 = vmatprep.subr.mxu0 0.0
    %1030 = vmatpush1.msra.mxu0 0.0
    %1031 = vmatprep.subr.mxu0 0.0
    %1032 = vmatpush1.msra.mxu0 0.0
    %1033 = vmatprep.subr.mxu0 0.0
    %1034 = vmatpush1.msra.mxu0 0.0
    %1035 = vmatprep.subr.mxu0 0.0
    %1036 = vmatpush1.msra.mxu0 0.0
    %1037 = vmatprep.subr.mxu0 0.0
    %1038 = vmatpush1.msra.mxu0 0.0
    %1039 = vmatprep.subr.mxu0 0.0
    %1040 = vmatpush1.msra.mxu0 0.0
    %1041 = vmatprep.subr.mxu0 0.0
    %1042 = vmatpush1.msra.mxu0 0.0
    %1043 = vmatprep.subr.mxu0 0.0
    %1044 = vmatpush1.msra.mxu0 0.0
    %1045 = vmatprep.subr.mxu0 0.0
    %1046 = vmatpush1.msra.mxu0 0.0
    %1047 = vmatprep.subr.mxu0 0.0
    %1048 = vmatpush1.msra.mxu0 0.0
    %1049 = vmatprep.subr.mxu0 0.0
    %1050 = vmatpush1.msra.mxu0 0.0
    %1051 = vmatprep.subr.mxu0 0.0
    %1052 = vmatpush1.msra.mxu0 0.0
    %1053 = vmatprep.subr.mxu0 0.0
    %1054 = vmatpush1.msra.mxu0 0.0
    %1055 = vmatprep.subr.mxu0 0.0
    %1056 = vmatpush1.msra.mxu0 0.0
    %1057 = vmatprep.subr.mxu0 0.0
    %1058 = vmatpush1.msra.mxu0 0.0
    %1059 = vmatprep.subr.mxu0 0.0
    %1060 = vmatpush1.msra.mxu0 0.0
    %1061 = vmatprep.subr.mxu0 0.0
    %1062 = vmatpush1.msra.mxu0 0.0
    %1063 = vmatprep.mubr.f32.mxu0 0.0
    %1064 = vmatmul.mubr.f32.gmra.mrb[0].mxu0 %v896
    %v1065 = vpop.f32.mrb[0].mxu0
    %v1066 = vadd.f32 0.0, %v1065
    %v1067 = vpop.f32.mrb[0].mxu0
    %v1068 = vadd.f32 0.0, %v1067
    %1069 = vmatprep.mubr.f32.mxu0 0.0
    %1070 = vmatmul.mubr.f32.gmra.mrb[0].mxu0 %v899
    %v1071 = vpop.f32.mrb[0].mxu0
    %v1072 = vadd.f32 0.0, %v1071
    %v1073 = vpop.f32.mrb[0].mxu0
    %v1074 = vadd.f32 0.0, %v1073
    %1075 = vdwg.mxu0
    %1076 = vmatprep.subr.mxu0 %v917
    %1077 = vmatpush1.msra.mxu0 %v914
    %1078 = vmatprep.subr.mxu0 0.0
    %1079 = vmatpush1.msra.mxu0 0.0
    %1080 = vmatprep.subr.mxu0 0.0
    %1081 = vmatpush1.msra.mxu0 0.0
    %1082 = vmatprep.subr.mxu0 0.0
    %1083 = vmatpush1.msra.mxu0 0.0
    %1084 = vmatprep.subr.mxu0 0.0
    %1085 = vmatpush1.msra.mxu0 0.0
    %1086 = vmatprep.subr.mxu0 0.0
    %1087 = vmatpush1.msra.mxu0 0.0
    %1088 = vmatprep.subr.mxu0 0.0
    %1089 = vmatpush1.msra.mxu0 0.0
    %1090 = vmatprep.subr.mxu0 0.0
    %1091 = vmatpush1.msra.mxu0 0.0
    %1092 = vmatprep.subr.mxu0 0.0
    %1093 = vmatpush1.msra.mxu0 0.0
    %1094 = vmatprep.subr.mxu0 0.0
    %1095 = vmatpush1.msra.mxu0 0.0
    %1096 = vmatprep.subr.mxu0 0.0
    %1097 = vmatpush1.msra.mxu0 0.0
    %1098 = vmatprep.subr.mxu0 0.0
    %1099 = vmatpush1.msra.mxu0 0.0
    %1100 = vmatprep.subr.mxu0 0.0
    %1101 = vmatpush1.msra.mxu0 0.0
    %1102 = vmatprep.subr.mxu0 0.0
    %1103 = vmatpush1.msra.mxu0 0.0
    %1104 = vmatprep.subr.mxu0 0.0
    %1105 = vmatpush1.msra.mxu0 0.0
    %1106 = vmatprep.subr.mxu0 0.0
    %1107 = vmatpush1.msra.mxu0 0.0
    %1108 = vmatprep.subr.mxu0 0.0
    %1109 = vmatpush1.msra.mxu0 0.0
    %1110 = vmatprep.subr.mxu0 0.0
    %1111 = vmatpush1.msra.mxu0 0.0
    %1112 = vmatprep.subr.mxu0 0.0
    %1113 = vmatpush1.msra.mxu0 0.0
    %1114 = vmatprep.subr.mxu0 0.0
    %1115 = vmatpush1.msra.mxu0 0.0
    %1116 = vmatprep.subr.mxu0 0.0
    %1117 = vmatpush1.msra.mxu0 0.0
    %1118 = vmatprep.subr.mxu0 0.0
    %1119 = vmatpush1.msra.mxu0 0.0
    %1120 = vmatprep.subr.mxu0 0.0
    %1121 = vmatpush1.msra.mxu0 0.0
    %1122 = vmatprep.subr.mxu0 0.0
    %1123 = vmatpush1.msra.mxu0 0.0
    %1124 = vmatprep.subr.mxu0 0.0
    %1125 = vmatpush1.msra.mxu0 0.0
    %1126 = vmatprep.subr.mxu0 0.0
    %1127 = vmatpush1.msra.mxu0 0.0
    %1128 = vmatprep.subr.mxu0 0.0
    %1129 = vmatpush1.msra.mxu0 0.0
    %1130 = vmatprep.subr.mxu0 0.0
    %1131 = vmatpush1.msra.mxu0 0.0
    %1132 = vmatprep.subr.mxu0 0.0
    %1133 = vmatpush1.msra.mxu0 0.0
    %1134 = vmatprep.subr.mxu0 0.0
    %1135 = vmatpush1.msra.mxu0 0.0
    %1136 = vmatprep.subr.mxu0 0.0
    %1137 = vmatpush1.msra.mxu0 0.0
    %1138 = vmatprep.subr.mxu0 0.0
    %1139 = vmatpush1.msra.mxu0 0.0
    %1140 = vmatprep.mubr.f32.mxu0 0.0
    %1141 = vmatmul.mubr.f32.gmra.mrb[0].mxu0 %v896
    %v1142 = vpop.f32.mrb[0].mxu0
    %v1143 = vadd.f32 0.0, %v1142
    %v1144 = vpop.f32.mrb[0].mxu0
    %v1145 = vadd.f32 0.0, %v1144
    %1146 = vmatprep.mubr.f32.mxu0 0.0
    %1147 = vmatmul.mubr.f32.gmra.mrb[0].mxu0 %v899
    %v1148 = vpop.f32.mrb[0].mxu0
    %v1149 = vadd.f32 0.0, %v1148
    %v1150 = vpop.f32.mrb[0].mxu0
    %v1151 = vadd.f32 0.0, %v1150
    %1152 = vdwg.mxu0
    %1153 = vmatprep.subr.mxu0 0.0
    %1154 = vmatpush1.msra.mxu0 %v920
    %1155 = vmatprep.subr.mxu0 0.0
    %1156 = vmatpush1.msra.mxu0 0.0
    %1157 = vmatprep.subr.mxu0 0.0
    %1158 = vmatpush1.msra.mxu0 0.0
    %1159 = vmatprep.subr.mxu0 0.0
    %1160 = vmatpush1.msra.mxu0 0.0
    %1161 = vmatprep.subr.mxu0 0.0
    %1162 = vmatpush1.msra.mxu0 0.0
    %1163 = vmatprep.subr.mxu0 0.0
    %1164 = vmatpush1.msra.mxu0 0.0
    %1165 = vmatprep.subr.mxu0 0.0
    %1166 = vmatpush1.msra.mxu0 0.0
    %1167 = vmatprep.subr.mxu0 0.0
    %1168 = vmatpush1.msra.mxu0 0.0
    %1169 = vmatprep.subr.mxu0 0.0
    %1170 = vmatpush1.msra.mxu0 0.0
    %1171 = vmatprep.subr.mxu0 0.0
    %1172 = vmatpush1.msra.mxu0 0.0
    %1173 = vmatprep.subr.mxu0 0.0
    %1174 = vmatpush1.msra.mxu0 0.0
    %1175 = vmatprep.subr.mxu0 0.0
    %1176 = vmatpush1.msra.mxu0 0.0
    %1177 = vmatprep.subr.mxu0 0.0
    %1178 = vmatpush1.msra.mxu0 0.0
    %1179 = vmatprep.subr.mxu0 0.0
    %1180 = vmatpush1.msra.mxu0 0.0
    %1181 = vmatprep.subr.mxu0 0.0
    %1182 = vmatpush1.msra.mxu0 0.0
    %1183 = vmatprep.subr.mxu0 0.0
    %1184 = vmatpush1.msra.mxu0 0.0
    %1185 = vmatprep.subr.mxu0 0.0
    %1186 = vmatpush1.msra.mxu0 0.0
    %1187 = vmatprep.subr.mxu0 0.0
    %1188 = vmatpush1.msra.mxu0 0.0
    %1189 = vmatprep.subr.mxu0 0.0
    %1190 = vmatpush1.msra.mxu0 0.0
    %1191 = vmatprep.subr.mxu0 0.0
    %1192 = vmatpush1.msra.mxu0 0.0
    %1193 = vmatprep.subr.mxu0 0.0
    %1194 = vmatpush1.msra.mxu0 0.0
    %1195 = vmatprep.subr.mxu0 0.0
    %1196 = vmatpush1.msra.mxu0 0.0
    %1197 = vmatprep.subr.mxu0 0.0
    %1198 = vmatpush1.msra.mxu0 0.0
    %1199 = vmatprep.subr.mxu0 0.0
    %1200 = vmatpush1.msra.mxu0 0.0
    %1201 = vmatprep.subr.mxu0 0.0
    %1202 = vmatpush1.msra.mxu0 0.0
    %1203 = vmatprep.subr.mxu0 0.0
    %1204 = vmatpush1.msra.mxu0 0.0
    %1205 = vmatprep.subr.mxu0 0.0
    %1206 = vmatpush1.msra.mxu0 0.0
    %1207 = vmatprep.subr.mxu0 0.0
    %1208 = vmatpush1.msra.mxu0 0.0
    %1209 = vmatprep.subr.mxu0 0.0
    %1210 = vmatpush1.msra.mxu0 0.0
    %1211 = vmatprep.subr.mxu0 0.0
    %1212 = vmatpush1.msra.mxu0 0.0
    %1213 = vmatprep.subr.mxu0 0.0
    %1214 = vmatpush1.msra.mxu0 0.0
    %1215 = vmatprep.subr.mxu0 0.0
    %1216 = vmatpush1.msra.mxu0 0.0
    %1217 = vmatprep.mubr.f32.mxu0 0.0
    %1218 = vmatmul.mubr.f32.gmra.mrb[0].mxu0 %v896
    %v1219 = vpop.f32.mrb[0].mxu0
    %v1220 = vadd.f32 0.0, %v1219
    %v1221 = vpop.f32.mrb[0].mxu0
    %1222 = vmatprep.mubr.f32.mxu0 0.0
    %1223 = vmatmul.mubr.f32.gmra.mrb[0].mxu0 %v899
    %v1224 = vpop.f32.mrb[0].mxu0
    %v1225 = vadd.f32 0.0, %v1224
    %v1226 = vpop.f32.mrb[0].mxu0
    %1227 = vdwg.mxu0
    %v1228 = vadd.f32 %v581, %v989
    %v1229 = vadd.f32 %v583, %v991
    %v1230 = vadd.f32 %v658, %v1066
    %v1231 = vadd.f32 %v660, %v1068
    %v1232 = vadd.f32 %v735, %v1143
    %v1233 = vadd.f32 %v737, %v1145
    %v1234 = vadd.f32 %v812, %v1220
    %v1235 = vadd.f32 %v587, %v995
    %v1236 = vadd.f32 %v589, %v997
    %v1237 = vadd.f32 %v664, %v1072
    %v1238 = vadd.f32 %v666, %v1074
    %v1239 = vadd.f32 %v741, %v1149
    %v1240 = vadd.f32 %v743, %v1151
    %v1241 = vadd.f32 %v817, %v1225
    %v1242 = vcombine.high %v34, %v34
    %v1244 = vunpack.c.l.s4 1983009808
    %v1245 = vunpack.c.0.s8 %v1244
    %v1246 = vlaneseq
    %v1247 = vshrl.u32 %v1246, 7
    %v1248 = vsub.s32 %v1245, %v1247
    %v1249 = vrot.slane %v1242, %v1248
    %1250 = vrot.lane.b32.xlu0 %v44, 1
    %v1251 = vpop.permute.xlu0 %1250
    %1252 = vrot.lane.b32.xlu0 %v52, 1
    %v1253 = vpop.permute.xlu0 %1252
    %1254 = vrot.lane.b32.xlu0 %v51, 1
    %v1255 = vpop.permute.xlu0 %1254
    %1256 = vrot.lane.b32.xlu0 %v53, 1
    %v1257 = vpop.permute.xlu0 %1256
    %1258 = vrot.lane.b32.xlu0 %v60, 1
    %v1259 = vpop.permute.xlu0 %1258
    %1260 = vrot.lane.b32.xlu0 %v61, 1
    %v1261 = vpop.permute.xlu0 %1260
    %1262 = vrot.lane.b32.xlu0 %v1249, 1
    %v1263 = vpop.permute.xlu0 %1262
    %vm1264 = vcmask 7168
    %v1265 = vsel %vm1264, %v1251, %v1253
    %v1266 = vsel %vm1264, %v1253, %v1255
    %v1267 = vsel %vm1264, %v1255, %v1257
    %v1268 = vsel %vm1264, %v1257, %v1259
    %v1269 = vsel %vm1264, %v1259, %v1261
    %v1270 = vsel %vm1264, %v1261, %v1263
    %v1278 = vsel %vm1264, 0.0, %v1251
    %s1279 = scalar_lea.vmem %s3, 3
    %v1280 = vld [vmem:[%s1279] ss:$8 sm:$0xf]
    %v1281 = vld [vmem:[%s1279] ss:$8 sm:$0x70]
    %v1282 = vor.u32 %v1280, %v1281
    %v1284 = vlaneseq
    %v1285 = vshrl.u32 %v1284, 7
    %v1286 = vsub.s32 0, %v1285
    %v1287 = vrot.slane %v1282, %v1286
    %v1288 = vlaneseq
    %v1289 = vshrl.u32 %v1288, 7
    %v1290 = vsub.s32 1, %v1289
    %v1291 = vrot.slane %v1282, %v1290
    %v1292 = vlaneseq
    %v1293 = vshrl.u32 %v1292, 7
    %v1294 = vsub.s32 2, %v1293
    %v1295 = vrot.slane %v1282, %v1294
    %v1296 = vlaneseq
    %v1297 = vshrl.u32 %v1296, 7
    %v1298 = vsub.s32 3, %v1297
    %v1299 = vrot.slane %v1282, %v1298
    %v1300 = vlaneseq
    %v1301 = vshrl.u32 %v1300, 7
    %v1302 = vsub.s32 4, %v1301
    %v1303 = vrot.slane %v1282, %v1302
    %v1304 = vlaneseq
    %v1305 = vshrl.u32 %v1304, 7
    %v1306 = vsub.s32 5, %v1305
    %v1307 = vrot.slane %v1282, %v1306
    %v1308 = vlaneseq
    %v1309 = vshrl.u32 %v1308, 7
    %v1310 = vsub.s32 6, %v1309
    %v1311 = vrot.slane %v1282, %v1310
    %v1319 = vmul.f32 %v1278, %v1287
    %v1320 = vmul.f32 %v1265, %v1291
    %v1321 = vmul.f32 %v1266, %v1295
    %v1322 = vmul.f32 %v1267, %v1299
    %v1323 = vmul.f32 %v1268, %v1303
    %v1324 = vmul.f32 %v1269, %v1307
    %v1325 = vmul.f32 %v1270, %v1311
    %v1326 = vld [vmem:[%s1 + $0x30] sm:$0xff]
    %v1327 = vld [vmem:[%s1 + $0x38] sm:$0xff]
    %v1329 = vsel %vm158, %v1326, 0
    %v1332 = vsel %vm158, %v1327, 0
    %v1335 = vsel %vm165, %v1319, 0
    %v1338 = vsel %vm165, %v1320, 0
    %v1341 = vsel %vm165, %v1321, 0
    %v1344 = vsel %vm165, %v1322, 0
    %v1347 = vsel %vm165, %v1323, 0
    %v1350 = vsel %vm165, %v1324, 0
    %v1353 = vsel %vm165, %v1325, 0
    %1355 = vmatprep.subr.mxu0 %v1338
    %1356 = vmatpush1.msra.mxu0 %v1335
    %1357 = vmatprep.subr.mxu0 0.0
    %1358 = vmatpush1.msra.mxu0 0.0
    %1359 = vmatprep.subr.mxu0 0.0
    %1360 = vmatpush1.msra.mxu0 0.0
    %1361 = vmatprep.subr.mxu0 0.0
    %1362 = vmatpush1.msra.mxu0 0.0
    %1363 = vmatprep.subr.mxu0 0.0
    %1364 = vmatpush1.msra.mxu0 0.0
    %1365 = vmatprep.subr.mxu0 0.0
    %1366 = vmatpush1.msra.mxu0 0.0
    %1367 = vmatprep.subr.mxu0 0.0
    %1368 = vmatpush1.msra.mxu0 0.0
    %1369 = vmatprep.subr.mxu0 0.0
    %1370 = vmatpush1.msra.mxu0 0.0
    %1371 = vmatprep.subr.mxu0 0.0
    %1372 = vmatpush1.msra.mxu0 0.0
    %1373 = vmatprep.subr.mxu0 0.0
    %1374 = vmatpush1.msra.mxu0 0.0
    %1375 = vmatprep.subr.mxu0 0.0
    %1376 = vmatpush1.msra.mxu0 0.0
    %1377 = vmatprep.subr.mxu0 0.0
    %1378 = vmatpush1.msra.mxu0 0.0
    %1379 = vmatprep.subr.mxu0 0.0
    %1380 = vmatpush1.msra.mxu0 0.0
    %1381 = vmatprep.subr.mxu0 0.0
    %1382 = vmatpush1.msra.mxu0 0.0
    %1383 = vmatprep.subr.mxu0 0.0
    %1384 = vmatpush1.msra.mxu0 0.0
    %1385 = vmatprep.subr.mxu0 0.0
    %1386 = vmatpush1.msra.mxu0 0.0
    %1387 = vmatprep.subr.mxu0 0.0
    %1388 = vmatpush1.msra.mxu0 0.0
    %1389 = vmatprep.subr.mxu0 0.0
    %1390 = vmatpush1.msra.mxu0 0.0
    %1391 = vmatprep.subr.mxu0 0.0
    %1392 = vmatpush1.msra.mxu0 0.0
    %1393 = vmatprep.subr.mxu0 0.0
    %1394 = vmatpush1.msra.mxu0 0.0
    %1395 = vmatprep.subr.mxu0 0.0
    %1396 = vmatpush1.msra.mxu0 0.0
    %1397 = vmatprep.subr.mxu0 0.0
    %1398 = vmatpush1.msra.mxu0 0.0
    %1399 = vmatprep.subr.mxu0 0.0
    %1400 = vmatpush1.msra.mxu0 0.0
    %1401 = vmatprep.subr.mxu0 0.0
    %1402 = vmatpush1.msra.mxu0 0.0
    %1403 = vmatprep.subr.mxu0 0.0
    %1404 = vmatpush1.msra.mxu0 0.0
    %1405 = vmatprep.subr.mxu0 0.0
    %1406 = vmatpush1.msra.mxu0 0.0
    %1407 = vmatprep.subr.mxu0 0.0
    %1408 = vmatpush1.msra.mxu0 0.0
    %1409 = vmatprep.subr.mxu0 0.0
    %1410 = vmatpush1.msra.mxu0 0.0
    %1411 = vmatprep.subr.mxu0 0.0
    %1412 = vmatpush1.msra.mxu0 0.0
    %1413 = vmatprep.subr.mxu0 0.0
    %1414 = vmatpush1.msra.mxu0 0.0
    %1415 = vmatprep.subr.mxu0 0.0
    %1416 = vmatpush1.msra.mxu0 0.0
    %1417 = vmatprep.subr.mxu0 0.0
    %1418 = vmatpush1.msra.mxu0 0.0
    %1419 = vmatprep.mubr.f32.mxu0 0.0
    %1420 = vmatmul.mubr.f32.gmra.mrb[0].mxu0 %v1329
    %v1421 = vpop.f32.mrb[0].mxu0
    %v1422 = vadd.f32 0.0, %v1421
    %v1423 = vpop.f32.mrb[0].mxu0
    %v1424 = vadd.f32 0.0, %v1423
    %1425 = vmatprep.mubr.f32.mxu0 0.0
    %1426 = vmatmul.mubr.f32.gmra.mrb[0].mxu0 %v1332
    %v1427 = vpop.f32.mrb[0].mxu0
    %v1428 = vadd.f32 0.0, %v1427
    %v1429 = vpop.f32.mrb[0].mxu0
    %v1430 = vadd.f32 0.0, %v1429
    %1431 = vdwg.mxu0
    %1432 = vmatprep.subr.mxu0 %v1344
    %1433 = vmatpush1.msra.mxu0 %v1341
    %1434 = vmatprep.subr.mxu0 0.0
    %1435 = vmatpush1.msra.mxu0 0.0
    %1436 = vmatprep.subr.mxu0 0.0
    %1437 = vmatpush1.msra.mxu0 0.0
    %1438 = vmatprep.subr.mxu0 0.0
    %1439 = vmatpush1.msra.mxu0 0.0
    %1440 = vmatprep.subr.mxu0 0.0
    %1441 = vmatpush1.msra.mxu0 0.0
    %1442 = vmatprep.subr.mxu0 0.0
    %1443 = vmatpush1.msra.mxu0 0.0
    %1444 = vmatprep.subr.mxu0 0.0
    %1445 = vmatpush1.msra.mxu0 0.0
    %1446 = vmatprep.subr.mxu0 0.0
    %1447 = vmatpush1.msra.mxu0 0.0
    %1448 = vmatprep.subr.mxu0 0.0
    %1449 = vmatpush1.msra.mxu0 0.0
    %1450 = vmatprep.subr.mxu0 0.0
    %1451 = vmatpush1.msra.mxu0 0.0
    %1452 = vmatprep.subr.mxu0 0.0
    %1453 = vmatpush1.msra.mxu0 0.0
    %1454 = vmatprep.subr.mxu0 0.0
    %1455 = vmatpush1.msra.mxu0 0.0
    %1456 = vmatprep.subr.mxu0 0.0
    %1457 = vmatpush1.msra.mxu0 0.0
    %1458 = vmatprep.subr.mxu0 0.0
    %1459 = vmatpush1.msra.mxu0 0.0
    %1460 = vmatprep.subr.mxu0 0.0
    %1461 = vmatpush1.msra.mxu0 0.0
    %1462 = vmatprep.subr.mxu0 0.0
    %1463 = vmatpush1.msra.mxu0 0.0
    %1464 = vmatprep.subr.mxu0 0.0
    %1465 = vmatpush1.msra.mxu0 0.0
    %1466 = vmatprep.subr.mxu0 0.0
    %1467 = vmatpush1.msra.mxu0 0.0
    %1468 = vmatprep.subr.mxu0 0.0
    %1469 = vmatpush1.msra.mxu0 0.0
    %1470 = vmatprep.subr.mxu0 0.0
    %1471 = vmatpush1.msra.mxu0 0.0
    %1472 = vmatprep.subr.mxu0 0.0
    %1473 = vmatpush1.msra.mxu0 0.0
    %1474 = vmatprep.subr.mxu0 0.0
    %1475 = vmatpush1.msra.mxu0 0.0
    %1476 = vmatprep.subr.mxu0 0.0
    %1477 = vmatpush1.msra.mxu0 0.0
    %1478 = vmatprep.subr.mxu0 0.0
    %1479 = vmatpush1.msra.mxu0 0.0
    %1480 = vmatprep.subr.mxu0 0.0
    %1481 = vmatpush1.msra.mxu0 0.0
    %1482 = vmatprep.subr.mxu0 0.0
    %1483 = vmatpush1.msra.mxu0 0.0
    %1484 = vmatprep.subr.mxu0 0.0
    %1485 = vmatpush1.msra.mxu0 0.0
    %1486 = vmatprep.subr.mxu0 0.0
    %1487 = vmatpush1.msra.mxu0 0.0
    %1488 = vmatprep.subr.mxu0 0.0
    %1489 = vmatpush1.msra.mxu0 0.0
    %1490 = vmatprep.subr.mxu0 0.0
    %1491 = vmatpush1.msra.mxu0 0.0
    %1492 = vmatprep.subr.mxu0 0.0
    %1493 = vmatpush1.msra.mxu0 0.0
    %1494 = vmatprep.subr.mxu0 0.0
    %1495 = vmatpush1.msra.mxu0 0.0
    %1496 = vmatprep.mubr.f32.mxu0 0.0
    %1497 = vmatmul.mubr.f32.gmra.mrb[0].mxu0 %v1329
    %v1498 = vpop.f32.mrb[0].mxu0
    %v1499 = vadd.f32 0.0, %v1498
    %v1500 = vpop.f32.mrb[0].mxu0
    %v1501 = vadd.f32 0.0, %v1500
    %1502 = vmatprep.mubr.f32.mxu0 0.0
    %1503 = vmatmul.mubr.f32.gmra.mrb[0].mxu0 %v1332
    %v1504 = vpop.f32.mrb[0].mxu0
    %v1505 = vadd.f32 0.0, %v1504
    %v1506 = vpop.f32.mrb[0].mxu0
    %v1507 = vadd.f32 0.0, %v1506
    %1508 = vdwg.mxu0
    %1509 = vmatprep.subr.mxu0 %v1350
    %1510 = vmatpush1.msra.mxu0 %v1347
    %1511 = vmatprep.subr.mxu0 0.0
    %1512 = vmatpush1.msra.mxu0 0.0
    %1513 = vmatprep.subr.mxu0 0.0
    %1514 = vmatpush1.msra.mxu0 0.0
    %1515 = vmatprep.subr.mxu0 0.0
    %1516 = vmatpush1.msra.mxu0 0.0
    %1517 = vmatprep.subr.mxu0 0.0
    %1518 = vmatpush1.msra.mxu0 0.0
    %1519 = vmatprep.subr.mxu0 0.0
    %1520 = vmatpush1.msra.mxu0 0.0
    %1521 = vmatprep.subr.mxu0 0.0
    %1522 = vmatpush1.msra.mxu0 0.0
    %1523 = vmatprep.subr.mxu0 0.0
    %1524 = vmatpush1.msra.mxu0 0.0
    %1525 = vmatprep.subr.mxu0 0.0
    %1526 = vmatpush1.msra.mxu0 0.0
    %1527 = vmatprep.subr.mxu0 0.0
    %1528 = vmatpush1.msra.mxu0 0.0
    %1529 = vmatprep.subr.mxu0 0.0
    %1530 = vmatpush1.msra.mxu0 0.0
    %1531 = vmatprep.subr.mxu0 0.0
    %1532 = vmatpush1.msra.mxu0 0.0
    %1533 = vmatprep.subr.mxu0 0.0
    %1534 = vmatpush1.msra.mxu0 0.0
    %1535 = vmatprep.subr.mxu0 0.0
    %1536 = vmatpush1.msra.mxu0 0.0
    %1537 = vmatprep.subr.mxu0 0.0
    %1538 = vmatpush1.msra.mxu0 0.0
    %1539 = vmatprep.subr.mxu0 0.0
    %1540 = vmatpush1.msra.mxu0 0.0
    %1541 = vmatprep.subr.mxu0 0.0
    %1542 = vmatpush1.msra.mxu0 0.0
    %1543 = vmatprep.subr.mxu0 0.0
    %1544 = vmatpush1.msra.mxu0 0.0
    %1545 = vmatprep.subr.mxu0 0.0
    %1546 = vmatpush1.msra.mxu0 0.0
    %1547 = vmatprep.subr.mxu0 0.0
    %1548 = vmatpush1.msra.mxu0 0.0
    %1549 = vmatprep.subr.mxu0 0.0
    %1550 = vmatpush1.msra.mxu0 0.0
    %1551 = vmatprep.subr.mxu0 0.0
    %1552 = vmatpush1.msra.mxu0 0.0
    %1553 = vmatprep.subr.mxu0 0.0
    %1554 = vmatpush1.msra.mxu0 0.0
    %1555 = vmatprep.subr.mxu0 0.0
    %1556 = vmatpush1.msra.mxu0 0.0
    %1557 = vmatprep.subr.mxu0 0.0
    %1558 = vmatpush1.msra.mxu0 0.0
    %1559 = vmatprep.subr.mxu0 0.0
    %1560 = vmatpush1.msra.mxu0 0.0
    %1561 = vmatprep.subr.mxu0 0.0
    %1562 = vmatpush1.msra.mxu0 0.0
    %1563 = vmatprep.subr.mxu0 0.0
    %1564 = vmatpush1.msra.mxu0 0.0
    %1565 = vmatprep.subr.mxu0 0.0
    %1566 = vmatpush1.msra.mxu0 0.0
    %1567 = vmatprep.subr.mxu0 0.0
    %1568 = vmatpush1.msra.mxu0 0.0
    %1569 = vmatprep.subr.mxu0 0.0
    %1570 = vmatpush1.msra.mxu0 0.0
    %1571 = vmatprep.subr.mxu0 0.0
    %1572 = vmatpush1.msra.mxu0 0.0
    %1573 = vmatprep.mubr.f32.mxu0 0.0
    %1574 = vmatmul.mubr.f32.gmra.mrb[0].mxu0 %v1329
    %v1575 = vpop.f32.mrb[0].mxu0
    %v1576 = vadd.f32 0.0, %v1575
    %v1577 = vpop.f32.mrb[0].mxu0
    %v1578 = vadd.f32 0.0, %v1577
    %1579 = vmatprep.mubr.f32.mxu0 0.0
    %1580 = vmatmul.mubr.f32.gmra.mrb[0].mxu0 %v1332
    %v1581 = vpop.f32.mrb[0].mxu0
    %v1582 = vadd.f32 0.0, %v1581
    %v1583 = vpop.f32.mrb[0].mxu0
    %v1584 = vadd.f32 0.0, %v1583
    %1585 = vdwg.mxu0
    %1586 = vmatprep.subr.mxu0 0.0
    %1587 = vmatpush1.msra.mxu0 %v1353
    %1588 = vmatprep.subr.mxu0 0.0
    %1589 = vmatpush1.msra.mxu0 0.0
    %1590 = vmatprep.subr.mxu0 0.0
    %1591 = vmatpush1.msra.mxu0 0.0
    %1592 = vmatprep.subr.mxu0 0.0
    %1593 = vmatpush1.msra.mxu0 0.0
    %1594 = vmatprep.subr.mxu0 0.0
    %1595 = vmatpush1.msra.mxu0 0.0
    %1596 = vmatprep.subr.mxu0 0.0
    %1597 = vmatpush1.msra.mxu0 0.0
    %1598 = vmatprep.subr.mxu0 0.0
    %1599 = vmatpush1.msra.mxu0 0.0
    %1600 = vmatprep.subr.mxu0 0.0
    %1601 = vmatpush1.msra.mxu0 0.0
    %1602 = vmatprep.subr.mxu0 0.0
    %1603 = vmatpush1.msra.mxu0 0.0
    %1604 = vmatprep.subr.mxu0 0.0
    %1605 = vmatpush1.msra.mxu0 0.0
    %1606 = vmatprep.subr.mxu0 0.0
    %1607 = vmatpush1.msra.mxu0 0.0
    %1608 = vmatprep.subr.mxu0 0.0
    %1609 = vmatpush1.msra.mxu0 0.0
    %1610 = vmatprep.subr.mxu0 0.0
    %1611 = vmatpush1.msra.mxu0 0.0
    %1612 = vmatprep.subr.mxu0 0.0
    %1613 = vmatpush1.msra.mxu0 0.0
    %1614 = vmatprep.subr.mxu0 0.0
    %1615 = vmatpush1.msra.mxu0 0.0
    %1616 = vmatprep.subr.mxu0 0.0
    %1617 = vmatpush1.msra.mxu0 0.0
    %1618 = vmatprep.subr.mxu0 0.0
    %1619 = vmatpush1.msra.mxu0 0.0
    %1620 = vmatprep.subr.mxu0 0.0
    %1621 = vmatpush1.msra.mxu0 0.0
    %1622 = vmatprep.subr.mxu0 0.0
    %1623 = vmatpush1.msra.mxu0 0.0
    %1624 = vmatprep.subr.mxu0 0.0
    %1625 = vmatpush1.msra.mxu0 0.0
    %1626 = vmatprep.subr.mxu0 0.0
    %1627 = vmatpush1.msra.mxu0 0.0
    %1628 = vmatprep.subr.mxu0 0.0
    %1629 = vmatpush1.msra.mxu0 0.0
    %1630 = vmatprep.subr.mxu0 0.0
    %1631 = vmatpush1.msra.mxu0 0.0
    %1632 = vmatprep.subr.mxu0 0.0
    %1633 = vmatpush1.msra.mxu0 0.0
    %1634 = vmatprep.subr.mxu0 0.0
    %1635 = vmatpush1.msra.mxu0 0.0
    %1636 = vmatprep.subr.mxu0 0.0
    %1637 = vmatpush1.msra.mxu0 0.0
    %1638 = vmatprep.subr.mxu0 0.0
    %1639 = vmatpush1.msra.mxu0 0.0
    %1640 = vmatprep.subr.mxu0 0.0
    %1641 = vmatpush1.msra.mxu0 0.0
    %1642 = vmatprep.subr.mxu0 0.0
    %1643 = vmatpush1.msra.mxu0 0.0
    %1644 = vmatprep.subr.mxu0 0.0
    %1645 = vmatpush1.msra.mxu0 0.0
    %1646 = vmatprep.subr.mxu0 0.0
    %1647 = vmatpush1.msra.mxu0 0.0
    %1648 = vmatprep.subr.mxu0 0.0
    %1649 = vmatpush1.msra.mxu0 0.0
    %1650 = vmatprep.mubr.f32.mxu0 0.0
    %1651 = vmatmul.mubr.f32.gmra.mrb[0].mxu0 %v1329
    %v1652 = vpop.f32.mrb[0].mxu0
    %v1653 = vadd.f32 0.0, %v1652
    %v1654 = vpop.f32.mrb[0].mxu0
    %1655 = vmatprep.mubr.f32.mxu0 0.0
    %1656 = vmatmul.mubr.f32.gmra.mrb[0].mxu0 %v1332
    %v1657 = vpop.f32.mrb[0].mxu0
    %v1658 = vadd.f32 0.0, %v1657
    %v1659 = vpop.f32.mrb[0].mxu0
    %1660 = vdwg.mxu0
    %v1661 = vadd.f32 %v1228, %v1422
    %v1662 = vadd.f32 %v1229, %v1424
    %v1663 = vadd.f32 %v1230, %v1499
    %v1664 = vadd.f32 %v1231, %v1501
    %v1665 = vadd.f32 %v1232, %v1576
    %v1666 = vadd.f32 %v1233, %v1578
    %v1667 = vadd.f32 %v1234, %v1653
    %v1668 = vadd.f32 %v1235, %v1428
    %v1669 = vadd.f32 %v1236, %v1430
    %v1670 = vadd.f32 %v1237, %v1505
    %v1671 = vadd.f32 %v1238, %v1507
    %v1672 = vadd.f32 %v1239, %v1582
    %v1673 = vadd.f32 %v1240, %v1584
    %v1674 = vadd.f32 %v1241, %v1658
    %v1675 = vld [vmem:[%s1 + $0x40] sm:$0xff]
    %v1676 = vld [vmem:[%s1 + $0x48] sm:$0xff]
    %v1678 = vsel %vm158, %v1675, 0
    %v1681 = vsel %vm158, %v1676, 0
    %v1683 = vsel %vm165, %v44, 0
    %v1685 = vsel %vm165, %v52, 0
    %v1687 = vsel %vm165, %v51, 0
    %v1689 = vsel %vm165, %v53, 0
    %v1691 = vsel %vm165, %v60, 0
    %v1693 = vsel %vm165, %v61, 0
    %v1695 = vsel %vm165, %v1249, 0
    %1697 = vmatprep.subr.mxu0 %v1685
    %1698 = vmatpush1.msra.mxu0 %v1683
    %1699 = vmatprep.subr.mxu0 0.0
    %1700 = vmatpush1.msra.mxu0 0.0
    %1701 = vmatprep.subr.mxu0 0.0
    %1702 = vmatpush1.msra.mxu0 0.0
    %1703 = vmatprep.subr.mxu0 0.0
    %1704 = vmatpush1.msra.mxu0 0.0
    %1705 = vmatprep.subr.mxu0 0.0
    %1706 = vmatpush1.msra.mxu0 0.0
    %1707 = vmatprep.subr.mxu0 0.0
    %1708 = vmatpush1.msra.mxu0 0.0
    %1709 = vmatprep.subr.mxu0 0.0
    %1710 = vmatpush1.msra.mxu0 0.0
    %1711 = vmatprep.subr.mxu0 0.0
    %1712 = vmatpush1.msra.mxu0 0.0
    %1713 = vmatprep.subr.mxu0 0.0
    %1714 = vmatpush1.msra.mxu0 0.0
    %1715 = vmatprep.subr.mxu0 0.0
    %1716 = vmatpush1.msra.mxu0 0.0
    %1717 = vmatprep.subr.mxu0 0.0
    %1718 = vmatpush1.msra.mxu0 0.0
    %1719 = vmatprep.subr.mxu0 0.0
    %1720 = vmatpush1.msra.mxu0 0.0
    %1721 = vmatprep.subr.mxu0 0.0
    %1722 = vmatpush1.msra.mxu0 0.0
    %1723 = vmatprep.subr.mxu0 0.0
    %1724 = vmatpush1.msra.mxu0 0.0
    %1725 = vmatprep.subr.mxu0 0.0
    %1726 = vmatpush1.msra.mxu0 0.0
    %1727 = vmatprep.subr.mxu0 0.0
    %1728 = vmatpush1.msra.mxu0 0.0
    %1729 = vmatprep.subr.mxu0 0.0
    %1730 = vmatpush1.msra.mxu0 0.0
    %1731 = vmatprep.subr.mxu0 0.0
    %1732 = vmatpush1.msra.mxu0 0.0
    %1733 = vmatprep.subr.mxu0 0.0
    %1734 = vmatpush1.msra.mxu0 0.0
    %1735 = vmatprep.subr.mxu0 0.0
    %1736 = vmatpush1.msra.mxu0 0.0
    %1737 = vmatprep.subr.mxu0 0.0
    %1738 = vmatpush1.msra.mxu0 0.0
    %1739 = vmatprep.subr.mxu0 0.0
    %1740 = vmatpush1.msra.mxu0 0.0
    %1741 = vmatprep.subr.mxu0 0.0
    %1742 = vmatpush1.msra.mxu0 0.0
    %1743 = vmatprep.subr.mxu0 0.0
    %1744 = vmatpush1.msra.mxu0 0.0
    %1745 = vmatprep.subr.mxu0 0.0
    %1746 = vmatpush1.msra.mxu0 0.0
    %1747 = vmatprep.subr.mxu0 0.0
    %1748 = vmatpush1.msra.mxu0 0.0
    %1749 = vmatprep.subr.mxu0 0.0
    %1750 = vmatpush1.msra.mxu0 0.0
    %1751 = vmatprep.subr.mxu0 0.0
    %1752 = vmatpush1.msra.mxu0 0.0
    %1753 = vmatprep.subr.mxu0 0.0
    %1754 = vmatpush1.msra.mxu0 0.0
    %1755 = vmatprep.subr.mxu0 0.0
    %1756 = vmatpush1.msra.mxu0 0.0
    %1757 = vmatprep.subr.mxu0 0.0
    %1758 = vmatpush1.msra.mxu0 0.0
    %1759 = vmatprep.subr.mxu0 0.0
    %1760 = vmatpush1.msra.mxu0 0.0
    %1761 = vmatprep.mubr.f32.mxu0 0.0
    %1762 = vmatmul.mubr.f32.gmra.mrb[0].mxu0 %v1678
    %v1763 = vpop.f32.mrb[0].mxu0
    %v1764 = vadd.f32 0.0, %v1763
    %v1765 = vpop.f32.mrb[0].mxu0
    %v1766 = vadd.f32 0.0, %v1765
    %1767 = vmatprep.mubr.f32.mxu0 0.0
    %1768 = vmatmul.mubr.f32.gmra.mrb[0].mxu0 %v1681
    %v1769 = vpop.f32.mrb[0].mxu0
    %v1770 = vadd.f32 0.0, %v1769
    %v1771 = vpop.f32.mrb[0].mxu0
    %v1772 = vadd.f32 0.0, %v1771
    %1773 = vdwg.mxu0
    %1774 = vmatprep.subr.mxu0 %v1689
    %1775 = vmatpush1.msra.mxu0 %v1687
    %1776 = vmatprep.subr.mxu0 0.0
    %1777 = vmatpush1.msra.mxu0 0.0
    %1778 = vmatprep.subr.mxu0 0.0
    %1779 = vmatpush1.msra.mxu0 0.0
    %1780 = vmatprep.subr.mxu0 0.0
    %1781 = vmatpush1.msra.mxu0 0.0
    %1782 = vmatprep.subr.mxu0 0.0
    %1783 = vmatpush1.msra.mxu0 0.0
    %1784 = vmatprep.subr.mxu0 0.0
    %1785 = vmatpush1.msra.mxu0 0.0
    %1786 = vmatprep.subr.mxu0 0.0
    %1787 = vmatpush1.msra.mxu0 0.0
    %1788 = vmatprep.subr.mxu0 0.0
    %1789 = vmatpush1.msra.mxu0 0.0
    %1790 = vmatprep.subr.mxu0 0.0
    %1791 = vmatpush1.msra.mxu0 0.0
    %1792 = vmatprep.subr.mxu0 0.0
    %1793 = vmatpush1.msra.mxu0 0.0
    %1794 = vmatprep.subr.mxu0 0.0
    %1795 = vmatpush1.msra.mxu0 0.0
    %1796 = vmatprep.subr.mxu0 0.0
    %1797 = vmatpush1.msra.mxu0 0.0
    %1798 = vmatprep.subr.mxu0 0.0
    %1799 = vmatpush1.msra.mxu0 0.0
    %1800 = vmatprep.subr.mxu0 0.0
    %1801 = vmatpush1.msra.mxu0 0.0
    %1802 = vmatprep.subr.mxu0 0.0
    %1803 = vmatpush1.msra.mxu0 0.0
    %1804 = vmatprep.subr.mxu0 0.0
    %1805 = vmatpush1.msra.mxu0 0.0
    %1806 = vmatprep.subr.mxu0 0.0
    %1807 = vmatpush1.msra.mxu0 0.0
    %1808 = vmatprep.subr.mxu0 0.0
    %1809 = vmatpush1.msra.mxu0 0.0
    %1810 = vmatprep.subr.mxu0 0.0
    %1811 = vmatpush1.msra.mxu0 0.0
    %1812 = vmatprep.subr.mxu0 0.0
    %1813 = vmatpush1.msra.mxu0 0.0
    %1814 = vmatprep.subr.mxu0 0.0
    %1815 = vmatpush1.msra.mxu0 0.0
    %1816 = vmatprep.subr.mxu0 0.0
    %1817 = vmatpush1.msra.mxu0 0.0
    %1818 = vmatprep.subr.mxu0 0.0
    %1819 = vmatpush1.msra.mxu0 0.0
    %1820 = vmatprep.subr.mxu0 0.0
    %1821 = vmatpush1.msra.mxu0 0.0
    %1822 = vmatprep.subr.mxu0 0.0
    %1823 = vmatpush1.msra.mxu0 0.0
    %1824 = vmatprep.subr.mxu0 0.0
    %1825 = vmatpush1.msra.mxu0 0.0
    %1826 = vmatprep.subr.mxu0 0.0
    %1827 = vmatpush1.msra.mxu0 0.0
    %1828 = vmatprep.subr.mxu0 0.0
    %1829 = vmatpush1.msra.mxu0 0.0
    %1830 = vmatprep.subr.mxu0 0.0
    %1831 = vmatpush1.msra.mxu0 0.0
    %1832 = vmatprep.subr.mxu0 0.0
    %1833 = vmatpush1.msra.mxu0 0.0
    %1834 = vmatprep.subr.mxu0 0.0
    %1835 = vmatpush1.msra.mxu0 0.0
    %1836 = vmatprep.subr.mxu0 0.0
    %1837 = vmatpush1.msra.mxu0 0.0
    %1838 = vmatprep.mubr.f32.mxu0 0.0
    %1839 = vmatmul.mubr.f32.gmra.mrb[0].mxu0 %v1678
    %v1840 = vpop.f32.mrb[0].mxu0
    %v1841 = vadd.f32 0.0, %v1840
    %v1842 = vpop.f32.mrb[0].mxu0
    %v1843 = vadd.f32 0.0, %v1842
    %1844 = vmatprep.mubr.f32.mxu0 0.0
    %1845 = vmatmul.mubr.f32.gmra.mrb[0].mxu0 %v1681
    %v1846 = vpop.f32.mrb[0].mxu0
    %v1847 = vadd.f32 0.0, %v1846
    %v1848 = vpop.f32.mrb[0].mxu0
    %v1849 = vadd.f32 0.0, %v1848
    %1850 = vdwg.mxu0
    %1851 = vmatprep.subr.mxu0 %v1693
    %1852 = vmatpush1.msra.mxu0 %v1691
    %1853 = vmatprep.subr.mxu0 0.0
    %1854 = vmatpush1.msra.mxu0 0.0
    %1855 = vmatprep.subr.mxu0 0.0
    %1856 = vmatpush1.msra.mxu0 0.0
    %1857 = vmatprep.subr.mxu0 0.0
    %1858 = vmatpush1.msra.mxu0 0.0
    %1859 = vmatprep.subr.mxu0 0.0
    %1860 = vmatpush1.msra.mxu0 0.0
    %1861 = vmatprep.subr.mxu0 0.0
    %1862 = vmatpush1.msra.mxu0 0.0
    %1863 = vmatprep.subr.mxu0 0.0
    %1864 = vmatpush1.msra.mxu0 0.0
    %1865 = vmatprep.subr.mxu0 0.0
    %1866 = vmatpush1.msra.mxu0 0.0
    %1867 = vmatprep.subr.mxu0 0.0
    %1868 = vmatpush1.msra.mxu0 0.0
    %1869 = vmatprep.subr.mxu0 0.0
    %1870 = vmatpush1.msra.mxu0 0.0
    %1871 = vmatprep.subr.mxu0 0.0
    %1872 = vmatpush1.msra.mxu0 0.0
    %1873 = vmatprep.subr.mxu0 0.0
    %1874 = vmatpush1.msra.mxu0 0.0
    %1875 = vmatprep.subr.mxu0 0.0
    %1876 = vmatpush1.msra.mxu0 0.0
    %1877 = vmatprep.subr.mxu0 0.0
    %1878 = vmatpush1.msra.mxu0 0.0
    %1879 = vmatprep.subr.mxu0 0.0
    %1880 = vmatpush1.msra.mxu0 0.0
    %1881 = vmatprep.subr.mxu0 0.0
    %1882 = vmatpush1.msra.mxu0 0.0
    %1883 = vmatprep.subr.mxu0 0.0
    %1884 = vmatpush1.msra.mxu0 0.0
    %1885 = vmatprep.subr.mxu0 0.0
    %1886 = vmatpush1.msra.mxu0 0.0
    %1887 = vmatprep.subr.mxu0 0.0
    %1888 = vmatpush1.msra.mxu0 0.0
    %1889 = vmatprep.subr.mxu0 0.0
    %1890 = vmatpush1.msra.mxu0 0.0
    %1891 = vmatprep.subr.mxu0 0.0
    %1892 = vmatpush1.msra.mxu0 0.0
    %1893 = vmatprep.subr.mxu0 0.0
    %1894 = vmatpush1.msra.mxu0 0.0
    %1895 = vmatprep.subr.mxu0 0.0
    %1896 = vmatpush1.msra.mxu0 0.0
    %1897 = vmatprep.subr.mxu0 0.0
    %1898 = vmatpush1.msra.mxu0 0.0
    %1899 = vmatprep.subr.mxu0 0.0
    %1900 = vmatpush1.msra.mxu0 0.0
    %1901 = vmatprep.subr.mxu0 0.0
    %1902 = vmatpush1.msra.mxu0 0.0
    %1903 = vmatprep.subr.mxu0 0.0
    %1904 = vmatpush1.msra.mxu0 0.0
    %1905 = vmatprep.subr.mxu0 0.0
    %1906 = vmatpush1.msra.mxu0 0.0
    %1907 = vmatprep.subr.mxu0 0.0
    %1908 = vmatpush1.msra.mxu0 0.0
    %1909 = vmatprep.subr.mxu0 0.0
    %1910 = vmatpush1.msra.mxu0 0.0
    %1911 = vmatprep.subr.mxu0 0.0
    %1912 = vmatpush1.msra.mxu0 0.0
    %1913 = vmatprep.subr.mxu0 0.0
    %1914 = vmatpush1.msra.mxu0 0.0
    %1915 = vmatprep.mubr.f32.mxu0 0.0
    %1916 = vmatmul.mubr.f32.gmra.mrb[0].mxu0 %v1678
    %v1917 = vpop.f32.mrb[0].mxu0
    %v1918 = vadd.f32 0.0, %v1917
    %v1919 = vpop.f32.mrb[0].mxu0
    %v1920 = vadd.f32 0.0, %v1919
    %1921 = vmatprep.mubr.f32.mxu0 0.0
    %1922 = vmatmul.mubr.f32.gmra.mrb[0].mxu0 %v1681
    %v1923 = vpop.f32.mrb[0].mxu0
    %v1924 = vadd.f32 0.0, %v1923
    %v1925 = vpop.f32.mrb[0].mxu0
    %v1926 = vadd.f32 0.0, %v1925
    %1927 = vdwg.mxu0
    %1928 = vmatprep.subr.mxu0 0.0
    %1929 = vmatpush1.msra.mxu0 %v1695
    %1930 = vmatprep.subr.mxu0 0.0
    %1931 = vmatpush1.msra.mxu0 0.0
    %1932 = vmatprep.subr.mxu0 0.0
    %1933 = vmatpush1.msra.mxu0 0.0
    %1934 = vmatprep.subr.mxu0 0.0
    %1935 = vmatpush1.msra.mxu0 0.0
    %1936 = vmatprep.subr.mxu0 0.0
    %1937 = vmatpush1.msra.mxu0 0.0
    %1938 = vmatprep.subr.mxu0 0.0
    %1939 = vmatpush1.msra.mxu0 0.0
    %1940 = vmatprep.subr.mxu0 0.0
    %1941 = vmatpush1.msra.mxu0 0.0
    %1942 = vmatprep.subr.mxu0 0.0
    %1943 = vmatpush1.msra.mxu0 0.0
    %1944 = vmatprep.subr.mxu0 0.0
    %1945 = vmatpush1.msra.mxu0 0.0
    %1946 = vmatprep.subr.mxu0 0.0
    %1947 = vmatpush1.msra.mxu0 0.0
    %1948 = vmatprep.subr.mxu0 0.0
    %1949 = vmatpush1.msra.mxu0 0.0
    %1950 = vmatprep.subr.mxu0 0.0
    %1951 = vmatpush1.msra.mxu0 0.0
    %1952 = vmatprep.subr.mxu0 0.0
    %1953 = vmatpush1.msra.mxu0 0.0
    %1954 = vmatprep.subr.mxu0 0.0
    %1955 = vmatpush1.msra.mxu0 0.0
    %1956 = vmatprep.subr.mxu0 0.0
    %1957 = vmatpush1.msra.mxu0 0.0
    %1958 = vmatprep.subr.mxu0 0.0
    %1959 = vmatpush1.msra.mxu0 0.0
    %1960 = vmatprep.subr.mxu0 0.0
    %1961 = vmatpush1.msra.mxu0 0.0
    %1962 = vmatprep.subr.mxu0 0.0
    %1963 = vmatpush1.msra.mxu0 0.0
    %1964 = vmatprep.subr.mxu0 0.0
    %1965 = vmatpush1.msra.mxu0 0.0
    %1966 = vmatprep.subr.mxu0 0.0
    %1967 = vmatpush1.msra.mxu0 0.0
    %1968 = vmatprep.subr.mxu0 0.0
    %1969 = vmatpush1.msra.mxu0 0.0
    %1970 = vmatprep.subr.mxu0 0.0
    %1971 = vmatpush1.msra.mxu0 0.0
    %1972 = vmatprep.subr.mxu0 0.0
    %1973 = vmatpush1.msra.mxu0 0.0
    %1974 = vmatprep.subr.mxu0 0.0
    %1975 = vmatpush1.msra.mxu0 0.0
    %1976 = vmatprep.subr.mxu0 0.0
    %1977 = vmatpush1.msra.mxu0 0.0
    %1978 = vmatprep.subr.mxu0 0.0
    %1979 = vmatpush1.msra.mxu0 0.0
    %1980 = vmatprep.subr.mxu0 0.0
    %1981 = vmatpush1.msra.mxu0 0.0
    %1982 = vmatprep.subr.mxu0 0.0
    %1983 = vmatpush1.msra.mxu0 0.0
    %1984 = vmatprep.subr.mxu0 0.0
    %1985 = vmatpush1.msra.mxu0 0.0
    %1986 = vmatprep.subr.mxu0 0.0
    %1987 = vmatpush1.msra.mxu0 0.0
    %1988 = vmatprep.subr.mxu0 0.0
    %1989 = vmatpush1.msra.mxu0 0.0
    %1990 = vmatprep.subr.mxu0 0.0
    %1991 = vmatpush1.msra.mxu0 0.0
    %1992 = vmatprep.mubr.f32.mxu0 0.0
    %1993 = vmatmul.mubr.f32.gmra.mrb[0].mxu0 %v1678
    %v1994 = vpop.f32.mrb[0].mxu0
    %v1995 = vadd.f32 0.0, %v1994
    %v1996 = vpop.f32.mrb[0].mxu0
    %1997 = vmatprep.mubr.f32.mxu0 0.0
    %1998 = vmatmul.mubr.f32.gmra.mrb[0].mxu0 %v1681
    %v1999 = vpop.f32.mrb[0].mxu0
    %v2000 = vadd.f32 0.0, %v1999
    %v2001 = vpop.f32.mrb[0].mxu0
    %2002 = vdwg.mxu0
    %v2003 = vadd.f32 %v1661, %v1764
    %v2004 = vadd.f32 %v1662, %v1766
    %v2005 = vadd.f32 %v1663, %v1841
    %v2006 = vadd.f32 %v1664, %v1843
    %v2007 = vadd.f32 %v1665, %v1918
    %v2008 = vadd.f32 %v1666, %v1920
    %v2009 = vadd.f32 %v1667, %v1995
    %v2010 = vadd.f32 %v1668, %v1770
    %v2011 = vadd.f32 %v1669, %v1772
    %v2012 = vadd.f32 %v1670, %v1847
    %v2013 = vadd.f32 %v1671, %v1849
    %v2014 = vadd.f32 %v1672, %v1924
    %v2015 = vadd.f32 %v1673, %v1926
    %v2016 = vadd.f32 %v1674, %v2000
    %2017 = vrot.lane.b32.xlu0 %v44, 127
    %v2018 = vpop.permute.xlu0 %2017
    %2019 = vrot.lane.b32.xlu0 %v52, 127
    %v2020 = vpop.permute.xlu0 %2019
    %2021 = vrot.lane.b32.xlu0 %v51, 127
    %v2022 = vpop.permute.xlu0 %2021
    %2023 = vrot.lane.b32.xlu0 %v53, 127
    %v2024 = vpop.permute.xlu0 %2023
    %2025 = vrot.lane.b32.xlu0 %v60, 127
    %v2026 = vpop.permute.xlu0 %2025
    %2027 = vrot.lane.b32.xlu0 %v61, 127
    %v2028 = vpop.permute.xlu0 %2027
    %2029 = vrot.lane.b32.xlu0 %v1249, 127
    %v2030 = vpop.permute.xlu0 %2029
    %vm2031 = vcmask 1039360
    %v2032 = vsel %vm2031, %v2018, %v2020
    %v2033 = vsel %vm2031, %v2020, %v2022
    %v2034 = vsel %vm2031, %v2022, %v2024
    %v2035 = vsel %vm2031, %v2024, %v2026
    %v2036 = vsel %vm2031, %v2026, %v2028
    %v2037 = vsel %vm2031, %v2028, %v2030
    %vm2045 = vcmask 121856
    %v2046 = vsel %vm2045, %v2030, 0.0
    %s2047 = scalar_lea.vmem %s3, 5
    %v2048 = vld [vmem:[%s2047] ss:$8 sm:$0xf]
    %v2049 = vld [vmem:[%s2047] ss:$8 sm:$0x70]
    %v2050 = vor.u32 %v2048, %v2049
    %v2052 = vlaneseq
    %v2053 = vshrl.u32 %v2052, 7
    %v2054 = vsub.s32 0, %v2053
    %v2055 = vrot.slane %v2050, %v2054
    %v2056 = vlaneseq
    %v2057 = vshrl.u32 %v2056, 7
    %v2058 = vsub.s32 1, %v2057
    %v2059 = vrot.slane %v2050, %v2058
    %v2060 = vlaneseq
    %v2061 = vshrl.u32 %v2060, 7
    %v2062 = vsub.s32 2, %v2061
    %v2063 = vrot.slane %v2050, %v2062
    %v2064 = vlaneseq
    %v2065 = vshrl.u32 %v2064, 7
    %v2066 = vsub.s32 3, %v2065
    %v2067 = vrot.slane %v2050, %v2066
    %v2068 = vlaneseq
    %v2069 = vshrl.u32 %v2068, 7
    %v2070 = vsub.s32 4, %v2069
    %v2071 = vrot.slane %v2050, %v2070
    %v2072 = vlaneseq
    %v2073 = vshrl.u32 %v2072, 7
    %v2074 = vsub.s32 5, %v2073
    %v2075 = vrot.slane %v2050, %v2074
    %v2076 = vlaneseq
    %v2077 = vshrl.u32 %v2076, 7
    %v2078 = vsub.s32 6, %v2077
    %v2079 = vrot.slane %v2050, %v2078
    %v2087 = vmul.f32 %v2032, %v2055
    %v2088 = vmul.f32 %v2033, %v2059
    %v2089 = vmul.f32 %v2034, %v2063
    %v2090 = vmul.f32 %v2035, %v2067
    %v2091 = vmul.f32 %v2036, %v2071
    %v2092 = vmul.f32 %v2037, %v2075
    %v2093 = vmul.f32 %v2046, %v2079
    %v2094 = vld [vmem:[%s1 + $0x50] sm:$0xff]
    %v2095 = vld [vmem:[%s1 + $0x58] sm:$0xff]
    %v2097 = vsel %vm158, %v2094, 0
    %v2100 = vsel %vm158, %v2095, 0
    %v2103 = vsel %vm165, %v2087, 0
    %v2106 = vsel %vm165, %v2088, 0
    %v2109 = vsel %vm165, %v2089, 0
    %v2112 = vsel %vm165, %v2090, 0
    %v2115 = vsel %vm165, %v2091, 0
    %v2118 = vsel %vm165, %v2092, 0
    %v2121 = vsel %vm165, %v2093, 0
    %2123 = vmatprep.subr.mxu0 %v2106
    %2124 = vmatpush1.msra.mxu0 %v2103
    %2125 = vmatprep.subr.mxu0 0.0
    %2126 = vmatpush1.msra.mxu0 0.0
    %2127 = vmatprep.subr.mxu0 0.0
    %2128 = vmatpush1.msra.mxu0 0.0
    %2129 = vmatprep.subr.mxu0 0.0
    %2130 = vmatpush1.msra.mxu0 0.0
    %2131 = vmatprep.subr.mxu0 0.0
    %2132 = vmatpush1.msra.mxu0 0.0
    %2133 = vmatprep.subr.mxu0 0.0
    %2134 = vmatpush1.msra.mxu0 0.0
    %2135 = vmatprep.subr.mxu0 0.0
    %2136 = vmatpush1.msra.mxu0 0.0
    %2137 = vmatprep.subr.mxu0 0.0
    %2138 = vmatpush1.msra.mxu0 0.0
    %2139 = vmatprep.subr.mxu0 0.0
    %2140 = vmatpush1.msra.mxu0 0.0
    %2141 = vmatprep.subr.mxu0 0.0
    %2142 = vmatpush1.msra.mxu0 0.0
    %2143 = vmatprep.subr.mxu0 0.0
    %2144 = vmatpush1.msra.mxu0 0.0
    %2145 = vmatprep.subr.mxu0 0.0
    %2146 = vmatpush1.msra.mxu0 0.0
    %2147 = vmatprep.subr.mxu0 0.0
    %2148 = vmatpush1.msra.mxu0 0.0
    %2149 = vmatprep.subr.mxu0 0.0
    %2150 = vmatpush1.msra.mxu0 0.0
    %2151 = vmatprep.subr.mxu0 0.0
    %2152 = vmatpush1.msra.mxu0 0.0
    %2153 = vmatprep.subr.mxu0 0.0
    %2154 = vmatpush1.msra.mxu0 0.0
    %2155 = vmatprep.subr.mxu0 0.0
    %2156 = vmatpush1.msra.mxu0 0.0
    %2157 = vmatprep.subr.mxu0 0.0
    %2158 = vmatpush1.msra.mxu0 0.0
    %2159 = vmatprep.subr.mxu0 0.0
    %2160 = vmatpush1.msra.mxu0 0.0
    %2161 = vmatprep.subr.mxu0 0.0
    %2162 = vmatpush1.msra.mxu0 0.0
    %2163 = vmatprep.subr.mxu0 0.0
    %2164 = vmatpush1.msra.mxu0 0.0
    %2165 = vmatprep.subr.mxu0 0.0
    %2166 = vmatpush1.msra.mxu0 0.0
    %2167 = vmatprep.subr.mxu0 0.0
    %2168 = vmatpush1.msra.mxu0 0.0
    %2169 = vmatprep.subr.mxu0 0.0
    %2170 = vmatpush1.msra.mxu0 0.0
    %2171 = vmatprep.subr.mxu0 0.0
    %2172 = vmatpush1.msra.mxu0 0.0
    %2173 = vmatprep.subr.mxu0 0.0
    %2174 = vmatpush1.msra.mxu0 0.0
    %2175 = vmatprep.subr.mxu0 0.0
    %2176 = vmatpush1.msra.mxu0 0.0
    %2177 = vmatprep.subr.mxu0 0.0
    %2178 = vmatpush1.msra.mxu0 0.0
    %2179 = vmatprep.subr.mxu0 0.0
    %2180 = vmatpush1.msra.mxu0 0.0
    %2181 = vmatprep.subr.mxu0 0.0
    %2182 = vmatpush1.msra.mxu0 0.0
    %2183 = vmatprep.subr.mxu0 0.0
    %2184 = vmatpush1.msra.mxu0 0.0
    %2185 = vmatprep.subr.mxu0 0.0
    %2186 = vmatpush1.msra.mxu0 0.0
    %2187 = vmatprep.mubr.f32.mxu0 0.0
    %2188 = vmatmul.mubr.f32.gmra.mrb[0].mxu0 %v2097
    %v2189 = vpop.f32.mrb[0].mxu0
    %v2190 = vadd.f32 0.0, %v2189
    %v2191 = vpop.f32.mrb[0].mxu0
    %v2192 = vadd.f32 0.0, %v2191
    %2193 = vmatprep.mubr.f32.mxu0 0.0
    %2194 = vmatmul.mubr.f32.gmra.mrb[0].mxu0 %v2100
    %v2195 = vpop.f32.mrb[0].mxu0
    %v2196 = vadd.f32 0.0, %v2195
    %v2197 = vpop.f32.mrb[0].mxu0
    %v2198 = vadd.f32 0.0, %v2197
    %2199 = vdwg.mxu0
    %2200 = vmatprep.subr.mxu0 %v2112
    %2201 = vmatpush1.msra.mxu0 %v2109
    %2202 = vmatprep.subr.mxu0 0.0
    %2203 = vmatpush1.msra.mxu0 0.0
    %2204 = vmatprep.subr.mxu0 0.0
    %2205 = vmatpush1.msra.mxu0 0.0
    %2206 = vmatprep.subr.mxu0 0.0
    %2207 = vmatpush1.msra.mxu0 0.0
    %2208 = vmatprep.subr.mxu0 0.0
    %2209 = vmatpush1.msra.mxu0 0.0
    %2210 = vmatprep.subr.mxu0 0.0
    %2211 = vmatpush1.msra.mxu0 0.0
    %2212 = vmatprep.subr.mxu0 0.0
    %2213 = vmatpush1.msra.mxu0 0.0
    %2214 = vmatprep.subr.mxu0 0.0
    %2215 = vmatpush1.msra.mxu0 0.0
    %2216 = vmatprep.subr.mxu0 0.0
    %2217 = vmatpush1.msra.mxu0 0.0
    %2218 = vmatprep.subr.mxu0 0.0
    %2219 = vmatpush1.msra.mxu0 0.0
    %2220 = vmatprep.subr.mxu0 0.0
    %2221 = vmatpush1.msra.mxu0 0.0
    %2222 = vmatprep.subr.mxu0 0.0
    %2223 = vmatpush1.msra.mxu0 0.0
    %2224 = vmatprep.subr.mxu0 0.0
    %2225 = vmatpush1.msra.mxu0 0.0
    %2226 = vmatprep.subr.mxu0 0.0
    %2227 = vmatpush1.msra.mxu0 0.0
    %2228 = vmatprep.subr.mxu0 0.0
    %2229 = vmatpush1.msra.mxu0 0.0
    %2230 = vmatprep.subr.mxu0 0.0
    %2231 = vmatpush1.msra.mxu0 0.0
    %2232 = vmatprep.subr.mxu0 0.0
    %2233 = vmatpush1.msra.mxu0 0.0
    %2234 = vmatprep.subr.mxu0 0.0
    %2235 = vmatpush1.msra.mxu0 0.0
    %2236 = vmatprep.subr.mxu0 0.0
    %2237 = vmatpush1.msra.mxu0 0.0
    %2238 = vmatprep.subr.mxu0 0.0
    %2239 = vmatpush1.msra.mxu0 0.0
    %2240 = vmatprep.subr.mxu0 0.0
    %2241 = vmatpush1.msra.mxu0 0.0
    %2242 = vmatprep.subr.mxu0 0.0
    %2243 = vmatpush1.msra.mxu0 0.0
    %2244 = vmatprep.subr.mxu0 0.0
    %2245 = vmatpush1.msra.mxu0 0.0
    %2246 = vmatprep.subr.mxu0 0.0
    %2247 = vmatpush1.msra.mxu0 0.0
    %2248 = vmatprep.subr.mxu0 0.0
    %2249 = vmatpush1.msra.mxu0 0.0
    %2250 = vmatprep.subr.mxu0 0.0
    %2251 = vmatpush1.msra.mxu0 0.0
    %2252 = vmatprep.subr.mxu0 0.0
    %2253 = vmatpush1.msra.mxu0 0.0
    %2254 = vmatprep.subr.mxu0 0.0
    %2255 = vmatpush1.msra.mxu0 0.0
    %2256 = vmatprep.subr.mxu0 0.0
    %2257 = vmatpush1.msra.mxu0 0.0
    %2258 = vmatprep.subr.mxu0 0.0
    %2259 = vmatpush1.msra.mxu0 0.0
    %2260 = vmatprep.subr.mxu0 0.0
    %2261 = vmatpush1.msra.mxu0 0.0
    %2262 = vmatprep.subr.mxu0 0.0
    %2263 = vmatpush1.msra.mxu0 0.0
    %2264 = vmatprep.mubr.f32.mxu0 0.0
    %2265 = vmatmul.mubr.f32.gmra.mrb[0].mxu0 %v2097
    %v2266 = vpop.f32.mrb[0].mxu0
    %v2267 = vadd.f32 0.0, %v2266
    %v2268 = vpop.f32.mrb[0].mxu0
    %v2269 = vadd.f32 0.0, %v2268
    %2270 = vmatprep.mubr.f32.mxu0 0.0
    %2271 = vmatmul.mubr.f32.gmra.mrb[0].mxu0 %v2100
    %v2272 = vpop.f32.mrb[0].mxu0
    %v2273 = vadd.f32 0.0, %v2272
    %v2274 = vpop.f32.mrb[0].mxu0
    %v2275 = vadd.f32 0.0, %v2274
    %2276 = vdwg.mxu0
    %2277 = vmatprep.subr.mxu0 %v2118
    %2278 = vmatpush1.msra.mxu0 %v2115
    %2279 = vmatprep.subr.mxu0 0.0
    %2280 = vmatpush1.msra.mxu0 0.0
    %2281 = vmatprep.subr.mxu0 0.0
    %2282 = vmatpush1.msra.mxu0 0.0
    %2283 = vmatprep.subr.mxu0 0.0
    %2284 = vmatpush1.msra.mxu0 0.0
    %2285 = vmatprep.subr.mxu0 0.0
    %2286 = vmatpush1.msra.mxu0 0.0
    %2287 = vmatprep.subr.mxu0 0.0
    %2288 = vmatpush1.msra.mxu0 0.0
    %2289 = vmatprep.subr.mxu0 0.0
    %2290 = vmatpush1.msra.mxu0 0.0
    %2291 = vmatprep.subr.mxu0 0.0
    %2292 = vmatpush1.msra.mxu0 0.0
    %2293 = vmatprep.subr.mxu0 0.0
    %2294 = vmatpush1.msra.mxu0 0.0
    %2295 = vmatprep.subr.mxu0 0.0
    %2296 = vmatpush1.msra.mxu0 0.0
    %2297 = vmatprep.subr.mxu0 0.0
    %2298 = vmatpush1.msra.mxu0 0.0
    %2299 = vmatprep.subr.mxu0 0.0
    %2300 = vmatpush1.msra.mxu0 0.0
    %2301 = vmatprep.subr.mxu0 0.0
    %2302 = vmatpush1.msra.mxu0 0.0
    %2303 = vmatprep.subr.mxu0 0.0
    %2304 = vmatpush1.msra.mxu0 0.0
    %2305 = vmatprep.subr.mxu0 0.0
    %2306 = vmatpush1.msra.mxu0 0.0
    %2307 = vmatprep.subr.mxu0 0.0
    %2308 = vmatpush1.msra.mxu0 0.0
    %2309 = vmatprep.subr.mxu0 0.0
    %2310 = vmatpush1.msra.mxu0 0.0
    %2311 = vmatprep.subr.mxu0 0.0
    %2312 = vmatpush1.msra.mxu0 0.0
    %2313 = vmatprep.subr.mxu0 0.0
    %2314 = vmatpush1.msra.mxu0 0.0
    %2315 = vmatprep.subr.mxu0 0.0
    %2316 = vmatpush1.msra.mxu0 0.0
    %2317 = vmatprep.subr.mxu0 0.0
    %2318 = vmatpush1.msra.mxu0 0.0
    %2319 = vmatprep.subr.mxu0 0.0
    %2320 = vmatpush1.msra.mxu0 0.0
    %2321 = vmatprep.subr.mxu0 0.0
    %2322 = vmatpush1.msra.mxu0 0.0
    %2323 = vmatprep.subr.mxu0 0.0
    %2324 = vmatpush1.msra.mxu0 0.0
    %2325 = vmatprep.subr.mxu0 0.0
    %2326 = vmatpush1.msra.mxu0 0.0
    %2327 = vmatprep.subr.mxu0 0.0
    %2328 = vmatpush1.msra.mxu0 0.0
    %2329 = vmatprep.subr.mxu0 0.0
    %2330 = vmatpush1.msra.mxu0 0.0
    %2331 = vmatprep.subr.mxu0 0.0
    %2332 = vmatpush1.msra.mxu0 0.0
    %2333 = vmatprep.subr.mxu0 0.0
    %2334 = vmatpush1.msra.mxu0 0.0
    %2335 = vmatprep.subr.mxu0 0.0
    %2336 = vmatpush1.msra.mxu0 0.0
    %2337 = vmatprep.subr.mxu0 0.0
    %2338 = vmatpush1.msra.mxu0 0.0
    %2339 = vmatprep.subr.mxu0 0.0
    %2340 = vmatpush1.msra.mxu0 0.0
    %2341 = vmatprep.mubr.f32.mxu0 0.0
    %2342 = vmatmul.mubr.f32.gmra.mrb[0].mxu0 %v2097
    %v2343 = vpop.f32.mrb[0].mxu0
    %v2344 = vadd.f32 0.0, %v2343
    %v2345 = vpop.f32.mrb[0].mxu0
    %v2346 = vadd.f32 0.0, %v2345
    %2347 = vmatprep.mubr.f32.mxu0 0.0
    %2348 = vmatmul.mubr.f32.gmra.mrb[0].mxu0 %v2100
    %v2349 = vpop.f32.mrb[0].mxu0
    %v2350 = vadd.f32 0.0, %v2349
    %v2351 = vpop.f32.mrb[0].mxu0
    %v2352 = vadd.f32 0.0, %v2351
    %2353 = vdwg.mxu0
    %2354 = vmatprep.subr.mxu0 0.0
    %2355 = vmatpush1.msra.mxu0 %v2121
    %2356 = vmatprep.subr.mxu0 0.0
    %2357 = vmatpush1.msra.mxu0 0.0
    %2358 = vmatprep.subr.mxu0 0.0
    %2359 = vmatpush1.msra.mxu0 0.0
    %2360 = vmatprep.subr.mxu0 0.0
    %2361 = vmatpush1.msra.mxu0 0.0
    %2362 = vmatprep.subr.mxu0 0.0
    %2363 = vmatpush1.msra.mxu0 0.0
    %2364 = vmatprep.subr.mxu0 0.0
    %2365 = vmatpush1.msra.mxu0 0.0
    %2366 = vmatprep.subr.mxu0 0.0
    %2367 = vmatpush1.msra.mxu0 0.0
    %2368 = vmatprep.subr.mxu0 0.0
    %2369 = vmatpush1.msra.mxu0 0.0
    %2370 = vmatprep.subr.mxu0 0.0
    %2371 = vmatpush1.msra.mxu0 0.0
    %2372 = vmatprep.subr.mxu0 0.0
    %2373 = vmatpush1.msra.mxu0 0.0
    %2374 = vmatprep.subr.mxu0 0.0
    %2375 = vmatpush1.msra.mxu0 0.0
    %2376 = vmatprep.subr.mxu0 0.0
    %2377 = vmatpush1.msra.mxu0 0.0
    %2378 = vmatprep.subr.mxu0 0.0
    %2379 = vmatpush1.msra.mxu0 0.0
    %2380 = vmatprep.subr.mxu0 0.0
    %2381 = vmatpush1.msra.mxu0 0.0
    %2382 = vmatprep.subr.mxu0 0.0
    %2383 = vmatpush1.msra.mxu0 0.0
    %2384 = vmatprep.subr.mxu0 0.0
    %2385 = vmatpush1.msra.mxu0 0.0
    %2386 = vmatprep.subr.mxu0 0.0
    %2387 = vmatpush1.msra.mxu0 0.0
    %2388 = vmatprep.subr.mxu0 0.0
    %2389 = vmatpush1.msra.mxu0 0.0
    %2390 = vmatprep.subr.mxu0 0.0
    %2391 = vmatpush1.msra.mxu0 0.0
    %2392 = vmatprep.subr.mxu0 0.0
    %2393 = vmatpush1.msra.mxu0 0.0
    %2394 = vmatprep.subr.mxu0 0.0
    %2395 = vmatpush1.msra.mxu0 0.0
    %2396 = vmatprep.subr.mxu0 0.0
    %2397 = vmatpush1.msra.mxu0 0.0
    %2398 = vmatprep.subr.mxu0 0.0
    %2399 = vmatpush1.msra.mxu0 0.0
    %2400 = vmatprep.subr.mxu0 0.0
    %2401 = vmatpush1.msra.mxu0 0.0
    %2402 = vmatprep.subr.mxu0 0.0
    %2403 = vmatpush1.msra.mxu0 0.0
    %2404 = vmatprep.subr.mxu0 0.0
    %2405 = vmatpush1.msra.mxu0 0.0
    %2406 = vmatprep.subr.mxu0 0.0
    %2407 = vmatpush1.msra.mxu0 0.0
    %2408 = vmatprep.subr.mxu0 0.0
    %2409 = vmatpush1.msra.mxu0 0.0
    %2410 = vmatprep.subr.mxu0 0.0
    %2411 = vmatpush1.msra.mxu0 0.0
    %2412 = vmatprep.subr.mxu0 0.0
    %2413 = vmatpush1.msra.mxu0 0.0
    %2414 = vmatprep.subr.mxu0 0.0
    %2415 = vmatpush1.msra.mxu0 0.0
    %2416 = vmatprep.subr.mxu0 0.0
    %2417 = vmatpush1.msra.mxu0 0.0
    %2418 = vmatprep.mubr.f32.mxu0 0.0
    %2419 = vmatmul.mubr.f32.gmra.mrb[0].mxu0 %v2097
    %v2420 = vpop.f32.mrb[0].mxu0
    %v2421 = vadd.f32 0.0, %v2420
    %v2422 = vpop.f32.mrb[0].mxu0
    %2423 = vmatprep.mubr.f32.mxu0 0.0
    %2424 = vmatmul.mubr.f32.gmra.mrb[0].mxu0 %v2100
    %v2425 = vpop.f32.mrb[0].mxu0
    %v2426 = vadd.f32 0.0, %v2425
    %v2427 = vpop.f32.mrb[0].mxu0
    %2428 = vdwg.mxu0
    %v2429 = vadd.f32 %v2003, %v2190
    %v2430 = vadd.f32 %v2004, %v2192
    %v2431 = vadd.f32 %v2005, %v2267
    %v2432 = vadd.f32 %v2006, %v2269
    %v2433 = vadd.f32 %v2007, %v2344
    %v2434 = vadd.f32 %v2008, %v2346
    %v2435 = vadd.f32 %v2009, %v2421
    %v2436 = vadd.f32 %v2010, %v2196
    %v2437 = vadd.f32 %v2011, %v2198
    %v2438 = vadd.f32 %v2012, %v2273
    %v2439 = vadd.f32 %v2013, %v2275
    %v2440 = vadd.f32 %v2014, %v2350
    %v2441 = vadd.f32 %v2015, %v2352
    %v2442 = vadd.f32 %v2016, %v2426
    %2443 = vrot.lane.b32.xlu0 %v44, 101
    %v2444 = vpop.permute.xlu0 %2443
    %2445 = vrot.lane.b32.xlu0 %v52, 101
    %v2446 = vpop.permute.xlu0 %2445
    %2447 = vrot.lane.b32.xlu0 %v51, 101
    %v2448 = vpop.permute.xlu0 %2447
    %2449 = vrot.lane.b32.xlu0 %v53, 101
    %v2450 = vpop.permute.xlu0 %2449
    %2451 = vrot.lane.b32.xlu0 %v60, 101
    %v2452 = vpop.permute.xlu0 %2451
    %2453 = vrot.lane.b32.xlu0 %v61, 101
    %v2454 = vpop.permute.xlu0 %2453
    %2455 = vrot.lane.b32.xlu0 %v1249, 101
    %v2456 = vpop.permute.xlu0 %2455
    %vm2457 = vcmask 826368
    %v2458 = vsel %vm2457, %v2444, %v2446
    %v2459 = vsel %vm2457, %v2446, %v2448
    %v2460 = vsel %vm2457, %v2448, %v2450
    %v2461 = vsel %vm2457, %v2450, %v2452
    %v2462 = vsel %vm2457, %v2452, %v2454
    %v2463 = vsel %vm2457, %v2454, %v2456
    %vm2470 = vcmask 957440
    %v2471 = vsel %vm2470, %v2463, 0.0
    %s2472 = scalar_lea.vmem %s3, 6
    %v2473 = vld [vmem:[%s2472] ss:$8 sm:$0xf]
    %v2474 = vld [vmem:[%s2472] ss:$8 sm:$0x70]
    %v2475 = vor.u32 %v2473, %v2474
    %v2477 = vlaneseq
    %v2478 = vshrl.u32 %v2477, 7
    %v2479 = vsub.s32 0, %v2478
    %v2480 = vrot.slane %v2475, %v2479
    %v2481 = vlaneseq
    %v2482 = vshrl.u32 %v2481, 7
    %v2483 = vsub.s32 1, %v2482
    %v2484 = vrot.slane %v2475, %v2483
    %v2485 = vlaneseq
    %v2486 = vshrl.u32 %v2485, 7
    %v2487 = vsub.s32 2, %v2486
    %v2488 = vrot.slane %v2475, %v2487
    %v2489 = vlaneseq
    %v2490 = vshrl.u32 %v2489, 7
    %v2491 = vsub.s32 3, %v2490
    %v2492 = vrot.slane %v2475, %v2491
    %v2493 = vlaneseq
    %v2494 = vshrl.u32 %v2493, 7
    %v2495 = vsub.s32 4, %v2494
    %v2496 = vrot.slane %v2475, %v2495
    %v2497 = vlaneseq
    %v2498 = vshrl.u32 %v2497, 7
    %v2499 = vsub.s32 5, %v2498
    %v2500 = vrot.slane %v2475, %v2499
    %v2501 = vlaneseq
    %v2502 = vshrl.u32 %v2501, 7
    %v2503 = vsub.s32 6, %v2502
    %v2504 = vrot.slane %v2475, %v2503
    %v2512 = vmul.f32 %v2458, %v2480
    %v2513 = vmul.f32 %v2459, %v2484
    %v2514 = vmul.f32 %v2460, %v2488
    %v2515 = vmul.f32 %v2461, %v2492
    %v2516 = vmul.f32 %v2462, %v2496
    %v2517 = vmul.f32 %v2471, %v2500
    %v2518 = vmul.f32 %v2504, 0.0
    %v2519 = vld [vmem:[%s1 + $0x60] sm:$0xff]
    %v2520 = vld [vmem:[%s1 + $0x68] sm:$0xff]
    %v2522 = vsel %vm158, %v2519, 0
    %v2525 = vsel %vm158, %v2520, 0
    %v2528 = vsel %vm165, %v2512, 0
    %v2531 = vsel %vm165, %v2513, 0
    %v2534 = vsel %vm165, %v2514, 0
    %v2537 = vsel %vm165, %v2515, 0
    %v2540 = vsel %vm165, %v2516, 0
    %v2543 = vsel %vm165, %v2517, 0
    %v2546 = vsel %vm165, %v2518, 0
    %2548 = vmatprep.subr.mxu0 %v2531
    %2549 = vmatpush1.msra.mxu0 %v2528
    %2550 = vmatprep.subr.mxu0 0.0
    %2551 = vmatpush1.msra.mxu0 0.0
    %2552 = vmatprep.subr.mxu0 0.0
    %2553 = vmatpush1.msra.mxu0 0.0
    %2554 = vmatprep.subr.mxu0 0.0
    %2555 = vmatpush1.msra.mxu0 0.0
    %2556 = vmatprep.subr.mxu0 0.0
    %2557 = vmatpush1.msra.mxu0 0.0
    %2558 = vmatprep.subr.mxu0 0.0
    %2559 = vmatpush1.msra.mxu0 0.0
    %2560 = vmatprep.subr.mxu0 0.0
    %2561 = vmatpush1.msra.mxu0 0.0
    %2562 = vmatprep.subr.mxu0 0.0
    %2563 = vmatpush1.msra.mxu0 0.0
    %2564 = vmatprep.subr.mxu0 0.0
    %2565 = vmatpush1.msra.mxu0 0.0
    %2566 = vmatprep.subr.mxu0 0.0
    %2567 = vmatpush1.msra.mxu0 0.0
    %2568 = vmatprep.subr.mxu0 0.0
    %2569 = vmatpush1.msra.mxu0 0.0
    %2570 = vmatprep.subr.mxu0 0.0
    %2571 = vmatpush1.msra.mxu0 0.0
    %2572 = vmatprep.subr.mxu0 0.0
    %2573 = vmatpush1.msra.mxu0 0.0
    %2574 = vmatprep.subr.mxu0 0.0
    %2575 = vmatpush1.msra.mxu0 0.0
    %2576 = vmatprep.subr.mxu0 0.0
    %2577 = vmatpush1.msra.mxu0 0.0
    %2578 = vmatprep.subr.mxu0 0.0
    %2579 = vmatpush1.msra.mxu0 0.0
    %2580 = vmatprep.subr.mxu0 0.0
    %2581 = vmatpush1.msra.mxu0 0.0
    %2582 = vmatprep.subr.mxu0 0.0
    %2583 = vmatpush1.msra.mxu0 0.0
    %2584 = vmatprep.subr.mxu0 0.0
    %2585 = vmatpush1.msra.mxu0 0.0
    %2586 = vmatprep.subr.mxu0 0.0
    %2587 = vmatpush1.msra.mxu0 0.0
    %2588 = vmatprep.subr.mxu0 0.0
    %2589 = vmatpush1.msra.mxu0 0.0
    %2590 = vmatprep.subr.mxu0 0.0
    %2591 = vmatpush1.msra.mxu0 0.0
    %2592 = vmatprep.subr.mxu0 0.0
    %2593 = vmatpush1.msra.mxu0 0.0
    %2594 = vmatprep.subr.mxu0 0.0
    %2595 = vmatpush1.msra.mxu0 0.0
    %2596 = vmatprep.subr.mxu0 0.0
    %2597 = vmatpush1.msra.mxu0 0.0
    %2598 = vmatprep.subr.mxu0 0.0
    %2599 = vmatpush1.msra.mxu0 0.0
    %2600 = vmatprep.subr.mxu0 0.0
    %2601 = vmatpush1.msra.mxu0 0.0
    %2602 = vmatprep.subr.mxu0 0.0
    %2603 = vmatpush1.msra.mxu0 0.0
    %2604 = vmatprep.subr.mxu0 0.0
    %2605 = vmatpush1.msra.mxu0 0.0
    %2606 = vmatprep.subr.mxu0 0.0
    %2607 = vmatpush1.msra.mxu0 0.0
    %2608 = vmatprep.subr.mxu0 0.0
    %2609 = vmatpush1.msra.mxu0 0.0
    %2610 = vmatprep.subr.mxu0 0.0
    %2611 = vmatpush1.msra.mxu0 0.0
    %2612 = vmatprep.mubr.f32.mxu0 0.0
    %2613 = vmatmul.mubr.f32.gmra.mrb[0].mxu0 %v2522
    %v2614 = vpop.f32.mrb[0].mxu0
    %v2615 = vadd.f32 0.0, %v2614
    %v2616 = vpop.f32.mrb[0].mxu0
    %v2617 = vadd.f32 0.0, %v2616
    %2618 = vmatprep.mubr.f32.mxu0 0.0
    %2619 = vmatmul.mubr.f32.gmra.mrb[0].mxu0 %v2525
    %v2620 = vpop.f32.mrb[0].mxu0
    %v2621 = vadd.f32 0.0, %v2620
    %v2622 = vpop.f32.mrb[0].mxu0
    %v2623 = vadd.f32 0.0, %v2622
    %2624 = vdwg.mxu0
    %2625 = vmatprep.subr.mxu0 %v2537
    %2626 = vmatpush1.msra.mxu0 %v2534
    %2627 = vmatprep.subr.mxu0 0.0
    %2628 = vmatpush1.msra.mxu0 0.0
    %2629 = vmatprep.subr.mxu0 0.0
    %2630 = vmatpush1.msra.mxu0 0.0
    %2631 = vmatprep.subr.mxu0 0.0
    %2632 = vmatpush1.msra.mxu0 0.0
    %2633 = vmatprep.subr.mxu0 0.0
    %2634 = vmatpush1.msra.mxu0 0.0
    %2635 = vmatprep.subr.mxu0 0.0
    %2636 = vmatpush1.msra.mxu0 0.0
    %2637 = vmatprep.subr.mxu0 0.0
    %2638 = vmatpush1.msra.mxu0 0.0
    %2639 = vmatprep.subr.mxu0 0.0
    %2640 = vmatpush1.msra.mxu0 0.0
    %2641 = vmatprep.subr.mxu0 0.0
    %2642 = vmatpush1.msra.mxu0 0.0
    %2643 = vmatprep.subr.mxu0 0.0
    %2644 = vmatpush1.msra.mxu0 0.0
    %2645 = vmatprep.subr.mxu0 0.0
    %2646 = vmatpush1.msra.mxu0 0.0
    %2647 = vmatprep.subr.mxu0 0.0
    %2648 = vmatpush1.msra.mxu0 0.0
    %2649 = vmatprep.subr.mxu0 0.0
    %2650 = vmatpush1.msra.mxu0 0.0
    %2651 = vmatprep.subr.mxu0 0.0
    %2652 = vmatpush1.msra.mxu0 0.0
    %2653 = vmatprep.subr.mxu0 0.0
    %2654 = vmatpush1.msra.mxu0 0.0
    %2655 = vmatprep.subr.mxu0 0.0
    %2656 = vmatpush1.msra.mxu0 0.0
    %2657 = vmatprep.subr.mxu0 0.0
    %2658 = vmatpush1.msra.mxu0 0.0
    %2659 = vmatprep.subr.mxu0 0.0
    %2660 = vmatpush1.msra.mxu0 0.0
    %2661 = vmatprep.subr.mxu0 0.0
    %2662 = vmatpush1.msra.mxu0 0.0
    %2663 = vmatprep.subr.mxu0 0.0
    %2664 = vmatpush1.msra.mxu0 0.0
    %2665 = vmatprep.subr.mxu0 0.0
    %2666 = vmatpush1.msra.mxu0 0.0
    %2667 = vmatprep.subr.mxu0 0.0
    %2668 = vmatpush1.msra.mxu0 0.0
    %2669 = vmatprep.subr.mxu0 0.0
    %2670 = vmatpush1.msra.mxu0 0.0
    %2671 = vmatprep.subr.mxu0 0.0
    %2672 = vmatpush1.msra.mxu0 0.0
    %2673 = vmatprep.subr.mxu0 0.0
    %2674 = vmatpush1.msra.mxu0 0.0
    %2675 = vmatprep.subr.mxu0 0.0
    %2676 = vmatpush1.msra.mxu0 0.0
    %2677 = vmatprep.subr.mxu0 0.0
    %2678 = vmatpush1.msra.mxu0 0.0
    %2679 = vmatprep.subr.mxu0 0.0
    %2680 = vmatpush1.msra.mxu0 0.0
    %2681 = vmatprep.subr.mxu0 0.0
    %2682 = vmatpush1.msra.mxu0 0.0
    %2683 = vmatprep.subr.mxu0 0.0
    %2684 = vmatpush1.msra.mxu0 0.0
    %2685 = vmatprep.subr.mxu0 0.0
    %2686 = vmatpush1.msra.mxu0 0.0
    %2687 = vmatprep.subr.mxu0 0.0
    %2688 = vmatpush1.msra.mxu0 0.0
    %2689 = vmatprep.mubr.f32.mxu0 0.0
    %2690 = vmatmul.mubr.f32.gmra.mrb[0].mxu0 %v2522
    %v2691 = vpop.f32.mrb[0].mxu0
    %v2692 = vadd.f32 0.0, %v2691
    %v2693 = vpop.f32.mrb[0].mxu0
    %v2694 = vadd.f32 0.0, %v2693
    %2695 = vmatprep.mubr.f32.mxu0 0.0
    %2696 = vmatmul.mubr.f32.gmra.mrb[0].mxu0 %v2525
    %v2697 = vpop.f32.mrb[0].mxu0
    %v2698 = vadd.f32 0.0, %v2697
    %v2699 = vpop.f32.mrb[0].mxu0
    %v2700 = vadd.f32 0.0, %v2699
    %2701 = vdwg.mxu0
    %2702 = vmatprep.subr.mxu0 %v2543
    %2703 = vmatpush1.msra.mxu0 %v2540
    %2704 = vmatprep.subr.mxu0 0.0
    %2705 = vmatpush1.msra.mxu0 0.0
    %2706 = vmatprep.subr.mxu0 0.0
    %2707 = vmatpush1.msra.mxu0 0.0
    %2708 = vmatprep.subr.mxu0 0.0
    %2709 = vmatpush1.msra.mxu0 0.0
    %2710 = vmatprep.subr.mxu0 0.0
    %2711 = vmatpush1.msra.mxu0 0.0
    %2712 = vmatprep.subr.mxu0 0.0
    %2713 = vmatpush1.msra.mxu0 0.0
    %2714 = vmatprep.subr.mxu0 0.0
    %2715 = vmatpush1.msra.mxu0 0.0
    %2716 = vmatprep.subr.mxu0 0.0
    %2717 = vmatpush1.msra.mxu0 0.0
    %2718 = vmatprep.subr.mxu0 0.0
    %2719 = vmatpush1.msra.mxu0 0.0
    %2720 = vmatprep.subr.mxu0 0.0
    %2721 = vmatpush1.msra.mxu0 0.0
    %2722 = vmatprep.subr.mxu0 0.0
    %2723 = vmatpush1.msra.mxu0 0.0
    %2724 = vmatprep.subr.mxu0 0.0
    %2725 = vmatpush1.msra.mxu0 0.0
    %2726 = vmatprep.subr.mxu0 0.0
    %2727 = vmatpush1.msra.mxu0 0.0
    %2728 = vmatprep.subr.mxu0 0.0
    %2729 = vmatpush1.msra.mxu0 0.0
    %2730 = vmatprep.subr.mxu0 0.0
    %2731 = vmatpush1.msra.mxu0 0.0
    %2732 = vmatprep.subr.mxu0 0.0
    %2733 = vmatpush1.msra.mxu0 0.0
    %2734 = vmatprep.subr.mxu0 0.0
    %2735 = vmatpush1.msra.mxu0 0.0
    %2736 = vmatprep.subr.mxu0 0.0
    %2737 = vmatpush1.msra.mxu0 0.0
    %2738 = vmatprep.subr.mxu0 0.0
    %2739 = vmatpush1.msra.mxu0 0.0
    %2740 = vmatprep.subr.mxu0 0.0
    %2741 = vmatpush1.msra.mxu0 0.0
    %2742 = vmatprep.subr.mxu0 0.0
    %2743 = vmatpush1.msra.mxu0 0.0
    %2744 = vmatprep.subr.mxu0 0.0
    %2745 = vmatpush1.msra.mxu0 0.0
    %2746 = vmatprep.subr.mxu0 0.0
    %2747 = vmatpush1.msra.mxu0 0.0
    %2748 = vmatprep.subr.mxu0 0.0
    %2749 = vmatpush1.msra.mxu0 0.0
    %2750 = vmatprep.subr.mxu0 0.0
    %2751 = vmatpush1.msra.mxu0 0.0
    %2752 = vmatprep.subr.mxu0 0.0
    %2753 = vmatpush1.msra.mxu0 0.0
    %2754 = vmatprep.subr.mxu0 0.0
    %2755 = vmatpush1.msra.mxu0 0.0
    %2756 = vmatprep.subr.mxu0 0.0
    %2757 = vmatpush1.msra.mxu0 0.0
    %2758 = vmatprep.subr.mxu0 0.0
    %2759 = vmatpush1.msra.mxu0 0.0
    %2760 = vmatprep.subr.mxu0 0.0
    %2761 = vmatpush1.msra.mxu0 0.0
    %2762 = vmatprep.subr.mxu0 0.0
    %2763 = vmatpush1.msra.mxu0 0.0
    %2764 = vmatprep.subr.mxu0 0.0
    %2765 = vmatpush1.msra.mxu0 0.0
    %2766 = vmatprep.mubr.f32.mxu0 0.0
    %2767 = vmatmul.mubr.f32.gmra.mrb[0].mxu0 %v2522
    %v2768 = vpop.f32.mrb[0].mxu0
    %v2769 = vadd.f32 0.0, %v2768
    %v2770 = vpop.f32.mrb[0].mxu0
    %v2771 = vadd.f32 0.0, %v2770
    %2772 = vmatprep.mubr.f32.mxu0 0.0
    %2773 = vmatmul.mubr.f32.gmra.mrb[0].mxu0 %v2525
    %v2774 = vpop.f32.mrb[0].mxu0
    %v2775 = vadd.f32 0.0, %v2774
    %v2776 = vpop.f32.mrb[0].mxu0
    %v2777 = vadd.f32 0.0, %v2776
    %2778 = vdwg.mxu0
    %2779 = vmatprep.subr.mxu0 0.0
    %2780 = vmatpush1.msra.mxu0 %v2546
    %2781 = vmatprep.subr.mxu0 0.0
    %2782 = vmatpush1.msra.mxu0 0.0
    %2783 = vmatprep.subr.mxu0 0.0
    %2784 = vmatpush1.msra.mxu0 0.0
    %2785 = vmatprep.subr.mxu0 0.0
    %2786 = vmatpush1.msra.mxu0 0.0
    %2787 = vmatprep.subr.mxu0 0.0
    %2788 = vmatpush1.msra.mxu0 0.0
    %2789 = vmatprep.subr.mxu0 0.0
    %2790 = vmatpush1.msra.mxu0 0.0
    %2791 = vmatprep.subr.mxu0 0.0
    %2792 = vmatpush1.msra.mxu0 0.0
    %2793 = vmatprep.subr.mxu0 0.0
    %2794 = vmatpush1.msra.mxu0 0.0
    %2795 = vmatprep.subr.mxu0 0.0
    %2796 = vmatpush1.msra.mxu0 0.0
    %2797 = vmatprep.subr.mxu0 0.0
    %2798 = vmatpush1.msra.mxu0 0.0
    %2799 = vmatprep.subr.mxu0 0.0
    %2800 = vmatpush1.msra.mxu0 0.0
    %2801 = vmatprep.subr.mxu0 0.0
    %2802 = vmatpush1.msra.mxu0 0.0
    %2803 = vmatprep.subr.mxu0 0.0
    %2804 = vmatpush1.msra.mxu0 0.0
    %2805 = vmatprep.subr.mxu0 0.0
    %2806 = vmatpush1.msra.mxu0 0.0
    %2807 = vmatprep.subr.mxu0 0.0
    %2808 = vmatpush1.msra.mxu0 0.0
    %2809 = vmatprep.subr.mxu0 0.0
    %2810 = vmatpush1.msra.mxu0 0.0
    %2811 = vmatprep.subr.mxu0 0.0
    %2812 = vmatpush1.msra.mxu0 0.0
    %2813 = vmatprep.subr.mxu0 0.0
    %2814 = vmatpush1.msra.mxu0 0.0
    %2815 = vmatprep.subr.mxu0 0.0
    %2816 = vmatpush1.msra.mxu0 0.0
    %2817 = vmatprep.subr.mxu0 0.0
    %2818 = vmatpush1.msra.mxu0 0.0
    %2819 = vmatprep.subr.mxu0 0.0
    %2820 = vmatpush1.msra.mxu0 0.0
    %2821 = vmatprep.subr.mxu0 0.0
    %2822 = vmatpush1.msra.mxu0 0.0
    %2823 = vmatprep.subr.mxu0 0.0
    %2824 = vmatpush1.msra.mxu0 0.0
    %2825 = vmatprep.subr.mxu0 0.0
    %2826 = vmatpush1.msra.mxu0 0.0
    %2827 = vmatprep.subr.mxu0 0.0
    %2828 = vmatpush1.msra.mxu0 0.0
    %2829 = vmatprep.subr.mxu0 0.0
    %2830 = vmatpush1.msra.mxu0 0.0
    %2831 = vmatprep.subr.mxu0 0.0
    %2832 = vmatpush1.msra.mxu0 0.0
    %2833 = vmatprep.subr.mxu0 0.0
    %2834 = vmatpush1.msra.mxu0 0.0
    %2835 = vmatprep.subr.mxu0 0.0
    %2836 = vmatpush1.msra.mxu0 0.0
    %2837 = vmatprep.subr.mxu0 0.0
    %2838 = vmatpush1.msra.mxu0 0.0
    %2839 = vmatprep.subr.mxu0 0.0
    %2840 = vmatpush1.msra.mxu0 0.0
    %2841 = vmatprep.subr.mxu0 0.0
    %2842 = vmatpush1.msra.mxu0 0.0
    %2843 = vmatprep.mubr.f32.mxu0 0.0
    %2844 = vmatmul.mubr.f32.gmra.mrb[0].mxu0 %v2522
    %v2845 = vpop.f32.mrb[0].mxu0
    %v2846 = vadd.f32 0.0, %v2845
    %v2847 = vpop.f32.mrb[0].mxu0
    %2848 = vmatprep.mubr.f32.mxu0 0.0
    %2849 = vmatmul.mubr.f32.gmra.mrb[0].mxu0 %v2525
    %v2850 = vpop.f32.mrb[0].mxu0
    %v2851 = vadd.f32 0.0, %v2850
    %v2852 = vpop.f32.mrb[0].mxu0
    %2853 = vdwg.mxu0
    %v2854 = vadd.f32 %v2429, %v2615
    %v2855 = vadd.f32 %v2430, %v2617
    %v2856 = vadd.f32 %v2431, %v2692
    %v2857 = vadd.f32 %v2432, %v2694
    %v2858 = vadd.f32 %v2433, %v2769
    %v2859 = vadd.f32 %v2434, %v2771
    %v2860 = vadd.f32 %v2435, %v2846
    %v2861 = vadd.f32 %v2436, %v2621
    %v2862 = vadd.f32 %v2437, %v2623
    %v2863 = vadd.f32 %v2438, %v2698
    %v2864 = vadd.f32 %v2439, %v2700
    %v2865 = vadd.f32 %v2440, %v2775
    %v2866 = vadd.f32 %v2441, %v2777
    %v2867 = vadd.f32 %v2442, %v2851
    %2868 = vrot.lane.b32.xlu0 %v44, 100
    %v2869 = vpop.permute.xlu0 %2868
    %2870 = vrot.lane.b32.xlu0 %v52, 100
    %v2871 = vpop.permute.xlu0 %2870
    %2872 = vrot.lane.b32.xlu0 %v51, 100
    %v2873 = vpop.permute.xlu0 %2872
    %2874 = vrot.lane.b32.xlu0 %v53, 100
    %v2875 = vpop.permute.xlu0 %2874
    %2876 = vrot.lane.b32.xlu0 %v60, 100
    %v2877 = vpop.permute.xlu0 %2876
    %2878 = vrot.lane.b32.xlu0 %v61, 100
    %v2879 = vpop.permute.xlu0 %2878
    %2880 = vrot.lane.b32.xlu0 %v1249, 100
    %v2881 = vpop.permute.xlu0 %2880
    %vm2882 = vcmask 818176
    %v2883 = vsel %vm2882, %v2869, %v2871
    %v2884 = vsel %vm2882, %v2871, %v2873
    %v2885 = vsel %vm2882, %v2873, %v2875
    %v2886 = vsel %vm2882, %v2875, %v2877
    %v2887 = vsel %vm2882, %v2877, %v2879
    %v2888 = vsel %vm2882, %v2879, %v2881
    %vm2890 = vcmask 949248
    %v2891 = vsel %vm2890, %v2888, 0.0
    %v2892 = vld [vmem:[%s1 + $0x70] sm:$0xff]
    %v2893 = vld [vmem:[%s1 + $0x78] sm:$0xff]
    %v2895 = vsel %vm158, %v2892, 0
    %v2898 = vsel %vm158, %v2893, 0
    %v2900 = vsel %vm165, %v2883, 0
    %v2902 = vsel %vm165, %v2884, 0
    %v2904 = vsel %vm165, %v2885, 0
    %v2906 = vsel %vm165, %v2886, 0
    %v2908 = vsel %vm165, %v2887, 0
    %v2911 = vsel %vm165, %v2891, 0
    %v2914 = vsel %vm165, 0.0, 0
    %2916 = vmatprep.subr.mxu0 %v2902
    %2917 = vmatpush1.msra.mxu0 %v2900
    %2918 = vmatprep.subr.mxu0 0.0
    %2919 = vmatpush1.msra.mxu0 0.0
    %2920 = vmatprep.subr.mxu0 0.0
    %2921 = vmatpush1.msra.mxu0 0.0
    %2922 = vmatprep.subr.mxu0 0.0
    %2923 = vmatpush1.msra.mxu0 0.0
    %2924 = vmatprep.subr.mxu0 0.0
    %2925 = vmatpush1.msra.mxu0 0.0
    %2926 = vmatprep.subr.mxu0 0.0
    %2927 = vmatpush1.msra.mxu0 0.0
    %2928 = vmatprep.subr.mxu0 0.0
    %2929 = vmatpush1.msra.mxu0 0.0
    %2930 = vmatprep.subr.mxu0 0.0
    %2931 = vmatpush1.msra.mxu0 0.0
    %2932 = vmatprep.subr.mxu0 0.0
    %2933 = vmatpush1.msra.mxu0 0.0
    %2934 = vmatprep.subr.mxu0 0.0
    %2935 = vmatpush1.msra.mxu0 0.0
    %2936 = vmatprep.subr.mxu0 0.0
    %2937 = vmatpush1.msra.mxu0 0.0
    %2938 = vmatprep.subr.mxu0 0.0
    %2939 = vmatpush1.msra.mxu0 0.0
    %2940 = vmatprep.subr.mxu0 0.0
    %2941 = vmatpush1.msra.mxu0 0.0
    %2942 = vmatprep.subr.mxu0 0.0
    %2943 = vmatpush1.msra.mxu0 0.0
    %2944 = vmatprep.subr.mxu0 0.0
    %2945 = vmatpush1.msra.mxu0 0.0
    %2946 = vmatprep.subr.mxu0 0.0
    %2947 = vmatpush1.msra.mxu0 0.0
    %2948 = vmatprep.subr.mxu0 0.0
    %2949 = vmatpush1.msra.mxu0 0.0
    %2950 = vmatprep.subr.mxu0 0.0
    %2951 = vmatpush1.msra.mxu0 0.0
    %2952 = vmatprep.subr.mxu0 0.0
    %2953 = vmatpush1.msra.mxu0 0.0
    %2954 = vmatprep.subr.mxu0 0.0
    %2955 = vmatpush1.msra.mxu0 0.0
    %2956 = vmatprep.subr.mxu0 0.0
    %2957 = vmatpush1.msra.mxu0 0.0
    %2958 = vmatprep.subr.mxu0 0.0
    %2959 = vmatpush1.msra.mxu0 0.0
    %2960 = vmatprep.subr.mxu0 0.0
    %2961 = vmatpush1.msra.mxu0 0.0
    %2962 = vmatprep.subr.mxu0 0.0
    %2963 = vmatpush1.msra.mxu0 0.0
    %2964 = vmatprep.subr.mxu0 0.0
    %2965 = vmatpush1.msra.mxu0 0.0
    %2966 = vmatprep.subr.mxu0 0.0
    %2967 = vmatpush1.msra.mxu0 0.0
    %2968 = vmatprep.subr.mxu0 0.0
    %2969 = vmatpush1.msra.mxu0 0.0
    %2970 = vmatprep.subr.mxu0 0.0
    %2971 = vmatpush1.msra.mxu0 0.0
    %2972 = vmatprep.subr.mxu0 0.0
    %2973 = vmatpush1.msra.mxu0 0.0
    %2974 = vmatprep.subr.mxu0 0.0
    %2975 = vmatpush1.msra.mxu0 0.0
    %2976 = vmatprep.subr.mxu0 0.0
    %2977 = vmatpush1.msra.mxu0 0.0
    %2978 = vmatprep.subr.mxu0 0.0
    %2979 = vmatpush1.msra.mxu0 0.0
    %2980 = vmatprep.mubr.f32.mxu0 0.0
    %2981 = vmatmul.mubr.f32.gmra.mrb[0].mxu0 %v2895
    %v2982 = vpop.f32.mrb[0].mxu0
    %v2983 = vadd.f32 0.0, %v2982
    %v2984 = vpop.f32.mrb[0].mxu0
    %v2985 = vadd.f32 0.0, %v2984
    %2986 = vmatprep.mubr.f32.mxu0 0.0
    %2987 = vmatmul.mubr.f32.gmra.mrb[0].mxu0 %v2898
    %v2988 = vpop.f32.mrb[0].mxu0
    %v2989 = vadd.f32 0.0, %v2988
    %v2990 = vpop.f32.mrb[0].mxu0
    %v2991 = vadd.f32 0.0, %v2990
    %2992 = vdwg.mxu0
    %2993 = vmatprep.subr.mxu0 %v2906
    %2994 = vmatpush1.msra.mxu0 %v2904
    %2995 = vmatprep.subr.mxu0 0.0
    %2996 = vmatpush1.msra.mxu0 0.0
    %2997 = vmatprep.subr.mxu0 0.0
    %2998 = vmatpush1.msra.mxu0 0.0
    %2999 = vmatprep.subr.mxu0 0.0
    %3000 = vmatpush1.msra.mxu0 0.0
    %3001 = vmatprep.subr.mxu0 0.0
    %3002 = vmatpush1.msra.mxu0 0.0
    %3003 = vmatprep.subr.mxu0 0.0
    %3004 = vmatpush1.msra.mxu0 0.0
    %3005 = vmatprep.subr.mxu0 0.0
    %3006 = vmatpush1.msra.mxu0 0.0
    %3007 = vmatprep.subr.mxu0 0.0
    %3008 = vmatpush1.msra.mxu0 0.0
    %3009 = vmatprep.subr.mxu0 0.0
    %3010 = vmatpush1.msra.mxu0 0.0
    %3011 = vmatprep.subr.mxu0 0.0
    %3012 = vmatpush1.msra.mxu0 0.0
    %3013 = vmatprep.subr.mxu0 0.0
    %3014 = vmatpush1.msra.mxu0 0.0
    %3015 = vmatprep.subr.mxu0 0.0
    %3016 = vmatpush1.msra.mxu0 0.0
    %3017 = vmatprep.subr.mxu0 0.0
    %3018 = vmatpush1.msra.mxu0 0.0
    %3019 = vmatprep.subr.mxu0 0.0
    %3020 = vmatpush1.msra.mxu0 0.0
    %3021 = vmatprep.subr.mxu0 0.0
    %3022 = vmatpush1.msra.mxu0 0.0
    %3023 = vmatprep.subr.mxu0 0.0
    %3024 = vmatpush1.msra.mxu0 0.0
    %3025 = vmatprep.subr.mxu0 0.0
    %3026 = vmatpush1.msra.mxu0 0.0
    %3027 = vmatprep.subr.mxu0 0.0
    %3028 = vmatpush1.msra.mxu0 0.0
    %3029 = vmatprep.subr.mxu0 0.0
    %3030 = vmatpush1.msra.mxu0 0.0
    %3031 = vmatprep.subr.mxu0 0.0
    %3032 = vmatpush1.msra.mxu0 0.0
    %3033 = vmatprep.subr.mxu0 0.0
    %3034 = vmatpush1.msra.mxu0 0.0
    %3035 = vmatprep.subr.mxu0 0.0
    %3036 = vmatpush1.msra.mxu0 0.0
    %3037 = vmatprep.subr.mxu0 0.0
    %3038 = vmatpush1.msra.mxu0 0.0
    %3039 = vmatprep.subr.mxu0 0.0
    %3040 = vmatpush1.msra.mxu0 0.0
    %3041 = vmatprep.subr.mxu0 0.0
    %3042 = vmatpush1.msra.mxu0 0.0
    %3043 = vmatprep.subr.mxu0 0.0
    %3044 = vmatpush1.msra.mxu0 0.0
    %3045 = vmatprep.subr.mxu0 0.0
    %3046 = vmatpush1.msra.mxu0 0.0
    %3047 = vmatprep.subr.mxu0 0.0
    %3048 = vmatpush1.msra.mxu0 0.0
    %3049 = vmatprep.subr.mxu0 0.0
    %3050 = vmatpush1.msra.mxu0 0.0
    %3051 = vmatprep.subr.mxu0 0.0
    %3052 = vmatpush1.msra.mxu0 0.0
    %3053 = vmatprep.subr.mxu0 0.0
    %3054 = vmatpush1.msra.mxu0 0.0
    %3055 = vmatprep.subr.mxu0 0.0
    %3056 = vmatpush1.msra.mxu0 0.0
    %3057 = vmatprep.mubr.f32.mxu0 0.0
    %3058 = vmatmul.mubr.f32.gmra.mrb[0].mxu0 %v2895
    %v3059 = vpop.f32.mrb[0].mxu0
    %v3060 = vadd.f32 0.0, %v3059
    %v3061 = vpop.f32.mrb[0].mxu0
    %v3062 = vadd.f32 0.0, %v3061
    %3063 = vmatprep.mubr.f32.mxu0 0.0
    %3064 = vmatmul.mubr.f32.gmra.mrb[0].mxu0 %v2898
    %v3065 = vpop.f32.mrb[0].mxu0
    %v3066 = vadd.f32 0.0, %v3065
    %v3067 = vpop.f32.mrb[0].mxu0
    %v3068 = vadd.f32 0.0, %v3067
    %3069 = vdwg.mxu0
    %3070 = vmatprep.subr.mxu0 %v2911
    %3071 = vmatpush1.msra.mxu0 %v2908
    %3072 = vmatprep.subr.mxu0 0.0
    %3073 = vmatpush1.msra.mxu0 0.0
    %3074 = vmatprep.subr.mxu0 0.0
    %3075 = vmatpush1.msra.mxu0 0.0
    %3076 = vmatprep.subr.mxu0 0.0
    %3077 = vmatpush1.msra.mxu0 0.0
    %3078 = vmatprep.subr.mxu0 0.0
    %3079 = vmatpush1.msra.mxu0 0.0
    %3080 = vmatprep.subr.mxu0 0.0
    %3081 = vmatpush1.msra.mxu0 0.0
    %3082 = vmatprep.subr.mxu0 0.0
    %3083 = vmatpush1.msra.mxu0 0.0
    %3084 = vmatprep.subr.mxu0 0.0
    %3085 = vmatpush1.msra.mxu0 0.0
    %3086 = vmatprep.subr.mxu0 0.0
    %3087 = vmatpush1.msra.mxu0 0.0
    %3088 = vmatprep.subr.mxu0 0.0
    %3089 = vmatpush1.msra.mxu0 0.0
    %3090 = vmatprep.subr.mxu0 0.0
    %3091 = vmatpush1.msra.mxu0 0.0
    %3092 = vmatprep.subr.mxu0 0.0
    %3093 = vmatpush1.msra.mxu0 0.0
    %3094 = vmatprep.subr.mxu0 0.0
    %3095 = vmatpush1.msra.mxu0 0.0
    %3096 = vmatprep.subr.mxu0 0.0
    %3097 = vmatpush1.msra.mxu0 0.0
    %3098 = vmatprep.subr.mxu0 0.0
    %3099 = vmatpush1.msra.mxu0 0.0
    %3100 = vmatprep.subr.mxu0 0.0
    %3101 = vmatpush1.msra.mxu0 0.0
    %3102 = vmatprep.subr.mxu0 0.0
    %3103 = vmatpush1.msra.mxu0 0.0
    %3104 = vmatprep.subr.mxu0 0.0
    %3105 = vmatpush1.msra.mxu0 0.0
    %3106 = vmatprep.subr.mxu0 0.0
    %3107 = vmatpush1.msra.mxu0 0.0
    %3108 = vmatprep.subr.mxu0 0.0
    %3109 = vmatpush1.msra.mxu0 0.0
    %3110 = vmatprep.subr.mxu0 0.0
    %3111 = vmatpush1.msra.mxu0 0.0
    %3112 = vmatprep.subr.mxu0 0.0
    %3113 = vmatpush1.msra.mxu0 0.0
    %3114 = vmatprep.subr.mxu0 0.0
    %3115 = vmatpush1.msra.mxu0 0.0
    %3116 = vmatprep.subr.mxu0 0.0
    %3117 = vmatpush1.msra.mxu0 0.0
    %3118 = vmatprep.subr.mxu0 0.0
    %3119 = vmatpush1.msra.mxu0 0.0
    %3120 = vmatprep.subr.mxu0 0.0
    %3121 = vmatpush1.msra.mxu0 0.0
    %3122 = vmatprep.subr.mxu0 0.0
    %3123 = vmatpush1.msra.mxu0 0.0
    %3124 = vmatprep.subr.mxu0 0.0
    %3125 = vmatpush1.msra.mxu0 0.0
    %3126 = vmatprep.subr.mxu0 0.0
    %3127 = vmatpush1.msra.mxu0 0.0
    %3128 = vmatprep.subr.mxu0 0.0
    %3129 = vmatpush1.msra.mxu0 0.0
    %3130 = vmatprep.subr.mxu0 0.0
    %3131 = vmatpush1.msra.mxu0 0.0
    %3132 = vmatprep.subr.mxu0 0.0
    %3133 = vmatpush1.msra.mxu0 0.0
    %3134 = vmatprep.mubr.f32.mxu0 0.0
    %3135 = vmatmul.mubr.f32.gmra.mrb[0].mxu0 %v2895
    %v3136 = vpop.f32.mrb[0].mxu0
    %v3137 = vadd.f32 0.0, %v3136
    %v3138 = vpop.f32.mrb[0].mxu0
    %v3139 = vadd.f32 0.0, %v3138
    %3140 = vmatprep.mubr.f32.mxu0 0.0
    %3141 = vmatmul.mubr.f32.gmra.mrb[0].mxu0 %v2898
    %v3142 = vpop.f32.mrb[0].mxu0
    %v3143 = vadd.f32 0.0, %v3142
    %v3144 = vpop.f32.mrb[0].mxu0
    %v3145 = vadd.f32 0.0, %v3144
    %3146 = vdwg.mxu0
    %3147 = vmatprep.subr.mxu0 0.0
    %3148 = vmatpush1.msra.mxu0 %v2914
    %3149 = vmatprep.subr.mxu0 0.0
    %3150 = vmatpush1.msra.mxu0 0.0
    %3151 = vmatprep.subr.mxu0 0.0
    %3152 = vmatpush1.msra.mxu0 0.0
    %3153 = vmatprep.subr.mxu0 0.0
    %3154 = vmatpush1.msra.mxu0 0.0
    %3155 = vmatprep.subr.mxu0 0.0
    %3156 = vmatpush1.msra.mxu0 0.0
    %3157 = vmatprep.subr.mxu0 0.0
    %3158 = vmatpush1.msra.mxu0 0.0
    %3159 = vmatprep.subr.mxu0 0.0
    %3160 = vmatpush1.msra.mxu0 0.0
    %3161 = vmatprep.subr.mxu0 0.0
    %3162 = vmatpush1.msra.mxu0 0.0
    %3163 = vmatprep.subr.mxu0 0.0
    %3164 = vmatpush1.msra.mxu0 0.0
    %3165 = vmatprep.subr.mxu0 0.0
    %3166 = vmatpush1.msra.mxu0 0.0
    %3167 = vmatprep.subr.mxu0 0.0
    %3168 = vmatpush1.msra.mxu0 0.0
    %3169 = vmatprep.subr.mxu0 0.0
    %3170 = vmatpush1.msra.mxu0 0.0
    %3171 = vmatprep.subr.mxu0 0.0
    %3172 = vmatpush1.msra.mxu0 0.0
    %3173 = vmatprep.subr.mxu0 0.0
    %3174 = vmatpush1.msra.mxu0 0.0
    %3175 = vmatprep.subr.mxu0 0.0
    %3176 = vmatpush1.msra.mxu0 0.0
    %3177 = vmatprep.subr.mxu0 0.0
    %3178 = vmatpush1.msra.mxu0 0.0
    %3179 = vmatprep.subr.mxu0 0.0
    %3180 = vmatpush1.msra.mxu0 0.0
    %3181 = vmatprep.subr.mxu0 0.0
    %3182 = vmatpush1.msra.mxu0 0.0
    %3183 = vmatprep.subr.mxu0 0.0
    %3184 = vmatpush1.msra.mxu0 0.0
    %3185 = vmatprep.subr.mxu0 0.0
    %3186 = vmatpush1.msra.mxu0 0.0
    %3187 = vmatprep.subr.mxu0 0.0
    %3188 = vmatpush1.msra.mxu0 0.0
    %3189 = vmatprep.subr.mxu0 0.0
    %3190 = vmatpush1.msra.mxu0 0.0
    %3191 = vmatprep.subr.mxu0 0.0
    %3192 = vmatpush1.msra.mxu0 0.0
    %3193 = vmatprep.subr.mxu0 0.0
    %3194 = vmatpush1.msra.mxu0 0.0
    %3195 = vmatprep.subr.mxu0 0.0
    %3196 = vmatpush1.msra.mxu0 0.0
    %3197 = vmatprep.subr.mxu0 0.0
    %3198 = vmatpush1.msra.mxu0 0.0
    %3199 = vmatprep.subr.mxu0 0.0
    %3200 = vmatpush1.msra.mxu0 0.0
    %3201 = vmatprep.subr.mxu0 0.0
    %3202 = vmatpush1.msra.mxu0 0.0
    %3203 = vmatprep.subr.mxu0 0.0
    %3204 = vmatpush1.msra.mxu0 0.0
    %3205 = vmatprep.subr.mxu0 0.0
    %3206 = vmatpush1.msra.mxu0 0.0
    %3207 = vmatprep.subr.mxu0 0.0
    %3208 = vmatpush1.msra.mxu0 0.0
    %3209 = vmatprep.subr.mxu0 0.0
    %3210 = vmatpush1.msra.mxu0 0.0
    %3211 = vmatprep.mubr.f32.mxu0 0.0
    %3212 = vmatmul.mubr.f32.gmra.mrb[0].mxu0 %v2895
    %v3213 = vpop.f32.mrb[0].mxu0
    %v3214 = vadd.f32 0.0, %v3213
    %v3215 = vpop.f32.mrb[0].mxu0
    %3216 = vmatprep.mubr.f32.mxu0 0.0
    %3217 = vmatmul.mubr.f32.gmra.mrb[0].mxu0 %v2898
    %v3218 = vpop.f32.mrb[0].mxu0
    %v3219 = vadd.f32 0.0, %v3218
    %v3220 = vpop.f32.mrb[0].mxu0
    %3221 = vdwg.mxu0
    %v3222 = vadd.f32 %v2854, %v2983
    %v3223 = vadd.f32 %v2855, %v2985
    %v3224 = vadd.f32 %v2856, %v3060
    %v3225 = vadd.f32 %v2857, %v3062
    %v3226 = vadd.f32 %v2858, %v3137
    %v3227 = vadd.f32 %v2859, %v3139
    %v3228 = vadd.f32 %v2860, %v3214
    %v3229 = vadd.f32 %v2861, %v2989
    %v3230 = vadd.f32 %v2862, %v2991
    %v3231 = vadd.f32 %v2863, %v3066
    %v3232 = vadd.f32 %v2864, %v3068
    %v3233 = vadd.f32 %v2865, %v3143
    %v3234 = vadd.f32 %v2866, %v3145
    %v3235 = vadd.f32 %v2867, %v3219
    %3236 = vrot.lane.b32.xlu0 %v44, 99
    %v3237 = vpop.permute.xlu0 %3236
    %3238 = vrot.lane.b32.xlu0 %v52, 99
    %v3239 = vpop.permute.xlu0 %3238
    %3240 = vrot.lane.b32.xlu0 %v51, 99
    %v3241 = vpop.permute.xlu0 %3240
    %3242 = vrot.lane.b32.xlu0 %v53, 99
    %v3243 = vpop.permute.xlu0 %3242
    %3244 = vrot.lane.b32.xlu0 %v60, 99
    %v3245 = vpop.permute.xlu0 %3244
    %3246 = vrot.lane.b32.xlu0 %v61, 99
    %v3247 = vpop.permute.xlu0 %3246
    %3248 = vrot.lane.b32.xlu0 %v1249, 99
    %v3249 = vpop.permute.xlu0 %3248
    %vm3250 = vcmask 809984
    %v3251 = vsel %vm3250, %v3237, %v3239
    %v3252 = vsel %vm3250, %v3239, %v3241
    %v3253 = vsel %vm3250, %v3241, %v3243
    %v3254 = vsel %vm3250, %v3243, %v3245
    %v3255 = vsel %vm3250, %v3245, %v3247
    %v3256 = vsel %vm3250, %v3247, %v3249
    %vm3263 = vcmask 941056
    %v3264 = vsel %vm3263, %v3256, 0.0
    %s3265 = scalar_lea.vmem %s3, 56
    %v3266 = vld [vmem:[%s3265] ss:$8 sm:$0xf]
    %v3267 = vld [vmem:[%s3265] ss:$8 sm:$0x70]
    %v3268 = vor.u32 %v3266, %v3267
    %v3270 = vlaneseq
    %v3271 = vshrl.u32 %v3270, 7
    %v3272 = vsub.s32 0, %v3271
    %v3273 = vrot.slane %v3268, %v3272
    %v3274 = vlaneseq
    %v3275 = vshrl.u32 %v3274, 7
    %v3276 = vsub.s32 1, %v3275
    %v3277 = vrot.slane %v3268, %v3276
    %v3278 = vlaneseq
    %v3279 = vshrl.u32 %v3278, 7
    %v3280 = vsub.s32 2, %v3279
    %v3281 = vrot.slane %v3268, %v3280
    %v3282 = vlaneseq
    %v3283 = vshrl.u32 %v3282, 7
    %v3284 = vsub.s32 3, %v3283
    %v3285 = vrot.slane %v3268, %v3284
    %v3286 = vlaneseq
    %v3287 = vshrl.u32 %v3286, 7
    %v3288 = vsub.s32 4, %v3287
    %v3289 = vrot.slane %v3268, %v3288
    %v3290 = vlaneseq
    %v3291 = vshrl.u32 %v3290, 7
    %v3292 = vsub.s32 5, %v3291
    %v3293 = vrot.slane %v3268, %v3292
    %v3294 = vlaneseq
    %v3295 = vshrl.u32 %v3294, 7
    %v3296 = vsub.s32 6, %v3295
    %v3297 = vrot.slane %v3268, %v3296
    %v3305 = vmul.f32 %v3251, %v3273
    %v3306 = vmul.f32 %v3252, %v3277
    %v3307 = vmul.f32 %v3253, %v3281
    %v3308 = vmul.f32 %v3254, %v3285
    %v3309 = vmul.f32 %v3255, %v3289
    %v3310 = vmul.f32 %v3264, %v3293
    %v3311 = vmul.f32 %v3297, 0.0
    %v3312 = vld [vmem:[%s1 + $0x80] sm:$0xff]
    %v3313 = vld [vmem:[%s1 + $0x88] sm:$0xff]
    %v3315 = vsel %vm158, %v3312, 0
    %v3318 = vsel %vm158, %v3313, 0
    %v3321 = vsel %vm165, %v3305, 0
    %v3324 = vsel %vm165, %v3306, 0
    %v3327 = vsel %vm165, %v3307, 0
    %v3330 = vsel %vm165, %v3308, 0
    %v3333 = vsel %vm165, %v3309, 0
    %v3336 = vsel %vm165, %v3310, 0
    %v3339 = vsel %vm165, %v3311, 0
    %3341 = vmatprep.subr.mxu0 %v3324
    %3342 = vmatpush1.msra.mxu0 %v3321
    %3343 = vmatprep.subr.mxu0 0.0
    %3344 = vmatpush1.msra.mxu0 0.0
    %3345 = vmatprep.subr.mxu0 0.0
    %3346 = vmatpush1.msra.mxu0 0.0
    %3347 = vmatprep.subr.mxu0 0.0
    %3348 = vmatpush1.msra.mxu0 0.0
    %3349 = vmatprep.subr.mxu0 0.0
    %3350 = vmatpush1.msra.mxu0 0.0
    %3351 = vmatprep.subr.mxu0 0.0
    %3352 = vmatpush1.msra.mxu0 0.0
    %3353 = vmatprep.subr.mxu0 0.0
    %3354 = vmatpush1.msra.mxu0 0.0
    %3355 = vmatprep.subr.mxu0 0.0
    %3356 = vmatpush1.msra.mxu0 0.0
    %3357 = vmatprep.subr.mxu0 0.0
    %3358 = vmatpush1.msra.mxu0 0.0
    %3359 = vmatprep.subr.mxu0 0.0
    %3360 = vmatpush1.msra.mxu0 0.0
    %3361 = vmatprep.subr.mxu0 0.0
    %3362 = vmatpush1.msra.mxu0 0.0
    %3363 = vmatprep.subr.mxu0 0.0
    %3364 = vmatpush1.msra.mxu0 0.0
    %3365 = vmatprep.subr.mxu0 0.0
    %3366 = vmatpush1.msra.mxu0 0.0
    %3367 = vmatprep.subr.mxu0 0.0
    %3368 = vmatpush1.msra.mxu0 0.0
    %3369 = vmatprep.subr.mxu0 0.0
    %3370 = vmatpush1.msra.mxu0 0.0
    %3371 = vmatprep.subr.mxu0 0.0
    %3372 = vmatpush1.msra.mxu0 0.0
    %3373 = vmatprep.subr.mxu0 0.0
    %3374 = vmatpush1.msra.mxu0 0.0
    %3375 = vmatprep.subr.mxu0 0.0
    %3376 = vmatpush1.msra.mxu0 0.0
    %3377 = vmatprep.subr.mxu0 0.0
    %3378 = vmatpush1.msra.mxu0 0.0
    %3379 = vmatprep.subr.mxu0 0.0
    %3380 = vmatpush1.msra.mxu0 0.0
    %3381 = vmatprep.subr.mxu0 0.0
    %3382 = vmatpush1.msra.mxu0 0.0
    %3383 = vmatprep.subr.mxu0 0.0
    %3384 = vmatpush1.msra.mxu0 0.0
    %3385 = vmatprep.subr.mxu0 0.0
    %3386 = vmatpush1.msra.mxu0 0.0
    %3387 = vmatprep.subr.mxu0 0.0
    %3388 = vmatpush1.msra.mxu0 0.0
    %3389 = vmatprep.subr.mxu0 0.0
    %3390 = vmatpush1.msra.mxu0 0.0
    %3391 = vmatprep.subr.mxu0 0.0
    %3392 = vmatpush1.msra.mxu0 0.0
    %3393 = vmatprep.subr.mxu0 0.0
    %3394 = vmatpush1.msra.mxu0 0.0
    %3395 = vmatprep.subr.mxu0 0.0
    %3396 = vmatpush1.msra.mxu0 0.0
    %3397 = vmatprep.subr.mxu0 0.0
    %3398 = vmatpush1.msra.mxu0 0.0
    %3399 = vmatprep.subr.mxu0 0.0
    %3400 = vmatpush1.msra.mxu0 0.0
    %3401 = vmatprep.subr.mxu0 0.0
    %3402 = vmatpush1.msra.mxu0 0.0
    %3403 = vmatprep.subr.mxu0 0.0
    %3404 = vmatpush1.msra.mxu0 0.0
    %3405 = vmatprep.mubr.f32.mxu0 0.0
    %3406 = vmatmul.mubr.f32.gmra.mrb[0].mxu0 %v3315
    %v3407 = vpop.f32.mrb[0].mxu0
    %v3408 = vadd.f32 0.0, %v3407
    %v3409 = vpop.f32.mrb[0].mxu0
    %v3410 = vadd.f32 0.0, %v3409
    %3411 = vmatprep.mubr.f32.mxu0 0.0
    %3412 = vmatmul.mubr.f32.gmra.mrb[0].mxu0 %v3318
    %v3413 = vpop.f32.mrb[0].mxu0
    %v3414 = vadd.f32 0.0, %v3413
    %v3415 = vpop.f32.mrb[0].mxu0
    %v3416 = vadd.f32 0.0, %v3415
    %3417 = vdwg.mxu0
    %3418 = vmatprep.subr.mxu0 %v3330
    %3419 = vmatpush1.msra.mxu0 %v3327
    %3420 = vmatprep.subr.mxu0 0.0
    %3421 = vmatpush1.msra.mxu0 0.0
    %3422 = vmatprep.subr.mxu0 0.0
    %3423 = vmatpush1.msra.mxu0 0.0
    %3424 = vmatprep.subr.mxu0 0.0
    %3425 = vmatpush1.msra.mxu0 0.0
    %3426 = vmatprep.subr.mxu0 0.0
    %3427 = vmatpush1.msra.mxu0 0.0
    %3428 = vmatprep.subr.mxu0 0.0
    %3429 = vmatpush1.msra.mxu0 0.0
    %3430 = vmatprep.subr.mxu0 0.0
    %3431 = vmatpush1.msra.mxu0 0.0
    %3432 = vmatprep.subr.mxu0 0.0
    %3433 = vmatpush1.msra.mxu0 0.0
    %3434 = vmatprep.subr.mxu0 0.0
    %3435 = vmatpush1.msra.mxu0 0.0
    %3436 = vmatprep.subr.mxu0 0.0
    %3437 = vmatpush1.msra.mxu0 0.0
    %3438 = vmatprep.subr.mxu0 0.0
    %3439 = vmatpush1.msra.mxu0 0.0
    %3440 = vmatprep.subr.mxu0 0.0
    %3441 = vmatpush1.msra.mxu0 0.0
    %3442 = vmatprep.subr.mxu0 0.0
    %3443 = vmatpush1.msra.mxu0 0.0
    %3444 = vmatprep.subr.mxu0 0.0
    %3445 = vmatpush1.msra.mxu0 0.0
    %3446 = vmatprep.subr.mxu0 0.0
    %3447 = vmatpush1.msra.mxu0 0.0
    %3448 = vmatprep.subr.mxu0 0.0
    %3449 = vmatpush1.msra.mxu0 0.0
    %3450 = vmatprep.subr.mxu0 0.0
    %3451 = vmatpush1.msra.mxu0 0.0
    %3452 = vmatprep.subr.mxu0 0.0
    %3453 = vmatpush1.msra.mxu0 0.0
    %3454 = vmatprep.subr.mxu0 0.0
    %3455 = vmatpush1.msra.mxu0 0.0
    %3456 = vmatprep.subr.mxu0 0.0
    %3457 = vmatpush1.msra.mxu0 0.0
    %3458 = vmatprep.subr.mxu0 0.0
    %3459 = vmatpush1.msra.mxu0 0.0
    %3460 = vmatprep.subr.mxu0 0.0
    %3461 = vmatpush1.msra.mxu0 0.0
    %3462 = vmatprep.subr.mxu0 0.0
    %3463 = vmatpush1.msra.mxu0 0.0
    %3464 = vmatprep.subr.mxu0 0.0
    %3465 = vmatpush1.msra.mxu0 0.0
    %3466 = vmatprep.subr.mxu0 0.0
    %3467 = vmatpush1.msra.mxu0 0.0
    %3468 = vmatprep.subr.mxu0 0.0
    %3469 = vmatpush1.msra.mxu0 0.0
    %3470 = vmatprep.subr.mxu0 0.0
    %3471 = vmatpush1.msra.mxu0 0.0
    %3472 = vmatprep.subr.mxu0 0.0
    %3473 = vmatpush1.msra.mxu0 0.0
    %3474 = vmatprep.subr.mxu0 0.0
    %3475 = vmatpush1.msra.mxu0 0.0
    %3476 = vmatprep.subr.mxu0 0.0
    %3477 = vmatpush1.msra.mxu0 0.0
    %3478 = vmatprep.subr.mxu0 0.0
    %3479 = vmatpush1.msra.mxu0 0.0
    %3480 = vmatprep.subr.mxu0 0.0
    %3481 = vmatpush1.msra.mxu0 0.0
    %3482 = vmatprep.mubr.f32.mxu0 0.0
    %3483 = vmatmul.mubr.f32.gmra.mrb[0].mxu0 %v3315
    %v3484 = vpop.f32.mrb[0].mxu0
    %v3485 = vadd.f32 0.0, %v3484
    %v3486 = vpop.f32.mrb[0].mxu0
    %v3487 = vadd.f32 0.0, %v3486
    %3488 = vmatprep.mubr.f32.mxu0 0.0
    %3489 = vmatmul.mubr.f32.gmra.mrb[0].mxu0 %v3318
    %v3490 = vpop.f32.mrb[0].mxu0
    %v3491 = vadd.f32 0.0, %v3490
    %v3492 = vpop.f32.mrb[0].mxu0
    %v3493 = vadd.f32 0.0, %v3492
    %3494 = vdwg.mxu0
    %3495 = vmatprep.subr.mxu0 %v3336
    %3496 = vmatpush1.msra.mxu0 %v3333
    %3497 = vmatprep.subr.mxu0 0.0
    %3498 = vmatpush1.msra.mxu0 0.0
    %3499 = vmatprep.subr.mxu0 0.0
    %3500 = vmatpush1.msra.mxu0 0.0
    %3501 = vmatprep.subr.mxu0 0.0
    %3502 = vmatpush1.msra.mxu0 0.0
    %3503 = vmatprep.subr.mxu0 0.0
    %3504 = vmatpush1.msra.mxu0 0.0
    %3505 = vmatprep.subr.mxu0 0.0
    %3506 = vmatpush1.msra.mxu0 0.0
    %3507 = vmatprep.subr.mxu0 0.0
    %3508 = vmatpush1.msra.mxu0 0.0
    %3509 = vmatprep.subr.mxu0 0.0
    %3510 = vmatpush1.msra.mxu0 0.0
    %3511 = vmatprep.subr.mxu0 0.0
    %3512 = vmatpush1.msra.mxu0 0.0
    %3513 = vmatprep.subr.mxu0 0.0
    %3514 = vmatpush1.msra.mxu0 0.0
    %3515 = vmatprep.subr.mxu0 0.0
    %3516 = vmatpush1.msra.mxu0 0.0
    %3517 = vmatprep.subr.mxu0 0.0
    %3518 = vmatpush1.msra.mxu0 0.0
    %3519 = vmatprep.subr.mxu0 0.0
    %3520 = vmatpush1.msra.mxu0 0.0
    %3521 = vmatprep.subr.mxu0 0.0
    %3522 = vmatpush1.msra.mxu0 0.0
    %3523 = vmatprep.subr.mxu0 0.0
    %3524 = vmatpush1.msra.mxu0 0.0
    %3525 = vmatprep.subr.mxu0 0.0
    %3526 = vmatpush1.msra.mxu0 0.0
    %3527 = vmatprep.subr.mxu0 0.0
    %3528 = vmatpush1.msra.mxu0 0.0
    %3529 = vmatprep.subr.mxu0 0.0
    %3530 = vmatpush1.msra.mxu0 0.0
    %3531 = vmatprep.subr.mxu0 0.0
    %3532 = vmatpush1.msra.mxu0 0.0
    %3533 = vmatprep.subr.mxu0 0.0
    %3534 = vmatpush1.msra.mxu0 0.0
    %3535 = vmatprep.subr.mxu0 0.0
    %3536 = vmatpush1.msra.mxu0 0.0
    %3537 = vmatprep.subr.mxu0 0.0
    %3538 = vmatpush1.msra.mxu0 0.0
    %3539 = vmatprep.subr.mxu0 0.0
    %3540 = vmatpush1.msra.mxu0 0.0
    %3541 = vmatprep.subr.mxu0 0.0
    %3542 = vmatpush1.msra.mxu0 0.0
    %3543 = vmatprep.subr.mxu0 0.0
    %3544 = vmatpush1.msra.mxu0 0.0
    %3545 = vmatprep.subr.mxu0 0.0
    %3546 = vmatpush1.msra.mxu0 0.0
    %3547 = vmatprep.subr.mxu0 0.0
    %3548 = vmatpush1.msra.mxu0 0.0
    %3549 = vmatprep.subr.mxu0 0.0
    %3550 = vmatpush1.msra.mxu0 0.0
    %3551 = vmatprep.subr.mxu0 0.0
    %3552 = vmatpush1.msra.mxu0 0.0
    %3553 = vmatprep.subr.mxu0 0.0
    %3554 = vmatpush1.msra.mxu0 0.0
    %3555 = vmatprep.subr.mxu0 0.0
    %3556 = vmatpush1.msra.mxu0 0.0
    %3557 = vmatprep.subr.mxu0 0.0
    %3558 = vmatpush1.msra.mxu0 0.0
    %3559 = vmatprep.mubr.f32.mxu0 0.0
    %3560 = vmatmul.mubr.f32.gmra.mrb[0].mxu0 %v3315
    %v3561 = vpop.f32.mrb[0].mxu0
    %v3562 = vadd.f32 0.0, %v3561
    %v3563 = vpop.f32.mrb[0].mxu0
    %v3564 = vadd.f32 0.0, %v3563
    %3565 = vmatprep.mubr.f32.mxu0 0.0
    %3566 = vmatmul.mubr.f32.gmra.mrb[0].mxu0 %v3318
    %v3567 = vpop.f32.mrb[0].mxu0
    %v3568 = vadd.f32 0.0, %v3567
    %v3569 = vpop.f32.mrb[0].mxu0
    %v3570 = vadd.f32 0.0, %v3569
    %3571 = vdwg.mxu0
    %3572 = vmatprep.subr.mxu0 0.0
    %3573 = vmatpush1.msra.mxu0 %v3339
    %3574 = vmatprep.subr.mxu0 0.0
    %3575 = vmatpush1.msra.mxu0 0.0
    %3576 = vmatprep.subr.mxu0 0.0
    %3577 = vmatpush1.msra.mxu0 0.0
    %3578 = vmatprep.subr.mxu0 0.0
    %3579 = vmatpush1.msra.mxu0 0.0
    %3580 = vmatprep.subr.mxu0 0.0
    %3581 = vmatpush1.msra.mxu0 0.0
    %3582 = vmatprep.subr.mxu0 0.0
    %3583 = vmatpush1.msra.mxu0 0.0
    %3584 = vmatprep.subr.mxu0 0.0
    %3585 = vmatpush1.msra.mxu0 0.0
    %3586 = vmatprep.subr.mxu0 0.0
    %3587 = vmatpush1.msra.mxu0 0.0
    %3588 = vmatprep.subr.mxu0 0.0
    %3589 = vmatpush1.msra.mxu0 0.0
    %3590 = vmatprep.subr.mxu0 0.0
    %3591 = vmatpush1.msra.mxu0 0.0
    %3592 = vmatprep.subr.mxu0 0.0
    %3593 = vmatpush1.msra.mxu0 0.0
    %3594 = vmatprep.subr.mxu0 0.0
    %3595 = vmatpush1.msra.mxu0 0.0
    %3596 = vmatprep.subr.mxu0 0.0
    %3597 = vmatpush1.msra.mxu0 0.0
    %3598 = vmatprep.subr.mxu0 0.0
    %3599 = vmatpush1.msra.mxu0 0.0
    %3600 = vmatprep.subr.mxu0 0.0
    %3601 = vmatpush1.msra.mxu0 0.0
    %3602 = vmatprep.subr.mxu0 0.0
    %3603 = vmatpush1.msra.mxu0 0.0
    %3604 = vmatprep.subr.mxu0 0.0
    %3605 = vmatpush1.msra.mxu0 0.0
    %3606 = vmatprep.subr.mxu0 0.0
    %3607 = vmatpush1.msra.mxu0 0.0
    %3608 = vmatprep.subr.mxu0 0.0
    %3609 = vmatpush1.msra.mxu0 0.0
    %3610 = vmatprep.subr.mxu0 0.0
    %3611 = vmatpush1.msra.mxu0 0.0
    %3612 = vmatprep.subr.mxu0 0.0
    %3613 = vmatpush1.msra.mxu0 0.0
    %3614 = vmatprep.subr.mxu0 0.0
    %3615 = vmatpush1.msra.mxu0 0.0
    %3616 = vmatprep.subr.mxu0 0.0
    %3617 = vmatpush1.msra.mxu0 0.0
    %3618 = vmatprep.subr.mxu0 0.0
    %3619 = vmatpush1.msra.mxu0 0.0
    %3620 = vmatprep.subr.mxu0 0.0
    %3621 = vmatpush1.msra.mxu0 0.0
    %3622 = vmatprep.subr.mxu0 0.0
    %3623 = vmatpush1.msra.mxu0 0.0
    %3624 = vmatprep.subr.mxu0 0.0
    %3625 = vmatpush1.msra.mxu0 0.0
    %3626 = vmatprep.subr.mxu0 0.0
    %3627 = vmatpush1.msra.mxu0 0.0
    %3628 = vmatprep.subr.mxu0 0.0
    %3629 = vmatpush1.msra.mxu0 0.0
    %3630 = vmatprep.subr.mxu0 0.0
    %3631 = vmatpush1.msra.mxu0 0.0
    %3632 = vmatprep.subr.mxu0 0.0
    %3633 = vmatpush1.msra.mxu0 0.0
    %3634 = vmatprep.subr.mxu0 0.0
    %3635 = vmatpush1.msra.mxu0 0.0
    %3636 = vmatprep.mubr.f32.mxu0 0.0
    %3637 = vmatmul.mubr.f32.gmra.mrb[0].mxu0 %v3315
    %v3638 = vpop.f32.mrb[0].mxu0
    %v3639 = vadd.f32 0.0, %v3638
    %v3640 = vpop.f32.mrb[0].mxu0
    %3641 = vmatprep.mubr.f32.mxu0 0.0
    %3642 = vmatmul.mubr.f32.gmra.mrb[0].mxu0 %v3318
    %v3643 = vpop.f32.mrb[0].mxu0
    %v3644 = vadd.f32 0.0, %v3643
    %v3645 = vpop.f32.mrb[0].mxu0
    %3646 = vdwg.mxu0
    %v3647 = vadd.f32 %v3222, %v3408
    %v3648 = vadd.f32 %v3223, %v3410
    %v3649 = vadd.f32 %v3224, %v3485
    %v3650 = vadd.f32 %v3225, %v3487
    %v3651 = vadd.f32 %v3226, %v3562
    %v3652 = vadd.f32 %v3227, %v3564
    %v3653 = vadd.f32 %v3228, %v3639
    %v3654 = vadd.f32 %v3229, %v3414
    %v3655 = vadd.f32 %v3230, %v3416
    %v3656 = vadd.f32 %v3231, %v3491
    %v3657 = vadd.f32 %v3232, %v3493
    %v3658 = vadd.f32 %v3233, %v3568
    %v3659 = vadd.f32 %v3234, %v3570
    %v3660 = vadd.f32 %v3235, %v3644
    %v3661 = vld [vmem:[%s2] sm:$0xff]
    %v3662 = vld [vmem:[%s2 + $0x8] sm:$0xff]
    %3664 = vset.pattern.permute.xlu0 0
    %3665 = vperm.xlu0 %3664, %v3661
    %v3666 = vpop.permute.xlu0 %3665
    %3669 = vset.pattern.permute.xlu0 0
    %3670 = vperm.xlu0 %3669, %v3662
    %v3671 = vpop.permute.xlu0 %3670
    %v3673 = vadd.f32 %v3647, %v3666
    %v3674 = vadd.f32 %v3648, %v3666
    %v3675 = vadd.f32 %v3649, %v3666
    %v3676 = vadd.f32 %v3650, %v3666
    %v3677 = vadd.f32 %v3651, %v3666
    %v3678 = vadd.f32 %v3652, %v3666
    %v3679 = vadd.f32 %v3653, %v3666
    %v3680 = vadd.f32 %v3654, %v3671
    %v3681 = vadd.f32 %v3655, %v3671
    %v3682 = vadd.f32 %v3656, %v3671
    %v3683 = vadd.f32 %v3657, %v3671
    %v3684 = vadd.f32 %v3658, %v3671
    %v3685 = vadd.f32 %v3659, %v3671
    %v3686 = vadd.f32 %v3660, %v3671
    %v3687 = vmax.f32 %v3673, 0.0
    %v3688 = vmax.f32 %v3674, 0.0
    %v3689 = vmax.f32 %v3675, 0.0
    %v3690 = vmax.f32 %v3676, 0.0
    %v3691 = vmax.f32 %v3677, 0.0
    %v3692 = vmax.f32 %v3678, 0.0
    %v3693 = vmax.f32 %v3679, 0.0
    %v3694 = vmax.f32 %v3680, 0.0
    %v3695 = vmax.f32 %v3681, 0.0
    %v3696 = vmax.f32 %v3682, 0.0
    %v3697 = vmax.f32 %v3683, 0.0
    %v3698 = vmax.f32 %v3684, 0.0
    %v3699 = vmax.f32 %v3685, 0.0
    %v3700 = vmax.f32 %v3686, 0.0
    %v3701 = vlaneseq
    %v3702 = vshrl.u32 %v3701, 7
    %v3703 = vadd.s32 %v3702, 8
    %v3704 = vadd.s32 %v3702, 16
    %v3705 = vadd.s32 %v3702, 24
    %v3706 = vadd.s32 %v3702, 32
    %v3707 = vadd.s32 %v3702, 40
    %v3708 = vadd.s32 %v3702, 48
    %v3709 = vadd.s32 %v3702, 56
    %v3710 = vadd.s32 %v3702, 64
    %v3711 = vadd.s32 %v3702, 72
    %v3712 = vadd.s32 %v3702, 80
    %v3713 = vadd.s32 %v3702, 88
    %v3714 = vadd.s32 %v3702, 96
    %v3715 = vadd.s32 %v3702, 104
    %v3716 = vadd.s32 %v3702, 112
    %v3717 = vadd.s32 %v3702, 120
    %v3718 = vadd.s32 %v3702, 128
    %v3719 = vadd.s32 %v3702, 136
    %v3720 = vadd.s32 %v3702, 144
    %v3721 = vadd.s32 %v3702, 152
    %v3722 = vadd.s32 %v3702, 160
    %v3723 = vadd.s32 %v3702, 168
    %v3724 = vadd.s32 %v3702, 176
    %v3725 = vadd.s32 %v3702, 184
    %v3726 = vadd.s32 %v3702, 192
    %v3727 = vadd.s32 %v3702, 200
    %v3728 = vadd.s32 %v3702, 208
    %v3729 = vadd.s32 %v3702, 216
    %v3730 = vadd.s32 %v3702, 224
    %v3731 = vadd.s32 %v3702, 232
    %v3732 = vadd.s32 %v3702, 240
    %v3733 = vadd.s32 %v3702, 248
    %v3734 = vadd.s32 %v3702, 256
    %v3735 = vadd.s32 %v3702, 264
    %v3736 = vadd.s32 %v3702, 272
    %v3737 = vadd.s32 %v3702, 280
    %v3738 = vadd.s32 %v3702, 288
    %v3739 = vadd.s32 %v3702, 296
    %v3740 = vadd.s32 %v3702, 304
    %v3741 = vadd.s32 %v3702, 312
    %v3742 = vadd.s32 %v3702, 320
    %v3743 = vadd.s32 %v3702, 328
    %v3744 = vadd.s32 %v3702, 336
    %v3745 = vadd.s32 %v3702, 344
    %v3746 = vadd.s32 %v3702, 352
    %v3747 = vadd.s32 %v3702, 360
    %v3748 = vadd.s32 %v3702, 368
    %v3749 = vadd.s32 %v3702, 376
    %v3750 = vadd.s32 %v3702, 384
    %v3751 = vadd.s32 %v3702, 392
    %v3752 = vadd.s32 %v3702, 400
    %v3753 = vadd.s32 %v3702, 408
    %v3754 = vadd.s32 %v3702, 416
    %v3755 = vadd.s32 %v3702, 424
    %v3756 = vadd.s32 %v3702, 432
    %v3757 = vadd.s32 %v3702, 440
    %v3758 = vadd.s32 %v3702, 448
    %v3759 = vadd.s32 %v3702, 456
    %v3760 = vadd.s32 %v3702, 464
    %v3761 = vadd.s32 %v3702, 472
    %v3762 = vadd.s32 %v3702, 480
    %v3763 = vadd.s32 %v3702, 488
    %v3764 = vadd.s32 %v3702, 496
    %v3765 = vadd.s32 %v3702, 504
    %v3766 = vadd.s32 %v3702, 512
    %v3767 = vadd.s32 %v3702, 520
    %v3768 = vadd.s32 %v3702, 528
    %v3769 = vadd.s32 %v3702, 536
    %v3770 = vadd.s32 %v3702, 544
    %v3771 = vadd.s32 %v3702, 552
    %v3772 = vadd.s32 %v3702, 560
    %v3773 = vadd.s32 %v3702, 568
    %v3774 = vadd.s32 %v3702, 576
    %v3775 = vadd.s32 %v3702, 584
    %v3776 = vadd.s32 %v3702, 592
    %v3777 = vadd.s32 %v3702, 600
    %v3778 = vadd.s32 %v3702, 608
    %v3779 = vadd.s32 %v3702, 616
    %v3780 = vadd.s32 %v3702, 624
    %v3781 = vadd.s32 %v3702, 632
    %v3782 = vadd.s32 %v3702, 640
    %v3783 = vadd.s32 %v3702, 648
    %v3784 = vadd.s32 %v3702, 656
    %v3785 = vadd.s32 %v3702, 664
    %v3786 = vadd.s32 %v3702, 672
    %v3787 = vadd.s32 %v3702, 680
    %v3788 = vadd.s32 %v3702, 688
    %v3789 = vadd.s32 %v3702, 696
    %v3790 = vadd.s32 %v3702, 704
    %v3791 = vadd.s32 %v3702, 712
    %v3792 = vadd.s32 %v3702, 720
    %v3793 = vadd.s32 %v3702, 728
    %v3794 = vadd.s32 %v3702, 736
    %v3795 = vadd.s32 %v3702, 744
    %v3796 = vadd.s32 %v3702, 752
    %v3797 = vadd.s32 %v3702, 760
    %v3798 = vadd.s32 %v3702, 768
    %v3799 = vadd.s32 %v3702, 776
    %v3800 = vcvt.s32.f32 %v3702
    %v3801 = vcvt.s32.f32 %v3703
    %v3802 = vcvt.s32.f32 %v3704
    %v3803 = vcvt.s32.f32 %v3705
    %v3804 = vcvt.s32.f32 %v3706
    %v3805 = vcvt.s32.f32 %v3707
    %v3806 = vcvt.s32.f32 %v3708
    %v3807 = vcvt.s32.f32 %v3709
    %v3808 = vcvt.s32.f32 %v3710
    %v3809 = vcvt.s32.f32 %v3711
    %v3810 = vcvt.s32.f32 %v3712
    %v3811 = vcvt.s32.f32 %v3713
    %v3812 = vcvt.s32.f32 %v3714
    %v3813 = vcvt.s32.f32 %v3715
    %v3814 = vcvt.s32.f32 %v3716
    %v3815 = vcvt.s32.f32 %v3717
    %v3816 = vcvt.s32.f32 %v3718
    %v3817 = vcvt.s32.f32 %v3719
    %v3818 = vcvt.s32.f32 %v3720
    %v3819 = vcvt.s32.f32 %v3721
    %v3820 = vcvt.s32.f32 %v3722
    %v3821 = vcvt.s32.f32 %v3723
    %v3822 = vcvt.s32.f32 %v3724
    %v3823 = vcvt.s32.f32 %v3725
    %v3824 = vcvt.s32.f32 %v3726
    %v3825 = vcvt.s32.f32 %v3727
    %v3826 = vcvt.s32.f32 %v3728
    %v3827 = vcvt.s32.f32 %v3729
    %v3828 = vcvt.s32.f32 %v3730
    %v3829 = vcvt.s32.f32 %v3731
    %v3830 = vcvt.s32.f32 %v3732
    %v3831 = vcvt.s32.f32 %v3733
    %v3832 = vcvt.s32.f32 %v3734
    %v3833 = vcvt.s32.f32 %v3735
    %v3834 = vcvt.s32.f32 %v3736
    %v3835 = vcvt.s32.f32 %v3737
    %v3836 = vcvt.s32.f32 %v3738
    %v3837 = vcvt.s32.f32 %v3739
    %v3838 = vcvt.s32.f32 %v3740
    %v3839 = vcvt.s32.f32 %v3741
    %v3840 = vcvt.s32.f32 %v3742
    %v3841 = vcvt.s32.f32 %v3743
    %v3842 = vcvt.s32.f32 %v3744
    %v3843 = vcvt.s32.f32 %v3745
    %v3844 = vcvt.s32.f32 %v3746
    %v3845 = vcvt.s32.f32 %v3747
    %v3846 = vcvt.s32.f32 %v3748
    %v3847 = vcvt.s32.f32 %v3749
    %v3848 = vcvt.s32.f32 %v3750
    %v3849 = vcvt.s32.f32 %v3751
    %v3850 = vcvt.s32.f32 %v3752
    %v3851 = vcvt.s32.f32 %v3753
    %v3852 = vcvt.s32.f32 %v3754
    %v3853 = vcvt.s32.f32 %v3755
    %v3854 = vcvt.s32.f32 %v3756
    %v3855 = vcvt.s32.f32 %v3757
    %v3856 = vcvt.s32.f32 %v3758
    %v3857 = vcvt.s32.f32 %v3759
    %v3858 = vcvt.s32.f32 %v3760
    %v3859 = vcvt.s32.f32 %v3761
    %v3860 = vcvt.s32.f32 %v3762
    %v3861 = vcvt.s32.f32 %v3763
    %v3862 = vcvt.s32.f32 %v3764
    %v3863 = vcvt.s32.f32 %v3765
    %v3864 = vcvt.s32.f32 %v3766
    %v3865 = vcvt.s32.f32 %v3767
    %v3866 = vcvt.s32.f32 %v3768
    %v3867 = vcvt.s32.f32 %v3769
    %v3868 = vcvt.s32.f32 %v3770
    %v3869 = vcvt.s32.f32 %v3771
    %v3870 = vcvt.s32.f32 %v3772
    %v3871 = vcvt.s32.f32 %v3773
    %v3872 = vcvt.s32.f32 %v3774
    %v3873 = vcvt.s32.f32 %v3775
    %v3874 = vcvt.s32.f32 %v3776
    %v3875 = vcvt.s32.f32 %v3777
    %v3876 = vcvt.s32.f32 %v3778
    %v3877 = vcvt.s32.f32 %v3779
    %v3878 = vcvt.s32.f32 %v3780
    %v3879 = vcvt.s32.f32 %v3781
    %v3880 = vcvt.s32.f32 %v3782
    %v3881 = vcvt.s32.f32 %v3783
    %v3882 = vcvt.s32.f32 %v3784
    %v3883 = vcvt.s32.f32 %v3785
    %v3884 = vcvt.s32.f32 %v3786
    %v3885 = vcvt.s32.f32 %v3787
    %v3886 = vcvt.s32.f32 %v3788
    %v3887 = vcvt.s32.f32 %v3789
    %v3888 = vcvt.s32.f32 %v3790
    %v3889 = vcvt.s32.f32 %v3791
    %v3890 = vcvt.s32.f32 %v3792
    %v3891 = vcvt.s32.f32 %v3793
    %v3892 = vcvt.s32.f32 %v3794
    %v3893 = vcvt.s32.f32 %v3795
    %v3894 = vcvt.s32.f32 %v3796
    %v3895 = vcvt.s32.f32 %v3797
    %v3896 = vcvt.s32.f32 %v3798
    %v3897 = vcvt.s32.f32 %v3799
    %v3898 = vlaneseq
    %v3899 = vand.u32 %v3898, 127
    %v3900 = vadd.s32 %v3899, 128
    %v3901 = vcvt.s32.f32 %v3899
    %v3902 = vcvt.s32.f32 %v3900
    %v3903 = vadd.f32 %v3901, 0.5
    %v3904 = vadd.f32 %v3902, 0.5
    %v3905 = vmul.f32 %v3903, 0.071428575
    %v3906 = vmul.f32 %v3904, 0.071428575
    %v3907 = vfloor.f32 %v3905
    %v3908 = vfloor.f32 %v3906
    %v3909 = vmul.f32 %v3907, 14.0
    %v3910 = vmul.f32 %v3908, 14.0
    %v3911 = vsub.f32 %v3901, %v3909
    %v3912 = vsub.f32 %v3902, %v3910
    %v3913 = vmul.f32 %v3907, 56.0
    %v3914 = vmul.f32 %v3908, 56.0
    %v3915 = vmul.f32 %v3911, 2.0
    %v3916 = vmul.f32 %v3912, 2.0
    %v3917 = vadd.f32 %v3913, %v3915
    %v3918 = vadd.f32 %v3914, %v3916
    %vm3919 = vcmp.eq.f32.partialorder %v3800, %v3917
    %vm3920 = vcmp.eq.f32.partialorder %v3800, %v3918
    %vm3921 = vcmp.eq.f32.partialorder %v3801, %v3917
    %vm3922 = vcmp.eq.f32.partialorder %v3801, %v3918
    %vm3923 = vcmp.eq.f32.partialorder %v3802, %v3917
    %vm3924 = vcmp.eq.f32.partialorder %v3802, %v3918
    %vm3925 = vcmp.eq.f32.partialorder %v3803, %v3917
    %vm3926 = vcmp.eq.f32.partialorder %v3803, %v3918
    %vm3927 = vcmp.eq.f32.partialorder %v3804, %v3917
    %vm3928 = vcmp.eq.f32.partialorder %v3804, %v3918
    %vm3929 = vcmp.eq.f32.partialorder %v3805, %v3917
    %vm3930 = vcmp.eq.f32.partialorder %v3805, %v3918
    %vm3931 = vcmp.eq.f32.partialorder %v3806, %v3917
    %vm3932 = vcmp.eq.f32.partialorder %v3806, %v3918
    %vm3933 = vcmp.eq.f32.partialorder %v3807, %v3917
    %vm3934 = vcmp.eq.f32.partialorder %v3807, %v3918
    %vm3935 = vcmp.eq.f32.partialorder %v3808, %v3917
    %vm3936 = vcmp.eq.f32.partialorder %v3808, %v3918
    %vm3937 = vcmp.eq.f32.partialorder %v3809, %v3917
    %vm3938 = vcmp.eq.f32.partialorder %v3809, %v3918
    %vm3939 = vcmp.eq.f32.partialorder %v3810, %v3917
    %vm3940 = vcmp.eq.f32.partialorder %v3810, %v3918
    %vm3941 = vcmp.eq.f32.partialorder %v3811, %v3917
    %vm3942 = vcmp.eq.f32.partialorder %v3811, %v3918
    %vm3943 = vcmp.eq.f32.partialorder %v3812, %v3917
    %vm3944 = vcmp.eq.f32.partialorder %v3812, %v3918
    %vm3945 = vcmp.eq.f32.partialorder %v3813, %v3917
    %vm3946 = vcmp.eq.f32.partialorder %v3813, %v3918
    %vm3947 = vcmp.eq.f32.partialorder %v3814, %v3917
    %vm3948 = vcmp.eq.f32.partialorder %v3814, %v3918
    %vm3949 = vcmp.eq.f32.partialorder %v3815, %v3917
    %vm3950 = vcmp.eq.f32.partialorder %v3815, %v3918
    %vm3951 = vcmp.eq.f32.partialorder %v3816, %v3917
    %vm3952 = vcmp.eq.f32.partialorder %v3816, %v3918
    %vm3953 = vcmp.eq.f32.partialorder %v3817, %v3917
    %vm3954 = vcmp.eq.f32.partialorder %v3817, %v3918
    %vm3955 = vcmp.eq.f32.partialorder %v3818, %v3917
    %vm3956 = vcmp.eq.f32.partialorder %v3818, %v3918
    %vm3957 = vcmp.eq.f32.partialorder %v3819, %v3917
    %vm3958 = vcmp.eq.f32.partialorder %v3819, %v3918
    %vm3959 = vcmp.eq.f32.partialorder %v3820, %v3917
    %vm3960 = vcmp.eq.f32.partialorder %v3820, %v3918
    %vm3961 = vcmp.eq.f32.partialorder %v3821, %v3917
    %vm3962 = vcmp.eq.f32.partialorder %v3821, %v3918
    %vm3963 = vcmp.eq.f32.partialorder %v3822, %v3917
    %vm3964 = vcmp.eq.f32.partialorder %v3822, %v3918
    %vm3965 = vcmp.eq.f32.partialorder %v3823, %v3917
    %vm3966 = vcmp.eq.f32.partialorder %v3823, %v3918
    %vm3967 = vcmp.eq.f32.partialorder %v3824, %v3917
    %vm3968 = vcmp.eq.f32.partialorder %v3824, %v3918
    %vm3969 = vcmp.eq.f32.partialorder %v3825, %v3917
    %vm3970 = vcmp.eq.f32.partialorder %v3825, %v3918
    %vm3971 = vcmp.eq.f32.partialorder %v3826, %v3917
    %vm3972 = vcmp.eq.f32.partialorder %v3826, %v3918
    %vm3973 = vcmp.eq.f32.partialorder %v3827, %v3917
    %vm3974 = vcmp.eq.f32.partialorder %v3827, %v3918
    %vm3975 = vcmp.eq.f32.partialorder %v3828, %v3917
    %vm3976 = vcmp.eq.f32.partialorder %v3828, %v3918
    %vm3977 = vcmp.eq.f32.partialorder %v3829, %v3917
    %vm3978 = vcmp.eq.f32.partialorder %v3829, %v3918
    %vm3979 = vcmp.eq.f32.partialorder %v3830, %v3917
    %vm3980 = vcmp.eq.f32.partialorder %v3830, %v3918
    %vm3981 = vcmp.eq.f32.partialorder %v3831, %v3917
    %vm3982 = vcmp.eq.f32.partialorder %v3831, %v3918
    %vm3983 = vcmp.eq.f32.partialorder %v3832, %v3917
    %vm3984 = vcmp.eq.f32.partialorder %v3832, %v3918
    %vm3985 = vcmp.eq.f32.partialorder %v3833, %v3917
    %vm3986 = vcmp.eq.f32.partialorder %v3833, %v3918
    %vm3987 = vcmp.eq.f32.partialorder %v3834, %v3917
    %vm3988 = vcmp.eq.f32.partialorder %v3834, %v3918
    %vm3989 = vcmp.eq.f32.partialorder %v3835, %v3917
    %vm3990 = vcmp.eq.f32.partialorder %v3835, %v3918
    %vm3991 = vcmp.eq.f32.partialorder %v3836, %v3917
    %vm3992 = vcmp.eq.f32.partialorder %v3836, %v3918
    %vm3993 = vcmp.eq.f32.partialorder %v3837, %v3917
    %vm3994 = vcmp.eq.f32.partialorder %v3837, %v3918
    %vm3995 = vcmp.eq.f32.partialorder %v3838, %v3917
    %vm3996 = vcmp.eq.f32.partialorder %v3838, %v3918
    %vm3997 = vcmp.eq.f32.partialorder %v3839, %v3917
    %vm3998 = vcmp.eq.f32.partialorder %v3839, %v3918
    %vm3999 = vcmp.eq.f32.partialorder %v3840, %v3917
    %vm4000 = vcmp.eq.f32.partialorder %v3840, %v3918
    %vm4001 = vcmp.eq.f32.partialorder %v3841, %v3917
    %vm4002 = vcmp.eq.f32.partialorder %v3841, %v3918
    %vm4003 = vcmp.eq.f32.partialorder %v3842, %v3917
    %vm4004 = vcmp.eq.f32.partialorder %v3842, %v3918
    %vm4005 = vcmp.eq.f32.partialorder %v3843, %v3917
    %vm4006 = vcmp.eq.f32.partialorder %v3843, %v3918
    %vm4007 = vcmp.eq.f32.partialorder %v3844, %v3917
    %vm4008 = vcmp.eq.f32.partialorder %v3844, %v3918
    %vm4009 = vcmp.eq.f32.partialorder %v3845, %v3917
    %vm4010 = vcmp.eq.f32.partialorder %v3845, %v3918
    %vm4011 = vcmp.eq.f32.partialorder %v3846, %v3917
    %vm4012 = vcmp.eq.f32.partialorder %v3846, %v3918
    %vm4013 = vcmp.eq.f32.partialorder %v3847, %v3917
    %vm4014 = vcmp.eq.f32.partialorder %v3847, %v3918
    %vm4015 = vcmp.eq.f32.partialorder %v3848, %v3917
    %vm4016 = vcmp.eq.f32.partialorder %v3848, %v3918
    %vm4017 = vcmp.eq.f32.partialorder %v3849, %v3917
    %vm4018 = vcmp.eq.f32.partialorder %v3849, %v3918
    %vm4019 = vcmp.eq.f32.partialorder %v3850, %v3917
    %vm4020 = vcmp.eq.f32.partialorder %v3850, %v3918
    %vm4021 = vcmp.eq.f32.partialorder %v3851, %v3917
    %vm4022 = vcmp.eq.f32.partialorder %v3851, %v3918
    %vm4023 = vcmp.eq.f32.partialorder %v3852, %v3917
    %vm4024 = vcmp.eq.f32.partialorder %v3852, %v3918
    %vm4025 = vcmp.eq.f32.partialorder %v3853, %v3917
    %vm4026 = vcmp.eq.f32.partialorder %v3853, %v3918
    %vm4027 = vcmp.eq.f32.partialorder %v3854, %v3917
    %vm4028 = vcmp.eq.f32.partialorder %v3854, %v3918
    %vm4029 = vcmp.eq.f32.partialorder %v3855, %v3917
    %vm4030 = vcmp.eq.f32.partialorder %v3855, %v3918
    %vm4031 = vcmp.eq.f32.partialorder %v3856, %v3917
    %vm4032 = vcmp.eq.f32.partialorder %v3856, %v3918
    %vm4033 = vcmp.eq.f32.partialorder %v3857, %v3917
    %vm4034 = vcmp.eq.f32.partialorder %v3857, %v3918
    %vm4035 = vcmp.eq.f32.partialorder %v3858, %v3917
    %vm4036 = vcmp.eq.f32.partialorder %v3858, %v3918
    %vm4037 = vcmp.eq.f32.partialorder %v3859, %v3917
    %vm4038 = vcmp.eq.f32.partialorder %v3859, %v3918
    %vm4039 = vcmp.eq.f32.partialorder %v3860, %v3917
    %vm4040 = vcmp.eq.f32.partialorder %v3860, %v3918
    %vm4041 = vcmp.eq.f32.partialorder %v3861, %v3917
    %vm4042 = vcmp.eq.f32.partialorder %v3861, %v3918
    %vm4043 = vcmp.eq.f32.partialorder %v3862, %v3917
    %vm4044 = vcmp.eq.f32.partialorder %v3862, %v3918
    %vm4045 = vcmp.eq.f32.partialorder %v3863, %v3917
    %vm4046 = vcmp.eq.f32.partialorder %v3863, %v3918
    %vm4047 = vcmp.eq.f32.partialorder %v3864, %v3917
    %vm4048 = vcmp.eq.f32.partialorder %v3864, %v3918
    %vm4049 = vcmp.eq.f32.partialorder %v3865, %v3917
    %vm4050 = vcmp.eq.f32.partialorder %v3865, %v3918
    %vm4051 = vcmp.eq.f32.partialorder %v3866, %v3917
    %vm4052 = vcmp.eq.f32.partialorder %v3866, %v3918
    %vm4053 = vcmp.eq.f32.partialorder %v3867, %v3917
    %vm4054 = vcmp.eq.f32.partialorder %v3867, %v3918
    %vm4055 = vcmp.eq.f32.partialorder %v3868, %v3917
    %vm4056 = vcmp.eq.f32.partialorder %v3868, %v3918
    %vm4057 = vcmp.eq.f32.partialorder %v3869, %v3917
    %vm4058 = vcmp.eq.f32.partialorder %v3869, %v3918
    %vm4059 = vcmp.eq.f32.partialorder %v3870, %v3917
    %vm4060 = vcmp.eq.f32.partialorder %v3870, %v3918
    %vm4061 = vcmp.eq.f32.partialorder %v3871, %v3917
    %vm4062 = vcmp.eq.f32.partialorder %v3871, %v3918
    %vm4063 = vcmp.eq.f32.partialorder %v3872, %v3917
    %vm4064 = vcmp.eq.f32.partialorder %v3872, %v3918
    %vm4065 = vcmp.eq.f32.partialorder %v3873, %v3917
    %vm4066 = vcmp.eq.f32.partialorder %v3873, %v3918
    %vm4067 = vcmp.eq.f32.partialorder %v3874, %v3917
    %vm4068 = vcmp.eq.f32.partialorder %v3874, %v3918
    %vm4069 = vcmp.eq.f32.partialorder %v3875, %v3917
    %vm4070 = vcmp.eq.f32.partialorder %v3875, %v3918
    %vm4071 = vcmp.eq.f32.partialorder %v3876, %v3917
    %vm4072 = vcmp.eq.f32.partialorder %v3876, %v3918
    %vm4073 = vcmp.eq.f32.partialorder %v3877, %v3917
    %vm4074 = vcmp.eq.f32.partialorder %v3877, %v3918
    %vm4075 = vcmp.eq.f32.partialorder %v3878, %v3917
    %vm4076 = vcmp.eq.f32.partialorder %v3878, %v3918
    %vm4077 = vcmp.eq.f32.partialorder %v3879, %v3917
    %vm4078 = vcmp.eq.f32.partialorder %v3879, %v3918
    %vm4079 = vcmp.eq.f32.partialorder %v3880, %v3917
    %vm4080 = vcmp.eq.f32.partialorder %v3880, %v3918
    %vm4081 = vcmp.eq.f32.partialorder %v3881, %v3917
    %vm4082 = vcmp.eq.f32.partialorder %v3881, %v3918
    %vm4083 = vcmp.eq.f32.partialorder %v3882, %v3917
    %vm4084 = vcmp.eq.f32.partialorder %v3882, %v3918
    %vm4085 = vcmp.eq.f32.partialorder %v3883, %v3917
    %vm4086 = vcmp.eq.f32.partialorder %v3883, %v3918
    %vm4087 = vcmp.eq.f32.partialorder %v3884, %v3917
    %vm4088 = vcmp.eq.f32.partialorder %v3884, %v3918
    %vm4089 = vcmp.eq.f32.partialorder %v3885, %v3917
    %vm4090 = vcmp.eq.f32.partialorder %v3885, %v3918
    %vm4091 = vcmp.eq.f32.partialorder %v3886, %v3917
    %vm4092 = vcmp.eq.f32.partialorder %v3886, %v3918
    %vm4093 = vcmp.eq.f32.partialorder %v3887, %v3917
    %vm4094 = vcmp.eq.f32.partialorder %v3887, %v3918
    %vm4095 = vcmp.eq.f32.partialorder %v3888, %v3917
    %vm4096 = vcmp.eq.f32.partialorder %v3888, %v3918
    %vm4097 = vcmp.eq.f32.partialorder %v3889, %v3917
    %vm4098 = vcmp.eq.f32.partialorder %v3889, %v3918
    %vm4099 = vcmp.eq.f32.partialorder %v3890, %v3917
    %vm4100 = vcmp.eq.f32.partialorder %v3890, %v3918
    %vm4101 = vcmp.eq.f32.partialorder %v3891, %v3917
    %vm4102 = vcmp.eq.f32.partialorder %v3891, %v3918
    %vm4103 = vcmp.eq.f32.partialorder %v3892, %v3917
    %vm4104 = vcmp.eq.f32.partialorder %v3892, %v3918
    %vm4105 = vcmp.eq.f32.partialorder %v3893, %v3917
    %vm4106 = vcmp.eq.f32.partialorder %v3893, %v3918
    %vm4107 = vcmp.eq.f32.partialorder %v3894, %v3917
    %vm4108 = vcmp.eq.f32.partialorder %v3894, %v3918
    %vm4109 = vcmp.eq.f32.partialorder %v3895, %v3917
    %vm4110 = vcmp.eq.f32.partialorder %v3895, %v3918
    %vm4111 = vcmp.eq.f32.partialorder %v3896, %v3917
    %vm4112 = vcmp.eq.f32.partialorder %v3896, %v3918
    %vm4113 = vcmp.eq.f32.partialorder %v3897, %v3917
    %vm4114 = vcmp.eq.f32.partialorder %v3897, %v3918
    %v4115 = vsel %vm3919, 1, 0
    %v4116 = vsel %vm3920, 1, 0
    %v4117 = vsel %vm3921, 1, 0
    %v4118 = vsel %vm3922, 1, 0
    %v4119 = vsel %vm3923, 1, 0
    %v4120 = vsel %vm3924, 1, 0
    %v4121 = vsel %vm3925, 1, 0
    %v4122 = vsel %vm3926, 1, 0
    %v4123 = vsel %vm3927, 1, 0
    %v4124 = vsel %vm3928, 1, 0
    %v4125 = vsel %vm3929, 1, 0
    %v4126 = vsel %vm3930, 1, 0
    %v4127 = vsel %vm3931, 1, 0
    %v4128 = vsel %vm3932, 1, 0
    %v4129 = vsel %vm3933, 1, 0
    %v4130 = vsel %vm3934, 1, 0
    %v4131 = vsel %vm3935, 1, 0
    %v4132 = vsel %vm3936, 1, 0
    %v4133 = vsel %vm3937, 1, 0
    %v4134 = vsel %vm3938, 1, 0
    %v4135 = vsel %vm3939, 1, 0
    %v4136 = vsel %vm3940, 1, 0
    %v4137 = vsel %vm3941, 1, 0
    %v4138 = vsel %vm3942, 1, 0
    %v4139 = vsel %vm3943, 1, 0
    %v4140 = vsel %vm3944, 1, 0
    %v4141 = vsel %vm3945, 1, 0
    %v4142 = vsel %vm3946, 1, 0
    %v4143 = vsel %vm3947, 1, 0
    %v4144 = vsel %vm3948, 1, 0
    %v4145 = vsel %vm3949, 1, 0
    %v4146 = vsel %vm3950, 1, 0
    %v4147 = vsel %vm3951, 1, 0
    %v4148 = vsel %vm3952, 1, 0
    %v4149 = vsel %vm3953, 1, 0
    %v4150 = vsel %vm3954, 1, 0
    %v4151 = vsel %vm3955, 1, 0
    %v4152 = vsel %vm3956, 1, 0
    %v4153 = vsel %vm3957, 1, 0
    %v4154 = vsel %vm3958, 1, 0
    %v4155 = vsel %vm3959, 1, 0
    %v4156 = vsel %vm3960, 1, 0
    %v4157 = vsel %vm3961, 1, 0
    %v4158 = vsel %vm3962, 1, 0
    %v4159 = vsel %vm3963, 1, 0
    %v4160 = vsel %vm3964, 1, 0
    %v4161 = vsel %vm3965, 1, 0
    %v4162 = vsel %vm3966, 1, 0
    %v4163 = vsel %vm3967, 1, 0
    %v4164 = vsel %vm3968, 1, 0
    %v4165 = vsel %vm3969, 1, 0
    %v4166 = vsel %vm3970, 1, 0
    %v4167 = vsel %vm3971, 1, 0
    %v4168 = vsel %vm3972, 1, 0
    %v4169 = vsel %vm3973, 1, 0
    %v4170 = vsel %vm3974, 1, 0
    %v4171 = vsel %vm3975, 1, 0
    %v4172 = vsel %vm3976, 1, 0
    %v4173 = vsel %vm3977, 1, 0
    %v4174 = vsel %vm3978, 1, 0
    %v4175 = vsel %vm3979, 1, 0
    %v4176 = vsel %vm3980, 1, 0
    %v4177 = vsel %vm3981, 1, 0
    %v4178 = vsel %vm3982, 1, 0
    %v4179 = vsel %vm3983, 1, 0
    %v4180 = vsel %vm3984, 1, 0
    %v4181 = vsel %vm3985, 1, 0
    %v4182 = vsel %vm3986, 1, 0
    %v4183 = vsel %vm3987, 1, 0
    %v4184 = vsel %vm3988, 1, 0
    %v4185 = vsel %vm3989, 1, 0
    %v4186 = vsel %vm3990, 1, 0
    %v4187 = vsel %vm3991, 1, 0
    %v4188 = vsel %vm3992, 1, 0
    %v4189 = vsel %vm3993, 1, 0
    %v4190 = vsel %vm3994, 1, 0
    %v4191 = vsel %vm3995, 1, 0
    %v4192 = vsel %vm3996, 1, 0
    %v4193 = vsel %vm3997, 1, 0
    %v4194 = vsel %vm3998, 1, 0
    %v4195 = vsel %vm3999, 1, 0
    %v4196 = vsel %vm4000, 1, 0
    %v4197 = vsel %vm4001, 1, 0
    %v4198 = vsel %vm4002, 1, 0
    %v4199 = vsel %vm4003, 1, 0
    %v4200 = vsel %vm4004, 1, 0
    %v4201 = vsel %vm4005, 1, 0
    %v4202 = vsel %vm4006, 1, 0
    %v4203 = vsel %vm4007, 1, 0
    %v4204 = vsel %vm4008, 1, 0
    %v4205 = vsel %vm4009, 1, 0
    %v4206 = vsel %vm4010, 1, 0
    %v4207 = vsel %vm4011, 1, 0
    %v4208 = vsel %vm4012, 1, 0
    %v4209 = vsel %vm4013, 1, 0
    %v4210 = vsel %vm4014, 1, 0
    %v4211 = vsel %vm4015, 1, 0
    %v4212 = vsel %vm4016, 1, 0
    %v4213 = vsel %vm4017, 1, 0
    %v4214 = vsel %vm4018, 1, 0
    %v4215 = vsel %vm4019, 1, 0
    %v4216 = vsel %vm4020, 1, 0
    %v4217 = vsel %vm4021, 1, 0
    %v4218 = vsel %vm4022, 1, 0
    %v4219 = vsel %vm4023, 1, 0
    %v4220 = vsel %vm4024, 1, 0
    %v4221 = vsel %vm4025, 1, 0
    %v4222 = vsel %vm4026, 1, 0
    %v4223 = vsel %vm4027, 1, 0
    %v4224 = vsel %vm4028, 1, 0
    %v4225 = vsel %vm4029, 1, 0
    %v4226 = vsel %vm4030, 1, 0
    %v4227 = vsel %vm4031, 1, 0
    %v4228 = vsel %vm4032, 1, 0
    %v4229 = vsel %vm4033, 1, 0
    %v4230 = vsel %vm4034, 1, 0
    %v4231 = vsel %vm4035, 1, 0
    %v4232 = vsel %vm4036, 1, 0
    %v4233 = vsel %vm4037, 1, 0
    %v4234 = vsel %vm4038, 1, 0
    %v4235 = vsel %vm4039, 1, 0
    %v4236 = vsel %vm4040, 1, 0
    %v4237 = vsel %vm4041, 1, 0
    %v4238 = vsel %vm4042, 1, 0
    %v4239 = vsel %vm4043, 1, 0
    %v4240 = vsel %vm4044, 1, 0
    %v4241 = vsel %vm4045, 1, 0
    %v4242 = vsel %vm4046, 1, 0
    %v4243 = vsel %vm4047, 1, 0
    %v4244 = vsel %vm4048, 1, 0
    %v4245 = vsel %vm4049, 1, 0
    %v4246 = vsel %vm4050, 1, 0
    %v4247 = vsel %vm4051, 1, 0
    %v4248 = vsel %vm4052, 1, 0
    %v4249 = vsel %vm4053, 1, 0
    %v4250 = vsel %vm4054, 1, 0
    %v4251 = vsel %vm4055, 1, 0
    %v4252 = vsel %vm4056, 1, 0
    %v4253 = vsel %vm4057, 1, 0
    %v4254 = vsel %vm4058, 1, 0
    %v4255 = vsel %vm4059, 1, 0
    %v4256 = vsel %vm4060, 1, 0
    %v4257 = vsel %vm4061, 1, 0
    %v4258 = vsel %vm4062, 1, 0
    %v4259 = vsel %vm4063, 1, 0
    %v4260 = vsel %vm4064, 1, 0
    %v4261 = vsel %vm4065, 1, 0
    %v4262 = vsel %vm4066, 1, 0
    %v4263 = vsel %vm4067, 1, 0
    %v4264 = vsel %vm4068, 1, 0
    %v4265 = vsel %vm4069, 1, 0
    %v4266 = vsel %vm4070, 1, 0
    %v4267 = vsel %vm4071, 1, 0
    %v4268 = vsel %vm4072, 1, 0
    %v4269 = vsel %vm4073, 1, 0
    %v4270 = vsel %vm4074, 1, 0
    %v4271 = vsel %vm4075, 1, 0
    %v4272 = vsel %vm4076, 1, 0
    %v4273 = vsel %vm4077, 1, 0
    %v4274 = vsel %vm4078, 1, 0
    %v4275 = vsel %vm4079, 1, 0
    %v4276 = vsel %vm4080, 1, 0
    %v4277 = vsel %vm4081, 1, 0
    %v4278 = vsel %vm4082, 1, 0
    %v4279 = vsel %vm4083, 1, 0
    %v4280 = vsel %vm4084, 1, 0
    %v4281 = vsel %vm4085, 1, 0
    %v4282 = vsel %vm4086, 1, 0
    %v4283 = vsel %vm4087, 1, 0
    %v4284 = vsel %vm4088, 1, 0
    %v4285 = vsel %vm4089, 1, 0
    %v4286 = vsel %vm4090, 1, 0
    %v4287 = vsel %vm4091, 1, 0
    %v4288 = vsel %vm4092, 1, 0
    %v4289 = vsel %vm4093, 1, 0
    %v4290 = vsel %vm4094, 1, 0
    %v4291 = vsel %vm4095, 1, 0
    %v4292 = vsel %vm4096, 1, 0
    %v4293 = vsel %vm4097, 1, 0
    %v4294 = vsel %vm4098, 1, 0
    %v4295 = vsel %vm4099, 1, 0
    %v4296 = vsel %vm4100, 1, 0
    %v4297 = vsel %vm4101, 1, 0
    %v4298 = vsel %vm4102, 1, 0
    %v4299 = vsel %vm4103, 1, 0
    %v4300 = vsel %vm4104, 1, 0
    %v4301 = vsel %vm4105, 1, 0
    %v4302 = vsel %vm4106, 1, 0
    %v4303 = vsel %vm4107, 1, 0
    %v4304 = vsel %vm4108, 1, 0
    %v4305 = vsel %vm4109, 1, 0
    %v4306 = vsel %vm4110, 1, 0
    %v4307 = vsel %vm4111, 1, 0
    %v4308 = vsel %vm4112, 1, 0
    %v4309 = vsel %vm4113, 1, 0
    %v4310 = vsel %vm4114, 1, 0
    %v4311 = vcvt.s32.f32 %v4115
    %v4312 = vcvt.s32.f32 %v4116
    %v4313 = vcvt.s32.f32 %v4117
    %v4314 = vcvt.s32.f32 %v4118
    %v4315 = vcvt.s32.f32 %v4119
    %v4316 = vcvt.s32.f32 %v4120
    %v4317 = vcvt.s32.f32 %v4121
    %v4318 = vcvt.s32.f32 %v4122
    %v4319 = vcvt.s32.f32 %v4123
    %v4320 = vcvt.s32.f32 %v4124
    %v4321 = vcvt.s32.f32 %v4125
    %v4322 = vcvt.s32.f32 %v4126
    %v4323 = vcvt.s32.f32 %v4127
    %v4324 = vcvt.s32.f32 %v4128
    %v4325 = vcvt.s32.f32 %v4129
    %v4326 = vcvt.s32.f32 %v4130
    %v4327 = vcvt.s32.f32 %v4131
    %v4328 = vcvt.s32.f32 %v4132
    %v4329 = vcvt.s32.f32 %v4133
    %v4330 = vcvt.s32.f32 %v4134
    %v4331 = vcvt.s32.f32 %v4135
    %v4332 = vcvt.s32.f32 %v4136
    %v4333 = vcvt.s32.f32 %v4137
    %v4334 = vcvt.s32.f32 %v4138
    %v4335 = vcvt.s32.f32 %v4139
    %v4336 = vcvt.s32.f32 %v4140
    %v4337 = vcvt.s32.f32 %v4141
    %v4338 = vcvt.s32.f32 %v4142
    %v4339 = vcvt.s32.f32 %v4143
    %v4340 = vcvt.s32.f32 %v4144
    %v4341 = vcvt.s32.f32 %v4145
    %v4342 = vcvt.s32.f32 %v4146
    %v4343 = vcvt.s32.f32 %v4147
    %v4344 = vcvt.s32.f32 %v4148
    %v4345 = vcvt.s32.f32 %v4149
    %v4346 = vcvt.s32.f32 %v4150
    %v4347 = vcvt.s32.f32 %v4151
    %v4348 = vcvt.s32.f32 %v4152
    %v4349 = vcvt.s32.f32 %v4153
    %v4350 = vcvt.s32.f32 %v4154
    %v4351 = vcvt.s32.f32 %v4155
    %v4352 = vcvt.s32.f32 %v4156
    %v4353 = vcvt.s32.f32 %v4157
    %v4354 = vcvt.s32.f32 %v4158
    %v4355 = vcvt.s32.f32 %v4159
    %v4356 = vcvt.s32.f32 %v4160
    %v4357 = vcvt.s32.f32 %v4161
    %v4358 = vcvt.s32.f32 %v4162
    %v4359 = vcvt.s32.f32 %v4163
    %v4360 = vcvt.s32.f32 %v4164
    %v4361 = vcvt.s32.f32 %v4165
    %v4362 = vcvt.s32.f32 %v4166
    %v4363 = vcvt.s32.f32 %v4167
    %v4364 = vcvt.s32.f32 %v4168
    %v4365 = vcvt.s32.f32 %v4169
    %v4366 = vcvt.s32.f32 %v4170
    %v4367 = vcvt.s32.f32 %v4171
    %v4368 = vcvt.s32.f32 %v4172
    %v4369 = vcvt.s32.f32 %v4173
    %v4370 = vcvt.s32.f32 %v4174
    %v4371 = vcvt.s32.f32 %v4175
    %v4372 = vcvt.s32.f32 %v4176
    %v4373 = vcvt.s32.f32 %v4177
    %v4374 = vcvt.s32.f32 %v4178
    %v4375 = vcvt.s32.f32 %v4179
    %v4376 = vcvt.s32.f32 %v4180
    %v4377 = vcvt.s32.f32 %v4181
    %v4378 = vcvt.s32.f32 %v4182
    %v4379 = vcvt.s32.f32 %v4183
    %v4380 = vcvt.s32.f32 %v4184
    %v4381 = vcvt.s32.f32 %v4185
    %v4382 = vcvt.s32.f32 %v4186
    %v4383 = vcvt.s32.f32 %v4187
    %v4384 = vcvt.s32.f32 %v4188
    %v4385 = vcvt.s32.f32 %v4189
    %v4386 = vcvt.s32.f32 %v4190
    %v4387 = vcvt.s32.f32 %v4191
    %v4388 = vcvt.s32.f32 %v4192
    %v4389 = vcvt.s32.f32 %v4193
    %v4390 = vcvt.s32.f32 %v4194
    %v4391 = vcvt.s32.f32 %v4195
    %v4392 = vcvt.s32.f32 %v4196
    %v4393 = vcvt.s32.f32 %v4197
    %v4394 = vcvt.s32.f32 %v4198
    %v4395 = vcvt.s32.f32 %v4199
    %v4396 = vcvt.s32.f32 %v4200
    %v4397 = vcvt.s32.f32 %v4201
    %v4398 = vcvt.s32.f32 %v4202
    %v4399 = vcvt.s32.f32 %v4203
    %v4400 = vcvt.s32.f32 %v4204
    %v4401 = vcvt.s32.f32 %v4205
    %v4402 = vcvt.s32.f32 %v4206
    %v4403 = vcvt.s32.f32 %v4207
    %v4404 = vcvt.s32.f32 %v4208
    %v4405 = vcvt.s32.f32 %v4209
    %v4406 = vcvt.s32.f32 %v4210
    %v4407 = vcvt.s32.f32 %v4211
    %v4408 = vcvt.s32.f32 %v4212
    %v4409 = vcvt.s32.f32 %v4213
    %v4410 = vcvt.s32.f32 %v4214
    %v4411 = vcvt.s32.f32 %v4215
    %v4412 = vcvt.s32.f32 %v4216
    %v4413 = vcvt.s32.f32 %v4217
    %v4414 = vcvt.s32.f32 %v4218
    %v4415 = vcvt.s32.f32 %v4219
    %v4416 = vcvt.s32.f32 %v4220
    %v4417 = vcvt.s32.f32 %v4221
    %v4418 = vcvt.s32.f32 %v4222
    %v4419 = vcvt.s32.f32 %v4223
    %v4420 = vcvt.s32.f32 %v4224
    %v4421 = vcvt.s32.f32 %v4225
    %v4422 = vcvt.s32.f32 %v4226
    %v4423 = vcvt.s32.f32 %v4227
    %v4424 = vcvt.s32.f32 %v4228
    %v4425 = vcvt.s32.f32 %v4229
    %v4426 = vcvt.s32.f32 %v4230
    %v4427 = vcvt.s32.f32 %v4231
    %v4428 = vcvt.s32.f32 %v4232
    %v4429 = vcvt.s32.f32 %v4233
    %v4430 = vcvt.s32.f32 %v4234
    %v4431 = vcvt.s32.f32 %v4235
    %v4432 = vcvt.s32.f32 %v4236
    %v4433 = vcvt.s32.f32 %v4237
    %v4434 = vcvt.s32.f32 %v4238
    %v4435 = vcvt.s32.f32 %v4239
    %v4436 = vcvt.s32.f32 %v4240
    %v4437 = vcvt.s32.f32 %v4241
    %v4438 = vcvt.s32.f32 %v4242
    %v4439 = vcvt.s32.f32 %v4243
    %v4440 = vcvt.s32.f32 %v4244
    %v4441 = vcvt.s32.f32 %v4245
    %v4442 = vcvt.s32.f32 %v4246
    %v4443 = vcvt.s32.f32 %v4247
    %v4444 = vcvt.s32.f32 %v4248
    %v4445 = vcvt.s32.f32 %v4249
    %v4446 = vcvt.s32.f32 %v4250
    %v4447 = vcvt.s32.f32 %v4251
    %v4448 = vcvt.s32.f32 %v4252
    %v4449 = vcvt.s32.f32 %v4253
    %v4450 = vcvt.s32.f32 %v4254
    %v4451 = vcvt.s32.f32 %v4255
    %v4452 = vcvt.s32.f32 %v4256
    %v4453 = vcvt.s32.f32 %v4257
    %v4454 = vcvt.s32.f32 %v4258
    %v4455 = vcvt.s32.f32 %v4259
    %v4456 = vcvt.s32.f32 %v4260
    %v4457 = vcvt.s32.f32 %v4261
    %v4458 = vcvt.s32.f32 %v4262
    %v4459 = vcvt.s32.f32 %v4263
    %v4460 = vcvt.s32.f32 %v4264
    %v4461 = vcvt.s32.f32 %v4265
    %v4462 = vcvt.s32.f32 %v4266
    %v4463 = vcvt.s32.f32 %v4267
    %v4464 = vcvt.s32.f32 %v4268
    %v4465 = vcvt.s32.f32 %v4269
    %v4466 = vcvt.s32.f32 %v4270
    %v4467 = vcvt.s32.f32 %v4271
    %v4468 = vcvt.s32.f32 %v4272
    %v4469 = vcvt.s32.f32 %v4273
    %v4470 = vcvt.s32.f32 %v4274
    %v4471 = vcvt.s32.f32 %v4275
    %v4472 = vcvt.s32.f32 %v4276
    %v4473 = vcvt.s32.f32 %v4277
    %v4474 = vcvt.s32.f32 %v4278
    %v4475 = vcvt.s32.f32 %v4279
    %v4476 = vcvt.s32.f32 %v4280
    %v4477 = vcvt.s32.f32 %v4281
    %v4478 = vcvt.s32.f32 %v4282
    %v4479 = vcvt.s32.f32 %v4283
    %v4480 = vcvt.s32.f32 %v4284
    %v4481 = vcvt.s32.f32 %v4285
    %v4482 = vcvt.s32.f32 %v4286
    %v4483 = vcvt.s32.f32 %v4287
    %v4484 = vcvt.s32.f32 %v4288
    %v4485 = vcvt.s32.f32 %v4289
    %v4486 = vcvt.s32.f32 %v4290
    %v4487 = vcvt.s32.f32 %v4291
    %v4488 = vcvt.s32.f32 %v4292
    %v4489 = vcvt.s32.f32 %v4293
    %v4490 = vcvt.s32.f32 %v4294
    %v4491 = vcvt.s32.f32 %v4295
    %v4492 = vcvt.s32.f32 %v4296
    %v4493 = vcvt.s32.f32 %v4297
    %v4494 = vcvt.s32.f32 %v4298
    %v4495 = vcvt.s32.f32 %v4299
    %v4496 = vcvt.s32.f32 %v4300
    %v4497 = vcvt.s32.f32 %v4301
    %v4498 = vcvt.s32.f32 %v4302
    %v4499 = vcvt.s32.f32 %v4303
    %v4500 = vcvt.s32.f32 %v4304
    %v4501 = vcvt.s32.f32 %v4305
    %v4502 = vcvt.s32.f32 %v4306
    %v4503 = vcvt.s32.f32 %v4307
    %v4504 = vcvt.s32.f32 %v4308
    %v4505 = vcvt.s32.f32 %v4309
    %v4506 = vcvt.s32.f32 %v4310
    %4507 = vst [vmem:[#allocation2] sm:$0xff] %v4311
    %vm4508 = vcmask 556032
    %4509 = vst.msk [vmem:[#allocation2 + $0x8] sm:$0xff] %vm4508, %v4312
    %4510 = vst [vmem:[#allocation2 + $0x10] sm:$0xff] %v4313
    %4511 = vst.msk [vmem:[#allocation2 + $0x18] sm:$0xff] %vm4508, %v4314
    %4512 = vst [vmem:[#allocation2 + $0x20] sm:$0xff] %v4315
    %4513 = vst.msk [vmem:[#allocation2 + $0x28] sm:$0xff] %vm4508, %v4316
    %4514 = vst [vmem:[#allocation2 + $0x30] sm:$0xff] %v4317
    %4515 = vst.msk [vmem:[#allocation2 + $0x38] sm:$0xff] %vm4508, %v4318
    %4516 = vst [vmem:[#allocation2 + $0x40] sm:$0xff] %v4319
    %4517 = vst.msk [vmem:[#allocation2 + $0x48] sm:$0xff] %vm4508, %v4320
    %4518 = vst [vmem:[#allocation2 + $0x50] sm:$0xff] %v4321
    %4519 = vst.msk [vmem:[#allocation2 + $0x58] sm:$0xff] %vm4508, %v4322
    %4520 = vst [vmem:[#allocation2 + $0x60] sm:$0xff] %v4323
    %4521 = vst.msk [vmem:[#allocation2 + $0x68] sm:$0xff] %vm4508, %v4324
    %4522 = vst [vmem:[#allocation2 + $0x70] sm:$0xff] %v4325
    %4523 = vst.msk [vmem:[#allocation2 + $0x78] sm:$0xff] %vm4508, %v4326
    %4524 = vst [vmem:[#allocation2 + $0x80] sm:$0xff] %v4327
    %4525 = vst.msk [vmem:[#allocation2 + $0x88] sm:$0xff] %vm4508, %v4328
    %4526 = vst [vmem:[#allocation2 + $0x90] sm:$0xff] %v4329
    %4527 = vst.msk [vmem:[#allocation2 + $0x98] sm:$0xff] %vm4508, %v4330
    %4528 = vst [vmem:[#allocation2 + $0xa0] sm:$0xff] %v4331
    %4529 = vst.msk [vmem:[#allocation2 + $0xa8] sm:$0xff] %vm4508, %v4332
    %4530 = vst [vmem:[#allocation2 + $0xb0] sm:$0xff] %v4333
    %4531 = vst.msk [vmem:[#allocation2 + $0xb8] sm:$0xff] %vm4508, %v4334
    %4532 = vst [vmem:[#allocation2 + $0xc0] sm:$0xff] %v4335
    %4533 = vst.msk [vmem:[#allocation2 + $0xc8] sm:$0xff] %vm4508, %v4336
    %4534 = vst [vmem:[#allocation2 + $0xd0] sm:$0xff] %v4337
    %4535 = vst.msk [vmem:[#allocation2 + $0xd8] sm:$0xff] %vm4508, %v4338
    %4536 = vst [vmem:[#allocation2 + $0xe0] sm:$0xff] %v4339
    %4537 = vst.msk [vmem:[#allocation2 + $0xe8] sm:$0xff] %vm4508, %v4340
    %4538 = vst [vmem:[#allocation2 + $0xf0] sm:$0xff] %v4341
    %4539 = vst.msk [vmem:[#allocation2 + $0xf8] sm:$0xff] %vm4508, %v4342
    %4540 = vst [vmem:[#allocation2 + $0x100] sm:$0xff] %v4343
    %4541 = vst.msk [vmem:[#allocation2 + $0x108] sm:$0xff] %vm4508, %v4344
    %4542 = vst [vmem:[#allocation2 + $0x110] sm:$0xff] %v4345
    %4543 = vst.msk [vmem:[#allocation2 + $0x118] sm:$0xff] %vm4508, %v4346
    %4544 = vst [vmem:[#allocation2 + $0x120] sm:$0xff] %v4347
    %4545 = vst.msk [vmem:[#allocation2 + $0x128] sm:$0xff] %vm4508, %v4348
    %4546 = vst [vmem:[#allocation2 + $0x130] sm:$0xff] %v4349
    %4547 = vst.msk [vmem:[#allocation2 + $0x138] sm:$0xff] %vm4508, %v4350
    %4548 = vst [vmem:[#allocation2 + $0x140] sm:$0xff] %v4351
    %4549 = vst.msk [vmem:[#allocation2 + $0x148] sm:$0xff] %vm4508, %v4352
    %4550 = vst [vmem:[#allocation2 + $0x150] sm:$0xff] %v4353
    %4551 = vst.msk [vmem:[#allocation2 + $0x158] sm:$0xff] %vm4508, %v4354
    %4552 = vst [vmem:[#allocation2 + $0x160] sm:$0xff] %v4355
    %4553 = vst.msk [vmem:[#allocation2 + $0x168] sm:$0xff] %vm4508, %v4356
    %4554 = vst [vmem:[#allocation2 + $0x170] sm:$0xff] %v4357
    %4555 = vst.msk [vmem:[#allocation2 + $0x178] sm:$0xff] %vm4508, %v4358
    %4556 = vst [vmem:[#allocation2 + $0x180] sm:$0xff] %v4359
    %4557 = vst.msk [vmem:[#allocation2 + $0x188] sm:$0xff] %vm4508, %v4360
    %4558 = vst [vmem:[#allocation2 + $0x190] sm:$0xff] %v4361
    %4559 = vst.msk [vmem:[#allocation2 + $0x198] sm:$0xff] %vm4508, %v4362
    %4560 = vst [vmem:[#allocation2 + $0x1a0] sm:$0xff] %v4363
    %4561 = vst.msk [vmem:[#allocation2 + $0x1a8] sm:$0xff] %vm4508, %v4364
    %4562 = vst [vmem:[#allocation2 + $0x1b0] sm:$0xff] %v4365
    %4563 = vst.msk [vmem:[#allocation2 + $0x1b8] sm:$0xff] %vm4508, %v4366
    %4564 = vst [vmem:[#allocation2 + $0x1c0] sm:$0xff] %v4367
    %4565 = vst.msk [vmem:[#allocation2 + $0x1c8] sm:$0xff] %vm4508, %v4368
    %4566 = vst [vmem:[#allocation2 + $0x1d0] sm:$0xff] %v4369
    %4567 = vst.msk [vmem:[#allocation2 + $0x1d8] sm:$0xff] %vm4508, %v4370
    %4568 = vst [vmem:[#allocation2 + $0x1e0] sm:$0xff] %v4371
    %4569 = vst.msk [vmem:[#allocation2 + $0x1e8] sm:$0xff] %vm4508, %v4372
    %4570 = vst [vmem:[#allocation2 + $0x1f0] sm:$0xff] %v4373
    %4571 = vst.msk [vmem:[#allocation2 + $0x1f8] sm:$0xff] %vm4508, %v4374
    %4572 = vst [vmem:[#allocation2 + $0x200] sm:$0xff] %v4375
    %4573 = vst.msk [vmem:[#allocation2 + $0x208] sm:$0xff] %vm4508, %v4376
    %4574 = vst [vmem:[#allocation2 + $0x210] sm:$0xff] %v4377
    %4575 = vst.msk [vmem:[#allocation2 + $0x218] sm:$0xff] %vm4508, %v4378
    %4576 = vst [vmem:[#allocation2 + $0x220] sm:$0xff] %v4379
    %4577 = vst.msk [vmem:[#allocation2 + $0x228] sm:$0xff] %vm4508, %v4380
    %4578 = vst [vmem:[#allocation2 + $0x230] sm:$0xff] %v4381
    %4579 = vst.msk [vmem:[#allocation2 + $0x238] sm:$0xff] %vm4508, %v4382
    %4580 = vst [vmem:[#allocation2 + $0x240] sm:$0xff] %v4383
    %4581 = vst.msk [vmem:[#allocation2 + $0x248] sm:$0xff] %vm4508, %v4384
    %4582 = vst [vmem:[#allocation2 + $0x250] sm:$0xff] %v4385
    %4583 = vst.msk [vmem:[#allocation2 + $0x258] sm:$0xff] %vm4508, %v4386
    %4584 = vst [vmem:[#allocation2 + $0x260] sm:$0xff] %v4387
    %4585 = vst.msk [vmem:[#allocation2 + $0x268] sm:$0xff] %vm4508, %v4388
    %4586 = vst [vmem:[#allocation2 + $0x270] sm:$0xff] %v4389
    %4587 = vst.msk [vmem:[#allocation2 + $0x278] sm:$0xff] %vm4508, %v4390
    %4588 = vst [vmem:[#allocation2 + $0x280] sm:$0xff] %v4391
    %4589 = vst.msk [vmem:[#allocation2 + $0x288] sm:$0xff] %vm4508, %v4392
    %4590 = vst [vmem:[#allocation2 + $0x290] sm:$0xff] %v4393
    %4591 = vst.msk [vmem:[#allocation2 + $0x298] sm:$0xff] %vm4508, %v4394
    %4592 = vst [vmem:[#allocation2 + $0x2a0] sm:$0xff] %v4395
    %4593 = vst.msk [vmem:[#allocation2 + $0x2a8] sm:$0xff] %vm4508, %v4396
    %4594 = vst [vmem:[#allocation2 + $0x2b0] sm:$0xff] %v4397
    %4595 = vst.msk [vmem:[#allocation2 + $0x2b8] sm:$0xff] %vm4508, %v4398
    %4596 = vst [vmem:[#allocation2 + $0x2c0] sm:$0xff] %v4399
    %4597 = vst.msk [vmem:[#allocation2 + $0x2c8] sm:$0xff] %vm4508, %v4400
    %4598 = vst [vmem:[#allocation2 + $0x2d0] sm:$0xff] %v4401
    %4599 = vst.msk [vmem:[#allocation2 + $0x2d8] sm:$0xff] %vm4508, %v4402
    %4600 = vst [vmem:[#allocation2 + $0x2e0] sm:$0xff] %v4403
    %4601 = vst.msk [vmem:[#allocation2 + $0x2e8] sm:$0xff] %vm4508, %v4404
    %4602 = vst [vmem:[#allocation2 + $0x2f0] sm:$0xff] %v4405
    %4603 = vst.msk [vmem:[#allocation2 + $0x2f8] sm:$0xff] %vm4508, %v4406
    %4604 = vst [vmem:[#allocation2 + $0x300] sm:$0xff] %v4407
    %4605 = vst.msk [vmem:[#allocation2 + $0x308] sm:$0xff] %vm4508, %v4408
    %4606 = vst [vmem:[#allocation2 + $0x310] sm:$0xff] %v4409
    %4607 = vst.msk [vmem:[#allocation2 + $0x318] sm:$0xff] %vm4508, %v4410
    %4608 = vst [vmem:[#allocation2 + $0x320] sm:$0xff] %v4411
    %4609 = vst.msk [vmem:[#allocation2 + $0x328] sm:$0xff] %vm4508, %v4412
    %4610 = vst [vmem:[#allocation2 + $0x330] sm:$0xff] %v4413
    %4611 = vst.msk [vmem:[#allocation2 + $0x338] sm:$0xff] %vm4508, %v4414
    %4612 = vst [vmem:[#allocation2 + $0x340] sm:$0xff] %v4415
    %4613 = vst.msk [vmem:[#allocation2 + $0x348] sm:$0xff] %vm4508, %v4416
    %4614 = vst [vmem:[#allocation2 + $0x350] sm:$0xff] %v4417
    %4615 = vst.msk [vmem:[#allocation2 + $0x358] sm:$0xff] %vm4508, %v4418
    %4616 = vst [vmem:[#allocation2 + $0x360] sm:$0xff] %v4419
    %4617 = vst.msk [vmem:[#allocation2 + $0x368] sm:$0xff] %vm4508, %v4420
    %4618 = vst [vmem:[#allocation2 + $0x370] sm:$0xff] %v4421
    %4619 = vst.msk [vmem:[#allocation2 + $0x378] sm:$0xff] %vm4508, %v4422
    %4620 = vst [vmem:[#allocation2 + $0x380] sm:$0xff] %v4423
    %4621 = vst.msk [vmem:[#allocation2 + $0x388] sm:$0xff] %vm4508, %v4424
    %4622 = vst [vmem:[#allocation2 + $0x390] sm:$0xff] %v4425
    %4623 = vst.msk [vmem:[#allocation2 + $0x398] sm:$0xff] %vm4508, %v4426
    %4624 = vst [vmem:[#allocation2 + $0x3a0] sm:$0xff] %v4427
    %4625 = vst.msk [vmem:[#allocation2 + $0x3a8] sm:$0xff] %vm4508, %v4428
    %4626 = vst [vmem:[#allocation2 + $0x3b0] sm:$0xff] %v4429
    %4627 = vst.msk [vmem:[#allocation2 + $0x3b8] sm:$0xff] %vm4508, %v4430
    %4628 = vst [vmem:[#allocation2 + $0x3c0] sm:$0xff] %v4431
    %4629 = vst.msk [vmem:[#allocation2 + $0x3c8] sm:$0xff] %vm4508, %v4432
    %4630 = vst [vmem:[#allocation2 + $0x3d0] sm:$0xff] %v4433
    %4631 = vst.msk [vmem:[#allocation2 + $0x3d8] sm:$0xff] %vm4508, %v4434
    %4632 = vst [vmem:[#allocation2 + $0x3e0] sm:$0xff] %v4435
    %4633 = vst.msk [vmem:[#allocation2 + $0x3e8] sm:$0xff] %vm4508, %v4436
    %4634 = vst [vmem:[#allocation2 + $0x3f0] sm:$0xff] %v4437
    %4635 = vst.msk [vmem:[#allocation2 + $0x3f8] sm:$0xff] %vm4508, %v4438
    %4636 = vst [vmem:[#allocation2 + $0x400] sm:$0xff] %v4439
    %4637 = vst.msk [vmem:[#allocation2 + $0x408] sm:$0xff] %vm4508, %v4440
    %4638 = vst [vmem:[#allocation2 + $0x410] sm:$0xff] %v4441
    %4639 = vst.msk [vmem:[#allocation2 + $0x418] sm:$0xff] %vm4508, %v4442
    %4640 = vst [vmem:[#allocation2 + $0x420] sm:$0xff] %v4443
    %4641 = vst.msk [vmem:[#allocation2 + $0x428] sm:$0xff] %vm4508, %v4444
    %4642 = vst [vmem:[#allocation2 + $0x430] sm:$0xff] %v4445
    %4643 = vst.msk [vmem:[#allocation2 + $0x438] sm:$0xff] %vm4508, %v4446
    %4644 = vst [vmem:[#allocation2 + $0x440] sm:$0xff] %v4447
    %4645 = vst.msk [vmem:[#allocation2 + $0x448] sm:$0xff] %vm4508, %v4448
    %4646 = vst [vmem:[#allocation2 + $0x450] sm:$0xff] %v4449
    %4647 = vst.msk [vmem:[#allocation2 + $0x458] sm:$0xff] %vm4508, %v4450
    %4648 = vst [vmem:[#allocation2 + $0x460] sm:$0xff] %v4451
    %4649 = vst.msk [vmem:[#allocation2 + $0x468] sm:$0xff] %vm4508, %v4452
    %4650 = vst [vmem:[#allocation2 + $0x470] sm:$0xff] %v4453
    %4651 = vst.msk [vmem:[#allocation2 + $0x478] sm:$0xff] %vm4508, %v4454
    %4652 = vst [vmem:[#allocation2 + $0x480] sm:$0xff] %v4455
    %4653 = vst.msk [vmem:[#allocation2 + $0x488] sm:$0xff] %vm4508, %v4456
    %4654 = vst [vmem:[#allocation2 + $0x490] sm:$0xff] %v4457
    %4655 = vst.msk [vmem:[#allocation2 + $0x498] sm:$0xff] %vm4508, %v4458
    %4656 = vst [vmem:[#allocation2 + $0x4a0] sm:$0xff] %v4459
    %4657 = vst.msk [vmem:[#allocation2 + $0x4a8] sm:$0xff] %vm4508, %v4460
    %4658 = vst [vmem:[#allocation2 + $0x4b0] sm:$0xff] %v4461
    %4659 = vst.msk [vmem:[#allocation2 + $0x4b8] sm:$0xff] %vm4508, %v4462
    %4660 = vst [vmem:[#allocation2 + $0x4c0] sm:$0xff] %v4463
    %4661 = vst.msk [vmem:[#allocation2 + $0x4c8] sm:$0xff] %vm4508, %v4464
    %4662 = vst [vmem:[#allocation2 + $0x4d0] sm:$0xff] %v4465
    %4663 = vst.msk [vmem:[#allocation2 + $0x4d8] sm:$0xff] %vm4508, %v4466
    %4664 = vst [vmem:[#allocation2 + $0x4e0] sm:$0xff] %v4467
    %4665 = vst.msk [vmem:[#allocation2 + $0x4e8] sm:$0xff] %vm4508, %v4468
    %4666 = vst [vmem:[#allocation2 + $0x4f0] sm:$0xff] %v4469
    %4667 = vst.msk [vmem:[#allocation2 + $0x4f8] sm:$0xff] %vm4508, %v4470
    %4668 = vst [vmem:[#allocation2 + $0x500] sm:$0xff] %v4471
    %4669 = vst.msk [vmem:[#allocation2 + $0x508] sm:$0xff] %vm4508, %v4472
    %4670 = vst [vmem:[#allocation2 + $0x510] sm:$0xff] %v4473
    %4671 = vst.msk [vmem:[#allocation2 + $0x518] sm:$0xff] %vm4508, %v4474
    %4672 = vst [vmem:[#allocation2 + $0x520] sm:$0xff] %v4475
    %4673 = vst.msk [vmem:[#allocation2 + $0x528] sm:$0xff] %vm4508, %v4476
    %4674 = vst [vmem:[#allocation2 + $0x530] sm:$0xff] %v4477
    %4675 = vst.msk [vmem:[#allocation2 + $0x538] sm:$0xff] %vm4508, %v4478
    %4676 = vst [vmem:[#allocation2 + $0x540] sm:$0xff] %v4479
    %4677 = vst.msk [vmem:[#allocation2 + $0x548] sm:$0xff] %vm4508, %v4480
    %4678 = vst [vmem:[#allocation2 + $0x550] sm:$0xff] %v4481
    %4679 = vst.msk [vmem:[#allocation2 + $0x558] sm:$0xff] %vm4508, %v4482
    %4680 = vst [vmem:[#allocation2 + $0x560] sm:$0xff] %v4483
    %4681 = vst.msk [vmem:[#allocation2 + $0x568] sm:$0xff] %vm4508, %v4484
    %4682 = vst [vmem:[#allocation2 + $0x570] sm:$0xff] %v4485
    %4683 = vst.msk [vmem:[#allocation2 + $0x578] sm:$0xff] %vm4508, %v4486
    %4684 = vst [vmem:[#allocation2 + $0x580] sm:$0xff] %v4487
    %4685 = vst.msk [vmem:[#allocation2 + $0x588] sm:$0xff] %vm4508, %v4488
    %4686 = vst [vmem:[#allocation2 + $0x590] sm:$0xff] %v4489
    %4687 = vst.msk [vmem:[#allocation2 + $0x598] sm:$0xff] %vm4508, %v4490
    %4688 = vst [vmem:[#allocation2 + $0x5a0] sm:$0xff] %v4491
    %4689 = vst.msk [vmem:[#allocation2 + $0x5a8] sm:$0xff] %vm4508, %v4492
    %4690 = vst [vmem:[#allocation2 + $0x5b0] sm:$0xff] %v4493
    %4691 = vst.msk [vmem:[#allocation2 + $0x5b8] sm:$0xff] %vm4508, %v4494
    %4692 = vst [vmem:[#allocation2 + $0x5c0] sm:$0xff] %v4495
    %4693 = vst.msk [vmem:[#allocation2 + $0x5c8] sm:$0xff] %vm4508, %v4496
    %4694 = vst [vmem:[#allocation2 + $0x5d0] sm:$0xff] %v4497
    %4695 = vst.msk [vmem:[#allocation2 + $0x5d8] sm:$0xff] %vm4508, %v4498
    %4696 = vst [vmem:[#allocation2 + $0x5e0] sm:$0xff] %v4499
    %4697 = vst.msk [vmem:[#allocation2 + $0x5e8] sm:$0xff] %vm4508, %v4500
    %4698 = vst [vmem:[#allocation2 + $0x5f0] sm:$0xff] %v4501
    %4699 = vst.msk [vmem:[#allocation2 + $0x5f8] sm:$0xff] %vm4508, %v4502
    %4700 = vst [vmem:[#allocation2 + $0x600] sm:$0xff] %v4503
    %4701 = vst.msk [vmem:[#allocation2 + $0x608] sm:$0xff] %vm4508, %v4504
    %4702 = vst [vmem:[#allocation2 + $0x610] sm:$0xff] %v4505
    %4703 = vst.msk [vmem:[#allocation2 + $0x618] sm:$0xff] %vm4508, %v4506
    %4718 = vrot.lane.b32.xlu0 %v3687, 127
    %v4719 = vpop.permute.xlu0 %4718
    %4720 = vrot.lane.b32.xlu0 %v3688, 127
    %v4721 = vpop.permute.xlu0 %4720
    %4722 = vrot.lane.b32.xlu0 %v3689, 127
    %v4723 = vpop.permute.xlu0 %4722
    %4724 = vrot.lane.b32.xlu0 %v3690, 127
    %v4725 = vpop.permute.xlu0 %4724
    %4726 = vrot.lane.b32.xlu0 %v3691, 127
    %v4727 = vpop.permute.xlu0 %4726
    %4728 = vrot.lane.b32.xlu0 %v3692, 127
    %v4729 = vpop.permute.xlu0 %4728
    %4730 = vrot.lane.b32.xlu0 %v3693, 127
    %v4731 = vpop.permute.xlu0 %4730
    %4732 = vrot.lane.b32.xlu0 %v3694, 127
    %v4733 = vpop.permute.xlu0 %4732
    %4734 = vrot.lane.b32.xlu0 %v3695, 127
    %v4735 = vpop.permute.xlu0 %4734
    %4736 = vrot.lane.b32.xlu0 %v3696, 127
    %v4737 = vpop.permute.xlu0 %4736
    %4738 = vrot.lane.b32.xlu0 %v3697, 127
    %v4739 = vpop.permute.xlu0 %4738
    %4740 = vrot.lane.b32.xlu0 %v3698, 127
    %v4741 = vpop.permute.xlu0 %4740
    %4742 = vrot.lane.b32.xlu0 %v3699, 127
    %v4743 = vpop.permute.xlu0 %4742
    %4744 = vrot.lane.b32.xlu0 %v3700, 127
    %v4745 = vpop.permute.xlu0 %4744
    %v4746 = vsel %vm2031, %v4719, %v4721
    %v4747 = vsel %vm2031, %v4721, %v4723
    %v4748 = vsel %vm2031, %v4723, %v4725
    %v4749 = vsel %vm2031, %v4725, %v4727
    %v4750 = vsel %vm2031, %v4727, %v4729
    %v4751 = vsel %vm2031, %v4729, %v4731
    %v4752 = vsel %vm2031, %v4733, %v4735
    %v4753 = vsel %vm2031, %v4735, %v4737
    %v4754 = vsel %vm2031, %v4737, %v4739
    %v4755 = vsel %vm2031, %v4739, %v4741
    %v4756 = vsel %vm2031, %v4741, %v4743
    %v4757 = vsel %vm2031, %v4743, %v4745
    %v4772 = vsel %vm2045, %v4731, 0.0
    %v4773 = vsel %vm2045, %v4745, 0.0
    %v4774 = vmax.f32 %v3687, %v4746
    %v4775 = vmax.f32 %v3688, %v4747
    %v4776 = vmax.f32 %v3689, %v4748
    %v4777 = vmax.f32 %v3690, %v4749
    %v4778 = vmax.f32 %v3691, %v4750
    %v4779 = vmax.f32 %v3692, %v4751
    %v4780 = vmax.f32 %v3693, %v4772
    %v4781 = vmax.f32 %v3694, %v4752
    %v4782 = vmax.f32 %v3695, %v4753
    %v4783 = vmax.f32 %v3696, %v4754
    %v4784 = vmax.f32 %v3697, %v4755
    %v4785 = vmax.f32 %v3698, %v4756
    %v4786 = vmax.f32 %v3699, %v4757
    %v4787 = vmax.f32 %v3700, %v4773
    %4788 = vrot.lane.b32.xlu0 %v3687, 100
    %v4789 = vpop.permute.xlu0 %4788
    %4790 = vrot.lane.b32.xlu0 %v3688, 100
    %v4791 = vpop.permute.xlu0 %4790
    %4792 = vrot.lane.b32.xlu0 %v3689, 100
    %v4793 = vpop.permute.xlu0 %4792
    %4794 = vrot.lane.b32.xlu0 %v3690, 100
    %v4795 = vpop.permute.xlu0 %4794
    %4796 = vrot.lane.b32.xlu0 %v3691, 100
    %v4797 = vpop.permute.xlu0 %4796
    %4798 = vrot.lane.b32.xlu0 %v3692, 100
    %v4799 = vpop.permute.xlu0 %4798
    %4800 = vrot.lane.b32.xlu0 %v3693, 100
    %v4801 = vpop.permute.xlu0 %4800
    %4802 = vrot.lane.b32.xlu0 %v3694, 100
    %v4803 = vpop.permute.xlu0 %4802
    %4804 = vrot.lane.b32.xlu0 %v3695, 100
    %v4805 = vpop.permute.xlu0 %4804
    %4806 = vrot.lane.b32.xlu0 %v3696, 100
    %v4807 = vpop.permute.xlu0 %4806
    %4808 = vrot.lane.b32.xlu0 %v3697, 100
    %v4809 = vpop.permute.xlu0 %4808
    %4810 = vrot.lane.b32.xlu0 %v3698, 100
    %v4811 = vpop.permute.xlu0 %4810
    %4812 = vrot.lane.b32.xlu0 %v3699, 100
    %v4813 = vpop.permute.xlu0 %4812
    %4814 = vrot.lane.b32.xlu0 %v3700, 100
    %v4815 = vpop.permute.xlu0 %4814
    %v4816 = vsel %vm2882, %v4789, %v4791
    %v4817 = vsel %vm2882, %v4791, %v4793
    %v4818 = vsel %vm2882, %v4793, %v4795
    %v4819 = vsel %vm2882, %v4795, %v4797
    %v4820 = vsel %vm2882, %v4797, %v4799
    %v4821 = vsel %vm2882, %v4799, %v4801
    %v4822 = vsel %vm2882, %v4803, %v4805
    %v4823 = vsel %vm2882, %v4805, %v4807
    %v4824 = vsel %vm2882, %v4807, %v4809
    %v4825 = vsel %vm2882, %v4809, %v4811
    %v4826 = vsel %vm2882, %v4811, %v4813
    %v4827 = vsel %vm2882, %v4813, %v4815
    %v4840 = vsel %vm2890, %v4821, 0.0
    %v4841 = vsel %vm2890, %v4827, 0.0
    %v4842 = vmax.f32 %v4774, %v4816
    %v4843 = vmax.f32 %v4775, %v4817
    %v4844 = vmax.f32 %v4776, %v4818
    %v4845 = vmax.f32 %v4777, %v4819
    %v4846 = vmax.f32 %v4778, %v4820
    %v4847 = vmax.f32 %v4779, %v4840
    %v4848 = vmax.f32 %v4780, 0.0
    %v4849 = vmax.f32 %v4781, %v4822
    %v4850 = vmax.f32 %v4782, %v4823
    %v4851 = vmax.f32 %v4783, %v4824
    %v4852 = vmax.f32 %v4784, %v4825
    %v4853 = vmax.f32 %v4785, %v4826
    %v4854 = vmax.f32 %v4786, %v4841
    %v4855 = vmax.f32 %v4787, 0.0
    %4856 = vrot.lane.b32.xlu0 %v3687, 99
    %v4857 = vpop.permute.xlu0 %4856
    %4858 = vrot.lane.b32.xlu0 %v3688, 99
    %v4859 = vpop.permute.xlu0 %4858
    %4860 = vrot.lane.b32.xlu0 %v3689, 99
    %v4861 = vpop.permute.xlu0 %4860
    %4862 = vrot.lane.b32.xlu0 %v3690, 99
    %v4863 = vpop.permute.xlu0 %4862
    %4864 = vrot.lane.b32.xlu0 %v3691, 99
    %v4865 = vpop.permute.xlu0 %4864
    %4866 = vrot.lane.b32.xlu0 %v3692, 99
    %v4867 = vpop.permute.xlu0 %4866
    %4868 = vrot.lane.b32.xlu0 %v3693, 99
    %v4869 = vpop.permute.xlu0 %4868
    %4870 = vrot.lane.b32.xlu0 %v3694, 99
    %v4871 = vpop.permute.xlu0 %4870
    %4872 = vrot.lane.b32.xlu0 %v3695, 99
    %v4873 = vpop.permute.xlu0 %4872
    %4874 = vrot.lane.b32.xlu0 %v3696, 99
    %v4875 = vpop.permute.xlu0 %4874
    %4876 = vrot.lane.b32.xlu0 %v3697, 99
    %v4877 = vpop.permute.xlu0 %4876
    %4878 = vrot.lane.b32.xlu0 %v3698, 99
    %v4879 = vpop.permute.xlu0 %4878
    %4880 = vrot.lane.b32.xlu0 %v3699, 99
    %v4881 = vpop.permute.xlu0 %4880
    %4882 = vrot.lane.b32.xlu0 %v3700, 99
    %v4883 = vpop.permute.xlu0 %4882
    %v4884 = vsel %vm3250, %v4857, %v4859
    %v4885 = vsel %vm3250, %v4859, %v4861
    %v4886 = vsel %vm3250, %v4861, %v4863
    %v4887 = vsel %vm3250, %v4863, %v4865
    %v4888 = vsel %vm3250, %v4865, %v4867
    %v4889 = vsel %vm3250, %v4867, %v4869
    %v4890 = vsel %vm3250, %v4871, %v4873
    %v4891 = vsel %vm3250, %v4873, %v4875
    %v4892 = vsel %vm3250, %v4875, %v4877
    %v4893 = vsel %vm3250, %v4877, %v4879
    %v4894 = vsel %vm3250, %v4879, %v4881
    %v4895 = vsel %vm3250, %v4881, %v4883
    %v4908 = vsel %vm3263, %v4889, 0.0
    %v4909 = vsel %vm3263, %v4895, 0.0
    %v4910 = vmax.f32 %v4842, %v4884
    %v4911 = vmax.f32 %v4843, %v4885
    %v4912 = vmax.f32 %v4844, %v4886
    %v4913 = vmax.f32 %v4845, %v4887
    %v4914 = vmax.f32 %v4846, %v4888
    %v4915 = vmax.f32 %v4847, %v4908
    %v4916 = vmax.f32 %v4848, 0.0
    %v4917 = vmax.f32 %v4849, %v4890
    %v4918 = vmax.f32 %v4850, %v4891
    %v4919 = vmax.f32 %v4851, %v4892
    %v4920 = vmax.f32 %v4852, %v4893
    %v4921 = vmax.f32 %v4853, %v4894
    %v4922 = vmax.f32 %v4854, %v4909
    %v4923 = vmax.f32 %v4855, 0.0
    %v4924 = vld [vmem:[#allocation2] sm:$0xff]
    %v4925 = vld [vmem:[#allocation2 + $0x8] sm:$0xff]
    %v4926 = vld [vmem:[#allocation2 + $0x10] sm:$0xff]
    %v4927 = vld [vmem:[#allocation2 + $0x18] sm:$0xff]
    %v4928 = vld [vmem:[#allocation2 + $0x20] sm:$0xff]
    %v4929 = vld [vmem:[#allocation2 + $0x28] sm:$0xff]
    %v4930 = vld [vmem:[#allocation2 + $0x30] sm:$0xff]
    %v4931 = vld [vmem:[#allocation2 + $0x38] sm:$0xff]
    %v4932 = vld [vmem:[#allocation2 + $0x40] sm:$0xff]
    %v4933 = vld [vmem:[#allocation2 + $0x48] sm:$0xff]
    %v4934 = vld [vmem:[#allocation2 + $0x50] sm:$0xff]
    %v4935 = vld [vmem:[#allocation2 + $0x58] sm:$0xff]
    %v4936 = vld [vmem:[#allocation2 + $0x60] sm:$0xff]
    %v4937 = vld [vmem:[#allocation2 + $0x68] sm:$0xff]
    %v4938 = vld [vmem:[#allocation2 + $0x70] sm:$0xff]
    %v4939 = vld [vmem:[#allocation2 + $0x78] sm:$0xff]
    %v4940 = vld [vmem:[#allocation2 + $0x80] sm:$0xff]
    %v4941 = vld [vmem:[#allocation2 + $0x88] sm:$0xff]
    %v4942 = vld [vmem:[#allocation2 + $0x90] sm:$0xff]
    %v4943 = vld [vmem:[#allocation2 + $0x98] sm:$0xff]
    %v4944 = vld [vmem:[#allocation2 + $0xa0] sm:$0xff]
    %v4945 = vld [vmem:[#allocation2 + $0xa8] sm:$0xff]
    %v4946 = vld [vmem:[#allocation2 + $0xb0] sm:$0xff]
    %v4947 = vld [vmem:[#allocation2 + $0xb8] sm:$0xff]
    %v4948 = vld [vmem:[#allocation2 + $0xc0] sm:$0xff]
    %v4949 = vld [vmem:[#allocation2 + $0xc8] sm:$0xff]
    %v4950 = vld [vmem:[#allocation2 + $0xd0] sm:$0xff]
    %v4951 = vld [vmem:[#allocation2 + $0xd8] sm:$0xff]
    %v4952 = vld [vmem:[#allocation2 + $0xe0] sm:$0xff]
    %v4953 = vld [vmem:[#allocation2 + $0xe8] sm:$0xff]
    %v4954 = vld [vmem:[#allocation2 + $0xf0] sm:$0xff]
    %v4955 = vld [vmem:[#allocation2 + $0xf8] sm:$0xff]
    %v4956 = vld [vmem:[#allocation2 + $0x100] sm:$0xff]
    %v4957 = vld [vmem:[#allocation2 + $0x108] sm:$0xff]
    %v4958 = vld [vmem:[#allocation2 + $0x110] sm:$0xff]
    %v4959 = vld [vmem:[#allocation2 + $0x118] sm:$0xff]
    %v4960 = vld [vmem:[#allocation2 + $0x120] sm:$0xff]
    %v4961 = vld [vmem:[#allocation2 + $0x128] sm:$0xff]
    %v4962 = vld [vmem:[#allocation2 + $0x130] sm:$0xff]
    %v4963 = vld [vmem:[#allocation2 + $0x138] sm:$0xff]
    %v4964 = vld [vmem:[#allocation2 + $0x140] sm:$0xff]
    %v4965 = vld [vmem:[#allocation2 + $0x148] sm:$0xff]
    %v4966 = vld [vmem:[#allocation2 + $0x150] sm:$0xff]
    %v4967 = vld [vmem:[#allocation2 + $0x158] sm:$0xff]
    %v4968 = vld [vmem:[#allocation2 + $0x160] sm:$0xff]
    %v4969 = vld [vmem:[#allocation2 + $0x168] sm:$0xff]
    %v4970 = vld [vmem:[#allocation2 + $0x170] sm:$0xff]
    %v4971 = vld [vmem:[#allocation2 + $0x178] sm:$0xff]
    %v4972 = vld [vmem:[#allocation2 + $0x180] sm:$0xff]
    %v4973 = vld [vmem:[#allocation2 + $0x188] sm:$0xff]
    %v4974 = vld [vmem:[#allocation2 + $0x190] sm:$0xff]
    %v4975 = vld [vmem:[#allocation2 + $0x198] sm:$0xff]
    %v4976 = vld [vmem:[#allocation2 + $0x1a0] sm:$0xff]
    %v4977 = vld [vmem:[#allocation2 + $0x1a8] sm:$0xff]
    %v4978 = vld [vmem:[#allocation2 + $0x1b0] sm:$0xff]
    %v4979 = vld [vmem:[#allocation2 + $0x1b8] sm:$0xff]
    %v4980 = vld [vmem:[#allocation2 + $0x1c0] sm:$0xff]
    %v4981 = vld [vmem:[#allocation2 + $0x1c8] sm:$0xff]
    %v4982 = vld [vmem:[#allocation2 + $0x1d0] sm:$0xff]
    %v4983 = vld [vmem:[#allocation2 + $0x1d8] sm:$0xff]
    %v4984 = vld [vmem:[#allocation2 + $0x1e0] sm:$0xff]
    %v4985 = vld [vmem:[#allocation2 + $0x1e8] sm:$0xff]
    %v4986 = vld [vmem:[#allocation2 + $0x1f0] sm:$0xff]
    %v4987 = vld [vmem:[#allocation2 + $0x1f8] sm:$0xff]
    %v4988 = vld [vmem:[#allocation2 + $0x200] sm:$0xff]
    %v4989 = vld [vmem:[#allocation2 + $0x208] sm:$0xff]
    %v4990 = vld [vmem:[#allocation2 + $0x210] sm:$0xff]
    %v4991 = vld [vmem:[#allocation2 + $0x218] sm:$0xff]
    %v4992 = vld [vmem:[#allocation2 + $0x220] sm:$0xff]
    %v4993 = vld [vmem:[#allocation2 + $0x228] sm:$0xff]
    %v4994 = vld [vmem:[#allocation2 + $0x230] sm:$0xff]
    %v4995 = vld [vmem:[#allocation2 + $0x238] sm:$0xff]
    %v4996 = vld [vmem:[#allocation2 + $0x240] sm:$0xff]
    %v4997 = vld [vmem:[#allocation2 + $0x248] sm:$0xff]
    %v4998 = vld [vmem:[#allocation2 + $0x250] sm:$0xff]
    %v4999 = vld [vmem:[#allocation2 + $0x258] sm:$0xff]
    %v5000 = vld [vmem:[#allocation2 + $0x260] sm:$0xff]
    %v5001 = vld [vmem:[#allocation2 + $0x268] sm:$0xff]
    %v5002 = vld [vmem:[#allocation2 + $0x270] sm:$0xff]
    %v5003 = vld [vmem:[#allocation2 + $0x278] sm:$0xff]
    %v5004 = vld [vmem:[#allocation2 + $0x280] sm:$0xff]
    %v5005 = vld [vmem:[#allocation2 + $0x288] sm:$0xff]
    %v5006 = vld [vmem:[#allocation2 + $0x290] sm:$0xff]
    %v5007 = vld [vmem:[#allocation2 + $0x298] sm:$0xff]
    %v5008 = vld [vmem:[#allocation2 + $0x2a0] sm:$0xff]
    %v5009 = vld [vmem:[#allocation2 + $0x2a8] sm:$0xff]
    %v5010 = vld [vmem:[#allocation2 + $0x2b0] sm:$0xff]
    %v5011 = vld [vmem:[#allocation2 + $0x2b8] sm:$0xff]
    %v5012 = vld [vmem:[#allocation2 + $0x2c0] sm:$0xff]
    %v5013 = vld [vmem:[#allocation2 + $0x2c8] sm:$0xff]
    %v5014 = vld [vmem:[#allocation2 + $0x2d0] sm:$0xff]
    %v5015 = vld [vmem:[#allocation2 + $0x2d8] sm:$0xff]
    %v5016 = vld [vmem:[#allocation2 + $0x2e0] sm:$0xff]
    %v5017 = vld [vmem:[#allocation2 + $0x2e8] sm:$0xff]
    %v5018 = vld [vmem:[#allocation2 + $0x2f0] sm:$0xff]
    %v5019 = vld [vmem:[#allocation2 + $0x2f8] sm:$0xff]
    %v5020 = vld [vmem:[#allocation2 + $0x300] sm:$0xff]
    %v5021 = vld [vmem:[#allocation2 + $0x308] sm:$0xff]
    %v5022 = vld [vmem:[#allocation2 + $0x310] sm:$0xff]
    %v5023 = vld [vmem:[#allocation2 + $0x318] sm:$0xff]
    %v5024 = vld [vmem:[#allocation2 + $0x320] sm:$0xff]
    %v5025 = vld [vmem:[#allocation2 + $0x328] sm:$0xff]
    %v5026 = vld [vmem:[#allocation2 + $0x330] sm:$0xff]
    %v5027 = vld [vmem:[#allocation2 + $0x338] sm:$0xff]
    %v5028 = vld [vmem:[#allocation2 + $0x340] sm:$0xff]
    %v5029 = vld [vmem:[#allocation2 + $0x348] sm:$0xff]
    %v5030 = vld [vmem:[#allocation2 + $0x350] sm:$0xff]
    %v5031 = vld [vmem:[#allocation2 + $0x358] sm:$0xff]
    %v5032 = vld [vmem:[#allocation2 + $0x360] sm:$0xff]
    %v5033 = vld [vmem:[#allocation2 + $0x368] sm:$0xff]
    %v5034 = vld [vmem:[#allocation2 + $0x370] sm:$0xff]
    %v5035 = vld [vmem:[#allocation2 + $0x378] sm:$0xff]
    %v5036 = vld [vmem:[#allocation2 + $0x380] sm:$0xff]
    %v5037 = vld [vmem:[#allocation2 + $0x388] sm:$0xff]
    %v5038 = vld [vmem:[#allocation2 + $0x390] sm:$0xff]
    %v5039 = vld [vmem:[#allocation2 + $0x398] sm:$0xff]
    %v5040 = vld [vmem:[#allocation2 + $0x3a0] sm:$0xff]
    %v5041 = vld [vmem:[#allocation2 + $0x3a8] sm:$0xff]
    %v5042 = vld [vmem:[#allocation2 + $0x3b0] sm:$0xff]
    %v5043 = vld [vmem:[#allocation2 + $0x3b8] sm:$0xff]
    %v5044 = vld [vmem:[#allocation2 + $0x3c0] sm:$0xff]
    %v5045 = vld [vmem:[#allocation2 + $0x3c8] sm:$0xff]
    %v5046 = vld [vmem:[#allocation2 + $0x3d0] sm:$0xff]
    %v5047 = vld [vmem:[#allocation2 + $0x3d8] sm:$0xff]
    %v5048 = vld [vmem:[#allocation2 + $0x3e0] sm:$0xff]
    %v5049 = vld [vmem:[#allocation2 + $0x3e8] sm:$0xff]
    %v5050 = vld [vmem:[#allocation2 + $0x3f0] sm:$0xff]
    %v5051 = vld [vmem:[#allocation2 + $0x3f8] sm:$0xff]
    %v5052 = vld [vmem:[#allocation2 + $0x400] sm:$0xff]
    %v5053 = vld [vmem:[#allocation2 + $0x408] sm:$0xff]
    %v5054 = vld [vmem:[#allocation2 + $0x410] sm:$0xff]
    %v5055 = vld [vmem:[#allocation2 + $0x418] sm:$0xff]
    %v5056 = vld [vmem:[#allocation2 + $0x420] sm:$0xff]
    %v5057 = vld [vmem:[#allocation2 + $0x428] sm:$0xff]
    %v5058 = vld [vmem:[#allocation2 + $0x430] sm:$0xff]
    %v5059 = vld [vmem:[#allocation2 + $0x438] sm:$0xff]
    %v5060 = vld [vmem:[#allocation2 + $0x440] sm:$0xff]
    %v5061 = vld [vmem:[#allocation2 + $0x448] sm:$0xff]
    %v5062 = vld [vmem:[#allocation2 + $0x450] sm:$0xff]
    %v5063 = vld [vmem:[#allocation2 + $0x458] sm:$0xff]
    %v5064 = vld [vmem:[#allocation2 + $0x460] sm:$0xff]
    %v5065 = vld [vmem:[#allocation2 + $0x468] sm:$0xff]
    %v5066 = vld [vmem:[#allocation2 + $0x470] sm:$0xff]
    %v5067 = vld [vmem:[#allocation2 + $0x478] sm:$0xff]
    %v5068 = vld [vmem:[#allocation2 + $0x480] sm:$0xff]
    %v5069 = vld [vmem:[#allocation2 + $0x488] sm:$0xff]
    %v5070 = vld [vmem:[#allocation2 + $0x490] sm:$0xff]
    %v5071 = vld [vmem:[#allocation2 + $0x498] sm:$0xff]
    %v5072 = vld [vmem:[#allocation2 + $0x4a0] sm:$0xff]
    %v5073 = vld [vmem:[#allocation2 + $0x4a8] sm:$0xff]
    %v5074 = vld [vmem:[#allocation2 + $0x4b0] sm:$0xff]
    %v5075 = vld [vmem:[#allocation2 + $0x4b8] sm:$0xff]
    %v5076 = vld [vmem:[#allocation2 + $0x4c0] sm:$0xff]
    %v5077 = vld [vmem:[#allocation2 + $0x4c8] sm:$0xff]
    %v5078 = vld [vmem:[#allocation2 + $0x4d0] sm:$0xff]
    %v5079 = vld [vmem:[#allocation2 + $0x4d8] sm:$0xff]
    %v5080 = vld [vmem:[#allocation2 + $0x4e0] sm:$0xff]
    %v5081 = vld [vmem:[#allocation2 + $0x4e8] sm:$0xff]
    %v5082 = vld [vmem:[#allocation2 + $0x4f0] sm:$0xff]
    %v5083 = vld [vmem:[#allocation2 + $0x4f8] sm:$0xff]
    %v5084 = vld [vmem:[#allocation2 + $0x500] sm:$0xff]
    %v5085 = vld [vmem:[#allocation2 + $0x508] sm:$0xff]
    %v5086 = vld [vmem:[#allocation2 + $0x510] sm:$0xff]
    %v5087 = vld [vmem:[#allocation2 + $0x518] sm:$0xff]
    %v5088 = vld [vmem:[#allocation2 + $0x520] sm:$0xff]
    %v5089 = vld [vmem:[#allocation2 + $0x528] sm:$0xff]
    %v5090 = vld [vmem:[#allocation2 + $0x530] sm:$0xff]
    %v5091 = vld [vmem:[#allocation2 + $0x538] sm:$0xff]
    %v5092 = vld [vmem:[#allocation2 + $0x540] sm:$0xff]
    %v5093 = vld [vmem:[#allocation2 + $0x548] sm:$0xff]
    %v5094 = vld [vmem:[#allocation2 + $0x550] sm:$0xff]
    %v5095 = vld [vmem:[#allocation2 + $0x558] sm:$0xff]
    %v5096 = vld [vmem:[#allocation2 + $0x560] sm:$0xff]
    %v5097 = vld [vmem:[#allocation2 + $0x568] sm:$0xff]
    %v5098 = vld [vmem:[#allocation2 + $0x570] sm:$0xff]
    %v5099 = vld [vmem:[#allocation2 + $0x578] sm:$0xff]
    %v5100 = vld [vmem:[#allocation2 + $0x580] sm:$0xff]
    %v5101 = vld [vmem:[#allocation2 + $0x588] sm:$0xff]
    %v5102 = vld [vmem:[#allocation2 + $0x590] sm:$0xff]
    %v5103 = vld [vmem:[#allocation2 + $0x598] sm:$0xff]
    %v5104 = vld [vmem:[#allocation2 + $0x5a0] sm:$0xff]
    %v5105 = vld [vmem:[#allocation2 + $0x5a8] sm:$0xff]
    %v5106 = vld [vmem:[#allocation2 + $0x5b0] sm:$0xff]
    %v5107 = vld [vmem:[#allocation2 + $0x5b8] sm:$0xff]
    %v5108 = vld [vmem:[#allocation2 + $0x5c0] sm:$0xff]
    %v5109 = vld [vmem:[#allocation2 + $0x5c8] sm:$0xff]
    %v5110 = vld [vmem:[#allocation2 + $0x5d0] sm:$0xff]
    %v5111 = vld [vmem:[#allocation2 + $0x5d8] sm:$0xff]
    %v5112 = vld [vmem:[#allocation2 + $0x5e0] sm:$0xff]
    %v5113 = vld [vmem:[#allocation2 + $0x5e8] sm:$0xff]
    %v5114 = vld [vmem:[#allocation2 + $0x5f0] sm:$0xff]
    %v5115 = vld [vmem:[#allocation2 + $0x5f8] sm:$0xff]
    %v5116 = vld [vmem:[#allocation2 + $0x600] sm:$0xff]
    %v5117 = vld [vmem:[#allocation2 + $0x608] sm:$0xff]
    %v5118 = vld [vmem:[#allocation2 + $0x610] sm:$0xff]
    %v5119 = vld [vmem:[#allocation2 + $0x618] sm:$0xff]
    %vm5120 = vcmask 130048
    %v5122 = vsel %vm5120, %v4916, 0
    %v5125 = vsel %vm5120, %v4923, 0
    %5127 = vmatprep.subr.mxu0 %v4925
    %5128 = vmatpush1.msra.mxu0 %v4924
    %5129 = vmatprep.subr.mxu0 %v4927
    %5130 = vmatpush1.msra.mxu0 %v4926
    %5131 = vmatprep.subr.mxu0 %v4929
    %5132 = vmatpush1.msra.mxu0 %v4928
    %5133 = vmatprep.subr.mxu0 %v4931
    %5134 = vmatpush1.msra.mxu0 %v4930
    %5135 = vmatprep.subr.mxu0 %v4933
    %5136 = vmatpush1.msra.mxu0 %v4932
    %5137 = vmatprep.subr.mxu0 %v4935
    %5138 = vmatpush1.msra.mxu0 %v4934
    %5139 = vmatprep.subr.mxu0 %v4937
    %5140 = vmatpush1.msra.mxu0 %v4936
    %5141 = vmatprep.subr.mxu0 %v4939
    %5142 = vmatpush1.msra.mxu0 %v4938
    %5143 = vmatprep.subr.mxu0 %v4941
    %5144 = vmatpush1.msra.mxu0 %v4940
    %5145 = vmatprep.subr.mxu0 %v4943
    %5146 = vmatpush1.msra.mxu0 %v4942
    %5147 = vmatprep.subr.mxu0 %v4945
    %5148 = vmatpush1.msra.mxu0 %v4944
    %5149 = vmatprep.subr.mxu0 %v4947
    %5150 = vmatpush1.msra.mxu0 %v4946
    %5151 = vmatprep.subr.mxu0 %v4949
    %5152 = vmatpush1.msra.mxu0 %v4948
    %5153 = vmatprep.subr.mxu0 %v4951
    %5154 = vmatpush1.msra.mxu0 %v4950
    %5155 = vmatprep.subr.mxu0 %v4953
    %5156 = vmatpush1.msra.mxu0 %v4952
    %5157 = vmatprep.subr.mxu0 %v4955
    %5158 = vmatpush1.msra.mxu0 %v4954
    %5159 = vmatprep.subr.mxu0 %v4957
    %5160 = vmatpush1.msra.mxu0 %v4956
    %5161 = vmatprep.subr.mxu0 %v4959
    %5162 = vmatpush1.msra.mxu0 %v4958
    %5163 = vmatprep.subr.mxu0 %v4961
    %5164 = vmatpush1.msra.mxu0 %v4960
    %5165 = vmatprep.subr.mxu0 %v4963
    %5166 = vmatpush1.msra.mxu0 %v4962
    %5167 = vmatprep.subr.mxu0 %v4965
    %5168 = vmatpush1.msra.mxu0 %v4964
    %5169 = vmatprep.subr.mxu0 %v4967
    %5170 = vmatpush1.msra.mxu0 %v4966
    %5171 = vmatprep.subr.mxu0 %v4969
    %5172 = vmatpush1.msra.mxu0 %v4968
    %5173 = vmatprep.subr.mxu0 %v4971
    %5174 = vmatpush1.msra.mxu0 %v4970
    %5175 = vmatprep.subr.mxu0 %v4973
    %5176 = vmatpush1.msra.mxu0 %v4972
    %5177 = vmatprep.subr.mxu0 %v4975
    %5178 = vmatpush1.msra.mxu0 %v4974
    %5179 = vmatprep.subr.mxu0 %v4977
    %5180 = vmatpush1.msra.mxu0 %v4976
    %5181 = vmatprep.subr.mxu0 %v4979
    %5182 = vmatpush1.msra.mxu0 %v4978
    %5183 = vmatprep.subr.mxu0 %v4981
    %5184 = vmatpush1.msra.mxu0 %v4980
    %5185 = vmatprep.subr.mxu0 %v4983
    %5186 = vmatpush1.msra.mxu0 %v4982
    %5187 = vmatprep.subr.mxu0 %v4985
    %5188 = vmatpush1.msra.mxu0 %v4984
    %5189 = vmatprep.subr.mxu0 %v4987
    %5190 = vmatpush1.msra.mxu0 %v4986
    %5191 = vmatprep.mubr.f32.mxu0 %v4911
    %5192 = vmatmul.mubr.f32.gmra.mrb[0].mxu0 %v4910
    %v5193 = vpop.f32.mrb[0].mxu0
    %v5194 = vadd.f32 0.0, %v5193
    %v5195 = vpop.f32.mrb[0].mxu0
    %v5196 = vadd.f32 0.0, %v5195
    %5197 = vmatprep.mubr.f32.mxu0 %v4918
    %5198 = vmatmul.mubr.f32.gmra.mrb[0].mxu0 %v4917
    %v5199 = vpop.f32.mrb[0].mxu0
    %v5200 = vadd.f32 0.0, %v5199
    %v5201 = vpop.f32.mrb[0].mxu0
    %v5202 = vadd.f32 0.0, %v5201
    %5203 = vdwg.mxu0
    %5204 = vmatprep.subr.mxu0 %v4989
    %5205 = vmatpush1.msra.mxu0 %v4988
    %5206 = vmatprep.subr.mxu0 %v4991
    %5207 = vmatpush1.msra.mxu0 %v4990
    %5208 = vmatprep.subr.mxu0 %v4993
    %5209 = vmatpush1.msra.mxu0 %v4992
    %5210 = vmatprep.subr.mxu0 %v4995
    %5211 = vmatpush1.msra.mxu0 %v4994
    %5212 = vmatprep.subr.mxu0 %v4997
    %5213 = vmatpush1.msra.mxu0 %v4996
    %5214 = vmatprep.subr.mxu0 %v4999
    %5215 = vmatpush1.msra.mxu0 %v4998
    %5216 = vmatprep.subr.mxu0 %v5001
    %5217 = vmatpush1.msra.mxu0 %v5000
    %5218 = vmatprep.subr.mxu0 %v5003
    %5219 = vmatpush1.msra.mxu0 %v5002
    %5220 = vmatprep.subr.mxu0 %v5005
    %5221 = vmatpush1.msra.mxu0 %v5004
    %5222 = vmatprep.subr.mxu0 %v5007
    %5223 = vmatpush1.msra.mxu0 %v5006
    %5224 = vmatprep.subr.mxu0 %v5009
    %5225 = vmatpush1.msra.mxu0 %v5008
    %5226 = vmatprep.subr.mxu0 %v5011
    %5227 = vmatpush1.msra.mxu0 %v5010
    %5228 = vmatprep.subr.mxu0 %v5013
    %5229 = vmatpush1.msra.mxu0 %v5012
    %5230 = vmatprep.subr.mxu0 %v5015
    %5231 = vmatpush1.msra.mxu0 %v5014
    %5232 = vmatprep.subr.mxu0 %v5017
    %5233 = vmatpush1.msra.mxu0 %v5016
    %5234 = vmatprep.subr.mxu0 %v5019
    %5235 = vmatpush1.msra.mxu0 %v5018
    %5236 = vmatprep.subr.mxu0 %v5021
    %5237 = vmatpush1.msra.mxu0 %v5020
    %5238 = vmatprep.subr.mxu0 %v5023
    %5239 = vmatpush1.msra.mxu0 %v5022
    %5240 = vmatprep.subr.mxu0 %v5025
    %5241 = vmatpush1.msra.mxu0 %v5024
    %5242 = vmatprep.subr.mxu0 %v5027
    %5243 = vmatpush1.msra.mxu0 %v5026
    %5244 = vmatprep.subr.mxu0 %v5029
    %5245 = vmatpush1.msra.mxu0 %v5028
    %5246 = vmatprep.subr.mxu0 %v5031
    %5247 = vmatpush1.msra.mxu0 %v5030
    %5248 = vmatprep.subr.mxu0 %v5033
    %5249 = vmatpush1.msra.mxu0 %v5032
    %5250 = vmatprep.subr.mxu0 %v5035
    %5251 = vmatpush1.msra.mxu0 %v5034
    %5252 = vmatprep.subr.mxu0 %v5037
    %5253 = vmatpush1.msra.mxu0 %v5036
    %5254 = vmatprep.subr.mxu0 %v5039
    %5255 = vmatpush1.msra.mxu0 %v5038
    %5256 = vmatprep.subr.mxu0 %v5041
    %5257 = vmatpush1.msra.mxu0 %v5040
    %5258 = vmatprep.subr.mxu0 %v5043
    %5259 = vmatpush1.msra.mxu0 %v5042
    %5260 = vmatprep.subr.mxu0 %v5045
    %5261 = vmatpush1.msra.mxu0 %v5044
    %5262 = vmatprep.subr.mxu0 %v5047
    %5263 = vmatpush1.msra.mxu0 %v5046
    %5264 = vmatprep.subr.mxu0 %v5049
    %5265 = vmatpush1.msra.mxu0 %v5048
    %5266 = vmatprep.subr.mxu0 %v5051
    %5267 = vmatpush1.msra.mxu0 %v5050
    %5268 = vmatprep.mubr.f32.mxu0 %v4913
    %5269 = vmatmul.mubr.f32.gmra.mrb[0].mxu0 %v4912
    %v5270 = vpop.f32.mrb[0].mxu0
    %v5271 = vadd.f32 %v5194, %v5270
    %v5272 = vpop.f32.mrb[0].mxu0
    %v5273 = vadd.f32 %v5196, %v5272
    %5274 = vmatprep.mubr.f32.mxu0 %v4920
    %5275 = vmatmul.mubr.f32.gmra.mrb[0].mxu0 %v4919
    %v5276 = vpop.f32.mrb[0].mxu0
    %v5277 = vadd.f32 %v5200, %v5276
    %v5278 = vpop.f32.mrb[0].mxu0
    %v5279 = vadd.f32 %v5202, %v5278
    %5280 = vdwg.mxu0
    %5281 = vmatprep.subr.mxu0 %v5053
    %5282 = vmatpush1.msra.mxu0 %v5052
    %5283 = vmatprep.subr.mxu0 %v5055
    %5284 = vmatpush1.msra.mxu0 %v5054
    %5285 = vmatprep.subr.mxu0 %v5057
    %5286 = vmatpush1.msra.mxu0 %v5056
    %5287 = vmatprep.subr.mxu0 %v5059
    %5288 = vmatpush1.msra.mxu0 %v5058
    %5289 = vmatprep.subr.mxu0 %v5061
    %5290 = vmatpush1.msra.mxu0 %v5060
    %5291 = vmatprep.subr.mxu0 %v5063
    %5292 = vmatpush1.msra.mxu0 %v5062
    %5293 = vmatprep.subr.mxu0 %v5065
    %5294 = vmatpush1.msra.mxu0 %v5064
    %5295 = vmatprep.subr.mxu0 %v5067
    %5296 = vmatpush1.msra.mxu0 %v5066
    %5297 = vmatprep.subr.mxu0 %v5069
    %5298 = vmatpush1.msra.mxu0 %v5068
    %5299 = vmatprep.subr.mxu0 %v5071
    %5300 = vmatpush1.msra.mxu0 %v5070
    %5301 = vmatprep.subr.mxu0 %v5073
    %5302 = vmatpush1.msra.mxu0 %v5072
    %5303 = vmatprep.subr.mxu0 %v5075
    %5304 = vmatpush1.msra.mxu0 %v5074
    %5305 = vmatprep.subr.mxu0 %v5077
    %5306 = vmatpush1.msra.mxu0 %v5076
    %5307 = vmatprep.subr.mxu0 %v5079
    %5308 = vmatpush1.msra.mxu0 %v5078
    %5309 = vmatprep.subr.mxu0 %v5081
    %5310 = vmatpush1.msra.mxu0 %v5080
    %5311 = vmatprep.subr.mxu0 %v5083
    %5312 = vmatpush1.msra.mxu0 %v5082
    %5313 = vmatprep.subr.mxu0 %v5085
    %5314 = vmatpush1.msra.mxu0 %v5084
    %5315 = vmatprep.subr.mxu0 %v5087
    %5316 = vmatpush1.msra.mxu0 %v5086
    %5317 = vmatprep.subr.mxu0 %v5089
    %5318 = vmatpush1.msra.mxu0 %v5088
    %5319 = vmatprep.subr.mxu0 %v5091
    %5320 = vmatpush1.msra.mxu0 %v5090
    %5321 = vmatprep.subr.mxu0 %v5093
    %5322 = vmatpush1.msra.mxu0 %v5092
    %5323 = vmatprep.subr.mxu0 %v5095
    %5324 = vmatpush1.msra.mxu0 %v5094
    %5325 = vmatprep.subr.mxu0 %v5097
    %5326 = vmatpush1.msra.mxu0 %v5096
    %5327 = vmatprep.subr.mxu0 %v5099
    %5328 = vmatpush1.msra.mxu0 %v5098
    %5329 = vmatprep.subr.mxu0 %v5101
    %5330 = vmatpush1.msra.mxu0 %v5100
    %5331 = vmatprep.subr.mxu0 %v5103
    %5332 = vmatpush1.msra.mxu0 %v5102
    %5333 = vmatprep.subr.mxu0 %v5105
    %5334 = vmatpush1.msra.mxu0 %v5104
    %5335 = vmatprep.subr.mxu0 %v5107
    %5336 = vmatpush1.msra.mxu0 %v5106
    %5337 = vmatprep.subr.mxu0 %v5109
    %5338 = vmatpush1.msra.mxu0 %v5108
    %5339 = vmatprep.subr.mxu0 %v5111
    %5340 = vmatpush1.msra.mxu0 %v5110
    %5341 = vmatprep.subr.mxu0 %v5113
    %5342 = vmatpush1.msra.mxu0 %v5112
    %5343 = vmatprep.subr.mxu0 %v5115
    %5344 = vmatpush1.msra.mxu0 %v5114
    %5345 = vmatprep.mubr.f32.mxu0 %v4915
    %5346 = vmatmul.mubr.f32.gmra.mrb[0].mxu0 %v4914
    %v5347 = vpop.f32.mrb[0].mxu0
    %v5348 = vadd.f32 %v5271, %v5347
    %v5349 = vpop.f32.mrb[0].mxu0
    %v5350 = vadd.f32 %v5273, %v5349
    %5351 = vmatprep.mubr.f32.mxu0 %v4922
    %5352 = vmatmul.mubr.f32.gmra.mrb[0].mxu0 %v4921
    %v5353 = vpop.f32.mrb[0].mxu0
    %v5354 = vadd.f32 %v5277, %v5353
    %v5355 = vpop.f32.mrb[0].mxu0
    %v5356 = vadd.f32 %v5279, %v5355
    %5357 = vdwg.mxu0
    %5358 = vmatprep.subr.mxu0 %v5117
    %5359 = vmatpush1.msra.mxu0 %v5116
    %5360 = vmatprep.subr.mxu0 %v5119
    %5361 = vmatpush1.msra.mxu0 %v5118
    %5362 = vmatprep.subr.mxu0 0.0
    %5363 = vmatpush1.msra.mxu0 0.0
    %5364 = vmatprep.subr.mxu0 0.0
    %5365 = vmatpush1.msra.mxu0 0.0
    %5366 = vmatprep.subr.mxu0 0.0
    %5367 = vmatpush1.msra.mxu0 0.0
    %5368 = vmatprep.subr.mxu0 0.0
    %5369 = vmatpush1.msra.mxu0 0.0
    %5370 = vmatprep.subr.mxu0 0.0
    %5371 = vmatpush1.msra.mxu0 0.0
    %5372 = vmatprep.subr.mxu0 0.0
    %5373 = vmatpush1.msra.mxu0 0.0
    %5374 = vmatprep.subr.mxu0 0.0
    %5375 = vmatpush1.msra.mxu0 0.0
    %5376 = vmatprep.subr.mxu0 0.0
    %5377 = vmatpush1.msra.mxu0 0.0
    %5378 = vmatprep.subr.mxu0 0.0
    %5379 = vmatpush1.msra.mxu0 0.0
    %5380 = vmatprep.subr.mxu0 0.0
    %5381 = vmatpush1.msra.mxu0 0.0
    %5382 = vmatprep.subr.mxu0 0.0
    %5383 = vmatpush1.msra.mxu0 0.0
    %5384 = vmatprep.subr.mxu0 0.0
    %5385 = vmatpush1.msra.mxu0 0.0
    %5386 = vmatprep.subr.mxu0 0.0
    %5387 = vmatpush1.msra.mxu0 0.0
    %5388 = vmatprep.subr.mxu0 0.0
    %5389 = vmatpush1.msra.mxu0 0.0
    %5390 = vmatprep.subr.mxu0 0.0
    %5391 = vmatpush1.msra.mxu0 0.0
    %5392 = vmatprep.subr.mxu0 0.0
    %5393 = vmatpush1.msra.mxu0 0.0
    %5394 = vmatprep.subr.mxu0 0.0
    %5395 = vmatpush1.msra.mxu0 0.0
    %5396 = vmatprep.subr.mxu0 0.0
    %5397 = vmatpush1.msra.mxu0 0.0
    %5398 = vmatprep.subr.mxu0 0.0
    %5399 = vmatpush1.msra.mxu0 0.0
    %5400 = vmatprep.subr.mxu0 0.0
    %5401 = vmatpush1.msra.mxu0 0.0
    %5402 = vmatprep.subr.mxu0 0.0
    %5403 = vmatpush1.msra.mxu0 0.0
    %5404 = vmatprep.subr.mxu0 0.0
    %5405 = vmatpush1.msra.mxu0 0.0
    %5406 = vmatprep.subr.mxu0 0.0
    %5407 = vmatpush1.msra.mxu0 0.0
    %5408 = vmatprep.subr.mxu0 0.0
    %5409 = vmatpush1.msra.mxu0 0.0
    %5410 = vmatprep.subr.mxu0 0.0
    %5411 = vmatpush1.msra.mxu0 0.0
    %5412 = vmatprep.subr.mxu0 0.0
    %5413 = vmatpush1.msra.mxu0 0.0
    %5414 = vmatprep.subr.mxu0 0.0
    %5415 = vmatpush1.msra.mxu0 0.0
    %5416 = vmatprep.subr.mxu0 0.0
    %5417 = vmatpush1.msra.mxu0 0.0
    %5418 = vmatprep.subr.mxu0 0.0
    %5419 = vmatpush1.msra.mxu0 0.0
    %5420 = vmatprep.subr.mxu0 0.0
    %5421 = vmatpush1.msra.mxu0 0.0
    %5422 = vmatprep.mubr.f32.mxu0 0.0
    %5423 = vmatmul.mubr.f32.gmra.mrb[0].mxu0 %v5122
    %v5424 = vpop.f32.mrb[0].mxu0
    %v5425 = vadd.f32 %v5348, %v5424
    %v5426 = vpop.f32.mrb[0].mxu0
    %v5427 = vadd.f32 %v5350, %v5426
    %5428 = vmatprep.mubr.f32.mxu0 0.0
    %5429 = vmatmul.mubr.f32.gmra.mrb[0].mxu0 %v5125
    %v5430 = vpop.f32.mrb[0].mxu0
    %v5431 = vadd.f32 %v5354, %v5430
    %v5432 = vpop.f32.mrb[0].mxu0
    %v5433 = vadd.f32 %v5356, %v5432
    %5434 = vdwg.mxu0
    %5439 = vrot.lane.b32.xlu0 %v5425, 15
    %v5440 = vpop.permute.xlu0 %5439
    %5441 = vrot.lane.b32.xlu0 %v5427, 15
    %v5442 = vpop.permute.xlu0 %5441
    %5443 = vrot.lane.b32.xlu0 %v5431, 15
    %v5444 = vpop.permute.xlu0 %5443
    %5445 = vrot.lane.b32.xlu0 %v5433, 15
    %v5446 = vpop.permute.xlu0 %5445
    %v5447 = vsel %vm2045, %v5440, %v5442
    %v5448 = vsel %vm2045, %v5444, %v5446
    %v5453 = vsel %vm2045, 0.0, %v5440
    %v5454 = vsel %vm2045, 0.0, %v5444
    %v5455 = vld [vmem:[%s6] ss:$8 sm:$0x3]
    %v5457 = vlaneseq
    %v5458 = vshrl.u32 %v5457, 7
    %v5459 = vsub.s32 0, %v5458
    %v5460 = vrot.slane %v5455, %v5459
    %v5461 = vlaneseq
    %v5462 = vshrl.u32 %v5461, 7
    %v5463 = vsub.s32 1, %v5462
    %v5464 = vrot.slane %v5455, %v5463
    %v5467 = vmul.f32 %v5453, %v5460
    %v5468 = vmul.f32 %v5447, %v5464
    %v5469 = vmul.f32 %v5454, %v5460
    %v5470 = vmul.f32 %v5448, %v5464
    %5471 = vst [vmem:[#allocation5] sm:$0xff] %v5467
    %5472 = vst.msk [vmem:[#allocation5 + $0x8] sm:$0xff] %vm4508, %v5468
    %5473 = vst [vmem:[#allocation5 + $0x10] sm:$0xff] %v5469
    %5474 = vst.msk [vmem:[#allocation5 + $0x18] sm:$0xff] %vm4508, %v5470
    %5475 = vrot.lane.b32.xlu0 %v5425, 14
    %v5476 = vpop.permute.xlu0 %5475
    %5477 = vrot.lane.b32.xlu0 %v5427, 14
    %v5478 = vpop.permute.xlu0 %5477
    %5479 = vrot.lane.b32.xlu0 %v5431, 14
    %v5480 = vpop.permute.xlu0 %5479
    %5481 = vrot.lane.b32.xlu0 %v5433, 14
    %v5482 = vpop.permute.xlu0 %5481
    %vm5483 = vcmask 113664
    %v5484 = vsel %vm5483, %v5476, %v5478
    %v5485 = vsel %vm5483, %v5480, %v5482
    %v5490 = vsel %vm5483, 0.0, %v5476
    %v5491 = vsel %vm5483, 0.0, %v5480
    %5492 = vst [vmem:[#allocation5 + $0x20] sm:$0xff] %v5490
    %5493 = vst.msk [vmem:[#allocation5 + $0x28] sm:$0xff] %vm4508, %v5484
    %5494 = vst [vmem:[#allocation5 + $0x30] sm:$0xff] %v5491
    %5495 = vst.msk [vmem:[#allocation5 + $0x38] sm:$0xff] %vm4508, %v5485
    %5496 = vrot.lane.b32.xlu0 %v5425, 13
    %v5497 = vpop.permute.xlu0 %5496
    %5498 = vrot.lane.b32.xlu0 %v5427, 13
    %v5499 = vpop.permute.xlu0 %5498
    %5500 = vrot.lane.b32.xlu0 %v5431, 13
    %v5501 = vpop.permute.xlu0 %5500
    %5502 = vrot.lane.b32.xlu0 %v5433, 13
    %v5503 = vpop.permute.xlu0 %5502
    %vm5504 = vcmask 105472
    %v5505 = vsel %vm5504, %v5497, %v5499
    %v5506 = vsel %vm5504, %v5501, %v5503
    %v5511 = vsel %vm5504, 0.0, %v5497
    %v5512 = vsel %vm5504, 0.0, %v5501
    %s5513 = scalar_lea.vmem %s6, 2
    %v5514 = vld [vmem:[%s5513] ss:$8 sm:$0x3]
    %v5516 = vlaneseq
    %v5517 = vshrl.u32 %v5516, 7
    %v5518 = vsub.s32 0, %v5517
    %v5519 = vrot.slane %v5514, %v5518
    %v5520 = vlaneseq
    %v5521 = vshrl.u32 %v5520, 7
    %v5522 = vsub.s32 1, %v5521
    %v5523 = vrot.slane %v5514, %v5522
    %v5526 = vmul.f32 %v5511, %v5519
    %v5527 = vmul.f32 %v5505, %v5523
    %v5528 = vmul.f32 %v5512, %v5519
    %v5529 = vmul.f32 %v5506, %v5523
    %5530 = vst [vmem:[#allocation5 + $0x40] sm:$0xff] %v5526
    %5531 = vst.msk [vmem:[#allocation5 + $0x48] sm:$0xff] %vm4508, %v5527
    %5532 = vst [vmem:[#allocation5 + $0x50] sm:$0xff] %v5528
    %5533 = vst.msk [vmem:[#allocation5 + $0x58] sm:$0xff] %vm4508, %v5529
    %5534 = vrot.lane.b32.xlu0 %v5425, 1
    %v5535 = vpop.permute.xlu0 %5534
    %5536 = vrot.lane.b32.xlu0 %v5427, 1
    %v5537 = vpop.permute.xlu0 %5536
    %5538 = vrot.lane.b32.xlu0 %v5431, 1
    %v5539 = vpop.permute.xlu0 %5538
    %5540 = vrot.lane.b32.xlu0 %v5433, 1
    %v5541 = vpop.permute.xlu0 %5540
    %v5542 = vsel %vm1264, %v5535, %v5537
    %v5543 = vsel %vm1264, %v5539, %v5541
    %v5548 = vsel %vm1264, 0.0, %v5535
    %v5549 = vsel %vm1264, 0.0, %v5539
    %s5550 = scalar_lea.vmem %s6, 3
    %v5551 = vld [vmem:[%s5550] ss:$8 sm:$0x3]
    %v5553 = vlaneseq
    %v5554 = vshrl.u32 %v5553, 7
    %v5555 = vsub.s32 0, %v5554
    %v5556 = vrot.slane %v5551, %v5555
    %v5557 = vlaneseq
    %v5558 = vshrl.u32 %v5557, 7
    %v5559 = vsub.s32 1, %v5558
    %v5560 = vrot.slane %v5551, %v5559
    %v5563 = vmul.f32 %v5548, %v5556
    %v5564 = vmul.f32 %v5542, %v5560
    %v5565 = vmul.f32 %v5549, %v5556
    %v5566 = vmul.f32 %v5543, %v5560
    %5567 = vst [vmem:[#allocation5 + $0x60] sm:$0xff] %v5563
    %5568 = vst.msk [vmem:[#allocation5 + $0x68] sm:$0xff] %vm4508, %v5564
    %5569 = vst [vmem:[#allocation5 + $0x70] sm:$0xff] %v5565
    %5570 = vst.msk [vmem:[#allocation5 + $0x78] sm:$0xff] %vm4508, %v5566
    %5571 = vst [vmem:[#allocation5 + $0x80] sm:$0xff] %v5425
    %5572 = vst.msk [vmem:[#allocation5 + $0x88] sm:$0xff] %vm4508, %v5427
    %5573 = vst [vmem:[#allocation5 + $0x90] sm:$0xff] %v5431
    %5574 = vst.msk [vmem:[#allocation5 + $0x98] sm:$0xff] %vm4508, %v5433
    %5575 = vrot.lane.b32.xlu0 %v5425, 127
    %v5576 = vpop.permute.xlu0 %5575
    %5577 = vrot.lane.b32.xlu0 %v5427, 127
    %v5578 = vpop.permute.xlu0 %5577
    %5579 = vrot.lane.b32.xlu0 %v5431, 127
    %v5580 = vpop.permute.xlu0 %5579
    %5581 = vrot.lane.b32.xlu0 %v5433, 127
    %v5582 = vpop.permute.xlu0 %5581
    %v5583 = vsel %vm2031, %v5576, %v5578
    %v5584 = vsel %vm2031, %v5580, %v5582
    %vm5589 = vcmask 547840
    %v5590 = vsel %vm5589, %v5578, 0.0
    %v5591 = vsel %vm5589, %v5582, 0.0
    %s5592 = scalar_lea.vmem %s6, 5
    %v5593 = vld [vmem:[%s5592] ss:$8 sm:$0x3]
    %v5595 = vlaneseq
    %v5596 = vshrl.u32 %v5595, 7
    %v5597 = vsub.s32 0, %v5596
    %v5598 = vrot.slane %v5593, %v5597
    %v5599 = vlaneseq
    %v5600 = vshrl.u32 %v5599, 7
    %v5601 = vsub.s32 1, %v5600
    %v5602 = vrot.slane %v5593, %v5601
    %v5605 = vmul.f32 %v5583, %v5598
    %v5606 = vmul.f32 %v5590, %v5602
    %v5607 = vmul.f32 %v5584, %v5598
    %v5608 = vmul.f32 %v5591, %v5602
    %5609 = vst [vmem:[#allocation5 + $0xa0] sm:$0xff] %v5605
    %5610 = vst.msk [vmem:[#allocation5 + $0xa8] sm:$0xff] %vm4508, %v5606
    %5611 = vst [vmem:[#allocation5 + $0xb0] sm:$0xff] %v5607
    %5612 = vst.msk [vmem:[#allocation5 + $0xb8] sm:$0xff] %vm4508, %v5608
    %5613 = vrot.lane.b32.xlu0 %v5425, 115
    %v5614 = vpop.permute.xlu0 %5613
    %5615 = vrot.lane.b32.xlu0 %v5427, 115
    %v5616 = vpop.permute.xlu0 %5615
    %5617 = vrot.lane.b32.xlu0 %v5431, 115
    %v5618 = vpop.permute.xlu0 %5617
    %5619 = vrot.lane.b32.xlu0 %v5433, 115
    %v5620 = vpop.permute.xlu0 %5619
    %v5621 = vsel %vm3263, %v5614, %v5616
    %v5622 = vsel %vm3263, %v5618, %v5620
    %vm5627 = vcmask 449536
    %v5628 = vsel %vm5627, %v5616, 0.0
    %v5629 = vsel %vm5627, %v5620, 0.0
    %s5630 = scalar_lea.vmem %s6, 6
    %v5631 = vld [vmem:[%s5630] ss:$8 sm:$0x3]
    %v5633 = vlaneseq
    %v5634 = vshrl.u32 %v5633, 7
    %v5635 = vsub.s32 0, %v5634
    %v5636 = vrot.slane %v5631, %v5635
    %v5637 = vlaneseq
    %v5638 = vshrl.u32 %v5637, 7
    %v5639 = vsub.s32 1, %v5638
    %v5640 = vrot.slane %v5631, %v5639
    %v5643 = vmul.f32 %v5621, %v5636
    %v5644 = vmul.f32 %v5628, %v5640
    %v5645 = vmul.f32 %v5622, %v5636
    %v5646 = vmul.f32 %v5629, %v5640
    %5647 = vst [vmem:[#allocation5 + $0xc0] sm:$0xff] %v5643
    %5648 = vst.msk [vmem:[#allocation5 + $0xc8] sm:$0xff] %vm4508, %v5644
    %5649 = vst [vmem:[#allocation5 + $0xd0] sm:$0xff] %v5645
    %5650 = vst.msk [vmem:[#allocation5 + $0xd8] sm:$0xff] %vm4508, %v5646
    %5651 = vrot.lane.b32.xlu0 %v5425, 114
    %v5652 = vpop.permute.xlu0 %5651
    %5653 = vrot.lane.b32.xlu0 %v5427, 114
    %v5654 = vpop.permute.xlu0 %5653
    %5655 = vrot.lane.b32.xlu0 %v5431, 114
    %v5656 = vpop.permute.xlu0 %5655
    %5657 = vrot.lane.b32.xlu0 %v5433, 114
    %v5658 = vpop.permute.xlu0 %5657
    %vm5659 = vcmask 932864
    %v5660 = vsel %vm5659, %v5652, %v5654
    %v5661 = vsel %vm5659, %v5656, %v5658
    %vm5666 = vcmask 441344
    %v5667 = vsel %vm5666, %v5654, 0.0
    %v5668 = vsel %vm5666, %v5658, 0.0
    %5669 = vst [vmem:[#allocation5 + $0xe0] sm:$0xff] %v5660
    %5670 = vst.msk [vmem:[#allocation5 + $0xe8] sm:$0xff] %vm4508, %v5667
    %5671 = vst [vmem:[#allocation5 + $0xf0] sm:$0xff] %v5661
    %5672 = vst.msk [vmem:[#allocation5 + $0xf8] sm:$0xff] %vm4508, %v5668
    %5673 = vrot.lane.b32.xlu0 %v5425, 113
    %v5674 = vpop.permute.xlu0 %5673
    %5675 = vrot.lane.b32.xlu0 %v5427, 113
    %v5676 = vpop.permute.xlu0 %5675
    %5677 = vrot.lane.b32.xlu0 %v5431, 113
    %v5678 = vpop.permute.xlu0 %5677
    %5679 = vrot.lane.b32.xlu0 %v5433, 113
    %v5680 = vpop.permute.xlu0 %5679
    %vm5681 = vcmask 924672
    %v5682 = vsel %vm5681, %v5674, %v5676
    %v5683 = vsel %vm5681, %v5678, %v5680
    %vm5688 = vcmask 433152
    %v5689 = vsel %vm5688, %v5676, 0.0
    %v5690 = vsel %vm5688, %v5680, 0.0
    %s5691 = scalar_lea.vmem %s6, 16
    %v5692 = vld [vmem:[%s5691] ss:$8 sm:$0x3]
    %v5694 = vlaneseq
    %v5695 = vshrl.u32 %v5694, 7
    %v5696 = vsub.s32 0, %v5695
    %v5697 = vrot.slane %v5692, %v5696
    %v5698 = vlaneseq
    %v5699 = vshrl.u32 %v5698, 7
    %v5700 = vsub.s32 1, %v5699
    %v5701 = vrot.slane %v5692, %v5700
    %v5704 = vmul.f32 %v5682, %v5697
    %v5705 = vmul.f32 %v5689, %v5701
    %v5706 = vmul.f32 %v5683, %v5697
    %v5707 = vmul.f32 %v5690, %v5701
    %5708 = vst [vmem:[#allocation5 + $0x100] sm:$0xff] %v5704
    %5709 = vst.msk [vmem:[#allocation5 + $0x108] sm:$0xff] %vm4508, %v5705
    %5710 = vst [vmem:[#allocation5 + $0x110] sm:$0xff] %v5706
    %5711 = vst.msk [vmem:[#allocation5 + $0x118] sm:$0xff] %vm4508, %v5707
    %v5712 = vld [vmem:[%s4] sm:$0xff]
    %v5713 = vld [vmem:[%s4 + $0x8] sm:$0xff]
    %v5714 = vld [vmem:[%s4 + $0x10] sm:$0xff]
    %v5715 = vld [vmem:[%s4 + $0x18] sm:$0xff]
    %v5716 = vld [vmem:[%s4 + $0x20] sm:$0xff]
    %v5717 = vld [vmem:[%s4 + $0x28] sm:$0xff]
    %v5718 = vld [vmem:[%s4 + $0x30] sm:$0xff]
    %v5719 = vld [vmem:[%s4 + $0x38] sm:$0xff]
    %v5720 = vld [vmem:[#allocation5] sm:$0xff]
    %v5721 = vld [vmem:[#allocation5 + $0x8] sm:$0xff]
    %v5722 = vld [vmem:[#allocation5 + $0x10] sm:$0xff]
    %v5723 = vld [vmem:[#allocation5 + $0x18] sm:$0xff]
    %v5724 = vld [vmem:[#allocation5 + $0x20] sm:$0xff]
    %v5725 = vld [vmem:[#allocation5 + $0x28] sm:$0xff]
    %v5726 = vld [vmem:[#allocation5 + $0x30] sm:$0xff]
    %v5727 = vld [vmem:[#allocation5 + $0x38] sm:$0xff]
    %v5728 = vld [vmem:[#allocation5 + $0x40] sm:$0xff]
    %v5729 = vld [vmem:[#allocation5 + $0x48] sm:$0xff]
    %v5730 = vld [vmem:[#allocation5 + $0x50] sm:$0xff]
    %v5731 = vld [vmem:[#allocation5 + $0x58] sm:$0xff]
    %v5732 = vld [vmem:[#allocation5 + $0x60] sm:$0xff]
    %v5733 = vld [vmem:[#allocation5 + $0x68] sm:$0xff]
    %v5734 = vld [vmem:[#allocation5 + $0x70] sm:$0xff]
    %v5735 = vld [vmem:[#allocation5 + $0x78] sm:$0xff]
    %v5736 = vld [vmem:[#allocation5 + $0x80] sm:$0xff]
    %v5737 = vld [vmem:[#allocation5 + $0x88] sm:$0xff]
    %v5738 = vld [vmem:[#allocation5 + $0x90] sm:$0xff]
    %v5739 = vld [vmem:[#allocation5 + $0x98] sm:$0xff]
    %v5740 = vld [vmem:[#allocation5 + $0xa0] sm:$0xff]
    %v5741 = vld [vmem:[#allocation5 + $0xa8] sm:$0xff]
    %v5742 = vld [vmem:[#allocation5 + $0xb0] sm:$0xff]
    %v5743 = vld [vmem:[#allocation5 + $0xb8] sm:$0xff]
    %v5744 = vld [vmem:[#allocation5 + $0xc0] sm:$0xff]
    %v5745 = vld [vmem:[#allocation5 + $0xc8] sm:$0xff]
    %v5746 = vld [vmem:[#allocation5 + $0xd0] sm:$0xff]
    %v5747 = vld [vmem:[#allocation5 + $0xd8] sm:$0xff]
    %v5748 = vld [vmem:[#allocation5 + $0xe0] sm:$0xff]
    %v5749 = vld [vmem:[#allocation5 + $0xe8] sm:$0xff]
    %v5750 = vld [vmem:[#allocation5 + $0xf0] sm:$0xff]
    %v5751 = vld [vmem:[#allocation5 + $0xf8] sm:$0xff]
    %v5752 = vld [vmem:[#allocation5 + $0x100] sm:$0xff]
    %v5753 = vld [vmem:[#allocation5 + $0x108] sm:$0xff]
    %v5754 = vld [vmem:[#allocation5 + $0x110] sm:$0xff]
    %v5755 = vld [vmem:[#allocation5 + $0x118] sm:$0xff]
    %v5756 = vld [vmem:[%s5] sm:$0xff]
    %v5757 = vld [vmem:[%s5 + $0x8] sm:$0xff]
    %v5758 = vld [vmem:[%s5 + $0x10] sm:$0xff]
    %v5759 = vld [vmem:[%s5 + $0x18] sm:$0xff]
    %5761 = vset.pattern.permute.xlu0 0
    %5762 = vperm.xlu0 %5761, %v5756
    %v5763 = vpop.permute.xlu0 %5762
    %5766 = vset.pattern.permute.xlu0 0
    %5767 = vperm.xlu0 %5766, %v5757
    %v5768 = vpop.permute.xlu0 %5767
    %5771 = vset.pattern.permute.xlu0 0
    %5772 = vperm.xlu0 %5771, %v5758
    %v5773 = vpop.permute.xlu0 %5772
    %5776 = vset.pattern.permute.xlu0 0
    %5777 = vperm.xlu0 %5776, %v5759
    %v5778 = vpop.permute.xlu0 %5777
    %v5781 = vsel %vm5120, %v5713, 0
    %v5784 = vsel %vm5120, %v5715, 0
    %v5787 = vsel %vm5120, %v5717, 0
    %v5790 = vsel %vm5120, %v5719, 0
    %5792 = vmatprep.subr.mxu0 %v5721
    %5793 = vmatpush1.msra.mxu0 %v5720
    %5794 = vmatprep.subr.mxu0 %v5723
    %5795 = vmatpush1.msra.mxu0 %v5722
    %5796 = vmatprep.subr.mxu0 %v5725
    %5797 = vmatpush1.msra.mxu0 %v5724
    %5798 = vmatprep.subr.mxu0 %v5727
    %5799 = vmatpush1.msra.mxu0 %v5726
    %5800 = vmatprep.subr.mxu0 %v5729
    %5801 = vmatpush1.msra.mxu0 %v5728
    %5802 = vmatprep.subr.mxu0 %v5731
    %5803 = vmatpush1.msra.mxu0 %v5730
    %5804 = vmatprep.subr.mxu0 %v5733
    %5805 = vmatpush1.msra.mxu0 %v5732
    %5806 = vmatprep.subr.mxu0 %v5735
    %5807 = vmatpush1.msra.mxu0 %v5734
    %5808 = vmatprep.subr.mxu0 %v5737
    %5809 = vmatpush1.msra.mxu0 %v5736
    %5810 = vmatprep.subr.mxu0 %v5739
    %5811 = vmatpush1.msra.mxu0 %v5738
    %5812 = vmatprep.subr.mxu0 %v5741
    %5813 = vmatpush1.msra.mxu0 %v5740
    %5814 = vmatprep.subr.mxu0 %v5743
    %5815 = vmatpush1.msra.mxu0 %v5742
    %5816 = vmatprep.subr.mxu0 %v5745
    %5817 = vmatpush1.msra.mxu0 %v5744
    %5818 = vmatprep.subr.mxu0 %v5747
    %5819 = vmatpush1.msra.mxu0 %v5746
    %5820 = vmatprep.subr.mxu0 %v5749
    %5821 = vmatpush1.msra.mxu0 %v5748
    %5822 = vmatprep.subr.mxu0 %v5751
    %5823 = vmatpush1.msra.mxu0 %v5750
    %5824 = vmatprep.subr.mxu0 %v5753
    %5825 = vmatpush1.msra.mxu0 %v5752
    %5826 = vmatprep.subr.mxu0 %v5755
    %5827 = vmatpush1.msra.mxu0 %v5754
    %5828 = vmatprep.subr.mxu0 0.0
    %5829 = vmatpush1.msra.mxu0 0.0
    %5830 = vmatprep.subr.mxu0 0.0
    %5831 = vmatpush1.msra.mxu0 0.0
    %5832 = vmatprep.subr.mxu0 0.0
    %5833 = vmatpush1.msra.mxu0 0.0
    %5834 = vmatprep.subr.mxu0 0.0
    %5835 = vmatpush1.msra.mxu0 0.0
    %5836 = vmatprep.subr.mxu0 0.0
    %5837 = vmatpush1.msra.mxu0 0.0
    %5838 = vmatprep.subr.mxu0 0.0
    %5839 = vmatpush1.msra.mxu0 0.0
    %5840 = vmatprep.subr.mxu0 0.0
    %5841 = vmatpush1.msra.mxu0 0.0
    %5842 = vmatprep.subr.mxu0 0.0
    %5843 = vmatpush1.msra.mxu0 0.0
    %5844 = vmatprep.subr.mxu0 0.0
    %5845 = vmatpush1.msra.mxu0 0.0
    %5846 = vmatprep.subr.mxu0 0.0
    %5847 = vmatpush1.msra.mxu0 0.0
    %5848 = vmatprep.subr.mxu0 0.0
    %5849 = vmatpush1.msra.mxu0 0.0
    %5850 = vmatprep.subr.mxu0 0.0
    %5851 = vmatpush1.msra.mxu0 0.0
    %5852 = vmatprep.subr.mxu0 0.0
    %5853 = vmatpush1.msra.mxu0 0.0
    %5854 = vmatprep.subr.mxu0 0.0
    %5855 = vmatpush1.msra.mxu0 0.0
    %5856 = vmatprep.mubr.f32.mxu0 %v5781
    %5857 = vmatmul.mubr.f32.gmra.mrb[0].mxu0 %v5712
    %v5858 = vpop.f32.mrb[0].mxu0
    %v5859 = vadd.f32 %v5763, %v5858
    %v5860 = vpop.f32.mrb[0].mxu0
    %v5861 = vadd.f32 %v5763, %v5860
    %5862 = vmatprep.mubr.f32.mxu0 %v5784
    %5863 = vmatmul.mubr.f32.gmra.mrb[0].mxu0 %v5714
    %v5864 = vpop.f32.mrb[0].mxu0
    %v5865 = vadd.f32 %v5768, %v5864
    %v5866 = vpop.f32.mrb[0].mxu0
    %v5867 = vadd.f32 %v5768, %v5866
    %5868 = vmatprep.mubr.f32.mxu0 %v5787
    %5869 = vmatmul.mubr.f32.gmra.mrb[0].mxu0 %v5716
    %v5870 = vpop.f32.mrb[0].mxu0
    %v5871 = vadd.f32 %v5773, %v5870
    %v5872 = vpop.f32.mrb[0].mxu0
    %v5873 = vadd.f32 %v5773, %v5872
    %5874 = vmatprep.mubr.f32.mxu0 %v5790
    %5875 = vmatmul.mubr.f32.gmra.mrb[0].mxu0 %v5718
    %v5876 = vpop.f32.mrb[0].mxu0
    %v5877 = vadd.f32 %v5778, %v5876
    %v5878 = vpop.f32.mrb[0].mxu0
    %v5879 = vadd.f32 %v5778, %v5878
    %5880 = vdwg.mxu0
    %v5881 = vmax.f32 %v5859, 0.0
    %v5882 = vmax.f32 %v5861, 0.0
    %v5883 = vmax.f32 %v5865, 0.0
    %v5884 = vmax.f32 %v5867, 0.0
    %v5885 = vmax.f32 %v5871, 0.0
    %v5886 = vmax.f32 %v5873, 0.0
    %v5887 = vmax.f32 %v5877, 0.0
    %v5888 = vmax.f32 %v5879, 0.0
    %v5889 = vmul.f32 %v3903, 0.14285715
    %v5890 = vfloor.f32 %v5889
    %v5891 = vmul.f32 %v5890, 7.0
    %v5892 = vsub.f32 %v3901, %v5891
    %v5893 = vmul.f32 %v5890, 28.0
    %v5894 = vmul.f32 %v5892, 2.0
    %v5895 = vadd.f32 %v5893, %v5894
    %vm5896 = vcmp.eq.f32.partialorder %v3800, %v5895
    %vm5897 = vcmp.eq.f32.partialorder %v3801, %v5895
    %vm5898 = vcmp.eq.f32.partialorder %v3802, %v5895
    %vm5899 = vcmp.eq.f32.partialorder %v3803, %v5895
    %vm5900 = vcmp.eq.f32.partialorder %v3804, %v5895
    %vm5901 = vcmp.eq.f32.partialorder %v3805, %v5895
    %vm5902 = vcmp.eq.f32.partialorder %v3806, %v5895
    %vm5903 = vcmp.eq.f32.partialorder %v3807, %v5895
    %vm5904 = vcmp.eq.f32.partialorder %v3808, %v5895
    %vm5905 = vcmp.eq.f32.partialorder %v3809, %v5895
    %vm5906 = vcmp.eq.f32.partialorder %v3810, %v5895
    %vm5907 = vcmp.eq.f32.partialorder %v3811, %v5895
    %vm5908 = vcmp.eq.f32.partialorder %v3812, %v5895
    %vm5909 = vcmp.eq.f32.partialorder %v3813, %v5895
    %vm5910 = vcmp.eq.f32.partialorder %v3814, %v5895
    %vm5911 = vcmp.eq.f32.partialorder %v3815, %v5895
    %vm5912 = vcmp.eq.f32.partialorder %v3816, %v5895
    %vm5913 = vcmp.eq.f32.partialorder %v3817, %v5895
    %vm5914 = vcmp.eq.f32.partialorder %v3818, %v5895
    %vm5915 = vcmp.eq.f32.partialorder %v3819, %v5895
    %vm5916 = vcmp.eq.f32.partialorder %v3820, %v5895
    %vm5917 = vcmp.eq.f32.partialorder %v3821, %v5895
    %vm5918 = vcmp.eq.f32.partialorder %v3822, %v5895
    %vm5919 = vcmp.eq.f32.partialorder %v3823, %v5895
    %vm5920 = vcmp.eq.f32.partialorder %v3824, %v5895
    %v5921 = vsel %vm5896, 1, 0
    %v5922 = vsel %vm5897, 1, 0
    %v5923 = vsel %vm5898, 1, 0
    %v5924 = vsel %vm5899, 1, 0
    %v5925 = vsel %vm5900, 1, 0
    %v5926 = vsel %vm5901, 1, 0
    %v5927 = vsel %vm5902, 1, 0
    %v5928 = vsel %vm5903, 1, 0
    %v5929 = vsel %vm5904, 1, 0
    %v5930 = vsel %vm5905, 1, 0
    %v5931 = vsel %vm5906, 1, 0
    %v5932 = vsel %vm5907, 1, 0
    %v5933 = vsel %vm5908, 1, 0
    %v5934 = vsel %vm5909, 1, 0
    %v5935 = vsel %vm5910, 1, 0
    %v5936 = vsel %vm5911, 1, 0
    %v5937 = vsel %vm5912, 1, 0
    %v5938 = vsel %vm5913, 1, 0
    %v5939 = vsel %vm5914, 1, 0
    %v5940 = vsel %vm5915, 1, 0
    %v5941 = vsel %vm5916, 1, 0
    %v5942 = vsel %vm5917, 1, 0
    %v5943 = vsel %vm5918, 1, 0
    %v5944 = vsel %vm5919, 1, 0
    %v5945 = vsel %vm5920, 1, 0
    %v5946 = vcvt.s32.f32 %v5921
    %v5947 = vcvt.s32.f32 %v5922
    %v5948 = vcvt.s32.f32 %v5923
    %v5949 = vcvt.s32.f32 %v5924
    %v5950 = vcvt.s32.f32 %v5925
    %v5951 = vcvt.s32.f32 %v5926
    %v5952 = vcvt.s32.f32 %v5927
    %v5953 = vcvt.s32.f32 %v5928
    %v5954 = vcvt.s32.f32 %v5929
    %v5955 = vcvt.s32.f32 %v5930
    %v5956 = vcvt.s32.f32 %v5931
    %v5957 = vcvt.s32.f32 %v5932
    %v5958 = vcvt.s32.f32 %v5933
    %v5959 = vcvt.s32.f32 %v5934
    %v5960 = vcvt.s32.f32 %v5935
    %v5961 = vcvt.s32.f32 %v5936
    %v5962 = vcvt.s32.f32 %v5937
    %v5963 = vcvt.s32.f32 %v5938
    %v5964 = vcvt.s32.f32 %v5939
    %v5965 = vcvt.s32.f32 %v5940
    %v5966 = vcvt.s32.f32 %v5941
    %v5967 = vcvt.s32.f32 %v5942
    %v5968 = vcvt.s32.f32 %v5943
    %v5969 = vcvt.s32.f32 %v5944
    %v5970 = vcvt.s32.f32 %v5945
    %vm5971 = vcmask 400384
    %5972 = vst.msk [vmem:[#allocation3] sm:$0xff] %vm5971, %v5946
    %5973 = vst.msk [vmem:[#allocation3 + $0x8] sm:$0xff] %vm5971, %v5947
    %5974 = vst.msk [vmem:[#allocation3 + $0x10] sm:$0xff] %vm5971, %v5948
    %5975 = vst.msk [vmem:[#allocation3 + $0x18] sm:$0xff] %vm5971, %v5949
    %5976 = vst.msk [vmem:[#allocation3 + $0x20] sm:$0xff] %vm5971, %v5950
    %5977 = vst.msk [vmem:[#allocation3 + $0x28] sm:$0xff] %vm5971, %v5951
    %5978 = vst.msk [vmem:[#allocation3 + $0x30] sm:$0xff] %vm5971, %v5952
    %5979 = vst.msk [vmem:[#allocation3 + $0x38] sm:$0xff] %vm5971, %v5953
    %5980 = vst.msk [vmem:[#allocation3 + $0x40] sm:$0xff] %vm5971, %v5954
    %5981 = vst.msk [vmem:[#allocation3 + $0x48] sm:$0xff] %vm5971, %v5955
    %5982 = vst.msk [vmem:[#allocation3 + $0x50] sm:$0xff] %vm5971, %v5956
    %5983 = vst.msk [vmem:[#allocation3 + $0x58] sm:$0xff] %vm5971, %v5957
    %5984 = vst.msk [vmem:[#allocation3 + $0x60] sm:$0xff] %vm5971, %v5958
    %5985 = vst.msk [vmem:[#allocation3 + $0x68] sm:$0xff] %vm5971, %v5959
    %5986 = vst.msk [vmem:[#allocation3 + $0x70] sm:$0xff] %vm5971, %v5960
    %5987 = vst.msk [vmem:[#allocation3 + $0x78] sm:$0xff] %vm5971, %v5961
    %5988 = vst.msk [vmem:[#allocation3 + $0x80] sm:$0xff] %vm5971, %v5962
    %5989 = vst.msk [vmem:[#allocation3 + $0x88] sm:$0xff] %vm5971, %v5963
    %5990 = vst.msk [vmem:[#allocation3 + $0x90] sm:$0xff] %vm5971, %v5964
    %5991 = vst.msk [vmem:[#allocation3 + $0x98] sm:$0xff] %vm5971, %v5965
    %5992 = vst.msk [vmem:[#allocation3 + $0xa0] sm:$0xff] %vm5971, %v5966
    %5993 = vst.msk [vmem:[#allocation3 + $0xa8] sm:$0xff] %vm5971, %v5967
    %5994 = vst.msk [vmem:[#allocation3 + $0xb0] sm:$0xff] %vm5971, %v5968
    %5995 = vst.msk [vmem:[#allocation3 + $0xb8] sm:$0xff] %vm5971, %v5969
    %vm5996 = vcmask 396288
    %5997 = vst.msk [vmem:[#allocation3 + $0xc0] sm:$0xf] %vm5996, %v5970
    %6006 = vrot.lane.b32.xlu0 %v5881, 127
    %v6007 = vpop.permute.xlu0 %6006
    %6008 = vrot.lane.b32.xlu0 %v5882, 127
    %v6009 = vpop.permute.xlu0 %6008
    %6010 = vrot.lane.b32.xlu0 %v5883, 127
    %v6011 = vpop.permute.xlu0 %6010
    %6012 = vrot.lane.b32.xlu0 %v5884, 127
    %v6013 = vpop.permute.xlu0 %6012
    %6014 = vrot.lane.b32.xlu0 %v5885, 127
    %v6015 = vpop.permute.xlu0 %6014
    %6016 = vrot.lane.b32.xlu0 %v5886, 127
    %v6017 = vpop.permute.xlu0 %6016
    %6018 = vrot.lane.b32.xlu0 %v5887, 127
    %v6019 = vpop.permute.xlu0 %6018
    %6020 = vrot.lane.b32.xlu0 %v5888, 127
    %v6021 = vpop.permute.xlu0 %6020
    %v6022 = vsel %vm2031, %v6007, %v6009
    %v6023 = vsel %vm2031, %v6011, %v6013
    %v6024 = vsel %vm2031, %v6015, %v6017
    %v6025 = vsel %vm2031, %v6019, %v6021
    %v6034 = vsel %vm5589, %v6009, 0.0
    %v6035 = vsel %vm5589, %v6013, 0.0
    %v6036 = vsel %vm5589, %v6017, 0.0
    %v6037 = vsel %vm5589, %v6021, 0.0
    %v6038 = vmax.f32 %v5881, %v6022
    %v6039 = vmax.f32 %v5882, %v6034
    %v6040 = vmax.f32 %v5883, %v6023
    %v6041 = vmax.f32 %v5884, %v6035
    %v6042 = vmax.f32 %v5885, %v6024
    %v6043 = vmax.f32 %v5886, %v6036
    %v6044 = vmax.f32 %v5887, %v6025
    %v6045 = vmax.f32 %v5888, %v6037
    %6046 = vrot.lane.b32.xlu0 %v5881, 114
    %v6047 = vpop.permute.xlu0 %6046
    %6048 = vrot.lane.b32.xlu0 %v5882, 114
    %v6049 = vpop.permute.xlu0 %6048
    %6050 = vrot.lane.b32.xlu0 %v5883, 114
    %v6051 = vpop.permute.xlu0 %6050
    %6052 = vrot.lane.b32.xlu0 %v5884, 114
    %v6053 = vpop.permute.xlu0 %6052
    %6054 = vrot.lane.b32.xlu0 %v5885, 114
    %v6055 = vpop.permute.xlu0 %6054
    %6056 = vrot.lane.b32.xlu0 %v5886, 114
    %v6057 = vpop.permute.xlu0 %6056
    %6058 = vrot.lane.b32.xlu0 %v5887, 114
    %v6059 = vpop.permute.xlu0 %6058
    %6060 = vrot.lane.b32.xlu0 %v5888, 114
    %v6061 = vpop.permute.xlu0 %6060
    %v6062 = vsel %vm5659, %v6047, %v6049
    %v6063 = vsel %vm5659, %v6051, %v6053
    %v6064 = vsel %vm5659, %v6055, %v6057
    %v6065 = vsel %vm5659, %v6059, %v6061
    %v6074 = vsel %vm5666, %v6049, 0.0
    %v6075 = vsel %vm5666, %v6053, 0.0
    %v6076 = vsel %vm5666, %v6057, 0.0
    %v6077 = vsel %vm5666, %v6061, 0.0
    %v6078 = vmax.f32 %v6038, %v6062
    %v6079 = vmax.f32 %v6039, %v6074
    %v6080 = vmax.f32 %v6040, %v6063
    %v6081 = vmax.f32 %v6041, %v6075
    %v6082 = vmax.f32 %v6042, %v6064
    %v6083 = vmax.f32 %v6043, %v6076
    %v6084 = vmax.f32 %v6044, %v6065
    %v6085 = vmax.f32 %v6045, %v6077
    %6086 = vrot.lane.b32.xlu0 %v5881, 113
    %v6087 = vpop.permute.xlu0 %6086
    %6088 = vrot.lane.b32.xlu0 %v5882, 113
    %v6089 = vpop.permute.xlu0 %6088
    %6090 = vrot.lane.b32.xlu0 %v5883, 113
    %v6091 = vpop.permute.xlu0 %6090
    %6092 = vrot.lane.b32.xlu0 %v5884, 113
    %v6093 = vpop.permute.xlu0 %6092
    %6094 = vrot.lane.b32.xlu0 %v5885, 113
    %v6095 = vpop.permute.xlu0 %6094
    %6096 = vrot.lane.b32.xlu0 %v5886, 113
    %v6097 = vpop.permute.xlu0 %6096
    %6098 = vrot.lane.b32.xlu0 %v5887, 113
    %v6099 = vpop.permute.xlu0 %6098
    %6100 = vrot.lane.b32.xlu0 %v5888, 113
    %v6101 = vpop.permute.xlu0 %6100
    %v6102 = vsel %vm5681, %v6087, %v6089
    %v6103 = vsel %vm5681, %v6091, %v6093
    %v6104 = vsel %vm5681, %v6095, %v6097
    %v6105 = vsel %vm5681, %v6099, %v6101
    %v6114 = vsel %vm5688, %v6089, 0.0
    %v6115 = vsel %vm5688, %v6093, 0.0
    %v6116 = vsel %vm5688, %v6097, 0.0
    %v6117 = vsel %vm5688, %v6101, 0.0
    %v6118 = vmax.f32 %v6078, %v6102
    %v6119 = vmax.f32 %v6079, %v6114
    %v6120 = vmax.f32 %v6080, %v6103
    %v6121 = vmax.f32 %v6081, %v6115
    %v6122 = vmax.f32 %v6082, %v6104
    %v6123 = vmax.f32 %v6083, %v6116
    %v6124 = vmax.f32 %v6084, %v6105
    %v6125 = vmax.f32 %v6085, %v6117
    %v6126 = vld [vmem:[#allocation3] sm:$0xff]
    %v6127 = vld [vmem:[#allocation3 + $0x8] sm:$0xff]
    %v6128 = vld [vmem:[#allocation3 + $0x10] sm:$0xff]
    %v6129 = vld [vmem:[#allocation3 + $0x18] sm:$0xff]
    %v6130 = vld [vmem:[#allocation3 + $0x20] sm:$0xff]
    %v6131 = vld [vmem:[#allocation3 + $0x28] sm:$0xff]
    %v6132 = vld [vmem:[#allocation3 + $0x30] sm:$0xff]
    %v6133 = vld [vmem:[#allocation3 + $0x38] sm:$0xff]
    %v6134 = vld [vmem:[#allocation3 + $0x40] sm:$0xff]
    %v6135 = vld [vmem:[#allocation3 + $0x48] sm:$0xff]
    %v6136 = vld [vmem:[#allocation3 + $0x50] sm:$0xff]
    %v6137 = vld [vmem:[#allocation3 + $0x58] sm:$0xff]
    %v6138 = vld [vmem:[#allocation3 + $0x60] sm:$0xff]
    %v6139 = vld [vmem:[#allocation3 + $0x68] sm:$0xff]
    %v6140 = vld [vmem:[#allocation3 + $0x70] sm:$0xff]
    %v6141 = vld [vmem:[#allocation3 + $0x78] sm:$0xff]
    %v6142 = vld [vmem:[#allocation3 + $0x80] sm:$0xff]
    %v6143 = vld [vmem:[#allocation3 + $0x88] sm:$0xff]
    %v6144 = vld [vmem:[#allocation3 + $0x90] sm:$0xff]
    %v6145 = vld [vmem:[#allocation3 + $0x98] sm:$0xff]
    %v6146 = vld [vmem:[#allocation3 + $0xa0] sm:$0xff]
    %v6147 = vld [vmem:[#allocation3 + $0xa8] sm:$0xff]
    %v6148 = vld [vmem:[#allocation3 + $0xb0] sm:$0xff]
    %v6149 = vld [vmem:[#allocation3 + $0xb8] sm:$0xff]
    %v6150 = vld [vmem:[#allocation3 + $0xc0] sm:$0xf]
    %v6152 = vsel %vm4508, %v6119, 0
    %v6155 = vsel %vm4508, %v6121, 0
    %v6158 = vsel %vm4508, %v6123, 0
    %v6161 = vsel %vm4508, %v6125, 0
    %vm6163 = vcmask 1043456
    %v6165 = vsel %vm6163, %v6150, 0
    %6167 = vmatprep.subr.mxu0 0.0
    %6168 = vmatpush1.msra.mxu0 %v6126
    %6169 = vmatprep.subr.mxu0 0.0
    %6170 = vmatpush1.msra.mxu0 %v6127
    %6171 = vmatprep.subr.mxu0 0.0
    %6172 = vmatpush1.msra.mxu0 %v6128
    %6173 = vmatprep.subr.mxu0 0.0
    %6174 = vmatpush1.msra.mxu0 %v6129
    %6175 = vmatprep.subr.mxu0 0.0
    %6176 = vmatpush1.msra.mxu0 %v6130
    %6177 = vmatprep.subr.mxu0 0.0
    %6178 = vmatpush1.msra.mxu0 %v6131
    %6179 = vmatprep.subr.mxu0 0.0
    %6180 = vmatpush1.msra.mxu0 %v6132
    %6181 = vmatprep.subr.mxu0 0.0
    %6182 = vmatpush1.msra.mxu0 %v6133
    %6183 = vmatprep.subr.mxu0 0.0
    %6184 = vmatpush1.msra.mxu0 %v6134
    %6185 = vmatprep.subr.mxu0 0.0
    %6186 = vmatpush1.msra.mxu0 %v6135
    %6187 = vmatprep.subr.mxu0 0.0
    %6188 = vmatpush1.msra.mxu0 %v6136
    %6189 = vmatprep.subr.mxu0 0.0
    %6190 = vmatpush1.msra.mxu0 %v6137
    %6191 = vmatprep.subr.mxu0 0.0
    %6192 = vmatpush1.msra.mxu0 %v6138
    %6193 = vmatprep.subr.mxu0 0.0
    %6194 = vmatpush1.msra.mxu0 %v6139
    %6195 = vmatprep.subr.mxu0 0.0
    %6196 = vmatpush1.msra.mxu0 %v6140
    %6197 = vmatprep.subr.mxu0 0.0
    %6198 = vmatpush1.msra.mxu0 %v6141
    %6199 = vmatprep.subr.mxu0 0.0
    %6200 = vmatpush1.msra.mxu0 %v6142
    %6201 = vmatprep.subr.mxu0 0.0
    %6202 = vmatpush1.msra.mxu0 %v6143
    %6203 = vmatprep.subr.mxu0 0.0
    %6204 = vmatpush1.msra.mxu0 %v6144
    %6205 = vmatprep.subr.mxu0 0.0
    %6206 = vmatpush1.msra.mxu0 %v6145
    %6207 = vmatprep.subr.mxu0 0.0
    %6208 = vmatpush1.msra.mxu0 %v6146
    %6209 = vmatprep.subr.mxu0 0.0
    %6210 = vmatpush1.msra.mxu0 %v6147
    %6211 = vmatprep.subr.mxu0 0.0
    %6212 = vmatpush1.msra.mxu0 %v6148
    %6213 = vmatprep.subr.mxu0 0.0
    %6214 = vmatpush1.msra.mxu0 %v6149
    %6215 = vmatprep.subr.mxu0 0.0
    %6216 = vmatpush1.msra.mxu0 %v6165
    %6217 = vmatprep.subr.mxu0 0.0
    %6218 = vmatpush1.msra.mxu0 0.0
    %6219 = vmatprep.subr.mxu0 0.0
    %6220 = vmatpush1.msra.mxu0 0.0
    %6221 = vmatprep.subr.mxu0 0.0
    %6222 = vmatpush1.msra.mxu0 0.0
    %6223 = vmatprep.subr.mxu0 0.0
    %6224 = vmatpush1.msra.mxu0 0.0
    %6225 = vmatprep.subr.mxu0 0.0
    %6226 = vmatpush1.msra.mxu0 0.0
    %6227 = vmatprep.subr.mxu0 0.0
    %6228 = vmatpush1.msra.mxu0 0.0
    %6229 = vmatprep.subr.mxu0 0.0
    %6230 = vmatpush1.msra.mxu0 0.0
    %6231 = vmatprep.mubr.f32.mxu0 %v6152
    %6232 = vmatmul.mubr.f32.gmra.mrb[0].mxu0 %v6118
    %v6233 = vpop.f32.mrb[0].mxu0
    %v6234 = vadd.f32 0.0, %v6233
    %v6235 = vpop.f32.mrb[0].mxu0
    %6236 = vmatprep.mubr.f32.mxu0 %v6155
    %6237 = vmatmul.mubr.f32.gmra.mrb[0].mxu0 %v6120
    %v6238 = vpop.f32.mrb[0].mxu0
    %v6239 = vadd.f32 0.0, %v6238
    %v6240 = vpop.f32.mrb[0].mxu0
    %6241 = vmatprep.mubr.f32.mxu0 %v6158
    %6242 = vmatmul.mubr.f32.gmra.mrb[0].mxu0 %v6122
    %v6243 = vpop.f32.mrb[0].mxu0
    %v6244 = vadd.f32 0.0, %v6243
    %v6245 = vpop.f32.mrb[0].mxu0
    %6246 = vmatprep.mubr.f32.mxu0 %v6161
    %6247 = vmatmul.mubr.f32.gmra.mrb[0].mxu0 %v6124
    %v6248 = vpop.f32.mrb[0].mxu0
    %v6249 = vadd.f32 0.0, %v6248
    %v6250 = vpop.f32.mrb[0].mxu0
    %6251 = vdwg.mxu0
    %v6252 = vld [vmem:[%s7] sm:$0xff]
    %v6253 = vld [vmem:[%s7 + $0x8] sm:$0xff]
    %v6254 = vld [vmem:[%s7 + $0x10] sm:$0xff]
    %v6255 = vld [vmem:[%s7 + $0x18] sm:$0xff]
    %v6256 = vld [vmem:[%s7 + $0x20] sm:$0xff]
    %v6257 = vld [vmem:[%s7 + $0x28] sm:$0xff]
    %v6258 = vld [vmem:[%s7 + $0x30] sm:$0xff]
    %v6259 = vld [vmem:[%s7 + $0x38] sm:$0xff]
    %v6260 = vld [vmem:[%s7 + $0x40] sm:$0xff]
    %v6261 = vld [vmem:[%s7 + $0x48] sm:$0xff]
    %v6262 = vld [vmem:[%s7 + $0x50] sm:$0xff]
    %v6263 = vld [vmem:[%s7 + $0x58] sm:$0xff]
    %v6264 = vld [vmem:[%s7 + $0x60] sm:$0x1]
    %v6265 = vld [vmem:[%s7 + $0x68] sm:$0x1]
    %v6267 = vsel %vm5971, %v6234, 0
    %v6270 = vsel %vm5971, %v6239, 0
    %v6273 = vsel %vm5971, %v6244, 0
    %v6276 = vsel %vm5971, %v6249, 0
    %vm6278 = vcmask 1040384
    %v6280 = vsel %vm6278, %v6264, 0
    %v6283 = vsel %vm6278, %v6265, 0
    %6285 = vmatprep.subr.mxu0 %v6253
    %6286 = vmatpush1.msra.mxu0 %v6252
    %6287 = vmatprep.subr.mxu0 %v6255
    %6288 = vmatpush1.msra.mxu0 %v6254
    %6289 = vmatprep.subr.mxu0 %v6257
    %6290 = vmatpush1.msra.mxu0 %v6256
    %6291 = vmatprep.subr.mxu0 %v6259
    %6292 = vmatpush1.msra.mxu0 %v6258
    %6293 = vmatprep.subr.mxu0 %v6261
    %6294 = vmatpush1.msra.mxu0 %v6260
    %6295 = vmatprep.subr.mxu0 %v6263
    %6296 = vmatpush1.msra.mxu0 %v6262
    %6297 = vmatprep.subr.mxu0 %v6283
    %6298 = vmatpush1.msra.mxu0 %v6280
    %6299 = vmatprep.subr.mxu0 0.0
    %6300 = vmatpush1.msra.mxu0 0.0
    %6301 = vmatprep.subr.mxu0 0.0
    %6302 = vmatpush1.msra.mxu0 0.0
    %6303 = vmatprep.subr.mxu0 0.0
    %6304 = vmatpush1.msra.mxu0 0.0
    %6305 = vmatprep.subr.mxu0 0.0
    %6306 = vmatpush1.msra.mxu0 0.0
    %6307 = vmatprep.subr.mxu0 0.0
    %6308 = vmatpush1.msra.mxu0 0.0
    %6309 = vmatprep.subr.mxu0 0.0
    %6310 = vmatpush1.msra.mxu0 0.0
    %6311 = vmatprep.subr.mxu0 0.0
    %6312 = vmatpush1.msra.mxu0 0.0
    %6313 = vmatprep.subr.mxu0 0.0
    %6314 = vmatpush1.msra.mxu0 0.0
    %6315 = vmatprep.subr.mxu0 0.0
    %6316 = vmatpush1.msra.mxu0 0.0
    %6317 = vmatprep.subr.mxu0 0.0
    %6318 = vmatpush1.msra.mxu0 0.0
    %6319 = vmatprep.subr.mxu0 0.0
    %6320 = vmatpush1.msra.mxu0 0.0
    %6321 = vmatprep.subr.mxu0 0.0
    %6322 = vmatpush1.msra.mxu0 0.0
    %6323 = vmatprep.subr.mxu0 0.0
    %6324 = vmatpush1.msra.mxu0 0.0
    %6325 = vmatprep.subr.mxu0 0.0
    %6326 = vmatpush1.msra.mxu0 0.0
    %6327 = vmatprep.subr.mxu0 0.0
    %6328 = vmatpush1.msra.mxu0 0.0
    %6329 = vmatprep.subr.mxu0 0.0
    %6330 = vmatpush1.msra.mxu0 0.0
    %6331 = vmatprep.subr.mxu0 0.0
    %6332 = vmatpush1.msra.mxu0 0.0
    %6333 = vmatprep.subr.mxu0 0.0
    %6334 = vmatpush1.msra.mxu0 0.0
    %6335 = vmatprep.subr.mxu0 0.0
    %6336 = vmatpush1.msra.mxu0 0.0
    %6337 = vmatprep.subr.mxu0 0.0
    %6338 = vmatpush1.msra.mxu0 0.0
    %6339 = vmatprep.subr.mxu0 0.0
    %6340 = vmatpush1.msra.mxu0 0.0
    %6341 = vmatprep.subr.mxu0 0.0
    %6342 = vmatpush1.msra.mxu0 0.0
    %6343 = vmatprep.subr.mxu0 0.0
    %6344 = vmatpush1.msra.mxu0 0.0
    %6345 = vmatprep.subr.mxu0 0.0
    %6346 = vmatpush1.msra.mxu0 0.0
    %6347 = vmatprep.subr.mxu0 0.0
    %6348 = vmatpush1.msra.mxu0 0.0
    %6349 = vmatprep.mubr.f32.mxu0 0.0
    %6350 = vmatmul.mubr.f32.gmra.mrb[0].mxu0 %v6267
    %v6351 = vpop.f32.mrb[0].mxu0
    %v6352 = vadd.f32 0.0, %v6351
    %v6353 = vpop.f32.mrb[0].mxu0
    %v6354 = vadd.f32 0.0, %v6353
    %6355 = vmatprep.mubr.f32.mxu0 0.0
    %6356 = vmatmul.mubr.f32.gmra.mrb[0].mxu0 %v6270
    %v6357 = vpop.f32.mrb[0].mxu0
    %v6358 = vadd.f32 0.0, %v6357
    %v6359 = vpop.f32.mrb[0].mxu0
    %v6360 = vadd.f32 0.0, %v6359
    %6361 = vmatprep.mubr.f32.mxu0 0.0
    %6362 = vmatmul.mubr.f32.gmra.mrb[0].mxu0 %v6273
    %v6363 = vpop.f32.mrb[0].mxu0
    %v6364 = vadd.f32 0.0, %v6363
    %v6365 = vpop.f32.mrb[0].mxu0
    %v6366 = vadd.f32 0.0, %v6365
    %6367 = vmatprep.mubr.f32.mxu0 0.0
    %6368 = vmatmul.mubr.f32.gmra.mrb[0].mxu0 %v6276
    %v6369 = vpop.f32.mrb[0].mxu0
    %v6370 = vadd.f32 0.0, %v6369
    %v6371 = vpop.f32.mrb[0].mxu0
    %v6372 = vadd.f32 0.0, %v6371
    %6373 = vdwg.mxu0
    %v6374 = vadd.f32 %v3800, 0.5
    %v6375 = vadd.f32 %v3801, 0.5
    %v6376 = vadd.f32 %v3802, 0.5
    %v6377 = vadd.f32 %v3803, 0.5
    %v6378 = vmul.f32 %v6374, 0.5
    %v6379 = vmul.f32 %v6375, 0.5
    %v6380 = vmul.f32 %v6376, 0.5
    %v6381 = vmul.f32 %v6377, 0.5
    %v6382 = vfloor.f32 %v6378
    %v6383 = vfloor.f32 %v6379
    %v6384 = vfloor.f32 %v6380
    %v6385 = vfloor.f32 %v6381
    %v6386 = vmul.f32 %v3903, 0.1
    %v6387 = vmul.f32 %v3904, 0.1
    %v6388 = vfloor.f32 %v6386
    %v6389 = vfloor.f32 %v6387
    %vm6390 = vcmp.eq.f32.partialorder %v6382, %v6388
    %vm6391 = vcmp.eq.f32.partialorder %v6382, %v6389
    %vm6392 = vcmp.eq.f32.partialorder %v6383, %v6388
    %vm6393 = vcmp.eq.f32.partialorder %v6383, %v6389
    %vm6394 = vcmp.eq.f32.partialorder %v6384, %v6388
    %vm6395 = vcmp.eq.f32.partialorder %v6384, %v6389
    %vm6396 = vcmp.eq.f32.partialorder %v6385, %v6388
    %vm6397 = vcmp.eq.f32.partialorder %v6385, %v6389
    %v6398 = vsel %vm6390, 1, 0
    %v6399 = vsel %vm6391, 1, 0
    %v6400 = vsel %vm6392, 1, 0
    %v6401 = vsel %vm6393, 1, 0
    %v6402 = vsel %vm6394, 1, 0
    %v6403 = vsel %vm6395, 1, 0
    %v6404 = vsel %vm6396, 1, 0
    %v6405 = vsel %vm6397, 1, 0
    %v6406 = vcvt.s32.f32 %v6398
    %v6407 = vcvt.s32.f32 %v6399
    %v6408 = vcvt.s32.f32 %v6400
    %v6409 = vcvt.s32.f32 %v6401
    %v6410 = vcvt.s32.f32 %v6402
    %v6411 = vcvt.s32.f32 %v6403
    %v6412 = vcvt.s32.f32 %v6404
    %v6413 = vcvt.s32.f32 %v6405
    %v6414 = vmul.f32 %v6352, %v6406
    %v6415 = vmul.f32 %v6354, %v6407
    %v6416 = vmul.f32 %v6358, %v6408
    %v6417 = vmul.f32 %v6360, %v6409
    %v6418 = vmul.f32 %v6364, %v6410
    %v6419 = vmul.f32 %v6366, %v6411
    %v6420 = vmul.f32 %v6370, %v6412
    %v6421 = vmul.f32 %v6372, %v6413
    %v6422 = vmul.f32 %v3903, 0.5
    %v6423 = vfloor.f32 %v6422
    %v6424 = vmul.f32 %v6423, 2.0
    %v6425 = vsub.f32 %v3901, %v6424
    %vm6426 = vcmp.eq.f32.partialorder %v6425, %v3800
    %v6427 = vsel %vm6426, 1, 0
    %v6428 = vcvt.s32.f32 %v6427
    %v6429 = vadd.f32 %v3804, 0.5
    %v6430 = vadd.f32 %v3805, 0.5
    %v6431 = vadd.f32 %v3806, 0.5
    %v6432 = vadd.f32 %v3807, 0.5
    %v6433 = vadd.f32 %v3808, 0.5
    %v6434 = vadd.f32 %v3809, 0.5
    %v6435 = vadd.f32 %v3810, 0.5
    %v6436 = vadd.f32 %v3811, 0.5
    %v6437 = vadd.f32 %v3812, 0.5
    %v6438 = vadd.f32 %v3813, 0.5
    %v6439 = vadd.f32 %v3814, 0.5
    %v6440 = vadd.f32 %v3815, 0.5
    %v6441 = vadd.f32 %v3816, 0.5
    %v6442 = vadd.f32 %v3817, 0.5
    %v6443 = vadd.f32 %v3818, 0.5
    %v6444 = vadd.f32 %v3819, 0.5
    %v6445 = vmul.f32 %v6374, 0.1
    %v6446 = vmul.f32 %v6375, 0.1
    %v6447 = vmul.f32 %v6376, 0.1
    %v6448 = vmul.f32 %v6377, 0.1
    %v6449 = vmul.f32 %v6429, 0.1
    %v6450 = vmul.f32 %v6430, 0.1
    %v6451 = vmul.f32 %v6431, 0.1
    %v6452 = vmul.f32 %v6432, 0.1
    %v6453 = vmul.f32 %v6433, 0.1
    %v6454 = vmul.f32 %v6434, 0.1
    %v6455 = vmul.f32 %v6435, 0.1
    %v6456 = vmul.f32 %v6436, 0.1
    %v6457 = vmul.f32 %v6437, 0.1
    %v6458 = vmul.f32 %v6438, 0.1
    %v6459 = vmul.f32 %v6439, 0.1
    %v6460 = vmul.f32 %v6440, 0.1
    %v6461 = vmul.f32 %v6441, 0.1
    %v6462 = vmul.f32 %v6442, 0.1
    %v6463 = vmul.f32 %v6443, 0.1
    %v6464 = vmul.f32 %v6444, 0.1
    %v6465 = vfloor.f32 %v6445
    %v6466 = vfloor.f32 %v6446
    %v6467 = vfloor.f32 %v6447
    %v6468 = vfloor.f32 %v6448
    %v6469 = vfloor.f32 %v6449
    %v6470 = vfloor.f32 %v6450
    %v6471 = vfloor.f32 %v6451
    %v6472 = vfloor.f32 %v6452
    %v6473 = vfloor.f32 %v6453
    %v6474 = vfloor.f32 %v6454
    %v6475 = vfloor.f32 %v6455
    %v6476 = vfloor.f32 %v6456
    %v6477 = vfloor.f32 %v6457
    %v6478 = vfloor.f32 %v6458
    %v6479 = vfloor.f32 %v6459
    %v6480 = vfloor.f32 %v6460
    %v6481 = vfloor.f32 %v6461
    %v6482 = vfloor.f32 %v6462
    %v6483 = vfloor.f32 %v6463
    %v6484 = vfloor.f32 %v6464
    %v6485 = vmul.f32 %v6465, 10.0
    %v6486 = vmul.f32 %v6466, 10.0
    %v6487 = vmul.f32 %v6467, 10.0
    %v6488 = vmul.f32 %v6468, 10.0
    %v6489 = vmul.f32 %v6469, 10.0
    %v6490 = vmul.f32 %v6470, 10.0
    %v6491 = vmul.f32 %v6471, 10.0
    %v6492 = vmul.f32 %v6472, 10.0
    %v6493 = vmul.f32 %v6473, 10.0
    %v6494 = vmul.f32 %v6474, 10.0
    %v6495 = vmul.f32 %v6475, 10.0
    %v6496 = vmul.f32 %v6476, 10.0
    %v6497 = vmul.f32 %v6477, 10.0
    %v6498 = vmul.f32 %v6478, 10.0
    %v6499 = vmul.f32 %v6479, 10.0
    %v6500 = vmul.f32 %v6480, 10.0
    %v6501 = vmul.f32 %v6481, 10.0
    %v6502 = vmul.f32 %v6482, 10.0
    %v6503 = vmul.f32 %v6483, 10.0
    %v6504 = vmul.f32 %v6484, 10.0
    %v6505 = vsub.f32 %v3800, %v6485
    %v6506 = vsub.f32 %v3801, %v6486
    %v6507 = vsub.f32 %v3802, %v6487
    %v6508 = vsub.f32 %v3803, %v6488
    %v6509 = vsub.f32 %v3804, %v6489
    %v6510 = vsub.f32 %v3805, %v6490
    %v6511 = vsub.f32 %v3806, %v6491
    %v6512 = vsub.f32 %v3807, %v6492
    %v6513 = vsub.f32 %v3808, %v6493
    %v6514 = vsub.f32 %v3809, %v6494
    %v6515 = vsub.f32 %v3810, %v6495
    %v6516 = vsub.f32 %v3811, %v6496
    %v6517 = vsub.f32 %v3812, %v6497
    %v6518 = vsub.f32 %v3813, %v6498
    %v6519 = vsub.f32 %v3814, %v6499
    %v6520 = vsub.f32 %v3815, %v6500
    %v6521 = vsub.f32 %v3816, %v6501
    %v6522 = vsub.f32 %v3817, %v6502
    %v6523 = vsub.f32 %v3818, %v6503
    %v6524 = vsub.f32 %v3819, %v6504
    %vm6525 = vcmp.eq.f32.partialorder %v6505, %v3901
    %vm6526 = vcmp.eq.f32.partialorder %v6506, %v3901
    %vm6527 = vcmp.eq.f32.partialorder %v6507, %v3901
    %vm6528 = vcmp.eq.f32.partialorder %v6508, %v3901
    %vm6529 = vcmp.eq.f32.partialorder %v6509, %v3901
    %vm6530 = vcmp.eq.f32.partialorder %v6510, %v3901
    %vm6531 = vcmp.eq.f32.partialorder %v6511, %v3901
    %vm6532 = vcmp.eq.f32.partialorder %v6512, %v3901
    %vm6533 = vcmp.eq.f32.partialorder %v6513, %v3901
    %vm6534 = vcmp.eq.f32.partialorder %v6514, %v3901
    %vm6535 = vcmp.eq.f32.partialorder %v6515, %v3901
    %vm6536 = vcmp.eq.f32.partialorder %v6516, %v3901
    %vm6537 = vcmp.eq.f32.partialorder %v6517, %v3901
    %vm6538 = vcmp.eq.f32.partialorder %v6518, %v3901
    %vm6539 = vcmp.eq.f32.partialorder %v6519, %v3901
    %vm6540 = vcmp.eq.f32.partialorder %v6520, %v3901
    %vm6541 = vcmp.eq.f32.partialorder %v6521, %v3901
    %vm6542 = vcmp.eq.f32.partialorder %v6522, %v3901
    %vm6543 = vcmp.eq.f32.partialorder %v6523, %v3901
    %vm6544 = vcmp.eq.f32.partialorder %v6524, %v3901
    %v6545 = vsel %vm6525, 1, 0
    %v6546 = vsel %vm6526, 1, 0
    %v6547 = vsel %vm6527, 1, 0
    %v6548 = vsel %vm6528, 1, 0
    %v6549 = vsel %vm6529, 1, 0
    %v6550 = vsel %vm6530, 1, 0
    %v6551 = vsel %vm6531, 1, 0
    %v6552 = vsel %vm6532, 1, 0
    %v6553 = vsel %vm6533, 1, 0
    %v6554 = vsel %vm6534, 1, 0
    %v6555 = vsel %vm6535, 1, 0
    %v6556 = vsel %vm6536, 1, 0
    %v6557 = vsel %vm6537, 1, 0
    %v6558 = vsel %vm6538, 1, 0
    %v6559 = vsel %vm6539, 1, 0
    %v6560 = vsel %vm6540, 1, 0
    %v6561 = vsel %vm6541, 1, 0
    %v6562 = vsel %vm6542, 1, 0
    %v6563 = vsel %vm6543, 1, 0
    %v6564 = vsel %vm6544, 1, 0
    %v6565 = vcvt.s32.f32 %v6545
    %v6566 = vcvt.s32.f32 %v6546
    %v6567 = vcvt.s32.f32 %v6547
    %v6568 = vcvt.s32.f32 %v6548
    %v6569 = vcvt.s32.f32 %v6549
    %v6570 = vcvt.s32.f32 %v6550
    %v6571 = vcvt.s32.f32 %v6551
    %v6572 = vcvt.s32.f32 %v6552
    %v6573 = vcvt.s32.f32 %v6553
    %v6574 = vcvt.s32.f32 %v6554
    %v6575 = vcvt.s32.f32 %v6555
    %v6576 = vcvt.s32.f32 %v6556
    %v6577 = vcvt.s32.f32 %v6557
    %v6578 = vcvt.s32.f32 %v6558
    %v6579 = vcvt.s32.f32 %v6559
    %v6580 = vcvt.s32.f32 %v6560
    %v6581 = vcvt.s32.f32 %v6561
    %v6582 = vcvt.s32.f32 %v6562
    %v6583 = vcvt.s32.f32 %v6563
    %v6584 = vcvt.s32.f32 %v6564
    %vm6585 = vcmask 261120
    %v6587 = vsel %vm6585, %v6428, 0
    %6589 = vmatprep.subr.mxu0 %v6415
    %6590 = vmatpush1.msra.mxu0 %v6414
    %6591 = vmatprep.subr.mxu0 %v6417
    %6592 = vmatpush1.msra.mxu0 %v6416
    %6593 = vmatprep.subr.mxu0 %v6419
    %6594 = vmatpush1.msra.mxu0 %v6418
    %6595 = vmatprep.subr.mxu0 %v6421
    %6596 = vmatpush1.msra.mxu0 %v6420
    %6597 = vmatprep.subr.mxu0 0.0
    %6598 = vmatpush1.msra.mxu0 0.0
    %6599 = vmatprep.subr.mxu0 0.0
    %6600 = vmatpush1.msra.mxu0 0.0
    %6601 = vmatprep.subr.mxu0 0.0
    %6602 = vmatpush1.msra.mxu0 0.0
    %6603 = vmatprep.subr.mxu0 0.0
    %6604 = vmatpush1.msra.mxu0 0.0
    %6605 = vmatprep.subr.mxu0 0.0
    %6606 = vmatpush1.msra.mxu0 0.0
    %6607 = vmatprep.subr.mxu0 0.0
    %6608 = vmatpush1.msra.mxu0 0.0
    %6609 = vmatprep.subr.mxu0 0.0
    %6610 = vmatpush1.msra.mxu0 0.0
    %6611 = vmatprep.subr.mxu0 0.0
    %6612 = vmatpush1.msra.mxu0 0.0
    %6613 = vmatprep.subr.mxu0 0.0
    %6614 = vmatpush1.msra.mxu0 0.0
    %6615 = vmatprep.subr.mxu0 0.0
    %6616 = vmatpush1.msra.mxu0 0.0
    %6617 = vmatprep.subr.mxu0 0.0
    %6618 = vmatpush1.msra.mxu0 0.0
    %6619 = vmatprep.subr.mxu0 0.0
    %6620 = vmatpush1.msra.mxu0 0.0
    %6621 = vmatprep.subr.mxu0 0.0
    %6622 = vmatpush1.msra.mxu0 0.0
    %6623 = vmatprep.subr.mxu0 0.0
    %6624 = vmatpush1.msra.mxu0 0.0
    %6625 = vmatprep.subr.mxu0 0.0
    %6626 = vmatpush1.msra.mxu0 0.0
    %6627 = vmatprep.subr.mxu0 0.0
    %6628 = vmatpush1.msra.mxu0 0.0
    %6629 = vmatprep.subr.mxu0 0.0
    %6630 = vmatpush1.msra.mxu0 0.0
    %6631 = vmatprep.subr.mxu0 0.0
    %6632 = vmatpush1.msra.mxu0 0.0
    %6633 = vmatprep.subr.mxu0 0.0
    %6634 = vmatpush1.msra.mxu0 0.0
    %6635 = vmatprep.subr.mxu0 0.0
    %6636 = vmatpush1.msra.mxu0 0.0
    %6637 = vmatprep.subr.mxu0 0.0
    %6638 = vmatpush1.msra.mxu0 0.0
    %6639 = vmatprep.subr.mxu0 0.0
    %6640 = vmatpush1.msra.mxu0 0.0
    %6641 = vmatprep.subr.mxu0 0.0
    %6642 = vmatpush1.msra.mxu0 0.0
    %6643 = vmatprep.subr.mxu0 0.0
    %6644 = vmatpush1.msra.mxu0 0.0
    %6645 = vmatprep.subr.mxu0 0.0
    %6646 = vmatpush1.msra.mxu0 0.0
    %6647 = vmatprep.subr.mxu0 0.0
    %6648 = vmatpush1.msra.mxu0 0.0
    %6649 = vmatprep.subr.mxu0 0.0
    %6650 = vmatpush1.msra.mxu0 0.0
    %6651 = vmatprep.subr.mxu0 0.0
    %6652 = vmatpush1.msra.mxu0 0.0
    %6653 = vmatprep.mubr.f32.mxu0 0.0
    %6654 = vmatmul.mubr.f32.gmra.mrb[0].mxu0 %v6587
    %v6655 = vpop.f32.mrb[0].mxu0
    %v6656 = vadd.f32 0.0, %v6655
    %v6657 = vpop.f32.mrb[0].mxu0
    %v6658 = vadd.f32 0.0, %v6657
    %6659 = vdwg.mxu0
    %v6660 = vld [vmem:[%s8] sm:$0x1]
    %v6662 = vlaneseq
    %v6663 = vshrl.u32 %v6662, 7
    %v6664 = vsub.s32 0, %v6663
    %v6665 = vrot.slane %v6660, %v6664
    %v6668 = vsel %vm6585, %v6658, 0
    %6670 = vmatprep.subr.mxu0 0.0
    %6671 = vmatpush1.msra.mxu0 %v6565
    %6672 = vmatprep.subr.mxu0 0.0
    %6673 = vmatpush1.msra.mxu0 %v6566
    %6674 = vmatprep.subr.mxu0 0.0
    %6675 = vmatpush1.msra.mxu0 %v6567
    %6676 = vmatprep.subr.mxu0 0.0
    %6677 = vmatpush1.msra.mxu0 %v6568
    %6678 = vmatprep.subr.mxu0 0.0
    %6679 = vmatpush1.msra.mxu0 %v6569
    %6680 = vmatprep.subr.mxu0 0.0
    %6681 = vmatpush1.msra.mxu0 %v6570
    %6682 = vmatprep.subr.mxu0 0.0
    %6683 = vmatpush1.msra.mxu0 %v6571
    %6684 = vmatprep.subr.mxu0 0.0
    %6685 = vmatpush1.msra.mxu0 %v6572
    %6686 = vmatprep.subr.mxu0 0.0
    %6687 = vmatpush1.msra.mxu0 %v6573
    %6688 = vmatprep.subr.mxu0 0.0
    %6689 = vmatpush1.msra.mxu0 %v6574
    %6690 = vmatprep.subr.mxu0 0.0
    %6691 = vmatpush1.msra.mxu0 %v6575
    %6692 = vmatprep.subr.mxu0 0.0
    %6693 = vmatpush1.msra.mxu0 %v6576
    %6694 = vmatprep.subr.mxu0 0.0
    %6695 = vmatpush1.msra.mxu0 %v6577
    %6696 = vmatprep.subr.mxu0 0.0
    %6697 = vmatpush1.msra.mxu0 %v6578
    %6698 = vmatprep.subr.mxu0 0.0
    %6699 = vmatpush1.msra.mxu0 %v6579
    %6700 = vmatprep.subr.mxu0 0.0
    %6701 = vmatpush1.msra.mxu0 %v6580
    %6702 = vmatprep.subr.mxu0 0.0
    %6703 = vmatpush1.msra.mxu0 %v6581
    %6704 = vmatprep.subr.mxu0 0.0
    %6705 = vmatpush1.msra.mxu0 %v6582
    %6706 = vmatprep.subr.mxu0 0.0
    %6707 = vmatpush1.msra.mxu0 %v6583
    %6708 = vmatprep.subr.mxu0 0.0
    %6709 = vmatpush1.msra.mxu0 %v6584
    %6710 = vmatprep.subr.mxu0 0.0
    %6711 = vmatpush1.msra.mxu0 0.0
    %6712 = vmatprep.subr.mxu0 0.0
    %6713 = vmatpush1.msra.mxu0 0.0
    %6714 = vmatprep.subr.mxu0 0.0
    %6715 = vmatpush1.msra.mxu0 0.0
    %6716 = vmatprep.subr.mxu0 0.0
    %6717 = vmatpush1.msra.mxu0 0.0
    %6718 = vmatprep.subr.mxu0 0.0
    %6719 = vmatpush1.msra.mxu0 0.0
    %6720 = vmatprep.subr.mxu0 0.0
    %6721 = vmatpush1.msra.mxu0 0.0
    %6722 = vmatprep.subr.mxu0 0.0
    %6723 = vmatpush1.msra.mxu0 0.0
    %6724 = vmatprep.subr.mxu0 0.0
    %6725 = vmatpush1.msra.mxu0 0.0
    %6726 = vmatprep.subr.mxu0 0.0
    %6727 = vmatpush1.msra.mxu0 0.0
    %6728 = vmatprep.subr.mxu0 0.0
    %6729 = vmatpush1.msra.mxu0 0.0
    %6730 = vmatprep.subr.mxu0 0.0
    %6731 = vmatpush1.msra.mxu0 0.0
    %6732 = vmatprep.subr.mxu0 0.0
    %6733 = vmatpush1.msra.mxu0 0.0
    %6734 = vmatprep.mubr.f32.mxu0 %v6668
    %6735 = vmatmul.mubr.f32.gmra.mrb[0].mxu0 %v6656
    %v6736 = vpop.f32.mrb[0].mxu0
    %v6737 = vadd.f32 %v6665, %v6736
    %v6738 = vpop.f32.mrb[0].mxu0
    %6739 = vdwg.mxu0
    %vm6740 = vcmask 74752
    %6741 = vst.msk [vmem:[#allocation6] sm:$0x3] %vm6740, %v6737
    // Predicated region
    $region38: #{cnn_forward.1} parent=1 // pred_check
      _
    $region39: #{cnn_forward.1} parent=1 // pred_check_branch
      %6743 = sbr.rel (0) target = $region41
    $region40: #{cnn_forward.1} parent=1 // pred_region
      %s6745 = ssub.s32 32, 32
      %6746 = vsyncadd [#allocation7], %s6745
      %s6748 = sshll.u32 [#allocation6], 4
      %s6749 = int_to_ptr.vmem [resolvable:$true] %s6748
      %6751 = dma.vmem_to_hbm [thread:$0]  %s6749, 32, %s9, [#allocation7]
    $region41: #{cnn_forward.1} parent=1 // pred_fallthru
      _
    // Predicated region
    $region42: #{cnn_forward.1} parent=1 // pred_check
      _
    $region43: #{cnn_forward.1} parent=1 // pred_check_branch
      %6753 = sbr.rel (0) target = $region45
    $region44: #{cnn_forward.1} parent=1 // pred_region
      %6754 = dma.done [#allocation7], 32
    $region45: #{cnn_forward.1} parent=1 // pred_fallthru
      _
    %6755 = vsyncpa [#allocation7], 1

</llo_original>
